<compile_context>
chip_gen: v6e
topology: v6e:2x2x1
jax: 0.10.0
libtpu: 0.0.40
codegen_flags: <defaults>
</compile_context>

<pallas_src>
import numpy as np
import jax
import jax.numpy as jnp
from jax.experimental import pallas as pl
from jax.experimental.pallas import tpu as pltpu


def _round_up(x, m):
    return (x + m - 1) // m * m


# ----------------------------------------------------------------------------
# Fused ResBlock_SFT kernel.  Wrapper-facing layout is NHWC; internally all
# images are handled as flat (H*W, C) slabs.
# ----------------------------------------------------------------------------
def resblock_sft_fused(x0, x1, x2, pk):
    """x0: (N,H,W,Cf) feature, x1/x2: (N,H,W,Cc) conditions, pk: packed params."""
    N, H, W, Cf = x0.shape
    Cc = x1.shape[-1]
    HW = H * W
    PR = _round_up(HW + 2 * W, 8)     # padded scratch rows (covers all ky windows)
    f32, bf16 = jnp.float32, jnp.bfloat16

    # free (contiguous) reshapes at the XLA level; kernel refs are (1, HW, C)
    x0f = x0.reshape(N, HW, Cf)
    x1f = x1.reshape(N, HW, Cc)
    x2f = x2.reshape(N, HW, Cc)

    def kernel(x0_ref, x1_ref, x2_ref,
               s0w0, s0b0, s0w1, s0b1, c0w, c0b,
               s1w0, s1b0, s1w1, s1b1, c1w, c1b,
               o_ref, pbuf):

        def leaky(v):
            return jnp.where(v >= 0, v, 0.1 * v)

        def sft(cond_bf, fea_f32, w0, b0, w1, b1):
            # merged first layer (Cc -> 2*Cc) and block-diagonal second layer
            # (2*Cc -> 2*Cf): ss = [scale | shift], lane-dense 2*Cf = 128 wide.
            h = jnp.dot(cond_bf, w0[...], preferred_element_type=f32) + b0[...]
            h = leaky(h).astype(bf16)
            ss = jnp.dot(h, w1[...], preferred_element_type=f32) + b1[...]
            return fea_f32 * (ss[:, :Cf] + 1.0) + ss[:, Cf:]

        # grid-invariant, tiny ((HW,1) ints): x coordinate of each flat row.
        xcol = jax.lax.broadcasted_iota(jnp.int32, (HW, 1), 0) % W
        not_first = xcol != 0            # source rows valid as the kx=+1 tap
        not_last = xcol != (W - 1)       # source rows valid as the kx=-1 tap
        zhalo = jnp.zeros((W + 1, 3 * Cf), bf16)

        def build_pbuf(fea_bf):
            # Zero only the halo bands (data region is fully rewritten below; the
            # rounded tail rows [HW+2W, PR) are never read).
            pbuf[0:W + 1, :] = zhalo
            pbuf[HW + W - 1:HW + 2 * W, :] = zhalo
            # kx lane-stacked, row-shifted slab stores: lane block L holds the
            # kx = L (dx = L-1) tap, stored at row offset W - dx with the
            # source-side x-boundary mask pre-applied.
            pbuf[W + 1:W + 1 + HW, 0:Cf] = jnp.where(not_last, fea_bf, 0)
            pbuf[W:W + HW, Cf:2 * Cf] = fea_bf
            pbuf[W - 1:W - 1 + HW, 2 * Cf:3 * Cf] = jnp.where(not_first, fea_bf, 0)

        def conv3x3(wref, bref):
            acc = None
            for ky in range(3):
                # aligned window start (multiple of W) -> no relayout when W % 8 == 0
                lhs = pbuf[ky * W:ky * W + HW, :]                 # (HW, 3*Cf) bf16
                d = jnp.dot(lhs, wref[ky], preferred_element_type=f32)
                acc = d if acc is None else acc + d
            return acc + bref[...]

        fea0 = x0_ref[0]                                          # (HW, Cf) f32
        cond2 = x2_ref[0].astype(bf16)                            # (HW, Cc) bf16

        # ----------------- SFT0 (cond = x2) + conv0 + ReLU -------------------
        sft0 = sft(cond2, fea0, s0w0, s0b0, s0w1, s0b1)           # (HW, Cf) f32
        build_pbuf(sft0.astype(bf16))
        a0 = jnp.maximum(conv3x3(c0w, c0b), 0.0)                  # (HW, Cf) f32

        # ----------------- SFT1 (cond = x1) + conv1 ---------------------------
        cond1 = x1_ref[0].astype(bf16)
        sft1 = sft(cond1, a0, s1w0, s1b0, s1w1, s1b1)
        build_pbuf(sft1.astype(bf16))
        res = conv3x3(c1w, c1b)                                   # (HW, Cf) f32

        # ----------------- residual add: one full-block store -----------------
        o_ref[0] = fea0 + res

    img = lambda n: (n, 0, 0)
    w2 = lambda n: (0, 0)
    w3 = lambda n: (0, 0, 0)

    in_specs = [
        pl.BlockSpec((1, HW, Cf), img),
        pl.BlockSpec((1, HW, Cc), img),
        pl.BlockSpec((1, HW, Cc), img),
        # sft0: merged first layer, block-diag second layer
        pl.BlockSpec((Cc, 2 * Cc), w2), pl.BlockSpec((1, 2 * Cc), w2),
        pl.BlockSpec((2 * Cc, 2 * Cf), w2), pl.BlockSpec((1, 2 * Cf), w2),
        # conv0: kx-stacked (3, 3*Cf, Cf) bf16 weight + f32 bias
        pl.BlockSpec((3, 3 * Cf, Cf), w3), pl.BlockSpec((1, Cf), w2),
        # sft1
        pl.BlockSpec((Cc, 2 * Cc), w2), pl.BlockSpec((1, 2 * Cc), w2),
        pl.BlockSpec((2 * Cc, 2 * Cf), w2), pl.BlockSpec((1, 2 * Cf), w2),
        # conv1
        pl.BlockSpec((3, 3 * Cf, Cf), w3), pl.BlockSpec((1, Cf), w2),
    ]

    out = pl.pallas_call(
        kernel,
        out_shape=jax.ShapeDtypeStruct((N, HW, Cf), f32),
        grid_spec=pltpu.PrefetchScalarGridSpec(
            num_scalar_prefetch=0,
            grid=(N,),
            in_specs=in_specs,
            out_specs=pl.BlockSpec((1, HW, Cf), img),
            scratch_shapes=[
                pltpu.VMEM((PR, 3 * Cf), bf16),   # flat-row, kx-stacked padded image
            ],
        ),
        compiler_params=pltpu.CompilerParams(
            dimension_semantics=("parallel",),
            vmem_limit_bytes=32 * 1024 * 1024,
        ),
    )(x0f, x1f, x2f,
      pk["s0_w0"], pk["s0_b0"], pk["s0_w1"], pk["s0_b1"],
      pk["c0_w"], pk["c0_b"],
      pk["s1_w0"], pk["s1_b0"], pk["s1_w1"], pk["s1_b1"],
      pk["c1_w"], pk["c1_b"])

    return out.reshape(N, H, W, Cf)


# ----------------------------------------------------------------------------
# Parameter init (deterministic, matches module __init__ shapes).
# 1x1 conv -> (Cin, Cout); 3x3 conv -> (ky, kx, Cin, Cout); bias -> (1, Cout).
# ----------------------------------------------------------------------------
def init_params(key):
    def w(k, shape, scale=0.1):
        return scale * jax.random.normal(k, shape, jnp.float32)

    keys = iter(jax.random.split(key, 24))

    def sft_params():
        return {
            "ws0": w(next(keys), (32, 32)), "bs0": w(next(keys), (1, 32), 0.01),
            "ws1": w(next(keys), (32, 64)), "bs1": w(next(keys), (1, 64), 0.01),
            "wh0": w(next(keys), (32, 32)), "bh0": w(next(keys), (1, 32), 0.01),
            "wh1": w(next(keys), (32, 64)), "bh1": w(next(keys), (1, 64), 0.01),
        }

    return {
        "sft0": sft_params(),
        "conv0_w": w(next(keys), (3, 3, 64, 64)),
        "conv0_b": w(next(keys), (1, 64), 0.01),
        "sft1": sft_params(),
        "conv1_w": w(next(keys), (3, 3, 64, 64)),
        "conv1_b": w(next(keys), (1, 64), 0.01),
        # note: the PyTorch module also constructs `sft2`, but forward() never
        # uses it, so its parameters are irrelevant to the output.
    }


def pack_params(params):
    """Pack raw per-branch weights into kernel-friendly merged bf16 layouts."""
    bf16 = jnp.bfloat16

    def pack_sft(sp):
        cc, cf = sp["ws1"].shape
        w0 = jnp.concatenate([sp["ws0"], sp["wh0"]], axis=1).astype(bf16)   # (Cc, 2Cc)
        b0 = jnp.concatenate([sp["bs0"], sp["bh0"]], axis=1)                # (1, 2Cc) f32
        w1 = jnp.zeros((2 * cc, 2 * cf), jnp.float32)                       # block-diag
        w1 = w1.at[:cc, :cf].set(sp["ws1"]).at[cc:, cf:].set(sp["wh1"])
        b1 = jnp.concatenate([sp["bs1"], sp["bh1"]], axis=1)                # (1, 2Cf) f32
        return w0, b0, w1.astype(bf16), b1

    s0w0, s0b0, s0w1, s0b1 = pack_sft(params["sft0"])
    s1w0, s1b0, s1w1, s1b1 = pack_sft(params["sft1"])
    c0w, c1w = params["conv0_w"], params["conv1_w"]
    return {
        "s0_w0": s0w0, "s0_b0": s0b0, "s0_w1": s0w1, "s0_b1": s0b1,
        "c0_w": c0w.reshape(3, 3 * c0w.shape[2], c0w.shape[3]).astype(bf16),
        "c0_b": params["conv0_b"],
        "s1_w0": s1w0, "s1_b0": s1b0, "s1_w1": s1w1, "s1_b1": s1b1,
        "c1_w": c1w.reshape(3, 3 * c1w.shape[2], c1w.shape[3]).astype(bf16),
        "c1_b": params["conv1_b"],
    }


# ----------------------------------------------------------------------------
# ResBlock_SFT forward.  Inputs/outputs are NCHW to mirror PyTorch semantics.
# ----------------------------------------------------------------------------
def resblock_sft_forward(x0_nchw, x1_nchw, x2_nchw, params):
    to_nhwc = lambda t: jnp.transpose(t, (0, 2, 3, 1))
    x0, x1, x2 = to_nhwc(x0_nchw), to_nhwc(x1_nchw), to_nhwc(x2_nchw)
    out = resblock_sft_fused(x0, x1, x2, pack_params(params))
    return jnp.transpose(out, (0, 3, 1, 2)), x1_nchw, x2_nchw


# ----------------------------------------------------------------------------
# Pure-JAX f32 reference (sanity check).
# ----------------------------------------------------------------------------
def _ref_sft(fea, cond, p):
    hs = cond @ p["ws0"] + p["bs0"]
    hs = jnp.where(hs >= 0, hs, 0.1 * hs)
    scale = hs @ p["ws1"] + p["bs1"]
    hh = cond @ p["wh0"] + p["bh0"]
    hh = jnp.where(hh >= 0, hh, 0.1 * hh)
    shift = hh @ p["wh1"] + p["bh1"]
    return fea * (scale + 1.0) + shift


def _ref_conv3x3(x, w, b):
    N, H, W, Cin = x.shape
    xpad = jnp.pad(x, ((0, 0), (1, 1), (1, 1), (0, 0)))
    out = jnp.zeros((N, H, W, w.shape[-1]), jnp.float32)
    for ky in range(3):
        for kx in range(3):
            out = out + jnp.einsum("nhwi,io->nhwo",
                                   xpad[:, ky:ky + H, kx:kx + W, :], w[ky, kx])
    return out + b.reshape(1, 1, 1, -1)


def _ref_forward(x0_nchw, x1_nchw, x2_nchw, params):
    to_nhwc = lambda t: jnp.transpose(t, (0, 2, 3, 1))
    x0, x1, x2 = to_nhwc(x0_nchw), to_nhwc(x1_nchw), to_nhwc(x2_nchw)
    fea = _ref_sft(x0, x2, params["sft0"])
    fea = jnp.maximum(_ref_conv3x3(fea, params["conv0_w"], params["conv0_b"]), 0.0)
    fea = _ref_sft(fea, x1, params["sft1"])
    fea = _ref_conv3x3(fea, params["conv1_w"], params["conv1_b"])
    return jnp.transpose(x0 + fea, (0, 3, 1, 2))


if __name__ == "__main__":
    key = jax.random.PRNGKey(0)
    k0, k1, k2, kp = jax.random.split(key, 4)

    N, H, W = 2, 16, 16
    x0 = jax.random.normal(k0, (N, 64, H, W), jnp.float32)   # feature (NCHW)
    x1 = jax.random.normal(k1, (N, 32, H, W), jnp.float32)   # condition 1
    x2 = jax.random.normal(k2, (N, 32, H, W), jnp.float32)   # condition 2
    params = init_params(kp)

    fwd = jax.jit(resblock_sft_forward)
    out0, out1, out2 = fwd(x0, x1, x2, params)
    jax.block_until_ready(out0)

    ref0 = _ref_forward(x0, x1, x2, params)
    # bf16 MXU operands (f32 accumulation) vs the f32 reference -> looser tolerance.
    np.testing.assert_allclose(np.asarray(out0), np.asarray(ref0),
                               rtol=5e-2, atol=1e-1)
    assert out0.shape == (N, 64, H, W)
    assert out1.shape == (N, 32, H, W) and out2.shape == (N, 32, H, W)

    print("KERNEL_OK")
</pallas_src>

<mosaic_0001>
module attributes {stable_mosaic.version = 11 : i64} {
  func.func @kernel(%arg0: i32, %arg1: memref<1x256x64xf32, #tpu.memory_space<vmem>>, %arg2: memref<1x256x32xf32, #tpu.memory_space<vmem>>, %arg3: memref<1x256x32xf32, #tpu.memory_space<vmem>>, %arg4: memref<32x64xbf16, #tpu.memory_space<vmem>>, %arg5: memref<1x64xf32, #tpu.memory_space<vmem>>, %arg6: memref<64x128xbf16, #tpu.memory_space<vmem>>, %arg7: memref<1x128xf32, #tpu.memory_space<vmem>>, %arg8: memref<3x192x64xbf16, #tpu.memory_space<vmem>>, %arg9: memref<1x64xf32, #tpu.memory_space<vmem>>, %arg10: memref<32x64xbf16, #tpu.memory_space<vmem>>, %arg11: memref<1x64xf32, #tpu.memory_space<vmem>>, %arg12: memref<64x128xbf16, #tpu.memory_space<vmem>>, %arg13: memref<1x128xf32, #tpu.memory_space<vmem>>, %arg14: memref<3x192x64xbf16, #tpu.memory_space<vmem>>, %arg15: memref<1x64xf32, #tpu.memory_space<vmem>>, %arg16: memref<1x256x64xf32, #tpu.memory_space<vmem>>, %arg17: memref<288x192xbf16, #tpu.memory_space<vmem>>) attributes {dimension_semantics = [#tpu.dimension_semantics<parallel>], iteration_bounds = array<i64: 2>, scalar_prefetch = 0 : i64, scratch_operands = 1 : i64, tpu.core_type = #tpu.core_type<tc>, window_params = [{transform_indices = @transform_0, window_bounds = array<i64: 1, 256, 64>}, {transform_indices = @transform_1, window_bounds = array<i64: 1, 256, 32>}, {transform_indices = @transform_2, window_bounds = array<i64: 1, 256, 32>}, {pipeline_mode = #tpu.pipeline_mode<synchronous>, transform_indices = @transform_3, window_bounds = array<i64: 32, 64>}, {pipeline_mode = #tpu.pipeline_mode<synchronous>, transform_indices = @transform_4, window_bounds = array<i64: 1, 64>}, {pipeline_mode = #tpu.pipeline_mode<synchronous>, transform_indices = @transform_5, window_bounds = array<i64: 64, 128>}, {pipeline_mode = #tpu.pipeline_mode<synchronous>, transform_indices = @transform_6, window_bounds = array<i64: 1, 128>}, {pipeline_mode = #tpu.pipeline_mode<synchronous>, transform_indices = @transform_7, window_bounds = array<i64: 3, 192, 64>}, {pipeline_mode = #tpu.pipeline_mode<synchronous>, transform_indices = @transform_8, window_bounds = array<i64: 1, 64>}, {pipeline_mode = #tpu.pipeline_mode<synchronous>, transform_indices = @transform_9, window_bounds = array<i64: 32, 64>}, {pipeline_mode = #tpu.pipeline_mode<synchronous>, transform_indices = @transform_10, window_bounds = array<i64: 1, 64>}, {pipeline_mode = #tpu.pipeline_mode<synchronous>, transform_indices = @transform_11, window_bounds = array<i64: 64, 128>}, {pipeline_mode = #tpu.pipeline_mode<synchronous>, transform_indices = @transform_12, window_bounds = array<i64: 1, 128>}, {pipeline_mode = #tpu.pipeline_mode<synchronous>, transform_indices = @transform_13, window_bounds = array<i64: 3, 192, 64>}, {pipeline_mode = #tpu.pipeline_mode<synchronous>, transform_indices = @transform_14, window_bounds = array<i64: 1, 64>}, {transform_indices = @transform_15, window_bounds = array<i64: 1, 256, 64>}]} {
    %0 = tpu.iota {dimensions = array<i32: 0>} : vector<256x1xi32>
    %c16_i32 = arith.constant 16 : i32
    %c0_i32 = arith.constant 0 : i32
    %1 = arith.cmpi eq, %c16_i32, %c0_i32 : i32
    %c1_i32 = arith.constant 1 : i32
    %2 = arith.select %1, %c1_i32, %c16_i32 : i32
    %3 = vector.broadcast %2 : i32 to vector<256x1xi32>
    %4 = arith.remsi %0, %3 : vector<256x1xi32>
    %c0_i32_0 = arith.constant 0 : i32
    %5 = vector.broadcast %c0_i32_0 : i32 to vector<256x1xi32>
    %6 = arith.cmpi ne, %4, %5 : vector<256x1xi32>
    %c0_i32_1 = arith.constant 0 : i32
    %7 = vector.broadcast %c0_i32_1 : i32 to vector<256x1xi32>
    %8 = arith.cmpi slt, %4, %7 : vector<256x1xi32>
    %c0_i32_2 = arith.constant 0 : i32
    %9 = arith.cmpi slt, %2, %c0_i32_2 : i32
    %10 = vector.broadcast %9 : i1 to vector<256x1xi1>
    %11 = vector.broadcast %10 : vector<256x1xi1> to vector<256x1xi1>
    %12 = arith.xori %8, %11 : vector<256x1xi1>
    %13 = arith.andi %12, %6 : vector<256x1xi1>
    %14 = vector.broadcast %2 : i32 to vector<256x1xi32>
    %15 = arith.addi %4, %14 : vector<256x1xi32>
    %16 = arith.select %13, %15, %4 : vector<256x1xi1>, vector<256x1xi32>
    %c0_i32_3 = arith.constant 0 : i32
    %17 = vector.broadcast %c0_i32_3 : i32 to vector<256x1xi32>
    %18 = arith.cmpi ne, %16, %17 : vector<256x1xi32>
    %c15_i32 = arith.constant 15 : i32
    %19 = vector.broadcast %c15_i32 : i32 to vector<256x1xi32>
    %20 = arith.cmpi ne, %16, %19 : vector<256x1xi32>
    %cst = arith.constant 0.000000e+00 : bf16
    %21 = vector.broadcast %cst : bf16 to vector<17x192xbf16>
    %c0 = arith.constant 0 : index
    %c0_4 = arith.constant 0 : index
    %c0_5 = arith.constant 0 : index
    %22 = vector.load %arg1[%c0, %c0_4, %c0_5] : memref<1x256x64xf32, #tpu.memory_space<vmem>>, vector<1x256x64xf32>
    %23 = vector.shape_cast %22 : vector<1x256x64xf32> to vector<256x64xf32>
    %c0_6 = arith.constant 0 : index
    %c0_7 = arith.constant 0 : index
    %c0_8 = arith.constant 0 : index
    %24 = vector.load %arg3[%c0_6, %c0_7, %c0_8] : memref<1x256x32xf32, #tpu.memory_space<vmem>>, vector<1x256x32xf32>
    %25 = vector.shape_cast %24 : vector<1x256x32xf32> to vector<256x32xf32>
    %26 = arith.truncf %25 : vector<256x32xf32> to vector<256x32xbf16>
    %c0_9 = arith.constant 0 : index
    %c0_10 = arith.constant 0 : index
    %27 = vector.load %arg4[%c0_9, %c0_10] : memref<32x64xbf16, #tpu.memory_space<vmem>>, vector<32x64xbf16>
    %cst_11 = arith.constant dense<0.000000e+00> : vector<256x64xf32>
    %28 = tpu.matmul %26, %27, %cst_11 {dimension_numbers = #tpu.dot_dimension_numbers<[1], [0], [0], [1], [0, 0, 1, 1], [], []>} : vector<256x32xbf16>, vector<32x64xbf16>, vector<256x64xf32> -> vector<256x64xf32>
    %c0_12 = arith.constant 0 : index
    %c0_13 = arith.constant 0 : index
    %29 = vector.load %arg5[%c0_12, %c0_13] : memref<1x64xf32, #tpu.memory_space<vmem>>, vector<1x64xf32>
    %30 = vector.broadcast %29 : vector<1x64xf32> to vector<256x64xf32>
    %31 = arith.addf %28, %30 : vector<256x64xf32>
    %cst_14 = arith.constant 0.000000e+00 : f32
    %32 = vector.broadcast %cst_14 : f32 to vector<256x64xf32>
    %33 = arith.cmpf oge, %31, %32 : vector<256x64xf32>
    %cst_15 = arith.constant 1.000000e-01 : f32
    %34 = vector.broadcast %cst_15 : f32 to vector<256x64xf32>
    %35 = arith.mulf %34, %31 : vector<256x64xf32>
    %36 = arith.select %33, %31, %35 : vector<256x64xi1>, vector<256x64xf32>
    %37 = arith.truncf %36 : vector<256x64xf32> to vector<256x64xbf16>
    %c0_16 = arith.constant 0 : index
    %c0_17 = arith.constant 0 : index
    %38 = vector.load %arg6[%c0_16, %c0_17] : memref<64x128xbf16, #tpu.memory_space<vmem>>, vector<64x128xbf16>
    %cst_18 = arith.constant dense<0.000000e+00> : vector<256x128xf32>
    %39 = tpu.matmul %37, %38, %cst_18 {dimension_numbers = #tpu.dot_dimension_numbers<[1], [0], [0], [1], [0, 0, 1, 1], [], []>} : vector<256x64xbf16>, vector<64x128xbf16>, vector<256x128xf32> -> vector<256x128xf32>
    %c0_19 = arith.constant 0 : index
    %c0_20 = arith.constant 0 : index
    %40 = vector.load %arg7[%c0_19, %c0_20] : memref<1x128xf32, #tpu.memory_space<vmem>>, vector<1x128xf32>
    %41 = vector.broadcast %40 : vector<1x128xf32> to vector<256x128xf32>
    %42 = arith.addf %39, %41 : vector<256x128xf32>
    %43 = vector.extract_strided_slice %42 {offsets = [0, 0], sizes = [256, 64], strides = [1, 1]} : vector<256x128xf32> to vector<256x64xf32>
    %cst_21 = arith.constant 1.000000e+00 : f32
    %44 = vector.broadcast %cst_21 : f32 to vector<256x64xf32>
    %45 = arith.addf %43, %44 : vector<256x64xf32>
    %46 = arith.mulf %23, %45 : vector<256x64xf32>
    %47 = vector.extract_strided_slice %42 {offsets = [0, 64], sizes = [256, 64], strides = [1, 1]} : vector<256x128xf32> to vector<256x64xf32>
    %48 = arith.addf %46, %47 : vector<256x64xf32>
    %49 = arith.truncf %48 : vector<256x64xf32> to vector<256x64xbf16>
    %c0_22 = arith.constant 0 : index
    %c0_23 = arith.constant 0 : index
    %50 = vector.load %arg17[%c0_22, %c0_23] : memref<288x192xbf16, #tpu.memory_space<vmem>>, vector<17x192xbf16>
    tpu.vector_store %arg17[%c0_22, %c0_23], %21 {strides = array<i32>} : memref<288x192xbf16, #tpu.memory_space<vmem>>, vector<17x192xbf16>,
    %c271 = arith.constant 271 : index
    %c0_24 = arith.constant 0 : index
    %51 = vector.load %arg17[%c271, %c0_24] : memref<288x192xbf16, #tpu.memory_space<vmem>>, vector<17x192xbf16>
    tpu.vector_store %arg17[%c271, %c0_24], %21 {strides = array<i32>} : memref<288x192xbf16, #tpu.memory_space<vmem>>, vector<17x192xbf16>,
    %c0_i32_25 = arith.constant 0 : i32
    %52 = arith.sitofp %c0_i32_25 : i32 to bf16
    %53 = vector.shape_cast %20 : vector<256x1xi1> to vector<256x1xi1>
    %54 = vector.broadcast %53 : vector<256x1xi1> to vector<256x64xi1>
    %55 = vector.broadcast %52 : bf16 to vector<256x64xbf16>
    %56 = arith.select %54, %49, %55 : vector<256x64xi1>, vector<256x64xbf16>
    %c17 = arith.constant 17 : index
    %c0_26 = arith.constant 0 : index
    %57 = vector.load %arg17[%c17, %c0_26] : memref<288x192xbf16, #tpu.memory_space<vmem>>, vector<256x64xbf16>
    tpu.vector_store %arg17[%c17, %c0_26], %56 {strides = array<i32>} : memref<288x192xbf16, #tpu.memory_space<vmem>>, vector<256x64xbf16>,
    %c16 = arith.constant 16 : index
    %c64 = arith.constant 64 : index
    %58 = vector.load %arg17[%c16, %c64] : memref<288x192xbf16, #tpu.memory_space<vmem>>, vector<256x64xbf16>
    tpu.vector_store %arg17[%c16, %c64], %49 {strides = array<i32>} : memref<288x192xbf16, #tpu.memory_space<vmem>>, vector<256x64xbf16>,
    %c0_i32_27 = arith.constant 0 : i32
    %59 = arith.sitofp %c0_i32_27 : i32 to bf16
    %60 = vector.shape_cast %18 : vector<256x1xi1> to vector<256x1xi1>
    %61 = vector.broadcast %60 : vector<256x1xi1> to vector<256x64xi1>
    %62 = vector.broadcast %59 : bf16 to vector<256x64xbf16>
    %63 = arith.select %61, %49, %62 : vector<256x64xi1>, vector<256x64xbf16>
    %c15 = arith.constant 15 : index
    %c128 = arith.constant 128 : index
    %64 = vector.load %arg17[%c15, %c128] : memref<288x192xbf16, #tpu.memory_space<vmem>>, vector<256x64xbf16>
    tpu.vector_store %arg17[%c15, %c128], %63 {strides = array<i32>} : memref<288x192xbf16, #tpu.memory_space<vmem>>, vector<256x64xbf16>,
    %c0_28 = arith.constant 0 : index
    %c0_29 = arith.constant 0 : index
    %65 = vector.load %arg17[%c0_28, %c0_29] : memref<288x192xbf16, #tpu.memory_space<vmem>>, vector<256x192xbf16>
    %c0_30 = arith.constant 0 : index
    %c0_31 = arith.constant 0 : index
    %c0_32 = arith.constant 0 : index
    %66 = vector.load %arg8[%c0_30, %c0_31, %c0_32] : memref<3x192x64xbf16, #tpu.memory_space<vmem>>, vector<1x192x64xbf16>
    %67 = vector.shape_cast %66 : vector<1x192x64xbf16> to vector<192x64xbf16>
    %cst_33 = arith.constant dense<0.000000e+00> : vector<256x64xf32>
    %68 = tpu.matmul %65, %67, %cst_33 {dimension_numbers = #tpu.dot_dimension_numbers<[1], [0], [0], [1], [0, 0, 1, 1], [], []>} : vector<256x192xbf16>, vector<192x64xbf16>, vector<256x64xf32> -> vector<256x64xf32>
    %c16_34 = arith.constant 16 : index
    %c0_35 = arith.constant 0 : index
    %69 = vector.load %arg17[%c16_34, %c0_35] : memref<288x192xbf16, #tpu.memory_space<vmem>>, vector<256x192xbf16>
    %c1 = arith.constant 1 : index
    %c0_36 = arith.constant 0 : index
    %c0_37 = arith.constant 0 : index
    %70 = vector.load %arg8[%c1, %c0_36, %c0_37] : memref<3x192x64xbf16, #tpu.memory_space<vmem>>, vector<1x192x64xbf16>
    %71 = vector.shape_cast %70 : vector<1x192x64xbf16> to vector<192x64xbf16>
    %cst_38 = arith.constant dense<0.000000e+00> : vector<256x64xf32>
    %72 = tpu.matmul %69, %71, %cst_38 {dimension_numbers = #tpu.dot_dimension_numbers<[1], [0], [0], [1], [0, 0, 1, 1], [], []>} : vector<256x192xbf16>, vector<192x64xbf16>, vector<256x64xf32> -> vector<256x64xf32>
    %73 = arith.addf %68, %72 : vector<256x64xf32>
    %c32 = arith.constant 32 : index
    %c0_39 = arith.constant 0 : index
    %74 = vector.load %arg17[%c32, %c0_39] : memref<288x192xbf16, #tpu.memory_space<vmem>>, vector<256x192xbf16>
    %c2 = arith.constant 2 : index
    %c0_40 = arith.constant 0 : index
    %c0_41 = arith.constant 0 : index
    %75 = vector.load %arg8[%c2, %c0_40, %c0_41] : memref<3x192x64xbf16, #tpu.memory_space<vmem>>, vector<1x192x64xbf16>
    %76 = vector.shape_cast %75 : vector<1x192x64xbf16> to vector<192x64xbf16>
    %cst_42 = arith.constant dense<0.000000e+00> : vector<256x64xf32>
    %77 = tpu.matmul %74, %76, %cst_42 {dimension_numbers = #tpu.dot_dimension_numbers<[1], [0], [0], [1], [0, 0, 1, 1], [], []>} : vector<256x192xbf16>, vector<192x64xbf16>, vector<256x64xf32> -> vector<256x64xf32>
    %78 = arith.addf %73, %77 : vector<256x64xf32>
    %c0_43 = arith.constant 0 : index
    %c0_44 = arith.constant 0 : index
    %79 = vector.load %arg9[%c0_43, %c0_44] : memref<1x64xf32, #tpu.memory_space<vmem>>, vector<1x64xf32>
    %80 = vector.broadcast %79 : vector<1x64xf32> to vector<256x64xf32>
    %81 = arith.addf %78, %80 : vector<256x64xf32>
    %cst_45 = arith.constant 0.000000e+00 : f32
    %82 = vector.broadcast %cst_45 : f32 to vector<256x64xf32>
    %83 = arith.maximumf %81, %82 : vector<256x64xf32>
    %c0_46 = arith.constant 0 : index
    %c0_47 = arith.constant 0 : index
    %c0_48 = arith.constant 0 : index
    %84 = vector.load %arg2[%c0_46, %c0_47, %c0_48] : memref<1x256x32xf32, #tpu.memory_space<vmem>>, vector<1x256x32xf32>
    %85 = vector.shape_cast %84 : vector<1x256x32xf32> to vector<256x32xf32>
    %86 = arith.truncf %85 : vector<256x32xf32> to vector<256x32xbf16>
    %c0_49 = arith.constant 0 : index
    %c0_50 = arith.constant 0 : index
    %87 = vector.load %arg10[%c0_49, %c0_50] : memref<32x64xbf16, #tpu.memory_space<vmem>>, vector<32x64xbf16>
    %cst_51 = arith.constant dense<0.000000e+00> : vector<256x64xf32>
    %88 = tpu.matmul %86, %87, %cst_51 {dimension_numbers = #tpu.dot_dimension_numbers<[1], [0], [0], [1], [0, 0, 1, 1], [], []>} : vector<256x32xbf16>, vector<32x64xbf16>, vector<256x64xf32> -> vector<256x64xf32>
    %c0_52 = arith.constant 0 : index
    %c0_53 = arith.constant 0 : index
    %89 = vector.load %arg11[%c0_52, %c0_53] : memref<1x64xf32, #tpu.memory_space<vmem>>, vector<1x64xf32>
    %90 = vector.broadcast %89 : vector<1x64xf32> to vector<256x64xf32>
    %91 = arith.addf %88, %90 : vector<256x64xf32>
    %cst_54 = arith.constant 0.000000e+00 : f32
    %92 = vector.broadcast %cst_54 : f32 to vector<256x64xf32>
    %93 = arith.cmpf oge, %91, %92 : vector<256x64xf32>
    %cst_55 = arith.constant 1.000000e-01 : f32
    %94 = vector.broadcast %cst_55 : f32 to vector<256x64xf32>
    %95 = arith.mulf %94, %91 : vector<256x64xf32>
    %96 = arith.select %93, %91, %95 : vector<256x64xi1>, vector<256x64xf32>
    %97 = arith.truncf %96 : vector<256x64xf32> to vector<256x64xbf16>
    %c0_56 = arith.constant 0 : index
    %c0_57 = arith.constant 0 : index
    %98 = vector.load %arg12[%c0_56, %c0_57] : memref<64x128xbf16, #tpu.memory_space<vmem>>, vector<64x128xbf16>
    %cst_58 = arith.constant dense<0.000000e+00> : vector<256x128xf32>
    %99 = tpu.matmul %97, %98, %cst_58 {dimension_numbers = #tpu.dot_dimension_numbers<[1], [0], [0], [1], [0, 0, 1, 1], [], []>} : vector<256x64xbf16>, vector<64x128xbf16>, vector<256x128xf32> -> vector<256x128xf32>
    %c0_59 = arith.constant 0 : index
    %c0_60 = arith.constant 0 : index
    %100 = vector.load %arg13[%c0_59, %c0_60] : memref<1x128xf32, #tpu.memory_space<vmem>>, vector<1x128xf32>
    %101 = vector.broadcast %100 : vector<1x128xf32> to vector<256x128xf32>
    %102 = arith.addf %99, %101 : vector<256x128xf32>
    %103 = vector.extract_strided_slice %102 {offsets = [0, 0], sizes = [256, 64], strides = [1, 1]} : vector<256x128xf32> to vector<256x64xf32>
    %cst_61 = arith.constant 1.000000e+00 : f32
    %104 = vector.broadcast %cst_61 : f32 to vector<256x64xf32>
    %105 = arith.addf %103, %104 : vector<256x64xf32>
    %106 = arith.mulf %83, %105 : vector<256x64xf32>
    %107 = vector.extract_strided_slice %102 {offsets = [0, 64], sizes = [256, 64], strides = [1, 1]} : vector<256x128xf32> to vector<256x64xf32>
    %108 = arith.addf %106, %107 : vector<256x64xf32>
    %109 = arith.truncf %108 : vector<256x64xf32> to vector<256x64xbf16>
    %c0_62 = arith.constant 0 : index
    %c0_63 = arith.constant 0 : index
    %110 = vector.load %arg17[%c0_62, %c0_63] : memref<288x192xbf16, #tpu.memory_space<vmem>>, vector<17x192xbf16>
    tpu.vector_store %arg17[%c0_62, %c0_63], %21 {strides = array<i32>} : memref<288x192xbf16, #tpu.memory_space<vmem>>, vector<17x192xbf16>,
    %c271_64 = arith.constant 271 : index
    %c0_65 = arith.constant 0 : index
    %111 = vector.load %arg17[%c271_64, %c0_65] : memref<288x192xbf16, #tpu.memory_space<vmem>>, vector<17x192xbf16>
    tpu.vector_store %arg17[%c271_64, %c0_65], %21 {strides = array<i32>} : memref<288x192xbf16, #tpu.memory_space<vmem>>, vector<17x192xbf16>,
    %c0_i32_66 = arith.constant 0 : i32
    %112 = arith.sitofp %c0_i32_66 : i32 to bf16
    %113 = vector.shape_cast %20 : vector<256x1xi1> to vector<256x1xi1>
    %114 = vector.broadcast %113 : vector<256x1xi1> to vector<256x64xi1>
    %115 = vector.broadcast %112 : bf16 to vector<256x64xbf16>
    %116 = arith.select %114, %109, %115 : vector<256x64xi1>, vector<256x64xbf16>
    %c17_67 = arith.constant 17 : index
    %c0_68 = arith.constant 0 : index
    %117 = vector.load %arg17[%c17_67, %c0_68] : memref<288x192xbf16, #tpu.memory_space<vmem>>, vector<256x64xbf16>
    tpu.vector_store %arg17[%c17_67, %c0_68], %116 {strides = array<i32>} : memref<288x192xbf16, #tpu.memory_space<vmem>>, vector<256x64xbf16>,
    %c16_69 = arith.constant 16 : index
    %c64_70 = arith.constant 64 : index
    %118 = vector.load %arg17[%c16_69, %c64_70] : memref<288x192xbf16, #tpu.memory_space<vmem>>, vector<256x64xbf16>
    tpu.vector_store %arg17[%c16_69, %c64_70], %109 {strides = array<i32>} : memref<288x192xbf16, #tpu.memory_space<vmem>>, vector<256x64xbf16>,
    %c0_i32_71 = arith.constant 0 : i32
    %119 = arith.sitofp %c0_i32_71 : i32 to bf16
    %120 = vector.shape_cast %18 : vector<256x1xi1> to vector<256x1xi1>
    %121 = vector.broadcast %120 : vector<256x1xi1> to vector<256x64xi1>
    %122 = vector.broadcast %119 : bf16 to vector<256x64xbf16>
    %123 = arith.select %121, %109, %122 : vector<256x64xi1>, vector<256x64xbf16>
    %c15_72 = arith.constant 15 : index
    %c128_73 = arith.constant 128 : index
    %124 = vector.load %arg17[%c15_72, %c128_73] : memref<288x192xbf16, #tpu.memory_space<vmem>>, vector<256x64xbf16>
    tpu.vector_store %arg17[%c15_72, %c128_73], %123 {strides = array<i32>} : memref<288x192xbf16, #tpu.memory_space<vmem>>, vector<256x64xbf16>,
    %c0_74 = arith.constant 0 : index
    %c0_75 = arith.constant 0 : index
    %125 = vector.load %arg17[%c0_74, %c0_75] : memref<288x192xbf16, #tpu.memory_space<vmem>>, vector<256x192xbf16>
    %c0_76 = arith.constant 0 : index
    %c0_77 = arith.constant 0 : index
    %c0_78 = arith.constant 0 : index
    %126 = vector.load %arg14[%c0_76, %c0_77, %c0_78] : memref<3x192x64xbf16, #tpu.memory_space<vmem>>, vector<1x192x64xbf16>
    %127 = vector.shape_cast %126 : vector<1x192x64xbf16> to vector<192x64xbf16>
    %cst_79 = arith.constant dense<0.000000e+00> : vector<256x64xf32>
    %128 = tpu.matmul %125, %127, %cst_79 {dimension_numbers = #tpu.dot_dimension_numbers<[1], [0], [0], [1], [0, 0, 1, 1], [], []>} : vector<256x192xbf16>, vector<192x64xbf16>, vector<256x64xf32> -> vector<256x64xf32>
    %c16_80 = arith.constant 16 : index
    %c0_81 = arith.constant 0 : index
    %129 = vector.load %arg17[%c16_80, %c0_81] : memref<288x192xbf16, #tpu.memory_space<vmem>>, vector<256x192xbf16>
    %c1_82 = arith.constant 1 : index
    %c0_83 = arith.constant 0 : index
    %c0_84 = arith.constant 0 : index
    %130 = vector.load %arg14[%c1_82, %c0_83, %c0_84] : memref<3x192x64xbf16, #tpu.memory_space<vmem>>, vector<1x192x64xbf16>
    %131 = vector.shape_cast %130 : vector<1x192x64xbf16> to vector<192x64xbf16>
    %cst_85 = arith.constant dense<0.000000e+00> : vector<256x64xf32>
    %132 = tpu.matmul %129, %131, %cst_85 {dimension_numbers = #tpu.dot_dimension_numbers<[1], [0], [0], [1], [0, 0, 1, 1], [], []>} : vector<256x192xbf16>, vector<192x64xbf16>, vector<256x64xf32> -> vector<256x64xf32>
    %133 = arith.addf %128, %132 : vector<256x64xf32>
    %c32_86 = arith.constant 32 : index
    %c0_87 = arith.constant 0 : index
    %134 = vector.load %arg17[%c32_86, %c0_87] : memref<288x192xbf16, #tpu.memory_space<vmem>>, vector<256x192xbf16>
    %c2_88 = arith.constant 2 : index
    %c0_89 = arith.constant 0 : index
    %c0_90 = arith.constant 0 : index
    %135 = vector.load %arg14[%c2_88, %c0_89, %c0_90] : memref<3x192x64xbf16, #tpu.memory_space<vmem>>, vector<1x192x64xbf16>
    %136 = vector.shape_cast %135 : vector<1x192x64xbf16> to vector<192x64xbf16>
    %cst_91 = arith.constant dense<0.000000e+00> : vector<256x64xf32>
    %137 = tpu.matmul %134, %136, %cst_91 {dimension_numbers = #tpu.dot_dimension_numbers<[1], [0], [0], [1], [0, 0, 1, 1], [], []>} : vector<256x192xbf16>, vector<192x64xbf16>, vector<256x64xf32> -> vector<256x64xf32>
    %138 = arith.addf %133, %137 : vector<256x64xf32>
    %c0_92 = arith.constant 0 : index
    %c0_93 = arith.constant 0 : index
    %139 = vector.load %arg15[%c0_92, %c0_93] : memref<1x64xf32, #tpu.memory_space<vmem>>, vector<1x64xf32>
    %140 = vector.broadcast %139 : vector<1x64xf32> to vector<256x64xf32>
    %141 = arith.addf %138, %140 : vector<256x64xf32>
    %142 = arith.addf %23, %141 : vector<256x64xf32>
    %c0_94 = arith.constant 0 : index
    %c0_95 = arith.constant 0 : index
    %c0_96 = arith.constant 0 : index
    %143 = vector.load %arg16[%c0_94, %c0_95, %c0_96] : memref<1x256x64xf32, #tpu.memory_space<vmem>>, vector<1x256x64xf32>
    %144 = vector.shape_cast %143 : vector<1x256x64xf32> to vector<256x64xf32>
    %145 = vector.shape_cast %142 : vector<256x64xf32> to vector<1x256x64xf32>
    tpu.vector_store %arg16[%c0_94, %c0_95, %c0_96], %145 {strides = array<i32>} : memref<1x256x64xf32, #tpu.memory_space<vmem>>, vector<1x256x64xf32>,
    return
  }
  func.func @transform_0(%arg0: i32) -> (i32, i32, i32) {
    %c0_i32 = arith.constant 0 : i32
    %c0_i32_0 = arith.constant 0 : i32
    %c0_i32_1 = arith.constant 0 : i32
    return %arg0, %c0_i32, %c0_i32_0 : i32, i32, i32
  }
  func.func @transform_1(%arg0: i32) -> (i32, i32, i32) {
    %c0_i32 = arith.constant 0 : i32
    %c0_i32_0 = arith.constant 0 : i32
    %c0_i32_1 = arith.constant 0 : i32
    return %arg0, %c0_i32, %c0_i32_0 : i32, i32, i32
  }
  func.func @transform_2(%arg0: i32) -> (i32, i32, i32) {
    %c0_i32 = arith.constant 0 : i32
    %c0_i32_0 = arith.constant 0 : i32
    %c0_i32_1 = arith.constant 0 : i32
    return %arg0, %c0_i32, %c0_i32_0 : i32, i32, i32
  }
  func.func @transform_3(%arg0: i32) -> (i32, i32) {
    %c0_i32 = arith.constant 0 : i32
    %c0_i32_0 = arith.constant 0 : i32
    %c0_i32_1 = arith.constant 0 : i32
    return %c0_i32, %c0_i32_0 : i32, i32
  }
  func.func @transform_4(%arg0: i32) -> (i32, i32) {
    %c0_i32 = arith.constant 0 : i32
    %c0_i32_0 = arith.constant 0 : i32
    %c0_i32_1 = arith.constant 0 : i32
    return %c0_i32, %c0_i32_0 : i32, i32
  }
  func.func @transform_5(%arg0: i32) -> (i32, i32) {
    %c0_i32 = arith.constant 0 : i32
    %c0_i32_0 = arith.constant 0 : i32
    %c0_i32_1 = arith.constant 0 : i32
    return %c0_i32, %c0_i32_0 : i32, i32
  }
  func.func @transform_6(%arg0: i32) -> (i32, i32) {
    %c0_i32 = arith.constant 0 : i32
    %c0_i32_0 = arith.constant 0 : i32
    %c0_i32_1 = arith.constant 0 : i32
    return %c0_i32, %c0_i32_0 : i32, i32
  }
  func.func @transform_7(%arg0: i32) -> (i32, i32, i32) {
    %c0_i32 = arith.constant 0 : i32
    %c0_i32_0 = arith.constant 0 : i32
    %c0_i32_1 = arith.constant 0 : i32
    %c0_i32_2 = arith.constant 0 : i32
    return %c0_i32, %c0_i32_0, %c0_i32_1 : i32, i32, i32
  }
  func.func @transform_8(%arg0: i32) -> (i32, i32) {
    %c0_i32 = arith.constant 0 : i32
    %c0_i32_0 = arith.constant 0 : i32
    %c0_i32_1 = arith.constant 0 : i32
    return %c0_i32, %c0_i32_0 : i32, i32
  }
  func.func @transform_9(%arg0: i32) -> (i32, i32) {
    %c0_i32 = arith.constant 0 : i32
    %c0_i32_0 = arith.constant 0 : i32
    %c0_i32_1 = arith.constant 0 : i32
    return %c0_i32, %c0_i32_0 : i32, i32
  }
  func.func @transform_10(%arg0: i32) -> (i32, i32) {
    %c0_i32 = arith.constant 0 : i32
    %c0_i32_0 = arith.constant 0 : i32
    %c0_i32_1 = arith.constant 0 : i32
    return %c0_i32, %c0_i32_0 : i32, i32
  }
  func.func @transform_11(%arg0: i32) -> (i32, i32) {
    %c0_i32 = arith.constant 0 : i32
    %c0_i32_0 = arith.constant 0 : i32
    %c0_i32_1 = arith.constant 0 : i32
    return %c0_i32, %c0_i32_0 : i32, i32
  }
  func.func @transform_12(%arg0: i32) -> (i32, i32) {
    %c0_i32 = arith.constant 0 : i32
    %c0_i32_0 = arith.constant 0 : i32
    %c0_i32_1 = arith.constant 0 : i32
    return %c0_i32, %c0_i32_0 : i32, i32
  }
  func.func @transform_13(%arg0: i32) -> (i32, i32, i32) {
    %c0_i32 = arith.constant 0 : i32
    %c0_i32_0 = arith.constant 0 : i32
    %c0_i32_1 = arith.constant 0 : i32
    %c0_i32_2 = arith.constant 0 : i32
    return %c0_i32, %c0_i32_0, %c0_i32_1 : i32, i32, i32
  }
  func.func @transform_14(%arg0: i32) -> (i32, i32) {
    %c0_i32 = arith.constant 0 : i32
    %c0_i32_0 = arith.constant 0 : i32
    %c0_i32_1 = arith.constant 0 : i32
    return %c0_i32, %c0_i32_0 : i32, i32
  }
  func.func @transform_15(%arg0: i32) -> (i32, i32, i32) {
    %c0_i32 = arith.constant 0 : i32
    %c0_i32_0 = arith.constant 0 : i32
    %c0_i32_1 = arith.constant 0 : i32
    return %arg0, %c0_i32, %c0_i32_0 : i32, i32, i32
  }
}

</mosaic_0001>

<llo_original>
// kernel: resblock_sft_forward.1
$region0: #{resblock_sft_forward.1}
  #allocation0 [shape = 'u32[]', space=smem, size = 0x4, offset = 0x4, fixed_abs, tag = 'smem constant byte address 0x4 - core index']
  #allocation1 [shape = 'u32[144,128]{1,0:T(1,128)}', space=vmem, size = 0x12000, scoped, tag = 'internal scratch']
  #allocation2 [shape = 'bf16[288,192]{1,0:T(8,128)(2,1)}', space=vmem, size = 0x24000, scoped, tag = 'scratch operand']
  %s0 = inlined_call_operand.hbm [shape: f32[2,256,64], index: 0, kind: input, shape index: {}]
  %s1 = inlined_call_operand.vmem [shape: f32[2,256,32], index: 1, kind: input, shape index: {}]
  %s2 = inlined_call_operand.vmem [shape: f32[2,256,32], index: 2, kind: input, shape index: {}]
  %s3 = inlined_call_operand.vmem [shape: bf16[32,64], index: 3, kind: input, shape index: {}]
  %s4 = inlined_call_operand.vmem [shape: f32[1,64], index: 4, kind: input, shape index: {}]
  %s5 = inlined_call_operand.vmem [shape: bf16[64,128], index: 5, kind: input, shape index: {}]
  %s6 = inlined_call_operand.vmem [shape: f32[1,128], index: 6, kind: input, shape index: {}]
  %s7 = inlined_call_operand.vmem [shape: bf16[3,192,64], index: 7, kind: input, shape index: {}]
  %s8 = inlined_call_operand.vmem [shape: f32[1,64], index: 8, kind: input, shape index: {}]
  %s9 = inlined_call_operand.vmem [shape: bf16[32,64], index: 9, kind: input, shape index: {}]
  %s10 = inlined_call_operand.vmem [shape: f32[1,64], index: 10, kind: input, shape index: {}]
  %s11 = inlined_call_operand.vmem [shape: bf16[64,128], index: 11, kind: input, shape index: {}]
  %s12 = inlined_call_operand.vmem [shape: f32[1,128], index: 12, kind: input, shape index: {}]
  %s13 = inlined_call_operand.vmem [shape: bf16[3,192,64], index: 13, kind: input, shape index: {}]
  %s14 = inlined_call_operand.vmem [shape: f32[1,64], index: 14, kind: input, shape index: {}]
  %s15 = inlined_call_operand.hbm [shape: f32[2,256,64], index: 15, kind: output, shape index: {}]
  %s16 = sld [smem:[#allocation0]]
  $region97: #{resblock_sft_forward.1} parent=0
    _
  %s18 = ssub.s32 1, %s16
  %s19 = scalar_select 0, %s18, %s16
  $region1: #{resblock_sft_forward.1} parent=0
    #allocation3 [shape = 'u8[262144]{0}', space=vmem, size = 0x40000, scoped, tag = 'input window, operand 0']
    #allocation4 [shape = 's32[2]{0}', space=sflag, size = 0x8, scoped, tag = 'scoped memory for resblock_sft_forward.1']
    #allocation5 [shape = 's32[2]{0}', space=sflag, size = 0x8, scoped, tag = 'scoped memory for resblock_sft_forward.1']
    #allocation6 [shape = 'u8[262144]{0}', space=vmem, size = 0x40000, scoped, tag = 'output window, operand 0']
    %20 = vsyncpa [#allocation4], 0
    %s21 = scalar_lea.sflag [#allocation4], 1
    %22 = vsyncpa %s21, 0
    %23 = vsyncpa [#allocation5], 0
    %s24 = scalar_lea.sflag [#allocation5], 1
    %25 = vsyncpa %s24, 0
    loop: start=0, step=1, limit=4
    $region2: #{resblock_sft_forward.1} parent=1 // loop_pre_header
      _
    $region3: #{resblock_sft_forward.1} parent=1 // loop_header
      %s27 = sphi 0, %s31
      %p28 = scmp.ge.s32.totalorder %s27, 4
      %s37 = sphi 0, %s39
      %s40 = sphi 0, %s37
      %s41 = sphi 0, %s40
      %s57 = sphi 0, %s41
      %s63 = sphi 0, %s65
      %s66 = sphi 0, %s63
      %s67 = sphi 0, %s66
      %s83 = sphi 0, %s67
      %s89 = sphi 0, %s91
      %s92 = sphi 0, %s89
      %s93 = sphi 0, %s92
      %s109 = sphi 0, %s93
      %s113 = sphi 0, %s113
      %s115 = sphi 0, %s113
      %s116 = sphi 0, %s115
      %s130 = sphi 0, %s116
      %s134 = sphi 0, %s134
      %s136 = sphi 0, %s134
      %s137 = sphi 0, %s136
      %s151 = sphi 0, %s137
      %s155 = sphi 0, %s155
      %s157 = sphi 0, %s155
      %s158 = sphi 0, %s157
      %s172 = sphi 0, %s158
      %s176 = sphi 0, %s176
      %s178 = sphi 0, %s176
      %s179 = sphi 0, %s178
      %s193 = sphi 0, %s179
      %s197 = sphi 0, %s197
      %s199 = sphi 0, %s197
      %s200 = sphi 0, %s199
      %s214 = sphi 0, %s200
      %s218 = sphi 0, %s218
      %s220 = sphi 0, %s218
      %s221 = sphi 0, %s220
      %s235 = sphi 0, %s221
      %s239 = sphi 0, %s239
      %s241 = sphi 0, %s239
      %s242 = sphi 0, %s241
      %s256 = sphi 0, %s242
      %s260 = sphi 0, %s260
      %s262 = sphi 0, %s260
      %s263 = sphi 0, %s262
      %s277 = sphi 0, %s263
      %s281 = sphi 0, %s281
      %s283 = sphi 0, %s281
      %s284 = sphi 0, %s283
      %s298 = sphi 0, %s284
      %s302 = sphi 0, %s302
      %s304 = sphi 0, %s302
      %s305 = sphi 0, %s304
      %s319 = sphi 0, %s305
      %s323 = sphi 0, %s323
      %s325 = sphi 0, %s323
      %s326 = sphi 0, %s325
      %s340 = sphi 0, %s326
      %s344 = sphi 0, %s344
      %s346 = sphi 0, %s344
      %s347 = sphi 0, %s346
      %s361 = sphi 0, %s347
      %s367 = sphi 0, %s369
      %s370 = sphi 0, %s367
      %s371 = sphi 0, %s370
      %s387 = sphi 0, %s371
    $region4: #{resblock_sft_forward.1} parent=1 // loop_header_branch
      %30 = sbr.rel (%p28) target = $region8
    $region5: #{resblock_sft_forward.1} parent=1 // loop_body
      %s32 = ssub.s32 %s27, 1
      %s33 = ssub.s32 %s27, 2
      %s34 = sadd.s32 %s27, 1
      %s35 = ssub.s32 %s27, %s34
      %p36 = scmp.eq.s32.totalorder %s35, 0
      %s38 = sadd.s32 %s37, 1
      %s39 = scalar_select %p36, %s37, %s38
      %p42 = pneg %p36
      %p43 = scmp.eq.s32.totalorder %s27, 1
      %p44 = por %p42, %p43
      %p45 = scmp.ne.s32.totalorder %s37, %s40
      %p46 = scmp.eq.s32.totalorder %s27, 0
      %p47 = por %p45, %p46
      %p48 = scmp.ne.s32.totalorder %s37, %s40
      %p49 = scmp.eq.s32.totalorder %s32, 1
      %p50 = por %p48, %p49
      %p51 = scmp.ne.s32.totalorder %s40, %s41
      %p52 = scmp.eq.s32.totalorder %s32, 0
      %p53 = por %p51, %p52
      %p54 = scmp.ne.s32.totalorder %s40, %s41
      %p55 = scmp.eq.s32.totalorder %s33, 1
      %p56 = por %p54, %p55
      %p58 = scmp.ne.s32.totalorder %s41, %s57
      %p59 = scmp.eq.s32.totalorder %s33, 0
      %p60 = por %p58, %p59
      %s61 = ssub.s32 %s27, %s34
      %p62 = scmp.eq.s32.totalorder %s61, 0
      %s64 = sadd.s32 %s63, 1
      %s65 = scalar_select %p62, %s63, %s64
      %p68 = pneg %p62
      %p69 = scmp.eq.s32.totalorder %s27, 1
      %p70 = por %p68, %p69
      %p71 = scmp.ne.s32.totalorder %s63, %s66
      %p72 = scmp.eq.s32.totalorder %s27, 0
      %p73 = por %p71, %p72
      %p74 = scmp.ne.s32.totalorder %s63, %s66
      %p75 = scmp.eq.s32.totalorder %s32, 1
      %p76 = por %p74, %p75
      %p77 = scmp.ne.s32.totalorder %s66, %s67
      %p78 = scmp.eq.s32.totalorder %s32, 0
      %p79 = por %p77, %p78
      %p80 = scmp.ne.s32.totalorder %s66, %s67
      %p81 = scmp.eq.s32.totalorder %s33, 1
      %p82 = por %p80, %p81
      %p84 = scmp.ne.s32.totalorder %s67, %s83
      %p85 = scmp.eq.s32.totalorder %s33, 0
      %p86 = por %p84, %p85
      %s87 = ssub.s32 %s27, %s34
      %p88 = scmp.eq.s32.totalorder %s87, 0
      %s90 = sadd.s32 %s89, 1
      %s91 = scalar_select %p88, %s89, %s90
      %p94 = pneg %p88
      %p95 = scmp.eq.s32.totalorder %s27, 1
      %p96 = por %p94, %p95
      %p97 = scmp.ne.s32.totalorder %s89, %s92
      %p98 = scmp.eq.s32.totalorder %s27, 0
      %p99 = por %p97, %p98
      %p100 = scmp.ne.s32.totalorder %s89, %s92
      %p101 = scmp.eq.s32.totalorder %s32, 1
      %p102 = por %p100, %p101
      %p103 = scmp.ne.s32.totalorder %s92, %s93
      %p104 = scmp.eq.s32.totalorder %s32, 0
      %p105 = por %p103, %p104
      %p106 = scmp.ne.s32.totalorder %s92, %s93
      %p107 = scmp.eq.s32.totalorder %s33, 1
      %p108 = por %p106, %p107
      %p110 = scmp.ne.s32.totalorder %s93, %s109
      %p111 = scmp.eq.s32.totalorder %s33, 0
      %p112 = por %p110, %p111
      %s114 = sadd.s32 %s113, 1
      %p117 = scmp.eq.s32.totalorder %s27, 1
      %p118 = scmp.ne.s32.totalorder %s113, %s115
      %p119 = scmp.eq.s32.totalorder %s27, 0
      %p120 = por %p118, %p119
      %p121 = scmp.ne.s32.totalorder %s113, %s115
      %p122 = scmp.eq.s32.totalorder %s32, 1
      %p123 = por %p121, %p122
      %p124 = scmp.ne.s32.totalorder %s115, %s116
      %p125 = scmp.eq.s32.totalorder %s32, 0
      %p126 = por %p124, %p125
      %p127 = scmp.ne.s32.totalorder %s115, %s116
      %p128 = scmp.eq.s32.totalorder %s33, 1
      %p129 = por %p127, %p128
      %p131 = scmp.ne.s32.totalorder %s116, %s130
      %p132 = scmp.eq.s32.totalorder %s33, 0
      %p133 = por %p131, %p132
      %s135 = sadd.s32 %s134, 1
      %p138 = scmp.eq.s32.totalorder %s27, 1
      %p139 = scmp.ne.s32.totalorder %s134, %s136
      %p140 = scmp.eq.s32.totalorder %s27, 0
      %p141 = por %p139, %p140
      %p142 = scmp.ne.s32.totalorder %s134, %s136
      %p143 = scmp.eq.s32.totalorder %s32, 1
      %p144 = por %p142, %p143
      %p145 = scmp.ne.s32.totalorder %s136, %s137
      %p146 = scmp.eq.s32.totalorder %s32, 0
      %p147 = por %p145, %p146
      %p148 = scmp.ne.s32.totalorder %s136, %s137
      %p149 = scmp.eq.s32.totalorder %s33, 1
      %p150 = por %p148, %p149
      %p152 = scmp.ne.s32.totalorder %s137, %s151
      %p153 = scmp.eq.s32.totalorder %s33, 0
      %p154 = por %p152, %p153
      %s156 = sadd.s32 %s155, 1
      %p159 = scmp.eq.s32.totalorder %s27, 1
      %p160 = scmp.ne.s32.totalorder %s155, %s157
      %p161 = scmp.eq.s32.totalorder %s27, 0
      %p162 = por %p160, %p161
      %p163 = scmp.ne.s32.totalorder %s155, %s157
      %p164 = scmp.eq.s32.totalorder %s32, 1
      %p165 = por %p163, %p164
      %p166 = scmp.ne.s32.totalorder %s157, %s158
      %p167 = scmp.eq.s32.totalorder %s32, 0
      %p168 = por %p166, %p167
      %p169 = scmp.ne.s32.totalorder %s157, %s158
      %p170 = scmp.eq.s32.totalorder %s33, 1
      %p171 = por %p169, %p170
      %p173 = scmp.ne.s32.totalorder %s158, %s172
      %p174 = scmp.eq.s32.totalorder %s33, 0
      %p175 = por %p173, %p174
      %s177 = sadd.s32 %s176, 1
      %p180 = scmp.eq.s32.totalorder %s27, 1
      %p181 = scmp.ne.s32.totalorder %s176, %s178
      %p182 = scmp.eq.s32.totalorder %s27, 0
      %p183 = por %p181, %p182
      %p184 = scmp.ne.s32.totalorder %s176, %s178
      %p185 = scmp.eq.s32.totalorder %s32, 1
      %p186 = por %p184, %p185
      %p187 = scmp.ne.s32.totalorder %s178, %s179
      %p188 = scmp.eq.s32.totalorder %s32, 0
      %p189 = por %p187, %p188
      %p190 = scmp.ne.s32.totalorder %s178, %s179
      %p191 = scmp.eq.s32.totalorder %s33, 1
      %p192 = por %p190, %p191
      %p194 = scmp.ne.s32.totalorder %s179, %s193
      %p195 = scmp.eq.s32.totalorder %s33, 0
      %p196 = por %p194, %p195
      %s198 = sadd.s32 %s197, 1
      %p201 = scmp.eq.s32.totalorder %s27, 1
      %p202 = scmp.ne.s32.totalorder %s197, %s199
      %p203 = scmp.eq.s32.totalorder %s27, 0
      %p204 = por %p202, %p203
      %p205 = scmp.ne.s32.totalorder %s197, %s199
      %p206 = scmp.eq.s32.totalorder %s32, 1
      %p207 = por %p205, %p206
      %p208 = scmp.ne.s32.totalorder %s199, %s200
      %p209 = scmp.eq.s32.totalorder %s32, 0
      %p210 = por %p208, %p209
      %p211 = scmp.ne.s32.totalorder %s199, %s200
      %p212 = scmp.eq.s32.totalorder %s33, 1
      %p213 = por %p211, %p212
      %p215 = scmp.ne.s32.totalorder %s200, %s214
      %p216 = scmp.eq.s32.totalorder %s33, 0
      %p217 = por %p215, %p216
      %s219 = sadd.s32 %s218, 1
      %p222 = scmp.eq.s32.totalorder %s27, 1
      %p223 = scmp.ne.s32.totalorder %s218, %s220
      %p224 = scmp.eq.s32.totalorder %s27, 0
      %p225 = por %p223, %p224
      %p226 = scmp.ne.s32.totalorder %s218, %s220
      %p227 = scmp.eq.s32.totalorder %s32, 1
      %p228 = por %p226, %p227
      %p229 = scmp.ne.s32.totalorder %s220, %s221
      %p230 = scmp.eq.s32.totalorder %s32, 0
      %p231 = por %p229, %p230
      %p232 = scmp.ne.s32.totalorder %s220, %s221
      %p233 = scmp.eq.s32.totalorder %s33, 1
      %p234 = por %p232, %p233
      %p236 = scmp.ne.s32.totalorder %s221, %s235
      %p237 = scmp.eq.s32.totalorder %s33, 0
      %p238 = por %p236, %p237
      %s240 = sadd.s32 %s239, 1
      %p243 = scmp.eq.s32.totalorder %s27, 1
      %p244 = scmp.ne.s32.totalorder %s239, %s241
      %p245 = scmp.eq.s32.totalorder %s27, 0
      %p246 = por %p244, %p245
      %p247 = scmp.ne.s32.totalorder %s239, %s241
      %p248 = scmp.eq.s32.totalorder %s32, 1
      %p249 = por %p247, %p248
      %p250 = scmp.ne.s32.totalorder %s241, %s242
      %p251 = scmp.eq.s32.totalorder %s32, 0
      %p252 = por %p250, %p251
      %p253 = scmp.ne.s32.totalorder %s241, %s242
      %p254 = scmp.eq.s32.totalorder %s33, 1
      %p255 = por %p253, %p254
      %p257 = scmp.ne.s32.totalorder %s242, %s256
      %p258 = scmp.eq.s32.totalorder %s33, 0
      %p259 = por %p257, %p258
      %s261 = sadd.s32 %s260, 1
      %p264 = scmp.eq.s32.totalorder %s27, 1
      %p265 = scmp.ne.s32.totalorder %s260, %s262
      %p266 = scmp.eq.s32.totalorder %s27, 0
      %p267 = por %p265, %p266
      %p268 = scmp.ne.s32.totalorder %s260, %s262
      %p269 = scmp.eq.s32.totalorder %s32, 1
      %p270 = por %p268, %p269
      %p271 = scmp.ne.s32.totalorder %s262, %s263
      %p272 = scmp.eq.s32.totalorder %s32, 0
      %p273 = por %p271, %p272
      %p274 = scmp.ne.s32.totalorder %s262, %s263
      %p275 = scmp.eq.s32.totalorder %s33, 1
      %p276 = por %p274, %p275
      %p278 = scmp.ne.s32.totalorder %s263, %s277
      %p279 = scmp.eq.s32.totalorder %s33, 0
      %p280 = por %p278, %p279
      %s282 = sadd.s32 %s281, 1
      %p285 = scmp.eq.s32.totalorder %s27, 1
      %p286 = scmp.ne.s32.totalorder %s281, %s283
      %p287 = scmp.eq.s32.totalorder %s27, 0
      %p288 = por %p286, %p287
      %p289 = scmp.ne.s32.totalorder %s281, %s283
      %p290 = scmp.eq.s32.totalorder %s32, 1
      %p291 = por %p289, %p290
      %p292 = scmp.ne.s32.totalorder %s283, %s284
      %p293 = scmp.eq.s32.totalorder %s32, 0
      %p294 = por %p292, %p293
      %p295 = scmp.ne.s32.totalorder %s283, %s284
      %p296 = scmp.eq.s32.totalorder %s33, 1
      %p297 = por %p295, %p296
      %p299 = scmp.ne.s32.totalorder %s284, %s298
      %p300 = scmp.eq.s32.totalorder %s33, 0
      %p301 = por %p299, %p300
      %s303 = sadd.s32 %s302, 1
      %p306 = scmp.eq.s32.totalorder %s27, 1
      %p307 = scmp.ne.s32.totalorder %s302, %s304
      %p308 = scmp.eq.s32.totalorder %s27, 0
      %p309 = por %p307, %p308
      %p310 = scmp.ne.s32.totalorder %s302, %s304
      %p311 = scmp.eq.s32.totalorder %s32, 1
      %p312 = por %p310, %p311
      %p313 = scmp.ne.s32.totalorder %s304, %s305
      %p314 = scmp.eq.s32.totalorder %s32, 0
      %p315 = por %p313, %p314
      %p316 = scmp.ne.s32.totalorder %s304, %s305
      %p317 = scmp.eq.s32.totalorder %s33, 1
      %p318 = por %p316, %p317
      %p320 = scmp.ne.s32.totalorder %s305, %s319
      %p321 = scmp.eq.s32.totalorder %s33, 0
      %p322 = por %p320, %p321
      %s324 = sadd.s32 %s323, 1
      %p327 = scmp.eq.s32.totalorder %s27, 1
      %p328 = scmp.ne.s32.totalorder %s323, %s325
      %p329 = scmp.eq.s32.totalorder %s27, 0
      %p330 = por %p328, %p329
      %p331 = scmp.ne.s32.totalorder %s323, %s325
      %p332 = scmp.eq.s32.totalorder %s32, 1
      %p333 = por %p331, %p332
      %p334 = scmp.ne.s32.totalorder %s325, %s326
      %p335 = scmp.eq.s32.totalorder %s32, 0
      %p336 = por %p334, %p335
      %p337 = scmp.ne.s32.totalorder %s325, %s326
      %p338 = scmp.eq.s32.totalorder %s33, 1
      %p339 = por %p337, %p338
      %p341 = scmp.ne.s32.totalorder %s326, %s340
      %p342 = scmp.eq.s32.totalorder %s33, 0
      %p343 = por %p341, %p342
      %s345 = sadd.s32 %s344, 1
      %p348 = scmp.eq.s32.totalorder %s27, 1
      %p349 = scmp.ne.s32.totalorder %s344, %s346
      %p350 = scmp.eq.s32.totalorder %s27, 0
      %p351 = por %p349, %p350
      %p352 = scmp.ne.s32.totalorder %s344, %s346
      %p353 = scmp.eq.s32.totalorder %s32, 1
      %p354 = por %p352, %p353
      %p355 = scmp.ne.s32.totalorder %s346, %s347
      %p356 = scmp.eq.s32.totalorder %s32, 0
      %p357 = por %p355, %p356
      %p358 = scmp.ne.s32.totalorder %s346, %s347
      %p359 = scmp.eq.s32.totalorder %s33, 1
      %p360 = por %p358, %p359
      %p362 = scmp.ne.s32.totalorder %s347, %s361
      %p363 = scmp.eq.s32.totalorder %s33, 0
      %p364 = por %p362, %p363
      %s365 = ssub.s32 %s27, %s34
      %p366 = scmp.eq.s32.totalorder %s365, 0
      %s368 = sadd.s32 %s367, 1
      %s369 = scalar_select %p366, %s367, %s368
      %p372 = pneg %p366
      %p373 = scmp.eq.s32.totalorder %s27, 1
      %p374 = por %p372, %p373
      %p375 = scmp.ne.s32.totalorder %s367, %s370
      %p376 = scmp.eq.s32.totalorder %s27, 0
      %p377 = por %p375, %p376
      %p378 = scmp.ne.s32.totalorder %s367, %s370
      %p379 = scmp.eq.s32.totalorder %s32, 1
      %p380 = por %p378, %p379
      %p381 = scmp.ne.s32.totalorder %s370, %s371
      %p382 = scmp.eq.s32.totalorder %s32, 0
      %p383 = por %p381, %p382
      %p384 = scmp.ne.s32.totalorder %s370, %s371
      %p385 = scmp.eq.s32.totalorder %s33, 1
      %p386 = por %p384, %p385
      %p388 = scmp.ne.s32.totalorder %s371, %s387
      %p389 = scmp.eq.s32.totalorder %s33, 0
      %p390 = por %p388, %p389
      %p391 = scmp.le.s32.totalorder 1, %s27
      %p392 = scmp.lt.s32.totalorder %s27, 3
      %p393 = pnand %p391, %p392
      %p394 = pneg %p393
      // Predicated region
      $region9: #{resblock_sft_forward.1} parent=5 // pred_check
        _
      $region10: #{resblock_sft_forward.1} parent=5 // pred_check_branch
        %396 = sbr.rel (%p393) target = $region12
      $region11: #{resblock_sft_forward.1} parent=5 // pred_region
        %s397 = ssub.s32 %s27, 1
        // Predicated region
        $region13: #{resblock_sft_forward.1} parent=11 // pred_check
          %p398 = pneg %p126
        $region14: #{resblock_sft_forward.1} parent=11 // pred_check_branch
          %400 = sbr.rel (%p398) target = $region16
        $region15: #{resblock_sft_forward.1} parent=11 // pred_region
          _
        $region16: #{resblock_sft_forward.1} parent=11 // pred_fallthru
          _
        // Predicated region
        $region17: #{resblock_sft_forward.1} parent=11 // pred_check
          %p401 = pneg %p147
        $region18: #{resblock_sft_forward.1} parent=11 // pred_check_branch
          %403 = sbr.rel (%p401) target = $region20
        $region19: #{resblock_sft_forward.1} parent=11 // pred_region
          _
        $region20: #{resblock_sft_forward.1} parent=11 // pred_fallthru
          _
        // Predicated region
        $region21: #{resblock_sft_forward.1} parent=11 // pred_check
          %p404 = pneg %p168
        $region22: #{resblock_sft_forward.1} parent=11 // pred_check_branch
          %406 = sbr.rel (%p404) target = $region24
        $region23: #{resblock_sft_forward.1} parent=11 // pred_region
          _
        $region24: #{resblock_sft_forward.1} parent=11 // pred_fallthru
          _
        // Predicated region
        $region25: #{resblock_sft_forward.1} parent=11 // pred_check
          %p407 = pneg %p189
        $region26: #{resblock_sft_forward.1} parent=11 // pred_check_branch
          %409 = sbr.rel (%p407) target = $region28
        $region27: #{resblock_sft_forward.1} parent=11 // pred_region
          _
        $region28: #{resblock_sft_forward.1} parent=11 // pred_fallthru
          _
        // Predicated region
        $region29: #{resblock_sft_forward.1} parent=11 // pred_check
          %p410 = pneg %p210
        $region30: #{resblock_sft_forward.1} parent=11 // pred_check_branch
          %412 = sbr.rel (%p410) target = $region32
        $region31: #{resblock_sft_forward.1} parent=11 // pred_region
          _
        $region32: #{resblock_sft_forward.1} parent=11 // pred_fallthru
          _
        // Predicated region
        $region33: #{resblock_sft_forward.1} parent=11 // pred_check
          %p413 = pneg %p231
        $region34: #{resblock_sft_forward.1} parent=11 // pred_check_branch
          %415 = sbr.rel (%p413) target = $region36
        $region35: #{resblock_sft_forward.1} parent=11 // pred_region
          _
        $region36: #{resblock_sft_forward.1} parent=11 // pred_fallthru
          _
        // Predicated region
        $region37: #{resblock_sft_forward.1} parent=11 // pred_check
          %p416 = pneg %p252
        $region38: #{resblock_sft_forward.1} parent=11 // pred_check_branch
          %418 = sbr.rel (%p416) target = $region40
        $region39: #{resblock_sft_forward.1} parent=11 // pred_region
          _
        $region40: #{resblock_sft_forward.1} parent=11 // pred_fallthru
          _
        // Predicated region
        $region41: #{resblock_sft_forward.1} parent=11 // pred_check
          %p419 = pneg %p273
        $region42: #{resblock_sft_forward.1} parent=11 // pred_check_branch
          %421 = sbr.rel (%p419) target = $region44
        $region43: #{resblock_sft_forward.1} parent=11 // pred_region
          _
        $region44: #{resblock_sft_forward.1} parent=11 // pred_fallthru
          _
        // Predicated region
        $region45: #{resblock_sft_forward.1} parent=11 // pred_check
          %p422 = pneg %p294
        $region46: #{resblock_sft_forward.1} parent=11 // pred_check_branch
          %424 = sbr.rel (%p422) target = $region48
        $region47: #{resblock_sft_forward.1} parent=11 // pred_region
          _
        $region48: #{resblock_sft_forward.1} parent=11 // pred_fallthru
          _
        // Predicated region
        $region49: #{resblock_sft_forward.1} parent=11 // pred_check
          %p425 = pneg %p315
        $region50: #{resblock_sft_forward.1} parent=11 // pred_check_branch
          %427 = sbr.rel (%p425) target = $region52
        $region51: #{resblock_sft_forward.1} parent=11 // pred_region
          _
        $region52: #{resblock_sft_forward.1} parent=11 // pred_fallthru
          _
        // Predicated region
        $region53: #{resblock_sft_forward.1} parent=11 // pred_check
          %p428 = pneg %p336
        $region54: #{resblock_sft_forward.1} parent=11 // pred_check_branch
          %430 = sbr.rel (%p428) target = $region56
        $region55: #{resblock_sft_forward.1} parent=11 // pred_region
          _
        $region56: #{resblock_sft_forward.1} parent=11 // pred_fallthru
          _
        // Predicated region
        $region57: #{resblock_sft_forward.1} parent=11 // pred_check
          %p431 = pneg %p357
        $region58: #{resblock_sft_forward.1} parent=11 // pred_check_branch
          %433 = sbr.rel (%p431) target = $region60
        $region59: #{resblock_sft_forward.1} parent=11 // pred_region
          _
        $region60: #{resblock_sft_forward.1} parent=11 // pred_fallthru
          _
      $region12: #{resblock_sft_forward.1} parent=5 // pred_fallthru
        _
      %p434 = scmp.lt.s32.totalorder %s27, 2
      // Predicated region
      $region61: #{resblock_sft_forward.1} parent=5 // pred_check
        %p435 = pneg %p434
      $region62: #{resblock_sft_forward.1} parent=5 // pred_check_branch
        %437 = sbr.rel (%p435) target = $region64
      $region63: #{resblock_sft_forward.1} parent=5 // pred_region
        // Predicated region
        $region65: #{resblock_sft_forward.1} parent=63 // pred_check
          %p438 = pneg %p47
        $region66: #{resblock_sft_forward.1} parent=63 // pred_check_branch
          %440 = sbr.rel (%p438) target = $region68
        $region67: #{resblock_sft_forward.1} parent=63 // pred_region
          %s441 = sand.u32 %s37, 1
          %s442 = scalar_lea.sflag [#allocation4], %s441
          %s443 = sand.u32 %s37, 1
          %s444 = smul.addr %s443, 256
          %s445 = scalar_lea.vmem [#allocation3], %s444
          %s447 = ssub.s32 4096, 4096
          %448 = vsyncadd %s442, %s447
          %s449 = smul.addr %s27, 32
          %s450 = smul.addr %s449, 128
          %s451 = scalar_lea.hbm %s0, %s450
          %s452 = sshll.u32 %s445, 4
          %s453 = int_to_ptr.vmem [resolvable:$true] %s452
          %458 = dma.hbm_to_vmem [thread:$0]  %s451, 4096, %s453, %s442, 128, 128, 8
        $region68: #{resblock_sft_forward.1} parent=63 // pred_fallthru
          _
        // Predicated region
        $region69: #{resblock_sft_forward.1} parent=63 // pred_check
          %p459 = pneg %p73
        $region70: #{resblock_sft_forward.1} parent=63 // pred_check_branch
          %461 = sbr.rel (%p459) target = $region72
        $region71: #{resblock_sft_forward.1} parent=63 // pred_region
          %p462 = scmp.lt.s32.totalorder %s27, 1
          %s463 = scalar_select %p462, %s27, 1
          %s464 = smul.addr %s463, 32
          %s465 = smul.addr %s464, 8
          %s466 = scalar_lea.vmem %s1, %s465
        $region72: #{resblock_sft_forward.1} parent=63 // pred_fallthru
          _
        // Predicated region
        $region73: #{resblock_sft_forward.1} parent=63 // pred_check
          %p467 = pneg %p99
        $region74: #{resblock_sft_forward.1} parent=63 // pred_check_branch
          %469 = sbr.rel (%p467) target = $region76
        $region75: #{resblock_sft_forward.1} parent=63 // pred_region
          %p470 = scmp.lt.s32.totalorder %s27, 1
          %s471 = scalar_select %p470, %s27, 1
          %s472 = smul.addr %s471, 32
          %s473 = smul.addr %s472, 8
          %s474 = scalar_lea.vmem %s2, %s473
        $region76: #{resblock_sft_forward.1} parent=63 // pred_fallthru
          _
      $region64: #{resblock_sft_forward.1} parent=5 // pred_fallthru
        _
      %p475 = scmp.le.s32.totalorder 1, %s27
      %p476 = scmp.lt.s32.totalorder %s27, 3
      %p477 = pnand %p475, %p476
      %p478 = pneg %p477
      // Predicated region
      $region77: #{resblock_sft_forward.1} parent=5 // pred_check
        _
      $region78: #{resblock_sft_forward.1} parent=5 // pred_check_branch
        %480 = sbr.rel (%p477) target = $region80
      $region79: #{resblock_sft_forward.1} parent=5 // pred_region
        %s481 = ssub.s32 %s27, 1
        %s482 = sand.u32 %s40, 1
        %s483 = scalar_lea.sflag [#allocation4], %s482
        %s484 = sand.u32 %s40, 1
        %s485 = smul.addr %s484, 256
        %s486 = scalar_lea.vmem [#allocation3], %s485
        // Predicated region
        $region81: #{resblock_sft_forward.1} parent=79 // pred_check
          %p487 = pneg %p53
        $region82: #{resblock_sft_forward.1} parent=79 // pred_check_branch
          %489 = sbr.rel (%p487) target = $region84
        $region83: #{resblock_sft_forward.1} parent=79 // pred_region
          %490 = dma.done %s483, 4096
        $region84: #{resblock_sft_forward.1} parent=79 // pred_fallthru
          _
        %s491 = sand.u32 %s40, 1
        %s492 = scalar_lea.sflag [#allocation4], %s491
        %s493 = sand.u32 %s40, 1
        %s494 = smul.addr %s493, 256
        %s495 = scalar_lea.vmem [#allocation3], %s494
        %p496 = pneg %p53
        %p497 = pneg %p50
        %p498 = scmp.lt.s32.totalorder %s32, 1
        %s499 = scalar_select %p498, %s32, 1
        %s500 = smul.addr %s499, 32
        %s501 = smul.addr %s500, 8
        %s502 = scalar_lea.vmem %s1, %s501
        %p503 = pneg %p79
        %p504 = pneg %p76
        %p505 = scmp.lt.s32.totalorder %s32, 1
        %s506 = scalar_select %p505, %s32, 1
        %s507 = smul.addr %s506, 32
        %s508 = smul.addr %s507, 8
        %s509 = scalar_lea.vmem %s2, %s508
        %p510 = pneg %p105
        %p511 = pneg %p102
        %p512 = pneg %p126
        %p513 = pneg %p123
        %p514 = pneg %p147
        %p515 = pneg %p144
        %p516 = pneg %p168
        %p517 = pneg %p165
        %p518 = pneg %p189
        %p519 = pneg %p186
        %p520 = pneg %p210
        %p521 = pneg %p207
        %p522 = pneg %p231
        %p523 = pneg %p228
        %p524 = pneg %p252
        %p525 = pneg %p249
        %p526 = pneg %p273
        %p527 = pneg %p270
        %p528 = pneg %p294
        %p529 = pneg %p291
        %p530 = pneg %p315
        %p531 = pneg %p312
        %p532 = pneg %p336
        %p533 = pneg %p333
        %p534 = pneg %p357
        %p535 = pneg %p354
        %p536 = pneg %p383
        %p537 = pneg %p380
        %s538 = sand.u32 %s370, 1
        %s539 = scalar_lea.sflag [#allocation5], %s538
        %s540 = sand.u32 %s370, 1
        %s541 = smul.addr %s540, 256
        %s542 = scalar_lea.vmem [#allocation6], %s541
        %p543 = scmp.lt.s32.totalorder %s32, 1
        %s544 = scalar_select %p543, %s32, 1
        %s545 = smul.addr %s544, 32
        %s546 = smul.addr %s545, 8
        %s547 = scalar_lea.vmem %s1, %s546
        %p548 = scmp.lt.s32.totalorder %s32, 1
        %s549 = scalar_select %p548, %s32, 1
        %s550 = smul.addr %s549, 32
        %s551 = smul.addr %s550, 8
        %s552 = scalar_lea.vmem %s2, %s551
        %v556 = vlaneseq
        %v557 = vshrl.u32 %v556, 7
        %v558 = vadd.s32 %v557, 8
        %v559 = vadd.s32 %v557, 16
        %v560 = vadd.s32 %v557, 24
        %v561 = vadd.s32 %v557, 32
        %v562 = vadd.s32 %v557, 40
        %v563 = vadd.s32 %v557, 48
        %v564 = vadd.s32 %v557, 56
        %v565 = vadd.s32 %v557, 64
        %v566 = vadd.s32 %v557, 72
        %v567 = vadd.s32 %v557, 80
        %v568 = vadd.s32 %v557, 88
        %v569 = vadd.s32 %v557, 96
        %v570 = vadd.s32 %v557, 104
        %v571 = vadd.s32 %v557, 112
        %v572 = vadd.s32 %v557, 120
        %v573 = vadd.s32 %v557, 128
        %v574 = vadd.s32 %v557, 136
        %v575 = vadd.s32 %v557, 144
        %v576 = vadd.s32 %v557, 152
        %v577 = vadd.s32 %v557, 160
        %v578 = vadd.s32 %v557, 168
        %v579 = vadd.s32 %v557, 176
        %v580 = vadd.s32 %v557, 184
        %v581 = vadd.s32 %v557, 192
        %v582 = vadd.s32 %v557, 200
        %v583 = vadd.s32 %v557, 208
        %v584 = vadd.s32 %v557, 216
        %v585 = vadd.s32 %v557, 224
        %v586 = vadd.s32 %v557, 232
        %v587 = vadd.s32 %v557, 240
        %v588 = vadd.s32 %v557, 248
        %vm589 = vcmp.lt.s32.totalorder %v557, 0
        %v590 = vsub.s32 0, %v557
        %v591 = vsel %vm589, %v590, %v557
        %v592 = vshrl.u32 %v591, 4
        %v593 = vand.u32 %v591, 15
        %v594 = vsub.s32 0, %v593
        %v595 = vsel %vm589, %v594, %v593
        %vm596 = vcmp.lt.s32.totalorder %v558, 0
        %v597 = vsub.s32 0, %v558
        %v598 = vsel %vm596, %v597, %v558
        %v599 = vshrl.u32 %v598, 4
        %v600 = vand.u32 %v598, 15
        %v601 = vsub.s32 0, %v600
        %v602 = vsel %vm596, %v601, %v600
        %vm603 = vcmp.lt.s32.totalorder %v559, 0
        %v604 = vsub.s32 0, %v559
        %v605 = vsel %vm603, %v604, %v559
        %v606 = vshrl.u32 %v605, 4
        %v607 = vand.u32 %v605, 15
        %v608 = vsub.s32 0, %v607
        %v609 = vsel %vm603, %v608, %v607
        %vm610 = vcmp.lt.s32.totalorder %v560, 0
        %v611 = vsub.s32 0, %v560
        %v612 = vsel %vm610, %v611, %v560
        %v613 = vshrl.u32 %v612, 4
        %v614 = vand.u32 %v612, 15
        %v615 = vsub.s32 0, %v614
        %v616 = vsel %vm610, %v615, %v614
        %vm617 = vcmp.lt.s32.totalorder %v561, 0
        %v618 = vsub.s32 0, %v561
        %v619 = vsel %vm617, %v618, %v561
        %v620 = vshrl.u32 %v619, 4
        %v621 = vand.u32 %v619, 15
        %v622 = vsub.s32 0, %v621
        %v623 = vsel %vm617, %v622, %v621
        %vm624 = vcmp.lt.s32.totalorder %v562, 0
        %v625 = vsub.s32 0, %v562
        %v626 = vsel %vm624, %v625, %v562
        %v627 = vshrl.u32 %v626, 4
        %v628 = vand.u32 %v626, 15
        %v629 = vsub.s32 0, %v628
        %v630 = vsel %vm624, %v629, %v628
        %vm631 = vcmp.lt.s32.totalorder %v563, 0
        %v632 = vsub.s32 0, %v563
        %v633 = vsel %vm631, %v632, %v563
        %v634 = vshrl.u32 %v633, 4
        %v635 = vand.u32 %v633, 15
        %v636 = vsub.s32 0, %v635
        %v637 = vsel %vm631, %v636, %v635
        %vm638 = vcmp.lt.s32.totalorder %v564, 0
        %v639 = vsub.s32 0, %v564
        %v640 = vsel %vm638, %v639, %v564
        %v641 = vshrl.u32 %v640, 4
        %v642 = vand.u32 %v640, 15
        %v643 = vsub.s32 0, %v642
        %v644 = vsel %vm638, %v643, %v642
        %vm645 = vcmp.lt.s32.totalorder %v565, 0
        %v646 = vsub.s32 0, %v565
        %v647 = vsel %vm645, %v646, %v565
        %v648 = vshrl.u32 %v647, 4
        %v649 = vand.u32 %v647, 15
        %v650 = vsub.s32 0, %v649
        %v651 = vsel %vm645, %v650, %v649
        %vm652 = vcmp.lt.s32.totalorder %v566, 0
        %v653 = vsub.s32 0, %v566
        %v654 = vsel %vm652, %v653, %v566
        %v655 = vshrl.u32 %v654, 4
        %v656 = vand.u32 %v654, 15
        %v657 = vsub.s32 0, %v656
        %v658 = vsel %vm652, %v657, %v656
        %vm659 = vcmp.lt.s32.totalorder %v567, 0
        %v660 = vsub.s32 0, %v567
        %v661 = vsel %vm659, %v660, %v567
        %v662 = vshrl.u32 %v661, 4
        %v663 = vand.u32 %v661, 15
        %v664 = vsub.s32 0, %v663
        %v665 = vsel %vm659, %v664, %v663
        %vm666 = vcmp.lt.s32.totalorder %v568, 0
        %v667 = vsub.s32 0, %v568
        %v668 = vsel %vm666, %v667, %v568
        %v669 = vshrl.u32 %v668, 4
        %v670 = vand.u32 %v668, 15
        %v671 = vsub.s32 0, %v670
        %v672 = vsel %vm666, %v671, %v670
        %vm673 = vcmp.lt.s32.totalorder %v569, 0
        %v674 = vsub.s32 0, %v569
        %v675 = vsel %vm673, %v674, %v569
        %v676 = vshrl.u32 %v675, 4
        %v677 = vand.u32 %v675, 15
        %v678 = vsub.s32 0, %v677
        %v679 = vsel %vm673, %v678, %v677
        %vm680 = vcmp.lt.s32.totalorder %v570, 0
        %v681 = vsub.s32 0, %v570
        %v682 = vsel %vm680, %v681, %v570
        %v683 = vshrl.u32 %v682, 4
        %v684 = vand.u32 %v682, 15
        %v685 = vsub.s32 0, %v684
        %v686 = vsel %vm680, %v685, %v684
        %vm687 = vcmp.lt.s32.totalorder %v571, 0
        %v688 = vsub.s32 0, %v571
        %v689 = vsel %vm687, %v688, %v571
        %v690 = vshrl.u32 %v689, 4
        %v691 = vand.u32 %v689, 15
        %v692 = vsub.s32 0, %v691
        %v693 = vsel %vm687, %v692, %v691
        %vm694 = vcmp.lt.s32.totalorder %v572, 0
        %v695 = vsub.s32 0, %v572
        %v696 = vsel %vm694, %v695, %v572
        %v697 = vshrl.u32 %v696, 4
        %v698 = vand.u32 %v696, 15
        %v699 = vsub.s32 0, %v698
        %v700 = vsel %vm694, %v699, %v698
        %vm701 = vcmp.lt.s32.totalorder %v573, 0
        %v702 = vsub.s32 0, %v573
        %v703 = vsel %vm701, %v702, %v573
        %v704 = vshrl.u32 %v703, 4
        %v705 = vand.u32 %v703, 15
        %v706 = vsub.s32 0, %v705
        %v707 = vsel %vm701, %v706, %v705
        %vm708 = vcmp.lt.s32.totalorder %v574, 0
        %v709 = vsub.s32 0, %v574
        %v710 = vsel %vm708, %v709, %v574
        %v711 = vshrl.u32 %v710, 4
        %v712 = vand.u32 %v710, 15
        %v713 = vsub.s32 0, %v712
        %v714 = vsel %vm708, %v713, %v712
        %vm715 = vcmp.lt.s32.totalorder %v575, 0
        %v716 = vsub.s32 0, %v575
        %v717 = vsel %vm715, %v716, %v575
        %v718 = vshrl.u32 %v717, 4
        %v719 = vand.u32 %v717, 15
        %v720 = vsub.s32 0, %v719
        %v721 = vsel %vm715, %v720, %v719
        %vm722 = vcmp.lt.s32.totalorder %v576, 0
        %v723 = vsub.s32 0, %v576
        %v724 = vsel %vm722, %v723, %v576
        %v725 = vshrl.u32 %v724, 4
        %v726 = vand.u32 %v724, 15
        %v727 = vsub.s32 0, %v726
        %v728 = vsel %vm722, %v727, %v726
        %vm729 = vcmp.lt.s32.totalorder %v577, 0
        %v730 = vsub.s32 0, %v577
        %v731 = vsel %vm729, %v730, %v577
        %v732 = vshrl.u32 %v731, 4
        %v733 = vand.u32 %v731, 15
        %v734 = vsub.s32 0, %v733
        %v735 = vsel %vm729, %v734, %v733
        %vm736 = vcmp.lt.s32.totalorder %v578, 0
        %v737 = vsub.s32 0, %v578
        %v738 = vsel %vm736, %v737, %v578
        %v739 = vshrl.u32 %v738, 4
        %v740 = vand.u32 %v738, 15
        %v741 = vsub.s32 0, %v740
        %v742 = vsel %vm736, %v741, %v740
        %vm743 = vcmp.lt.s32.totalorder %v579, 0
        %v744 = vsub.s32 0, %v579
        %v745 = vsel %vm743, %v744, %v579
        %v746 = vshrl.u32 %v745, 4
        %v747 = vand.u32 %v745, 15
        %v748 = vsub.s32 0, %v747
        %v749 = vsel %vm743, %v748, %v747
        %vm750 = vcmp.lt.s32.totalorder %v580, 0
        %v751 = vsub.s32 0, %v580
        %v752 = vsel %vm750, %v751, %v580
        %v753 = vshrl.u32 %v752, 4
        %v754 = vand.u32 %v752, 15
        %v755 = vsub.s32 0, %v754
        %v756 = vsel %vm750, %v755, %v754
        %vm757 = vcmp.lt.s32.totalorder %v581, 0
        %v758 = vsub.s32 0, %v581
        %v759 = vsel %vm757, %v758, %v581
        %v760 = vshrl.u32 %v759, 4
        %v761 = vand.u32 %v759, 15
        %v762 = vsub.s32 0, %v761
        %v763 = vsel %vm757, %v762, %v761
        %vm764 = vcmp.lt.s32.totalorder %v582, 0
        %v765 = vsub.s32 0, %v582
        %v766 = vsel %vm764, %v765, %v582
        %v767 = vshrl.u32 %v766, 4
        %v768 = vand.u32 %v766, 15
        %v769 = vsub.s32 0, %v768
        %v770 = vsel %vm764, %v769, %v768
        %vm771 = vcmp.lt.s32.totalorder %v583, 0
        %v772 = vsub.s32 0, %v583
        %v773 = vsel %vm771, %v772, %v583
        %v774 = vshrl.u32 %v773, 4
        %v775 = vand.u32 %v773, 15
        %v776 = vsub.s32 0, %v775
        %v777 = vsel %vm771, %v776, %v775
        %vm778 = vcmp.lt.s32.totalorder %v584, 0
        %v779 = vsub.s32 0, %v584
        %v780 = vsel %vm778, %v779, %v584
        %v781 = vshrl.u32 %v780, 4
        %v782 = vand.u32 %v780, 15
        %v783 = vsub.s32 0, %v782
        %v784 = vsel %vm778, %v783, %v782
        %vm785 = vcmp.lt.s32.totalorder %v585, 0
        %v786 = vsub.s32 0, %v585
        %v787 = vsel %vm785, %v786, %v585
        %v788 = vshrl.u32 %v787, 4
        %v789 = vand.u32 %v787, 15
        %v790 = vsub.s32 0, %v789
        %v791 = vsel %vm785, %v790, %v789
        %vm792 = vcmp.lt.s32.totalorder %v586, 0
        %v793 = vsub.s32 0, %v586
        %v794 = vsel %vm792, %v793, %v586
        %v795 = vshrl.u32 %v794, 4
        %v796 = vand.u32 %v794, 15
        %v797 = vsub.s32 0, %v796
        %v798 = vsel %vm792, %v797, %v796
        %vm799 = vcmp.lt.s32.totalorder %v587, 0
        %v800 = vsub.s32 0, %v587
        %v801 = vsel %vm799, %v800, %v587
        %v802 = vshrl.u32 %v801, 4
        %v803 = vand.u32 %v801, 15
        %v804 = vsub.s32 0, %v803
        %v805 = vsel %vm799, %v804, %v803
        %vm806 = vcmp.lt.s32.totalorder %v588, 0
        %v807 = vsub.s32 0, %v588
        %v808 = vsel %vm806, %v807, %v588
        %v809 = vshrl.u32 %v808, 4
        %v810 = vand.u32 %v808, 15
        %v811 = vsub.s32 0, %v810
        %v812 = vsel %vm806, %v811, %v810
        %vm813 = vcmp.ne.s32.totalorder %v595, 0
        %vm814 = vcmp.ne.s32.totalorder %v602, 0
        %vm815 = vcmp.ne.s32.totalorder %v609, 0
        %vm816 = vcmp.ne.s32.totalorder %v616, 0
        %vm817 = vcmp.ne.s32.totalorder %v623, 0
        %vm818 = vcmp.ne.s32.totalorder %v630, 0
        %vm819 = vcmp.ne.s32.totalorder %v637, 0
        %vm820 = vcmp.ne.s32.totalorder %v644, 0
        %vm821 = vcmp.ne.s32.totalorder %v651, 0
        %vm822 = vcmp.ne.s32.totalorder %v658, 0
        %vm823 = vcmp.ne.s32.totalorder %v665, 0
        %vm824 = vcmp.ne.s32.totalorder %v672, 0
        %vm825 = vcmp.ne.s32.totalorder %v679, 0
        %vm826 = vcmp.ne.s32.totalorder %v686, 0
        %vm827 = vcmp.ne.s32.totalorder %v693, 0
        %vm828 = vcmp.ne.s32.totalorder %v700, 0
        %vm829 = vcmp.ne.s32.totalorder %v707, 0
        %vm830 = vcmp.ne.s32.totalorder %v714, 0
        %vm831 = vcmp.ne.s32.totalorder %v721, 0
        %vm832 = vcmp.ne.s32.totalorder %v728, 0
        %vm833 = vcmp.ne.s32.totalorder %v735, 0
        %vm834 = vcmp.ne.s32.totalorder %v742, 0
        %vm835 = vcmp.ne.s32.totalorder %v749, 0
        %vm836 = vcmp.ne.s32.totalorder %v756, 0
        %vm837 = vcmp.ne.s32.totalorder %v763, 0
        %vm838 = vcmp.ne.s32.totalorder %v770, 0
        %vm839 = vcmp.ne.s32.totalorder %v777, 0
        %vm840 = vcmp.ne.s32.totalorder %v784, 0
        %vm841 = vcmp.ne.s32.totalorder %v791, 0
        %vm842 = vcmp.ne.s32.totalorder %v798, 0
        %vm843 = vcmp.ne.s32.totalorder %v805, 0
        %vm844 = vcmp.ne.s32.totalorder %v812, 0
        %vm845 = vcmp.lt.s32.totalorder %v595, 0
        %vm846 = vcmp.lt.s32.totalorder %v602, 0
        %vm847 = vcmp.lt.s32.totalorder %v609, 0
        %vm848 = vcmp.lt.s32.totalorder %v616, 0
        %vm849 = vcmp.lt.s32.totalorder %v623, 0
        %vm850 = vcmp.lt.s32.totalorder %v630, 0
        %vm851 = vcmp.lt.s32.totalorder %v637, 0
        %vm852 = vcmp.lt.s32.totalorder %v644, 0
        %vm853 = vcmp.lt.s32.totalorder %v651, 0
        %vm854 = vcmp.lt.s32.totalorder %v658, 0
        %vm855 = vcmp.lt.s32.totalorder %v665, 0
        %vm856 = vcmp.lt.s32.totalorder %v672, 0
        %vm857 = vcmp.lt.s32.totalorder %v679, 0
        %vm858 = vcmp.lt.s32.totalorder %v686, 0
        %vm859 = vcmp.lt.s32.totalorder %v693, 0
        %vm860 = vcmp.lt.s32.totalorder %v700, 0
        %vm861 = vcmp.lt.s32.totalorder %v707, 0
        %vm862 = vcmp.lt.s32.totalorder %v714, 0
        %vm863 = vcmp.lt.s32.totalorder %v721, 0
        %vm864 = vcmp.lt.s32.totalorder %v728, 0
        %vm865 = vcmp.lt.s32.totalorder %v735, 0
        %vm866 = vcmp.lt.s32.totalorder %v742, 0
        %vm867 = vcmp.lt.s32.totalorder %v749, 0
        %vm868 = vcmp.lt.s32.totalorder %v756, 0
        %vm869 = vcmp.lt.s32.totalorder %v763, 0
        %vm870 = vcmp.lt.s32.totalorder %v770, 0
        %vm871 = vcmp.lt.s32.totalorder %v777, 0
        %vm872 = vcmp.lt.s32.totalorder %v784, 0
        %vm873 = vcmp.lt.s32.totalorder %v791, 0
        %vm874 = vcmp.lt.s32.totalorder %v798, 0
        %vm875 = vcmp.lt.s32.totalorder %v805, 0
        %vm876 = vcmp.lt.s32.totalorder %v812, 0
        %vm877 = vmand %vm845, %vm813
        %vm878 = vmand %vm846, %vm814
        %vm879 = vmand %vm847, %vm815
        %vm880 = vmand %vm848, %vm816
        %vm881 = vmand %vm849, %vm817
        %vm882 = vmand %vm850, %vm818
        %vm883 = vmand %vm851, %vm819
        %vm884 = vmand %vm852, %vm820
        %vm885 = vmand %vm853, %vm821
        %vm886 = vmand %vm854, %vm822
        %vm887 = vmand %vm855, %vm823
        %vm888 = vmand %vm856, %vm824
        %vm889 = vmand %vm857, %vm825
        %vm890 = vmand %vm858, %vm826
        %vm891 = vmand %vm859, %vm827
        %vm892 = vmand %vm860, %vm828
        %vm893 = vmand %vm861, %vm829
        %vm894 = vmand %vm862, %vm830
        %vm895 = vmand %vm863, %vm831
        %vm896 = vmand %vm864, %vm832
        %vm897 = vmand %vm865, %vm833
        %vm898 = vmand %vm866, %vm834
        %vm899 = vmand %vm867, %vm835
        %vm900 = vmand %vm868, %vm836
        %vm901 = vmand %vm869, %vm837
        %vm902 = vmand %vm870, %vm838
        %vm903 = vmand %vm871, %vm839
        %vm904 = vmand %vm872, %vm840
        %vm905 = vmand %vm873, %vm841
        %vm906 = vmand %vm874, %vm842
        %vm907 = vmand %vm875, %vm843
        %vm908 = vmand %vm876, %vm844
        %v909 = vadd.s32 %v595, 16
        %v910 = vadd.s32 %v602, 16
        %v911 = vadd.s32 %v609, 16
        %v912 = vadd.s32 %v616, 16
        %v913 = vadd.s32 %v623, 16
        %v914 = vadd.s32 %v630, 16
        %v915 = vadd.s32 %v637, 16
        %v916 = vadd.s32 %v644, 16
        %v917 = vadd.s32 %v651, 16
        %v918 = vadd.s32 %v658, 16
        %v919 = vadd.s32 %v665, 16
        %v920 = vadd.s32 %v672, 16
        %v921 = vadd.s32 %v679, 16
        %v922 = vadd.s32 %v686, 16
        %v923 = vadd.s32 %v693, 16
        %v924 = vadd.s32 %v700, 16
        %v925 = vadd.s32 %v707, 16
        %v926 = vadd.s32 %v714, 16
        %v927 = vadd.s32 %v721, 16
        %v928 = vadd.s32 %v728, 16
        %v929 = vadd.s32 %v735, 16
        %v930 = vadd.s32 %v742, 16
        %v931 = vadd.s32 %v749, 16
        %v932 = vadd.s32 %v756, 16
        %v933 = vadd.s32 %v763, 16
        %v934 = vadd.s32 %v770, 16
        %v935 = vadd.s32 %v777, 16
        %v936 = vadd.s32 %v784, 16
        %v937 = vadd.s32 %v791, 16
        %v938 = vadd.s32 %v798, 16
        %v939 = vadd.s32 %v805, 16
        %v940 = vadd.s32 %v812, 16
        %v941 = vsel %vm877, %v909, %v595
        %v942 = vsel %vm878, %v910, %v602
        %v943 = vsel %vm879, %v911, %v609
        %v944 = vsel %vm880, %v912, %v616
        %v945 = vsel %vm881, %v913, %v623
        %v946 = vsel %vm882, %v914, %v630
        %v947 = vsel %vm883, %v915, %v637
        %v948 = vsel %vm884, %v916, %v644
        %v949 = vsel %vm885, %v917, %v651
        %v950 = vsel %vm886, %v918, %v658
        %v951 = vsel %vm887, %v919, %v665
        %v952 = vsel %vm888, %v920, %v672
        %v953 = vsel %vm889, %v921, %v679
        %v954 = vsel %vm890, %v922, %v686
        %v955 = vsel %vm891, %v923, %v693
        %v956 = vsel %vm892, %v924, %v700
        %v957 = vsel %vm893, %v925, %v707
        %v958 = vsel %vm894, %v926, %v714
        %v959 = vsel %vm895, %v927, %v721
        %v960 = vsel %vm896, %v928, %v728
        %v961 = vsel %vm897, %v929, %v735
        %v962 = vsel %vm898, %v930, %v742
        %v963 = vsel %vm899, %v931, %v749
        %v964 = vsel %vm900, %v932, %v756
        %v965 = vsel %vm901, %v933, %v763
        %v966 = vsel %vm902, %v934, %v770
        %v967 = vsel %vm903, %v935, %v777
        %v968 = vsel %vm904, %v936, %v784
        %v969 = vsel %vm905, %v937, %v791
        %v970 = vsel %vm906, %v938, %v798
        %v971 = vsel %vm907, %v939, %v805
        %v972 = vsel %vm908, %v940, %v812
        %vm973 = vcmp.ne.s32.totalorder %v941, 0
        %vm974 = vcmp.ne.s32.totalorder %v942, 0
        %vm975 = vcmp.ne.s32.totalorder %v943, 0
        %vm976 = vcmp.ne.s32.totalorder %v944, 0
        %vm977 = vcmp.ne.s32.totalorder %v945, 0
        %vm978 = vcmp.ne.s32.totalorder %v946, 0
        %vm979 = vcmp.ne.s32.totalorder %v947, 0
        %vm980 = vcmp.ne.s32.totalorder %v948, 0
        %vm981 = vcmp.ne.s32.totalorder %v949, 0
        %vm982 = vcmp.ne.s32.totalorder %v950, 0
        %vm983 = vcmp.ne.s32.totalorder %v951, 0
        %vm984 = vcmp.ne.s32.totalorder %v952, 0
        %vm985 = vcmp.ne.s32.totalorder %v953, 0
        %vm986 = vcmp.ne.s32.totalorder %v954, 0
        %vm987 = vcmp.ne.s32.totalorder %v955, 0
        %vm988 = vcmp.ne.s32.totalorder %v956, 0
        %vm989 = vcmp.ne.s32.totalorder %v957, 0
        %vm990 = vcmp.ne.s32.totalorder %v958, 0
        %vm991 = vcmp.ne.s32.totalorder %v959, 0
        %vm992 = vcmp.ne.s32.totalorder %v960, 0
        %vm993 = vcmp.ne.s32.totalorder %v961, 0
        %vm994 = vcmp.ne.s32.totalorder %v962, 0
        %vm995 = vcmp.ne.s32.totalorder %v963, 0
        %vm996 = vcmp.ne.s32.totalorder %v964, 0
        %vm997 = vcmp.ne.s32.totalorder %v965, 0
        %vm998 = vcmp.ne.s32.totalorder %v966, 0
        %vm999 = vcmp.ne.s32.totalorder %v967, 0
        %vm1000 = vcmp.ne.s32.totalorder %v968, 0
        %vm1001 = vcmp.ne.s32.totalorder %v969, 0
        %vm1002 = vcmp.ne.s32.totalorder %v970, 0
        %vm1003 = vcmp.ne.s32.totalorder %v971, 0
        %vm1004 = vcmp.ne.s32.totalorder %v972, 0
        %vm1005 = vcmp.ne.s32.totalorder %v941, 15
        %vm1006 = vcmp.ne.s32.totalorder %v942, 15
        %vm1007 = vcmp.ne.s32.totalorder %v943, 15
        %vm1008 = vcmp.ne.s32.totalorder %v944, 15
        %vm1009 = vcmp.ne.s32.totalorder %v945, 15
        %vm1010 = vcmp.ne.s32.totalorder %v946, 15
        %vm1011 = vcmp.ne.s32.totalorder %v947, 15
        %vm1012 = vcmp.ne.s32.totalorder %v948, 15
        %vm1013 = vcmp.ne.s32.totalorder %v949, 15
        %vm1014 = vcmp.ne.s32.totalorder %v950, 15
        %vm1015 = vcmp.ne.s32.totalorder %v951, 15
        %vm1016 = vcmp.ne.s32.totalorder %v952, 15
        %vm1017 = vcmp.ne.s32.totalorder %v953, 15
        %vm1018 = vcmp.ne.s32.totalorder %v954, 15
        %vm1019 = vcmp.ne.s32.totalorder %v955, 15
        %vm1020 = vcmp.ne.s32.totalorder %v956, 15
        %vm1021 = vcmp.ne.s32.totalorder %v957, 15
        %vm1022 = vcmp.ne.s32.totalorder %v958, 15
        %vm1023 = vcmp.ne.s32.totalorder %v959, 15
        %vm1024 = vcmp.ne.s32.totalorder %v960, 15
        %vm1025 = vcmp.ne.s32.totalorder %v961, 15
        %vm1026 = vcmp.ne.s32.totalorder %v962, 15
        %vm1027 = vcmp.ne.s32.totalorder %v963, 15
        %vm1028 = vcmp.ne.s32.totalorder %v964, 15
        %vm1029 = vcmp.ne.s32.totalorder %v965, 15
        %vm1030 = vcmp.ne.s32.totalorder %v966, 15
        %vm1031 = vcmp.ne.s32.totalorder %v967, 15
        %vm1032 = vcmp.ne.s32.totalorder %v968, 15
        %vm1033 = vcmp.ne.s32.totalorder %v969, 15
        %vm1034 = vcmp.ne.s32.totalorder %v970, 15
        %vm1035 = vcmp.ne.s32.totalorder %v971, 15
        %vm1036 = vcmp.ne.s32.totalorder %v972, 15
        %v1037 = vld [vmem:[%s486] sm:$0xff]
        %v1038 = vld [vmem:[%s486 + $0x8] sm:$0xff]
        %v1039 = vld [vmem:[%s486 + $0x10] sm:$0xff]
        %v1040 = vld [vmem:[%s486 + $0x18] sm:$0xff]
        %v1041 = vld [vmem:[%s486 + $0x20] sm:$0xff]
        %v1042 = vld [vmem:[%s486 + $0x28] sm:$0xff]
        %v1043 = vld [vmem:[%s486 + $0x30] sm:$0xff]
        %v1044 = vld [vmem:[%s486 + $0x38] sm:$0xff]
        %v1045 = vld [vmem:[%s486 + $0x40] sm:$0xff]
        %v1046 = vld [vmem:[%s486 + $0x48] sm:$0xff]
        %v1047 = vld [vmem:[%s486 + $0x50] sm:$0xff]
        %v1048 = vld [vmem:[%s486 + $0x58] sm:$0xff]
        %v1049 = vld [vmem:[%s486 + $0x60] sm:$0xff]
        %v1050 = vld [vmem:[%s486 + $0x68] sm:$0xff]
        %v1051 = vld [vmem:[%s486 + $0x70] sm:$0xff]
        %v1052 = vld [vmem:[%s486 + $0x78] sm:$0xff]
        %v1053 = vld [vmem:[%s486 + $0x80] sm:$0xff]
        %v1054 = vld [vmem:[%s486 + $0x88] sm:$0xff]
        %v1055 = vld [vmem:[%s486 + $0x90] sm:$0xff]
        %v1056 = vld [vmem:[%s486 + $0x98] sm:$0xff]
        %v1057 = vld [vmem:[%s486 + $0xa0] sm:$0xff]
        %v1058 = vld [vmem:[%s486 + $0xa8] sm:$0xff]
        %v1059 = vld [vmem:[%s486 + $0xb0] sm:$0xff]
        %v1060 = vld [vmem:[%s486 + $0xb8] sm:$0xff]
        %v1061 = vld [vmem:[%s486 + $0xc0] sm:$0xff]
        %v1062 = vld [vmem:[%s486 + $0xc8] sm:$0xff]
        %v1063 = vld [vmem:[%s486 + $0xd0] sm:$0xff]
        %v1064 = vld [vmem:[%s486 + $0xd8] sm:$0xff]
        %v1065 = vld [vmem:[%s486 + $0xe0] sm:$0xff]
        %v1066 = vld [vmem:[%s486 + $0xe8] sm:$0xff]
        %v1067 = vld [vmem:[%s486 + $0xf0] sm:$0xff]
        %v1068 = vld [vmem:[%s486 + $0xf8] sm:$0xff]
        %v1069 = vld [vmem:[%s552] sm:$0xff]
        %v1070 = vld [vmem:[%s552 + $0x8] sm:$0xff]
        %v1071 = vld [vmem:[%s552 + $0x10] sm:$0xff]
        %v1072 = vld [vmem:[%s552 + $0x18] sm:$0xff]
        %v1073 = vld [vmem:[%s552 + $0x20] sm:$0xff]
        %v1074 = vld [vmem:[%s552 + $0x28] sm:$0xff]
        %v1075 = vld [vmem:[%s552 + $0x30] sm:$0xff]
        %v1076 = vld [vmem:[%s552 + $0x38] sm:$0xff]
        %v1077 = vld [vmem:[%s552 + $0x40] sm:$0xff]
        %v1078 = vld [vmem:[%s552 + $0x48] sm:$0xff]
        %v1079 = vld [vmem:[%s552 + $0x50] sm:$0xff]
        %v1080 = vld [vmem:[%s552 + $0x58] sm:$0xff]
        %v1081 = vld [vmem:[%s552 + $0x60] sm:$0xff]
        %v1082 = vld [vmem:[%s552 + $0x68] sm:$0xff]
        %v1083 = vld [vmem:[%s552 + $0x70] sm:$0xff]
        %v1084 = vld [vmem:[%s552 + $0x78] sm:$0xff]
        %v1085 = vld [vmem:[%s552 + $0x80] sm:$0xff]
        %v1086 = vld [vmem:[%s552 + $0x88] sm:$0xff]
        %v1087 = vld [vmem:[%s552 + $0x90] sm:$0xff]
        %v1088 = vld [vmem:[%s552 + $0x98] sm:$0xff]
        %v1089 = vld [vmem:[%s552 + $0xa0] sm:$0xff]
        %v1090 = vld [vmem:[%s552 + $0xa8] sm:$0xff]
        %v1091 = vld [vmem:[%s552 + $0xb0] sm:$0xff]
        %v1092 = vld [vmem:[%s552 + $0xb8] sm:$0xff]
        %v1093 = vld [vmem:[%s552 + $0xc0] sm:$0xff]
        %v1094 = vld [vmem:[%s552 + $0xc8] sm:$0xff]
        %v1095 = vld [vmem:[%s552 + $0xd0] sm:$0xff]
        %v1096 = vld [vmem:[%s552 + $0xd8] sm:$0xff]
        %v1097 = vld [vmem:[%s552 + $0xe0] sm:$0xff]
        %v1098 = vld [vmem:[%s552 + $0xe8] sm:$0xff]
        %v1099 = vld [vmem:[%s552 + $0xf0] sm:$0xff]
        %v1100 = vld [vmem:[%s552 + $0xf8] sm:$0xff]
        %v1101 = vpack.c.bf16 %v1070, %v1069
        %v1102 = vpack.c.bf16 %v1072, %v1071
        %v1103 = vpack.c.bf16 %v1074, %v1073
        %v1104 = vpack.c.bf16 %v1076, %v1075
        %v1105 = vpack.c.bf16 %v1078, %v1077
        %v1106 = vpack.c.bf16 %v1080, %v1079
        %v1107 = vpack.c.bf16 %v1082, %v1081
        %v1108 = vpack.c.bf16 %v1084, %v1083
        %v1109 = vpack.c.bf16 %v1086, %v1085
        %v1110 = vpack.c.bf16 %v1088, %v1087
        %v1111 = vpack.c.bf16 %v1090, %v1089
        %v1112 = vpack.c.bf16 %v1092, %v1091
        %v1113 = vpack.c.bf16 %v1094, %v1093
        %v1114 = vpack.c.bf16 %v1096, %v1095
        %v1115 = vpack.c.bf16 %v1098, %v1097
        %v1116 = vpack.c.bf16 %v1100, %v1099
        %v1117 = vld [vmem:[%s3] sm:$0xf]
        %v1118 = vld [vmem:[%s3 + $0x4] sm:$0xf]
        %v1119 = vld [vmem:[%s3 + $0x8] sm:$0xf]
        %v1120 = vld [vmem:[%s3 + $0xc] sm:$0xf]
        %v1121 = vld [vmem:[%s4] sm:$0x1]
        %v1123 = vlaneseq
        %v1124 = vshrl.u32 %v1123, 7
        %v1125 = vsub.s32 0, %v1124
        %v1126 = vrot.slane %v1121, %v1125
        %v1132 = vunpack.c.l.b16 %v1117
        %v1133 = vunpack.c.l.b16 %v1118
        %v1134 = vunpack.c.l.b16 %v1119
        %v1135 = vunpack.c.l.b16 %v1120
        %v1136 = vpack.c.b16 %v1133, %v1132
        %v1137 = vpack.c.b16 %v1135, %v1134
        %vm1140 = vcmask 261120
        %v1142 = vsel %vm1140, %v1101, 0
        %v1145 = vsel %vm1140, %v1102, 0
        %v1148 = vsel %vm1140, %v1103, 0
        %v1151 = vsel %vm1140, %v1104, 0
        %v1154 = vsel %vm1140, %v1105, 0
        %v1157 = vsel %vm1140, %v1106, 0
        %v1160 = vsel %vm1140, %v1107, 0
        %v1163 = vsel %vm1140, %v1108, 0
        %v1166 = vsel %vm1140, %v1109, 0
        %v1169 = vsel %vm1140, %v1110, 0
        %v1172 = vsel %vm1140, %v1111, 0
        %v1175 = vsel %vm1140, %v1112, 0
        %v1178 = vsel %vm1140, %v1113, 0
        %v1181 = vsel %vm1140, %v1114, 0
        %v1184 = vsel %vm1140, %v1115, 0
        %v1187 = vsel %vm1140, %v1116, 0
        %1189 = vmatprep.subr.bf16.mxu0 0
        %1190 = vmatpush1.bf16.msra.mxu0 0
        %1191 = vmatprep.subr.bf16.mxu0 0
        %1192 = vmatpush1.bf16.msra.mxu0 0
        %1193 = vmatprep.subr.bf16.mxu0 0
        %1194 = vmatpush1.bf16.msra.mxu0 0
        %1195 = vmatprep.subr.bf16.mxu0 0
        %1196 = vmatpush1.bf16.msra.mxu0 0
        %1197 = vmatprep.subr.bf16.mxu0 0
        %1198 = vmatpush1.bf16.msra.mxu0 0
        %1199 = vmatprep.subr.bf16.mxu0 0
        %1200 = vmatpush1.bf16.msra.mxu0 0
        %1201 = vmatprep.subr.bf16.mxu0 0
        %1202 = vmatpush1.bf16.msra.mxu0 %v1137
        %1203 = vmatprep.subr.bf16.mxu0 0
        %1204 = vmatpush1.bf16.msra.mxu0 %v1136
        %1205 = vmatprep.subr.bf16.mxu0 0
        %1206 = vmatpush2.bf16.msra.mxu0 0
        %1207 = vmatprep.subr.bf16.mxu0 0
        %1208 = vmatpush2.bf16.msra.mxu0 0
        %1209 = vmatprep.subr.bf16.mxu0 0
        %1210 = vmatpush2.bf16.msra.mxu0 0
        %1211 = vmatprep.subr.bf16.mxu0 0
        %1212 = vmatpush2.bf16.msra.mxu0 0
        %1213 = vmatprep.subr.bf16.mxu0 0
        %1214 = vmatpush2.bf16.msra.mxu0 0
        %1215 = vmatprep.subr.bf16.mxu0 0
        %1216 = vmatpush2.bf16.msra.mxu0 0
        %1217 = vmatprep.subr.bf16.mxu0 0
        %1218 = vmatpush2.bf16.msra.mxu0 0
        %1219 = vmatprep.subr.bf16.mxu0 0
        %1220 = vmatpush2.bf16.msra.mxu0 0
        %1221 = vmatprep.mubr.bf16.mxu0 0
        %1222 = vmatmul.mubr.bf16.gmra.mxu0 %v1142
        %v1223 = vpop.f32.mrf.mxu0
        %v1224 = vadd.f32 %v1126, %v1223
        %v1225 = vpop.f32.mrf.mxu0
        %v1226 = vpop.f32.mrf.mxu0
        %v1227 = vadd.f32 %v1126, %v1226
        %v1228 = vpop.f32.mrf.mxu0
        %1229 = vmatprep.mubr.bf16.mxu0 0
        %1230 = vmatmul.mubr.bf16.gmra.mxu0 %v1145
        %v1231 = vpop.f32.mrf.mxu0
        %v1232 = vadd.f32 %v1126, %v1231
        %v1233 = vpop.f32.mrf.mxu0
        %v1234 = vpop.f32.mrf.mxu0
        %v1235 = vadd.f32 %v1126, %v1234
        %v1236 = vpop.f32.mrf.mxu0
        %1237 = vmatprep.mubr.bf16.mxu0 0
        %1238 = vmatmul.mubr.bf16.gmra.mxu0 %v1148
        %v1239 = vpop.f32.mrf.mxu0
        %v1240 = vadd.f32 %v1126, %v1239
        %v1241 = vpop.f32.mrf.mxu0
        %v1242 = vpop.f32.mrf.mxu0
        %v1243 = vadd.f32 %v1126, %v1242
        %v1244 = vpop.f32.mrf.mxu0
        %1245 = vmatprep.mubr.bf16.mxu0 0
        %1246 = vmatmul.mubr.bf16.gmra.mxu0 %v1151
        %v1247 = vpop.f32.mrf.mxu0
        %v1248 = vadd.f32 %v1126, %v1247
        %v1249 = vpop.f32.mrf.mxu0
        %v1250 = vpop.f32.mrf.mxu0
        %v1251 = vadd.f32 %v1126, %v1250
        %v1252 = vpop.f32.mrf.mxu0
        %1253 = vmatprep.mubr.bf16.mxu0 0
        %1254 = vmatmul.mubr.bf16.gmra.mxu0 %v1154
        %v1255 = vpop.f32.mrf.mxu0
        %v1256 = vadd.f32 %v1126, %v1255
        %v1257 = vpop.f32.mrf.mxu0
        %v1258 = vpop.f32.mrf.mxu0
        %v1259 = vadd.f32 %v1126, %v1258
        %v1260 = vpop.f32.mrf.mxu0
        %1261 = vmatprep.mubr.bf16.mxu0 0
        %1262 = vmatmul.mubr.bf16.gmra.mxu0 %v1157
        %v1263 = vpop.f32.mrf.mxu0
        %v1264 = vadd.f32 %v1126, %v1263
        %v1265 = vpop.f32.mrf.mxu0
        %v1266 = vpop.f32.mrf.mxu0
        %v1267 = vadd.f32 %v1126, %v1266
        %v1268 = vpop.f32.mrf.mxu0
        %1269 = vmatprep.mubr.bf16.mxu0 0
        %1270 = vmatmul.mubr.bf16.gmra.mxu0 %v1160
        %v1271 = vpop.f32.mrf.mxu0
        %v1272 = vadd.f32 %v1126, %v1271
        %v1273 = vpop.f32.mrf.mxu0
        %v1274 = vpop.f32.mrf.mxu0
        %v1275 = vadd.f32 %v1126, %v1274
        %v1276 = vpop.f32.mrf.mxu0
        %1277 = vmatprep.mubr.bf16.mxu0 0
        %1278 = vmatmul.mubr.bf16.gmra.mxu0 %v1163
        %v1279 = vpop.f32.mrf.mxu0
        %v1280 = vadd.f32 %v1126, %v1279
        %v1281 = vpop.f32.mrf.mxu0
        %v1282 = vpop.f32.mrf.mxu0
        %v1283 = vadd.f32 %v1126, %v1282
        %v1284 = vpop.f32.mrf.mxu0
        %1285 = vmatprep.mubr.bf16.mxu0 0
        %1286 = vmatmul.mubr.bf16.gmra.mxu0 %v1166
        %v1287 = vpop.f32.mrf.mxu0
        %v1288 = vadd.f32 %v1126, %v1287
        %v1289 = vpop.f32.mrf.mxu0
        %v1290 = vpop.f32.mrf.mxu0
        %v1291 = vadd.f32 %v1126, %v1290
        %v1292 = vpop.f32.mrf.mxu0
        %1293 = vmatprep.mubr.bf16.mxu0 0
        %1294 = vmatmul.mubr.bf16.gmra.mxu0 %v1169
        %v1295 = vpop.f32.mrf.mxu0
        %v1296 = vadd.f32 %v1126, %v1295
        %v1297 = vpop.f32.mrf.mxu0
        %v1298 = vpop.f32.mrf.mxu0
        %v1299 = vadd.f32 %v1126, %v1298
        %v1300 = vpop.f32.mrf.mxu0
        %1301 = vmatprep.mubr.bf16.mxu0 0
        %1302 = vmatmul.mubr.bf16.gmra.mxu0 %v1172
        %v1303 = vpop.f32.mrf.mxu0
        %v1304 = vadd.f32 %v1126, %v1303
        %v1305 = vpop.f32.mrf.mxu0
        %v1306 = vpop.f32.mrf.mxu0
        %v1307 = vadd.f32 %v1126, %v1306
        %v1308 = vpop.f32.mrf.mxu0
        %1309 = vmatprep.mubr.bf16.mxu0 0
        %1310 = vmatmul.mubr.bf16.gmra.mxu0 %v1175
        %v1311 = vpop.f32.mrf.mxu0
        %v1312 = vadd.f32 %v1126, %v1311
        %v1313 = vpop.f32.mrf.mxu0
        %v1314 = vpop.f32.mrf.mxu0
        %v1315 = vadd.f32 %v1126, %v1314
        %v1316 = vpop.f32.mrf.mxu0
        %1317 = vmatprep.mubr.bf16.mxu0 0
        %1318 = vmatmul.mubr.bf16.gmra.mxu0 %v1178
        %v1319 = vpop.f32.mrf.mxu0
        %v1320 = vadd.f32 %v1126, %v1319
        %v1321 = vpop.f32.mrf.mxu0
        %v1322 = vpop.f32.mrf.mxu0
        %v1323 = vadd.f32 %v1126, %v1322
        %v1324 = vpop.f32.mrf.mxu0
        %1325 = vmatprep.mubr.bf16.mxu0 0
        %1326 = vmatmul.mubr.bf16.gmra.mxu0 %v1181
        %v1327 = vpop.f32.mrf.mxu0
        %v1328 = vadd.f32 %v1126, %v1327
        %v1329 = vpop.f32.mrf.mxu0
        %v1330 = vpop.f32.mrf.mxu0
        %v1331 = vadd.f32 %v1126, %v1330
        %v1332 = vpop.f32.mrf.mxu0
        %1333 = vmatprep.mubr.bf16.mxu0 0
        %1334 = vmatmul.mubr.bf16.gmra.mxu0 %v1184
        %v1335 = vpop.f32.mrf.mxu0
        %v1336 = vadd.f32 %v1126, %v1335
        %v1337 = vpop.f32.mrf.mxu0
        %v1338 = vpop.f32.mrf.mxu0
        %v1339 = vadd.f32 %v1126, %v1338
        %v1340 = vpop.f32.mrf.mxu0
        %1341 = vmatprep.mubr.bf16.mxu0 0
        %1342 = vmatmul.mubr.bf16.gmra.mxu0 %v1187
        %v1343 = vpop.f32.mrf.mxu0
        %v1344 = vadd.f32 %v1126, %v1343
        %v1345 = vpop.f32.mrf.mxu0
        %v1346 = vpop.f32.mrf.mxu0
        %v1347 = vadd.f32 %v1126, %v1346
        %v1348 = vpop.f32.mrf.mxu0
        %1349 = vdwg.mxu0
        %vm1350 = vcmp.ge.f32.partialorder %v1224, 0.0
        %vm1351 = vcmp.ge.f32.partialorder %v1227, 0.0
        %vm1352 = vcmp.ge.f32.partialorder %v1232, 0.0
        %vm1353 = vcmp.ge.f32.partialorder %v1235, 0.0
        %vm1354 = vcmp.ge.f32.partialorder %v1240, 0.0
        %vm1355 = vcmp.ge.f32.partialorder %v1243, 0.0
        %vm1356 = vcmp.ge.f32.partialorder %v1248, 0.0
        %vm1357 = vcmp.ge.f32.partialorder %v1251, 0.0
        %vm1358 = vcmp.ge.f32.partialorder %v1256, 0.0
        %vm1359 = vcmp.ge.f32.partialorder %v1259, 0.0
        %vm1360 = vcmp.ge.f32.partialorder %v1264, 0.0
        %vm1361 = vcmp.ge.f32.partialorder %v1267, 0.0
        %vm1362 = vcmp.ge.f32.partialorder %v1272, 0.0
        %vm1363 = vcmp.ge.f32.partialorder %v1275, 0.0
        %vm1364 = vcmp.ge.f32.partialorder %v1280, 0.0
        %vm1365 = vcmp.ge.f32.partialorder %v1283, 0.0
        %vm1366 = vcmp.ge.f32.partialorder %v1288, 0.0
        %vm1367 = vcmp.ge.f32.partialorder %v1291, 0.0
        %vm1368 = vcmp.ge.f32.partialorder %v1296, 0.0
        %vm1369 = vcmp.ge.f32.partialorder %v1299, 0.0
        %vm1370 = vcmp.ge.f32.partialorder %v1304, 0.0
        %vm1371 = vcmp.ge.f32.partialorder %v1307, 0.0
        %vm1372 = vcmp.ge.f32.partialorder %v1312, 0.0
        %vm1373 = vcmp.ge.f32.partialorder %v1315, 0.0
        %vm1374 = vcmp.ge.f32.partialorder %v1320, 0.0
        %vm1375 = vcmp.ge.f32.partialorder %v1323, 0.0
        %vm1376 = vcmp.ge.f32.partialorder %v1328, 0.0
        %vm1377 = vcmp.ge.f32.partialorder %v1331, 0.0
        %vm1378 = vcmp.ge.f32.partialorder %v1336, 0.0
        %vm1379 = vcmp.ge.f32.partialorder %v1339, 0.0
        %vm1380 = vcmp.ge.f32.partialorder %v1344, 0.0
        %vm1381 = vcmp.ge.f32.partialorder %v1347, 0.0
        %v1382 = vmul.f32 %v1224, 0.1
        %v1383 = vmul.f32 %v1227, 0.1
        %v1384 = vmul.f32 %v1232, 0.1
        %v1385 = vmul.f32 %v1235, 0.1
        %v1386 = vmul.f32 %v1240, 0.1
        %v1387 = vmul.f32 %v1243, 0.1
        %v1388 = vmul.f32 %v1248, 0.1
        %v1389 = vmul.f32 %v1251, 0.1
        %v1390 = vmul.f32 %v1256, 0.1
        %v1391 = vmul.f32 %v1259, 0.1
        %v1392 = vmul.f32 %v1264, 0.1
        %v1393 = vmul.f32 %v1267, 0.1
        %v1394 = vmul.f32 %v1272, 0.1
        %v1395 = vmul.f32 %v1275, 0.1
        %v1396 = vmul.f32 %v1280, 0.1
        %v1397 = vmul.f32 %v1283, 0.1
        %v1398 = vmul.f32 %v1288, 0.1
        %v1399 = vmul.f32 %v1291, 0.1
        %v1400 = vmul.f32 %v1296, 0.1
        %v1401 = vmul.f32 %v1299, 0.1
        %v1402 = vmul.f32 %v1304, 0.1
        %v1403 = vmul.f32 %v1307, 0.1
        %v1404 = vmul.f32 %v1312, 0.1
        %v1405 = vmul.f32 %v1315, 0.1
        %v1406 = vmul.f32 %v1320, 0.1
        %v1407 = vmul.f32 %v1323, 0.1
        %v1408 = vmul.f32 %v1328, 0.1
        %v1409 = vmul.f32 %v1331, 0.1
        %v1410 = vmul.f32 %v1336, 0.1
        %v1411 = vmul.f32 %v1339, 0.1
        %v1412 = vmul.f32 %v1344, 0.1
        %v1413 = vmul.f32 %v1347, 0.1
        %v1414 = vsel %vm1350, %v1224, %v1382
        %v1415 = vsel %vm1351, %v1227, %v1383
        %v1416 = vsel %vm1352, %v1232, %v1384
        %v1417 = vsel %vm1353, %v1235, %v1385
        %v1418 = vsel %vm1354, %v1240, %v1386
        %v1419 = vsel %vm1355, %v1243, %v1387
        %v1420 = vsel %vm1356, %v1248, %v1388
        %v1421 = vsel %vm1357, %v1251, %v1389
        %v1422 = vsel %vm1358, %v1256, %v1390
        %v1423 = vsel %vm1359, %v1259, %v1391
        %v1424 = vsel %vm1360, %v1264, %v1392
        %v1425 = vsel %vm1361, %v1267, %v1393
        %v1426 = vsel %vm1362, %v1272, %v1394
        %v1427 = vsel %vm1363, %v1275, %v1395
        %v1428 = vsel %vm1364, %v1280, %v1396
        %v1429 = vsel %vm1365, %v1283, %v1397
        %v1430 = vsel %vm1366, %v1288, %v1398
        %v1431 = vsel %vm1367, %v1291, %v1399
        %v1432 = vsel %vm1368, %v1296, %v1400
        %v1433 = vsel %vm1369, %v1299, %v1401
        %v1434 = vsel %vm1370, %v1304, %v1402
        %v1435 = vsel %vm1371, %v1307, %v1403
        %v1436 = vsel %vm1372, %v1312, %v1404
        %v1437 = vsel %vm1373, %v1315, %v1405
        %v1438 = vsel %vm1374, %v1320, %v1406
        %v1439 = vsel %vm1375, %v1323, %v1407
        %v1440 = vsel %vm1376, %v1328, %v1408
        %v1441 = vsel %vm1377, %v1331, %v1409
        %v1442 = vsel %vm1378, %v1336, %v1410
        %v1443 = vsel %vm1379, %v1339, %v1411
        %v1444 = vsel %vm1380, %v1344, %v1412
        %v1445 = vsel %vm1381, %v1347, %v1413
        %v1446 = vpack.c.bf16 %v1415, %v1414
        %v1447 = vpack.c.bf16 %v1417, %v1416
        %v1448 = vpack.c.bf16 %v1419, %v1418
        %v1449 = vpack.c.bf16 %v1421, %v1420
        %v1450 = vpack.c.bf16 %v1423, %v1422
        %v1451 = vpack.c.bf16 %v1425, %v1424
        %v1452 = vpack.c.bf16 %v1427, %v1426
        %v1453 = vpack.c.bf16 %v1429, %v1428
        %v1454 = vpack.c.bf16 %v1431, %v1430
        %v1455 = vpack.c.bf16 %v1433, %v1432
        %v1456 = vpack.c.bf16 %v1435, %v1434
        %v1457 = vpack.c.bf16 %v1437, %v1436
        %v1458 = vpack.c.bf16 %v1439, %v1438
        %v1459 = vpack.c.bf16 %v1441, %v1440
        %v1460 = vpack.c.bf16 %v1443, %v1442
        %v1461 = vpack.c.bf16 %v1445, %v1444
        %v1462 = vld [vmem:[%s5] sm:$0xf]
        %v1463 = vld [vmem:[%s5 + $0x4] sm:$0xf]
        %v1464 = vld [vmem:[%s5 + $0x8] sm:$0xf]
        %v1465 = vld [vmem:[%s5 + $0xc] sm:$0xf]
        %v1466 = vld [vmem:[%s5 + $0x10] sm:$0xf]
        %v1467 = vld [vmem:[%s5 + $0x14] sm:$0xf]
        %v1468 = vld [vmem:[%s5 + $0x18] sm:$0xf]
        %v1469 = vld [vmem:[%s5 + $0x1c] sm:$0xf]
        %v1470 = vld [vmem:[%s6] sm:$0x1]
        %v1472 = vlaneseq
        %v1473 = vshrl.u32 %v1472, 7
        %v1474 = vsub.s32 0, %v1473
        %v1475 = vrot.slane %v1470, %v1474
        %v1485 = vunpack.c.l.b16 %v1462
        %v1486 = vunpack.c.l.b16 %v1463
        %v1487 = vunpack.c.l.b16 %v1464
        %v1488 = vunpack.c.l.b16 %v1465
        %v1489 = vunpack.c.l.b16 %v1466
        %v1490 = vunpack.c.l.b16 %v1467
        %v1491 = vunpack.c.l.b16 %v1468
        %v1492 = vunpack.c.l.b16 %v1469
        %v1493 = vpack.c.b16 %v1486, %v1485
        %v1494 = vpack.c.b16 %v1488, %v1487
        %v1495 = vpack.c.b16 %v1490, %v1489
        %v1496 = vpack.c.b16 %v1492, %v1491
        %vm1501 = vcmask 523264
        %v1503 = vsel %vm1501, %v1446, 0
        %v1506 = vsel %vm1501, %v1447, 0
        %v1509 = vsel %vm1501, %v1448, 0
        %v1512 = vsel %vm1501, %v1449, 0
        %v1515 = vsel %vm1501, %v1450, 0
        %v1518 = vsel %vm1501, %v1451, 0
        %v1521 = vsel %vm1501, %v1452, 0
        %v1524 = vsel %vm1501, %v1453, 0
        %v1527 = vsel %vm1501, %v1454, 0
        %v1530 = vsel %vm1501, %v1455, 0
        %v1533 = vsel %vm1501, %v1456, 0
        %v1536 = vsel %vm1501, %v1457, 0
        %v1539 = vsel %vm1501, %v1458, 0
        %v1542 = vsel %vm1501, %v1459, 0
        %v1545 = vsel %vm1501, %v1460, 0
        %v1548 = vsel %vm1501, %v1461, 0
        %1550 = vmatprep.subr.bf16.mxu0 0
        %1551 = vmatpush1.bf16.msra.mxu0 0
        %1552 = vmatprep.subr.bf16.mxu0 0
        %1553 = vmatpush1.bf16.msra.mxu0 0
        %1554 = vmatprep.subr.bf16.mxu0 0
        %1555 = vmatpush1.bf16.msra.mxu0 0
        %1556 = vmatprep.subr.bf16.mxu0 0
        %1557 = vmatpush1.bf16.msra.mxu0 0
        %1558 = vmatprep.subr.bf16.mxu0 0
        %1559 = vmatpush1.bf16.msra.mxu0 %v1496
        %1560 = vmatprep.subr.bf16.mxu0 0
        %1561 = vmatpush1.bf16.msra.mxu0 %v1495
        %1562 = vmatprep.subr.bf16.mxu0 0
        %1563 = vmatpush1.bf16.msra.mxu0 %v1494
        %1564 = vmatprep.subr.bf16.mxu0 0
        %1565 = vmatpush1.bf16.msra.mxu0 %v1493
        %1566 = vmatprep.subr.bf16.mxu0 0
        %1567 = vmatpush2.bf16.msra.mxu0 0
        %1568 = vmatprep.subr.bf16.mxu0 0
        %1569 = vmatpush2.bf16.msra.mxu0 0
        %1570 = vmatprep.subr.bf16.mxu0 0
        %1571 = vmatpush2.bf16.msra.mxu0 0
        %1572 = vmatprep.subr.bf16.mxu0 0
        %1573 = vmatpush2.bf16.msra.mxu0 0
        %1574 = vmatprep.subr.bf16.mxu0 0
        %1575 = vmatpush2.bf16.msra.mxu0 0
        %1576 = vmatprep.subr.bf16.mxu0 0
        %1577 = vmatpush2.bf16.msra.mxu0 0
        %1578 = vmatprep.subr.bf16.mxu0 0
        %1579 = vmatpush2.bf16.msra.mxu0 0
        %1580 = vmatprep.subr.bf16.mxu0 0
        %1581 = vmatpush2.bf16.msra.mxu0 0
        %1582 = vmatprep.mubr.bf16.mxu0 0
        %1583 = vmatmul.mubr.bf16.gmra.mxu0 %v1503
        %v1584 = vpop.f32.mrf.mxu0
        %v1585 = vadd.f32 %v1475, %v1584
        %v1586 = vpop.f32.mrf.mxu0
        %v1587 = vpop.f32.mrf.mxu0
        %v1588 = vadd.f32 %v1475, %v1587
        %v1589 = vpop.f32.mrf.mxu0
        %1590 = vmatprep.mubr.bf16.mxu0 0
        %1591 = vmatmul.mubr.bf16.gmra.mxu0 %v1506
        %v1592 = vpop.f32.mrf.mxu0
        %v1593 = vadd.f32 %v1475, %v1592
        %v1594 = vpop.f32.mrf.mxu0
        %v1595 = vpop.f32.mrf.mxu0
        %v1596 = vadd.f32 %v1475, %v1595
        %v1597 = vpop.f32.mrf.mxu0
        %1598 = vmatprep.mubr.bf16.mxu0 0
        %1599 = vmatmul.mubr.bf16.gmra.mxu0 %v1509
        %v1600 = vpop.f32.mrf.mxu0
        %v1601 = vadd.f32 %v1475, %v1600
        %v1602 = vpop.f32.mrf.mxu0
        %v1603 = vpop.f32.mrf.mxu0
        %v1604 = vadd.f32 %v1475, %v1603
        %v1605 = vpop.f32.mrf.mxu0
        %1606 = vmatprep.mubr.bf16.mxu0 0
        %1607 = vmatmul.mubr.bf16.gmra.mxu0 %v1512
        %v1608 = vpop.f32.mrf.mxu0
        %v1609 = vadd.f32 %v1475, %v1608
        %v1610 = vpop.f32.mrf.mxu0
        %v1611 = vpop.f32.mrf.mxu0
        %v1612 = vadd.f32 %v1475, %v1611
        %v1613 = vpop.f32.mrf.mxu0
        %1614 = vmatprep.mubr.bf16.mxu0 0
        %1615 = vmatmul.mubr.bf16.gmra.mxu0 %v1515
        %v1616 = vpop.f32.mrf.mxu0
        %v1617 = vadd.f32 %v1475, %v1616
        %v1618 = vpop.f32.mrf.mxu0
        %v1619 = vpop.f32.mrf.mxu0
        %v1620 = vadd.f32 %v1475, %v1619
        %v1621 = vpop.f32.mrf.mxu0
        %1622 = vmatprep.mubr.bf16.mxu0 0
        %1623 = vmatmul.mubr.bf16.gmra.mxu0 %v1518
        %v1624 = vpop.f32.mrf.mxu0
        %v1625 = vadd.f32 %v1475, %v1624
        %v1626 = vpop.f32.mrf.mxu0
        %v1627 = vpop.f32.mrf.mxu0
        %v1628 = vadd.f32 %v1475, %v1627
        %v1629 = vpop.f32.mrf.mxu0
        %1630 = vmatprep.mubr.bf16.mxu0 0
        %1631 = vmatmul.mubr.bf16.gmra.mxu0 %v1521
        %v1632 = vpop.f32.mrf.mxu0
        %v1633 = vadd.f32 %v1475, %v1632
        %v1634 = vpop.f32.mrf.mxu0
        %v1635 = vpop.f32.mrf.mxu0
        %v1636 = vadd.f32 %v1475, %v1635
        %v1637 = vpop.f32.mrf.mxu0
        %1638 = vmatprep.mubr.bf16.mxu0 0
        %1639 = vmatmul.mubr.bf16.gmra.mxu0 %v1524
        %v1640 = vpop.f32.mrf.mxu0
        %v1641 = vadd.f32 %v1475, %v1640
        %v1642 = vpop.f32.mrf.mxu0
        %v1643 = vpop.f32.mrf.mxu0
        %v1644 = vadd.f32 %v1475, %v1643
        %v1645 = vpop.f32.mrf.mxu0
        %1646 = vmatprep.mubr.bf16.mxu0 0
        %1647 = vmatmul.mubr.bf16.gmra.mxu0 %v1527
        %v1648 = vpop.f32.mrf.mxu0
        %v1649 = vadd.f32 %v1475, %v1648
        %v1650 = vpop.f32.mrf.mxu0
        %v1651 = vpop.f32.mrf.mxu0
        %v1652 = vadd.f32 %v1475, %v1651
        %v1653 = vpop.f32.mrf.mxu0
        %1654 = vmatprep.mubr.bf16.mxu0 0
        %1655 = vmatmul.mubr.bf16.gmra.mxu0 %v1530
        %v1656 = vpop.f32.mrf.mxu0
        %v1657 = vadd.f32 %v1475, %v1656
        %v1658 = vpop.f32.mrf.mxu0
        %v1659 = vpop.f32.mrf.mxu0
        %v1660 = vadd.f32 %v1475, %v1659
        %v1661 = vpop.f32.mrf.mxu0
        %1662 = vmatprep.mubr.bf16.mxu0 0
        %1663 = vmatmul.mubr.bf16.gmra.mxu0 %v1533
        %v1664 = vpop.f32.mrf.mxu0
        %v1665 = vadd.f32 %v1475, %v1664
        %v1666 = vpop.f32.mrf.mxu0
        %v1667 = vpop.f32.mrf.mxu0
        %v1668 = vadd.f32 %v1475, %v1667
        %v1669 = vpop.f32.mrf.mxu0
        %1670 = vmatprep.mubr.bf16.mxu0 0
        %1671 = vmatmul.mubr.bf16.gmra.mxu0 %v1536
        %v1672 = vpop.f32.mrf.mxu0
        %v1673 = vadd.f32 %v1475, %v1672
        %v1674 = vpop.f32.mrf.mxu0
        %v1675 = vpop.f32.mrf.mxu0
        %v1676 = vadd.f32 %v1475, %v1675
        %v1677 = vpop.f32.mrf.mxu0
        %1678 = vmatprep.mubr.bf16.mxu0 0
        %1679 = vmatmul.mubr.bf16.gmra.mxu0 %v1539
        %v1680 = vpop.f32.mrf.mxu0
        %v1681 = vadd.f32 %v1475, %v1680
        %v1682 = vpop.f32.mrf.mxu0
        %v1683 = vpop.f32.mrf.mxu0
        %v1684 = vadd.f32 %v1475, %v1683
        %v1685 = vpop.f32.mrf.mxu0
        %1686 = vmatprep.mubr.bf16.mxu0 0
        %1687 = vmatmul.mubr.bf16.gmra.mxu0 %v1542
        %v1688 = vpop.f32.mrf.mxu0
        %v1689 = vadd.f32 %v1475, %v1688
        %v1690 = vpop.f32.mrf.mxu0
        %v1691 = vpop.f32.mrf.mxu0
        %v1692 = vadd.f32 %v1475, %v1691
        %v1693 = vpop.f32.mrf.mxu0
        %1694 = vmatprep.mubr.bf16.mxu0 0
        %1695 = vmatmul.mubr.bf16.gmra.mxu0 %v1545
        %v1696 = vpop.f32.mrf.mxu0
        %v1697 = vadd.f32 %v1475, %v1696
        %v1698 = vpop.f32.mrf.mxu0
        %v1699 = vpop.f32.mrf.mxu0
        %v1700 = vadd.f32 %v1475, %v1699
        %v1701 = vpop.f32.mrf.mxu0
        %1702 = vmatprep.mubr.bf16.mxu0 0
        %1703 = vmatmul.mubr.bf16.gmra.mxu0 %v1548
        %v1704 = vpop.f32.mrf.mxu0
        %v1705 = vadd.f32 %v1475, %v1704
        %v1706 = vpop.f32.mrf.mxu0
        %v1707 = vpop.f32.mrf.mxu0
        %v1708 = vadd.f32 %v1475, %v1707
        %v1709 = vpop.f32.mrf.mxu0
        %1710 = vdwg.mxu0
        %v1711 = vadd.f32 %v1585, 1.0
        %v1712 = vadd.f32 %v1588, 1.0
        %v1713 = vadd.f32 %v1593, 1.0
        %v1714 = vadd.f32 %v1596, 1.0
        %v1715 = vadd.f32 %v1601, 1.0
        %v1716 = vadd.f32 %v1604, 1.0
        %v1717 = vadd.f32 %v1609, 1.0
        %v1718 = vadd.f32 %v1612, 1.0
        %v1719 = vadd.f32 %v1617, 1.0
        %v1720 = vadd.f32 %v1620, 1.0
        %v1721 = vadd.f32 %v1625, 1.0
        %v1722 = vadd.f32 %v1628, 1.0
        %v1723 = vadd.f32 %v1633, 1.0
        %v1724 = vadd.f32 %v1636, 1.0
        %v1725 = vadd.f32 %v1641, 1.0
        %v1726 = vadd.f32 %v1644, 1.0
        %v1727 = vadd.f32 %v1649, 1.0
        %v1728 = vadd.f32 %v1652, 1.0
        %v1729 = vadd.f32 %v1657, 1.0
        %v1730 = vadd.f32 %v1660, 1.0
        %v1731 = vadd.f32 %v1665, 1.0
        %v1732 = vadd.f32 %v1668, 1.0
        %v1733 = vadd.f32 %v1673, 1.0
        %v1734 = vadd.f32 %v1676, 1.0
        %v1735 = vadd.f32 %v1681, 1.0
        %v1736 = vadd.f32 %v1684, 1.0
        %v1737 = vadd.f32 %v1689, 1.0
        %v1738 = vadd.f32 %v1692, 1.0
        %v1739 = vadd.f32 %v1697, 1.0
        %v1740 = vadd.f32 %v1700, 1.0
        %v1741 = vadd.f32 %v1705, 1.0
        %v1742 = vadd.f32 %v1708, 1.0
        %v1743 = vmul.f32 %v1037, %v1711
        %v1744 = vmul.f32 %v1038, %v1712
        %v1745 = vmul.f32 %v1039, %v1713
        %v1746 = vmul.f32 %v1040, %v1714
        %v1747 = vmul.f32 %v1041, %v1715
        %v1748 = vmul.f32 %v1042, %v1716
        %v1749 = vmul.f32 %v1043, %v1717
        %v1750 = vmul.f32 %v1044, %v1718
        %v1751 = vmul.f32 %v1045, %v1719
        %v1752 = vmul.f32 %v1046, %v1720
        %v1753 = vmul.f32 %v1047, %v1721
        %v1754 = vmul.f32 %v1048, %v1722
        %v1755 = vmul.f32 %v1049, %v1723
        %v1756 = vmul.f32 %v1050, %v1724
        %v1757 = vmul.f32 %v1051, %v1725
        %v1758 = vmul.f32 %v1052, %v1726
        %v1759 = vmul.f32 %v1053, %v1727
        %v1760 = vmul.f32 %v1054, %v1728
        %v1761 = vmul.f32 %v1055, %v1729
        %v1762 = vmul.f32 %v1056, %v1730
        %v1763 = vmul.f32 %v1057, %v1731
        %v1764 = vmul.f32 %v1058, %v1732
        %v1765 = vmul.f32 %v1059, %v1733
        %v1766 = vmul.f32 %v1060, %v1734
        %v1767 = vmul.f32 %v1061, %v1735
        %v1768 = vmul.f32 %v1062, %v1736
        %v1769 = vmul.f32 %v1063, %v1737
        %v1770 = vmul.f32 %v1064, %v1738
        %v1771 = vmul.f32 %v1065, %v1739
        %v1772 = vmul.f32 %v1066, %v1740
        %v1773 = vmul.f32 %v1067, %v1741
        %v1774 = vmul.f32 %v1068, %v1742
        %1807 = vrot.lane.b32.xlu0 %v1585, 64
        %v1808 = vpop.permute.xlu0 %1807
        %1809 = vrot.lane.b32.xlu0 %v1588, 64
        %v1810 = vpop.permute.xlu0 %1809
        %1811 = vrot.lane.b32.xlu0 %v1593, 64
        %v1812 = vpop.permute.xlu0 %1811
        %1813 = vrot.lane.b32.xlu0 %v1596, 64
        %v1814 = vpop.permute.xlu0 %1813
        %1815 = vrot.lane.b32.xlu0 %v1601, 64
        %v1816 = vpop.permute.xlu0 %1815
        %1817 = vrot.lane.b32.xlu0 %v1604, 64
        %v1818 = vpop.permute.xlu0 %1817
        %1819 = vrot.lane.b32.xlu0 %v1609, 64
        %v1820 = vpop.permute.xlu0 %1819
        %1821 = vrot.lane.b32.xlu0 %v1612, 64
        %v1822 = vpop.permute.xlu0 %1821
        %1823 = vrot.lane.b32.xlu0 %v1617, 64
        %v1824 = vpop.permute.xlu0 %1823
        %1825 = vrot.lane.b32.xlu0 %v1620, 64
        %v1826 = vpop.permute.xlu0 %1825
        %1827 = vrot.lane.b32.xlu0 %v1625, 64
        %v1828 = vpop.permute.xlu0 %1827
        %1829 = vrot.lane.b32.xlu0 %v1628, 64
        %v1830 = vpop.permute.xlu0 %1829
        %1831 = vrot.lane.b32.xlu0 %v1633, 64
        %v1832 = vpop.permute.xlu0 %1831
        %1833 = vrot.lane.b32.xlu0 %v1636, 64
        %v1834 = vpop.permute.xlu0 %1833
        %1835 = vrot.lane.b32.xlu0 %v1641, 64
        %v1836 = vpop.permute.xlu0 %1835
        %1837 = vrot.lane.b32.xlu0 %v1644, 64
        %v1838 = vpop.permute.xlu0 %1837
        %1839 = vrot.lane.b32.xlu0 %v1649, 64
        %v1840 = vpop.permute.xlu0 %1839
        %1841 = vrot.lane.b32.xlu0 %v1652, 64
        %v1842 = vpop.permute.xlu0 %1841
        %1843 = vrot.lane.b32.xlu0 %v1657, 64
        %v1844 = vpop.permute.xlu0 %1843
        %1845 = vrot.lane.b32.xlu0 %v1660, 64
        %v1846 = vpop.permute.xlu0 %1845
        %1847 = vrot.lane.b32.xlu0 %v1665, 64
        %v1848 = vpop.permute.xlu0 %1847
        %1849 = vrot.lane.b32.xlu0 %v1668, 64
        %v1850 = vpop.permute.xlu0 %1849
        %1851 = vrot.lane.b32.xlu0 %v1673, 64
        %v1852 = vpop.permute.xlu0 %1851
        %1853 = vrot.lane.b32.xlu0 %v1676, 64
        %v1854 = vpop.permute.xlu0 %1853
        %1855 = vrot.lane.b32.xlu0 %v1681, 64
        %v1856 = vpop.permute.xlu0 %1855
        %1857 = vrot.lane.b32.xlu0 %v1684, 64
        %v1858 = vpop.permute.xlu0 %1857
        %1859 = vrot.lane.b32.xlu0 %v1689, 64
        %v1860 = vpop.permute.xlu0 %1859
        %1861 = vrot.lane.b32.xlu0 %v1692, 64
        %v1862 = vpop.permute.xlu0 %1861
        %1863 = vrot.lane.b32.xlu0 %v1697, 64
        %v1864 = vpop.permute.xlu0 %1863
        %1865 = vrot.lane.b32.xlu0 %v1700, 64
        %v1866 = vpop.permute.xlu0 %1865
        %1867 = vrot.lane.b32.xlu0 %v1705, 64
        %v1868 = vpop.permute.xlu0 %1867
        %1869 = vrot.lane.b32.xlu0 %v1708, 64
        %v1870 = vpop.permute.xlu0 %1869
        %v1903 = vadd.f32 %v1743, %v1808
        %v1904 = vadd.f32 %v1744, %v1810
        %v1905 = vadd.f32 %v1745, %v1812
        %v1906 = vadd.f32 %v1746, %v1814
        %v1907 = vadd.f32 %v1747, %v1816
        %v1908 = vadd.f32 %v1748, %v1818
        %v1909 = vadd.f32 %v1749, %v1820
        %v1910 = vadd.f32 %v1750, %v1822
        %v1911 = vadd.f32 %v1751, %v1824
        %v1912 = vadd.f32 %v1752, %v1826
        %v1913 = vadd.f32 %v1753, %v1828
        %v1914 = vadd.f32 %v1754, %v1830
        %v1915 = vadd.f32 %v1755, %v1832
        %v1916 = vadd.f32 %v1756, %v1834
        %v1917 = vadd.f32 %v1757, %v1836
        %v1918 = vadd.f32 %v1758, %v1838
        %v1919 = vadd.f32 %v1759, %v1840
        %v1920 = vadd.f32 %v1760, %v1842
        %v1921 = vadd.f32 %v1761, %v1844
        %v1922 = vadd.f32 %v1762, %v1846
        %v1923 = vadd.f32 %v1763, %v1848
        %v1924 = vadd.f32 %v1764, %v1850
        %v1925 = vadd.f32 %v1765, %v1852
        %v1926 = vadd.f32 %v1766, %v1854
        %v1927 = vadd.f32 %v1767, %v1856
        %v1928 = vadd.f32 %v1768, %v1858
        %v1929 = vadd.f32 %v1769, %v1860
        %v1930 = vadd.f32 %v1770, %v1862
        %v1931 = vadd.f32 %v1771, %v1864
        %v1932 = vadd.f32 %v1772, %v1866
        %v1933 = vadd.f32 %v1773, %v1868
        %v1934 = vadd.f32 %v1774, %v1870
        %v1935 = vpack.c.bf16 %v1904, %v1903
        %v1936 = vpack.c.bf16 %v1906, %v1905
        %v1937 = vpack.c.bf16 %v1908, %v1907
        %v1938 = vpack.c.bf16 %v1910, %v1909
        %v1939 = vpack.c.bf16 %v1912, %v1911
        %v1940 = vpack.c.bf16 %v1914, %v1913
        %v1941 = vpack.c.bf16 %v1916, %v1915
        %v1942 = vpack.c.bf16 %v1918, %v1917
        %v1943 = vpack.c.bf16 %v1920, %v1919
        %v1944 = vpack.c.bf16 %v1922, %v1921
        %v1945 = vpack.c.bf16 %v1924, %v1923
        %v1946 = vpack.c.bf16 %v1926, %v1925
        %v1947 = vpack.c.bf16 %v1928, %v1927
        %v1948 = vpack.c.bf16 %v1930, %v1929
        %v1949 = vpack.c.bf16 %v1932, %v1931
        %v1950 = vpack.c.bf16 %v1934, %v1933
        %vm1951 = vcmask 1043456
        %vm1952 = vcmask 523268
        %vm1953 = vmor %vm1952, %vm1951
        %1954 = vst.msk [vmem:[#allocation2] sm:$0xff] %vm1953, 0
        %1955 = vst.msk [vmem:[#allocation2 + $0x8] sm:$0xff] %vm1953, 0
        %vm1956 = vcmask 1040384
        %vm1957 = vsmask.f32 256
        %vm1958 = vmand %vm1956, %vm1957
        %vm1959 = vcmask 520196
        %vm1960 = vsmask.f32 4352
        %vm1961 = vmand %vm1959, %vm1960
        %vm1962 = vmor %vm1961, %vm1958
        %v1963 = vld [vmem:[#allocation2 + $0x10] sm:$0x11]
        %v1964 = vsel %vm1962, 0, %v1963
        %1965 = vst [vmem:[#allocation2 + $0x10] sm:$0x11] %v1964
        %vm1966 = vcmask 1043459
        %vm1967 = vsmask.f32 7950
        %vm1968 = vmand %vm1966, %vm1967
        %vm1969 = vcmask 523271
        %vm1970 = vsmask.f32 7966
        %vm1971 = vmand %vm1969, %vm1970
        %vm1972 = vmor %vm1971, %vm1968
        %v1973 = vld [vmem:[#allocation2 + $0x108] sm:$0x88]
        %v1974 = vsel %vm1972, 0, %v1973
        %1975 = vst [vmem:[#allocation2 + $0x108] sm:$0x88] %v1974
        %1976 = vst.msk [vmem:[#allocation2 + $0x110] sm:$0xff] %vm1953, 0
        %1977 = vst.msk [vmem:[#allocation2 + $0x118] sm:$0xff] %vm1953, 0
        %v1978 = vsel %vm1005, 1, 0
        %v1979 = vsel %vm1006, 1, 0
        %v1980 = vsel %vm1007, 1, 0
        %v1981 = vsel %vm1008, 1, 0
        %v1982 = vsel %vm1009, 1, 0
        %v1983 = vsel %vm1010, 1, 0
        %v1984 = vsel %vm1011, 1, 0
        %v1985 = vsel %vm1012, 1, 0
        %v1986 = vsel %vm1013, 1, 0
        %v1987 = vsel %vm1014, 1, 0
        %v1988 = vsel %vm1015, 1, 0
        %v1989 = vsel %vm1016, 1, 0
        %v1990 = vsel %vm1017, 1, 0
        %v1991 = vsel %vm1018, 1, 0
        %v1992 = vsel %vm1019, 1, 0
        %v1993 = vsel %vm1020, 1, 0
        %v1994 = vsel %vm1021, 1, 0
        %v1995 = vsel %vm1022, 1, 0
        %v1996 = vsel %vm1023, 1, 0
        %v1997 = vsel %vm1024, 1, 0
        %v1998 = vsel %vm1025, 1, 0
        %v1999 = vsel %vm1026, 1, 0
        %v2000 = vsel %vm1027, 1, 0
        %v2001 = vsel %vm1028, 1, 0
        %v2002 = vsel %vm1029, 1, 0
        %v2003 = vsel %vm1030, 1, 0
        %v2004 = vsel %vm1031, 1, 0
        %v2005 = vsel %vm1032, 1, 0
        %v2006 = vsel %vm1033, 1, 0
        %v2007 = vsel %vm1034, 1, 0
        %v2008 = vsel %vm1035, 1, 0
        %v2009 = vsel %vm1036, 1, 0
        %vm2010 = vcmp.eq.s32.totalorder %v1978, 1
        %vm2011 = vcmp.eq.s32.totalorder %v1979, 1
        %vm2012 = vcmp.eq.s32.totalorder %v1980, 1
        %vm2013 = vcmp.eq.s32.totalorder %v1981, 1
        %vm2014 = vcmp.eq.s32.totalorder %v1982, 1
        %vm2015 = vcmp.eq.s32.totalorder %v1983, 1
        %vm2016 = vcmp.eq.s32.totalorder %v1984, 1
        %vm2017 = vcmp.eq.s32.totalorder %v1985, 1
        %vm2018 = vcmp.eq.s32.totalorder %v1986, 1
        %vm2019 = vcmp.eq.s32.totalorder %v1987, 1
        %vm2020 = vcmp.eq.s32.totalorder %v1988, 1
        %vm2021 = vcmp.eq.s32.totalorder %v1989, 1
        %vm2022 = vcmp.eq.s32.totalorder %v1990, 1
        %vm2023 = vcmp.eq.s32.totalorder %v1991, 1
        %vm2024 = vcmp.eq.s32.totalorder %v1992, 1
        %vm2025 = vcmp.eq.s32.totalorder %v1993, 1
        %vm2026 = vcmp.eq.s32.totalorder %v1994, 1
        %vm2027 = vcmp.eq.s32.totalorder %v1995, 1
        %vm2028 = vcmp.eq.s32.totalorder %v1996, 1
        %vm2029 = vcmp.eq.s32.totalorder %v1997, 1
        %vm2030 = vcmp.eq.s32.totalorder %v1998, 1
        %vm2031 = vcmp.eq.s32.totalorder %v1999, 1
        %vm2032 = vcmp.eq.s32.totalorder %v2000, 1
        %vm2033 = vcmp.eq.s32.totalorder %v2001, 1
        %vm2034 = vcmp.eq.s32.totalorder %v2002, 1
        %vm2035 = vcmp.eq.s32.totalorder %v2003, 1
        %vm2036 = vcmp.eq.s32.totalorder %v2004, 1
        %vm2037 = vcmp.eq.s32.totalorder %v2005, 1
        %vm2038 = vcmp.eq.s32.totalorder %v2006, 1
        %vm2039 = vcmp.eq.s32.totalorder %v2007, 1
        %vm2040 = vcmp.eq.s32.totalorder %v2008, 1
        %vm2041 = vcmp.eq.s32.totalorder %v2009, 1
        %vm2042 = vmpackc.low %vm2010, %vm2010
        %vm2043 = vmpackc.low %vm2011, %vm2011
        %vm2044 = vmpackc.low %vm2012, %vm2012
        %vm2045 = vmpackc.low %vm2013, %vm2013
        %vm2046 = vmpackc.low %vm2014, %vm2014
        %vm2047 = vmpackc.low %vm2015, %vm2015
        %vm2048 = vmpackc.low %vm2016, %vm2016
        %vm2049 = vmpackc.low %vm2017, %vm2017
        %vm2050 = vmpackc.low %vm2018, %vm2018
        %vm2051 = vmpackc.low %vm2019, %vm2019
        %vm2052 = vmpackc.low %vm2020, %vm2020
        %vm2053 = vmpackc.low %vm2021, %vm2021
        %vm2054 = vmpackc.low %vm2022, %vm2022
        %vm2055 = vmpackc.low %vm2023, %vm2023
        %vm2056 = vmpackc.low %vm2024, %vm2024
        %vm2057 = vmpackc.low %vm2025, %vm2025
        %vm2058 = vmpackc.low %vm2026, %vm2026
        %vm2059 = vmpackc.low %vm2027, %vm2027
        %vm2060 = vmpackc.low %vm2028, %vm2028
        %vm2061 = vmpackc.low %vm2029, %vm2029
        %vm2062 = vmpackc.low %vm2030, %vm2030
        %vm2063 = vmpackc.low %vm2031, %vm2031
        %vm2064 = vmpackc.low %vm2032, %vm2032
        %vm2065 = vmpackc.low %vm2033, %vm2033
        %vm2066 = vmpackc.low %vm2034, %vm2034
        %vm2067 = vmpackc.low %vm2035, %vm2035
        %vm2068 = vmpackc.low %vm2036, %vm2036
        %vm2069 = vmpackc.low %vm2037, %vm2037
        %vm2070 = vmpackc.low %vm2038, %vm2038
        %vm2071 = vmpackc.low %vm2039, %vm2039
        %vm2072 = vmpackc.low %vm2040, %vm2040
        %vm2073 = vmpackc.low %vm2041, %vm2041
        %v2074 = vsel %vm2042, 65537, 0
        %v2075 = vsel %vm2043, 65537, 0
        %v2076 = vsel %vm2044, 65537, 0
        %v2077 = vsel %vm2045, 65537, 0
        %v2078 = vsel %vm2046, 65537, 0
        %v2079 = vsel %vm2047, 65537, 0
        %v2080 = vsel %vm2048, 65537, 0
        %v2081 = vsel %vm2049, 65537, 0
        %v2082 = vsel %vm2050, 65537, 0
        %v2083 = vsel %vm2051, 65537, 0
        %v2084 = vsel %vm2052, 65537, 0
        %v2085 = vsel %vm2053, 65537, 0
        %v2086 = vsel %vm2054, 65537, 0
        %v2087 = vsel %vm2055, 65537, 0
        %v2088 = vsel %vm2056, 65537, 0
        %v2089 = vsel %vm2057, 65537, 0
        %v2090 = vsel %vm2058, 65537, 0
        %v2091 = vsel %vm2059, 65537, 0
        %v2092 = vsel %vm2060, 65537, 0
        %v2093 = vsel %vm2061, 65537, 0
        %v2094 = vsel %vm2062, 65537, 0
        %v2095 = vsel %vm2063, 65537, 0
        %v2096 = vsel %vm2064, 65537, 0
        %v2097 = vsel %vm2065, 65537, 0
        %v2098 = vsel %vm2066, 65537, 0
        %v2099 = vsel %vm2067, 65537, 0
        %v2100 = vsel %vm2068, 65537, 0
        %v2101 = vsel %vm2069, 65537, 0
        %v2102 = vsel %vm2070, 65537, 0
        %v2103 = vsel %vm2071, 65537, 0
        %v2104 = vsel %vm2072, 65537, 0
        %v2105 = vsel %vm2073, 65537, 0
        %v2106 = vunpack.c.l.b16 %v2074
        %v2107 = vunpack.c.l.b16 %v2075
        %v2108 = vunpack.c.l.b16 %v2076
        %v2109 = vunpack.c.l.b16 %v2077
        %v2110 = vunpack.c.l.b16 %v2078
        %v2111 = vunpack.c.l.b16 %v2079
        %v2112 = vunpack.c.l.b16 %v2080
        %v2113 = vunpack.c.l.b16 %v2081
        %v2114 = vunpack.c.l.b16 %v2082
        %v2115 = vunpack.c.l.b16 %v2083
        %v2116 = vunpack.c.l.b16 %v2084
        %v2117 = vunpack.c.l.b16 %v2085
        %v2118 = vunpack.c.l.b16 %v2086
        %v2119 = vunpack.c.l.b16 %v2087
        %v2120 = vunpack.c.l.b16 %v2088
        %v2121 = vunpack.c.l.b16 %v2089
        %v2122 = vunpack.c.l.b16 %v2090
        %v2123 = vunpack.c.l.b16 %v2091
        %v2124 = vunpack.c.l.b16 %v2092
        %v2125 = vunpack.c.l.b16 %v2093
        %v2126 = vunpack.c.l.b16 %v2094
        %v2127 = vunpack.c.l.b16 %v2095
        %v2128 = vunpack.c.l.b16 %v2096
        %v2129 = vunpack.c.l.b16 %v2097
        %v2130 = vunpack.c.l.b16 %v2098
        %v2131 = vunpack.c.l.b16 %v2099
        %v2132 = vunpack.c.l.b16 %v2100
        %v2133 = vunpack.c.l.b16 %v2101
        %v2134 = vunpack.c.l.b16 %v2102
        %v2135 = vunpack.c.l.b16 %v2103
        %v2136 = vunpack.c.l.b16 %v2104
        %v2137 = vunpack.c.l.b16 %v2105
        %v2138 = vpack.c.b16 %v2107, %v2106
        %v2139 = vpack.c.b16 %v2109, %v2108
        %v2140 = vpack.c.b16 %v2111, %v2110
        %v2141 = vpack.c.b16 %v2113, %v2112
        %v2142 = vpack.c.b16 %v2115, %v2114
        %v2143 = vpack.c.b16 %v2117, %v2116
        %v2144 = vpack.c.b16 %v2119, %v2118
        %v2145 = vpack.c.b16 %v2121, %v2120
        %v2146 = vpack.c.b16 %v2123, %v2122
        %v2147 = vpack.c.b16 %v2125, %v2124
        %v2148 = vpack.c.b16 %v2127, %v2126
        %v2149 = vpack.c.b16 %v2129, %v2128
        %v2150 = vpack.c.b16 %v2131, %v2130
        %v2151 = vpack.c.b16 %v2133, %v2132
        %v2152 = vpack.c.b16 %v2135, %v2134
        %v2153 = vpack.c.b16 %v2137, %v2136
        %vm2154 = vcmp.ne.s16.totalorder %v2138, 0
        %vm2155 = vcmp.ne.s16.totalorder %v2139, 0
        %vm2156 = vcmp.ne.s16.totalorder %v2140, 0
        %vm2157 = vcmp.ne.s16.totalorder %v2141, 0
        %vm2158 = vcmp.ne.s16.totalorder %v2142, 0
        %vm2159 = vcmp.ne.s16.totalorder %v2143, 0
        %vm2160 = vcmp.ne.s16.totalorder %v2144, 0
        %vm2161 = vcmp.ne.s16.totalorder %v2145, 0
        %vm2162 = vcmp.ne.s16.totalorder %v2146, 0
        %vm2163 = vcmp.ne.s16.totalorder %v2147, 0
        %vm2164 = vcmp.ne.s16.totalorder %v2148, 0
        %vm2165 = vcmp.ne.s16.totalorder %v2149, 0
        %vm2166 = vcmp.ne.s16.totalorder %v2150, 0
        %vm2167 = vcmp.ne.s16.totalorder %v2151, 0
        %vm2168 = vcmp.ne.s16.totalorder %v2152, 0
        %vm2169 = vcmp.ne.s16.totalorder %v2153, 0
        %v2170 = vsel %vm2154, %v1935, 0
        %v2171 = vsel %vm2155, %v1936, 0
        %v2172 = vsel %vm2156, %v1937, 0
        %v2173 = vsel %vm2157, %v1938, 0
        %v2174 = vsel %vm2158, %v1939, 0
        %v2175 = vsel %vm2159, %v1940, 0
        %v2176 = vsel %vm2160, %v1941, 0
        %v2177 = vsel %vm2161, %v1942, 0
        %v2178 = vsel %vm2162, %v1943, 0
        %v2179 = vsel %vm2163, %v1944, 0
        %v2180 = vsel %vm2164, %v1945, 0
        %v2181 = vsel %vm2165, %v1946, 0
        %v2182 = vsel %vm2166, %v1947, 0
        %v2183 = vsel %vm2167, %v1948, 0
        %v2184 = vsel %vm2168, %v1949, 0
        %v2185 = vsel %vm2169, %v1950, 0
        %v2202 = vunpack.c.l.b16 %v2170
        %v2203 = vunpack.c.h.b16 %v2170
        %v2204 = vunpack.c.l.b16 %v2171
        %v2205 = vunpack.c.h.b16 %v2171
        %v2206 = vunpack.c.l.b16 %v2172
        %v2207 = vunpack.c.h.b16 %v2172
        %v2208 = vunpack.c.l.b16 %v2173
        %v2209 = vunpack.c.h.b16 %v2173
        %v2210 = vunpack.c.l.b16 %v2174
        %v2211 = vunpack.c.h.b16 %v2174
        %v2212 = vunpack.c.l.b16 %v2175
        %v2213 = vunpack.c.h.b16 %v2175
        %v2214 = vunpack.c.l.b16 %v2176
        %v2215 = vunpack.c.h.b16 %v2176
        %v2216 = vunpack.c.l.b16 %v2177
        %v2217 = vunpack.c.h.b16 %v2177
        %v2218 = vunpack.c.l.b16 %v2178
        %v2219 = vunpack.c.h.b16 %v2178
        %v2220 = vunpack.c.l.b16 %v2179
        %v2221 = vunpack.c.h.b16 %v2179
        %v2222 = vunpack.c.l.b16 %v2180
        %v2223 = vunpack.c.h.b16 %v2180
        %v2224 = vunpack.c.l.b16 %v2181
        %v2225 = vunpack.c.h.b16 %v2181
        %v2226 = vunpack.c.l.b16 %v2182
        %v2227 = vunpack.c.h.b16 %v2182
        %v2228 = vunpack.c.l.b16 %v2183
        %v2229 = vunpack.c.h.b16 %v2183
        %v2230 = vunpack.c.l.b16 %v2184
        %v2231 = vunpack.c.h.b16 %v2184
        %v2232 = vunpack.c.l.b16 %v2185
        %v2233 = vunpack.c.h.b16 %v2185
        %v2234 = vpack.c.b16 %v2202, %v2202
        %v2235 = vpack.c.b16 %v2203, %v2203
        %v2236 = vpack.c.b16 %v2204, %v2204
        %v2237 = vpack.c.b16 %v2205, %v2205
        %v2238 = vpack.c.b16 %v2206, %v2206
        %v2239 = vpack.c.b16 %v2207, %v2207
        %v2240 = vpack.c.b16 %v2208, %v2208
        %v2241 = vpack.c.b16 %v2209, %v2209
        %v2242 = vpack.c.b16 %v2210, %v2210
        %v2243 = vpack.c.b16 %v2211, %v2211
        %v2244 = vpack.c.b16 %v2212, %v2212
        %v2245 = vpack.c.b16 %v2213, %v2213
        %v2246 = vpack.c.b16 %v2214, %v2214
        %v2247 = vpack.c.b16 %v2215, %v2215
        %v2248 = vpack.c.b16 %v2216, %v2216
        %v2249 = vpack.c.b16 %v2217, %v2217
        %v2250 = vpack.c.b16 %v2218, %v2218
        %v2251 = vpack.c.b16 %v2219, %v2219
        %v2252 = vpack.c.b16 %v2220, %v2220
        %v2253 = vpack.c.b16 %v2221, %v2221
        %v2254 = vpack.c.b16 %v2222, %v2222
        %v2255 = vpack.c.b16 %v2223, %v2223
        %v2256 = vpack.c.b16 %v2224, %v2224
        %v2257 = vpack.c.b16 %v2225, %v2225
        %v2258 = vpack.c.b16 %v2226, %v2226
        %v2259 = vpack.c.b16 %v2227, %v2227
        %v2260 = vpack.c.b16 %v2228, %v2228
        %v2261 = vpack.c.b16 %v2229, %v2229
        %v2262 = vpack.c.b16 %v2230, %v2230
        %v2263 = vpack.c.b16 %v2231, %v2231
        %v2264 = vpack.c.b16 %v2232, %v2232
        %v2265 = vpack.c.b16 %v2233, %v2233
        %vm2266 = vsmask.f32 4368
        %vm2267 = vmor %vm1957, %vm2266
        %v2269 = vshrl.u32 %v2234, 16
        %v2271 = vrot.slane %v2269, 7
        %v2272 = vshll.u32 %v2234, 16
        %v2274 = vor.u32 %v2271, %v2272
        %v2275 = vrot.slane %v2271, 4
        %v2277 = vshrl.u32 %v2235, 16
        %v2279 = vrot.slane %v2277, 7
        %v2280 = vshll.u32 %v2235, 16
        %v2282 = vor.u32 %v2279, %v2280
        %v2283 = vsel %vm2267, %v2275, %v2282
        %v2284 = vrot.slane %v2279, 4
        %v2286 = vshrl.u32 %v2236, 16
        %v2288 = vrot.slane %v2286, 7
        %v2289 = vshll.u32 %v2236, 16
        %v2291 = vor.u32 %v2288, %v2289
        %v2292 = vsel %vm2267, %v2284, %v2291
        %v2293 = vrot.slane %v2288, 4
        %v2295 = vshrl.u32 %v2237, 16
        %v2297 = vrot.slane %v2295, 7
        %v2298 = vshll.u32 %v2237, 16
        %v2300 = vor.u32 %v2297, %v2298
        %v2301 = vsel %vm2267, %v2293, %v2300
        %v2302 = vrot.slane %v2297, 4
        %v2304 = vshrl.u32 %v2238, 16
        %v2306 = vrot.slane %v2304, 7
        %v2307 = vshll.u32 %v2238, 16
        %v2309 = vor.u32 %v2306, %v2307
        %v2310 = vsel %vm2267, %v2302, %v2309
        %v2311 = vrot.slane %v2306, 4
        %v2313 = vshrl.u32 %v2239, 16
        %v2315 = vrot.slane %v2313, 7
        %v2316 = vshll.u32 %v2239, 16
        %v2318 = vor.u32 %v2315, %v2316
        %v2319 = vsel %vm2267, %v2311, %v2318
        %v2320 = vrot.slane %v2315, 4
        %v2322 = vshrl.u32 %v2240, 16
        %v2324 = vrot.slane %v2322, 7
        %v2325 = vshll.u32 %v2240, 16
        %v2327 = vor.u32 %v2324, %v2325
        %v2328 = vsel %vm2267, %v2320, %v2327
        %v2329 = vrot.slane %v2324, 4
        %v2331 = vshrl.u32 %v2241, 16
        %v2333 = vrot.slane %v2331, 7
        %v2334 = vshll.u32 %v2241, 16
        %v2336 = vor.u32 %v2333, %v2334
        %v2337 = vsel %vm2267, %v2329, %v2336
        %v2338 = vrot.slane %v2333, 4
        %v2340 = vshrl.u32 %v2242, 16
        %v2342 = vrot.slane %v2340, 7
        %v2343 = vshll.u32 %v2242, 16
        %v2345 = vor.u32 %v2342, %v2343
        %v2346 = vsel %vm2267, %v2338, %v2345
        %v2347 = vrot.slane %v2342, 4
        %v2349 = vshrl.u32 %v2243, 16
        %v2351 = vrot.slane %v2349, 7
        %v2352 = vshll.u32 %v2243, 16
        %v2354 = vor.u32 %v2351, %v2352
        %v2355 = vsel %vm2267, %v2347, %v2354
        %v2356 = vrot.slane %v2351, 4
        %v2358 = vshrl.u32 %v2244, 16
        %v2360 = vrot.slane %v2358, 7
        %v2361 = vshll.u32 %v2244, 16
        %v2363 = vor.u32 %v2360, %v2361
        %v2364 = vsel %vm2267, %v2356, %v2363
        %v2365 = vrot.slane %v2360, 4
        %v2367 = vshrl.u32 %v2245, 16
        %v2369 = vrot.slane %v2367, 7
        %v2370 = vshll.u32 %v2245, 16
        %v2372 = vor.u32 %v2369, %v2370
        %v2373 = vsel %vm2267, %v2365, %v2372
        %v2374 = vrot.slane %v2369, 4
        %v2376 = vshrl.u32 %v2246, 16
        %v2378 = vrot.slane %v2376, 7
        %v2379 = vshll.u32 %v2246, 16
        %v2381 = vor.u32 %v2378, %v2379
        %v2382 = vsel %vm2267, %v2374, %v2381
        %v2383 = vrot.slane %v2378, 4
        %v2385 = vshrl.u32 %v2247, 16
        %v2387 = vrot.slane %v2385, 7
        %v2388 = vshll.u32 %v2247, 16
        %v2390 = vor.u32 %v2387, %v2388
        %v2391 = vsel %vm2267, %v2383, %v2390
        %v2392 = vrot.slane %v2387, 4
        %v2394 = vshrl.u32 %v2248, 16
        %v2396 = vrot.slane %v2394, 7
        %v2397 = vshll.u32 %v2248, 16
        %v2399 = vor.u32 %v2396, %v2397
        %v2400 = vsel %vm2267, %v2392, %v2399
        %v2401 = vrot.slane %v2396, 4
        %v2403 = vshrl.u32 %v2249, 16
        %v2405 = vrot.slane %v2403, 7
        %v2406 = vshll.u32 %v2249, 16
        %v2408 = vor.u32 %v2405, %v2406
        %v2409 = vsel %vm2267, %v2401, %v2408
        %v2410 = vrot.slane %v2405, 4
        %v2412 = vshrl.u32 %v2250, 16
        %v2414 = vrot.slane %v2412, 7
        %v2415 = vshll.u32 %v2250, 16
        %v2417 = vor.u32 %v2414, %v2415
        %v2418 = vsel %vm2267, %v2410, %v2417
        %v2419 = vrot.slane %v2414, 4
        %v2421 = vshrl.u32 %v2251, 16
        %v2423 = vrot.slane %v2421, 7
        %v2424 = vshll.u32 %v2251, 16
        %v2426 = vor.u32 %v2423, %v2424
        %v2427 = vsel %vm2267, %v2419, %v2426
        %v2428 = vrot.slane %v2423, 4
        %v2430 = vshrl.u32 %v2252, 16
        %v2432 = vrot.slane %v2430, 7
        %v2433 = vshll.u32 %v2252, 16
        %v2435 = vor.u32 %v2432, %v2433
        %v2436 = vsel %vm2267, %v2428, %v2435
        %v2437 = vrot.slane %v2432, 4
        %v2439 = vshrl.u32 %v2253, 16
        %v2441 = vrot.slane %v2439, 7
        %v2442 = vshll.u32 %v2253, 16
        %v2444 = vor.u32 %v2441, %v2442
        %v2445 = vsel %vm2267, %v2437, %v2444
        %v2446 = vrot.slane %v2441, 4
        %v2448 = vshrl.u32 %v2254, 16
        %v2450 = vrot.slane %v2448, 7
        %v2451 = vshll.u32 %v2254, 16
        %v2453 = vor.u32 %v2450, %v2451
        %v2454 = vsel %vm2267, %v2446, %v2453
        %v2455 = vrot.slane %v2450, 4
        %v2457 = vshrl.u32 %v2255, 16
        %v2459 = vrot.slane %v2457, 7
        %v2460 = vshll.u32 %v2255, 16
        %v2462 = vor.u32 %v2459, %v2460
        %v2463 = vsel %vm2267, %v2455, %v2462
        %v2464 = vrot.slane %v2459, 4
        %v2466 = vshrl.u32 %v2256, 16
        %v2468 = vrot.slane %v2466, 7
        %v2469 = vshll.u32 %v2256, 16
        %v2471 = vor.u32 %v2468, %v2469
        %v2472 = vsel %vm2267, %v2464, %v2471
        %v2473 = vrot.slane %v2468, 4
        %v2475 = vshrl.u32 %v2257, 16
        %v2477 = vrot.slane %v2475, 7
        %v2478 = vshll.u32 %v2257, 16
        %v2480 = vor.u32 %v2477, %v2478
        %v2481 = vsel %vm2267, %v2473, %v2480
        %v2482 = vrot.slane %v2477, 4
        %v2484 = vshrl.u32 %v2258, 16
        %v2486 = vrot.slane %v2484, 7
        %v2487 = vshll.u32 %v2258, 16
        %v2489 = vor.u32 %v2486, %v2487
        %v2490 = vsel %vm2267, %v2482, %v2489
        %v2491 = vrot.slane %v2486, 4
        %v2493 = vshrl.u32 %v2259, 16
        %v2495 = vrot.slane %v2493, 7
        %v2496 = vshll.u32 %v2259, 16
        %v2498 = vor.u32 %v2495, %v2496
        %v2499 = vsel %vm2267, %v2491, %v2498
        %v2500 = vrot.slane %v2495, 4
        %v2502 = vshrl.u32 %v2260, 16
        %v2504 = vrot.slane %v2502, 7
        %v2505 = vshll.u32 %v2260, 16
        %v2507 = vor.u32 %v2504, %v2505
        %v2508 = vsel %vm2267, %v2500, %v2507
        %v2509 = vrot.slane %v2504, 4
        %v2511 = vshrl.u32 %v2261, 16
        %v2513 = vrot.slane %v2511, 7
        %v2514 = vshll.u32 %v2261, 16
        %v2516 = vor.u32 %v2513, %v2514
        %v2517 = vsel %vm2267, %v2509, %v2516
        %v2518 = vrot.slane %v2513, 4
        %v2520 = vshrl.u32 %v2262, 16
        %v2522 = vrot.slane %v2520, 7
        %v2523 = vshll.u32 %v2262, 16
        %v2525 = vor.u32 %v2522, %v2523
        %v2526 = vsel %vm2267, %v2518, %v2525
        %v2527 = vrot.slane %v2522, 4
        %v2529 = vshrl.u32 %v2263, 16
        %v2531 = vrot.slane %v2529, 7
        %v2532 = vshll.u32 %v2263, 16
        %v2534 = vor.u32 %v2531, %v2532
        %v2535 = vsel %vm2267, %v2527, %v2534
        %v2536 = vrot.slane %v2531, 4
        %v2538 = vshrl.u32 %v2264, 16
        %v2540 = vrot.slane %v2538, 7
        %v2541 = vshll.u32 %v2264, 16
        %v2543 = vor.u32 %v2540, %v2541
        %v2544 = vsel %vm2267, %v2536, %v2543
        %v2545 = vrot.slane %v2540, 4
        %v2547 = vshrl.u32 %v2265, 16
        %v2549 = vrot.slane %v2547, 7
        %v2550 = vshll.u32 %v2265, 16
        %v2552 = vor.u32 %v2549, %v2550
        %v2553 = vsel %vm2267, %v2545, %v2552
        %v2554 = vrot.slane %v2549, 4
        %vm2588 = vcmask 519168
        %vm2589 = vsmask.f32 7938
        %vm2590 = vmand %vm2588, %vm2589
        %v2591 = vld [vmem:[#allocation2 + $0x10] sm:$0xf]
        %v2592 = vsel %vm2590, %v2274, %v2591
        %2593 = vst [vmem:[#allocation2 + $0x10] sm:$0xf] %v2592
        %vm2594 = vcmask 519168
        %2595 = vst.msk [vmem:[#allocation2 + $0x18] sm:$0xf] %vm2594, %v2283
        %2596 = vst.msk [vmem:[#allocation2 + $0x20] sm:$0xf] %vm2594, %v2292
        %2597 = vst.msk [vmem:[#allocation2 + $0x28] sm:$0xf] %vm2594, %v2301
        %2598 = vst.msk [vmem:[#allocation2 + $0x30] sm:$0xf] %vm2594, %v2310
        %2599 = vst.msk [vmem:[#allocation2 + $0x38] sm:$0xf] %vm2594, %v2319
        %2600 = vst.msk [vmem:[#allocation2 + $0x40] sm:$0xf] %vm2594, %v2328
        %2601 = vst.msk [vmem:[#allocation2 + $0x48] sm:$0xf] %vm2594, %v2337
        %2602 = vst.msk [vmem:[#allocation2 + $0x50] sm:$0xf] %vm2594, %v2346
        %2603 = vst.msk [vmem:[#allocation2 + $0x58] sm:$0xf] %vm2594, %v2355
        %2604 = vst.msk [vmem:[#allocation2 + $0x60] sm:$0xf] %vm2594, %v2364
        %2605 = vst.msk [vmem:[#allocation2 + $0x68] sm:$0xf] %vm2594, %v2373
        %2606 = vst.msk [vmem:[#allocation2 + $0x70] sm:$0xf] %vm2594, %v2382
        %2607 = vst.msk [vmem:[#allocation2 + $0x78] sm:$0xf] %vm2594, %v2391
        %2608 = vst.msk [vmem:[#allocation2 + $0x80] sm:$0xf] %vm2594, %v2400
        %2609 = vst.msk [vmem:[#allocation2 + $0x88] sm:$0xf] %vm2594, %v2409
        %2610 = vst.msk [vmem:[#allocation2 + $0x90] sm:$0xf] %vm2594, %v2418
        %2611 = vst.msk [vmem:[#allocation2 + $0x98] sm:$0xf] %vm2594, %v2427
        %2612 = vst.msk [vmem:[#allocation2 + $0xa0] sm:$0xf] %vm2594, %v2436
        %2613 = vst.msk [vmem:[#allocation2 + $0xa8] sm:$0xf] %vm2594, %v2445
        %2614 = vst.msk [vmem:[#allocation2 + $0xb0] sm:$0xf] %vm2594, %v2454
        %2615 = vst.msk [vmem:[#allocation2 + $0xb8] sm:$0xf] %vm2594, %v2463
        %2616 = vst.msk [vmem:[#allocation2 + $0xc0] sm:$0xf] %vm2594, %v2472
        %2617 = vst.msk [vmem:[#allocation2 + $0xc8] sm:$0xf] %vm2594, %v2481
        %2618 = vst.msk [vmem:[#allocation2 + $0xd0] sm:$0xf] %vm2594, %v2490
        %2619 = vst.msk [vmem:[#allocation2 + $0xd8] sm:$0xf] %vm2594, %v2499
        %2620 = vst.msk [vmem:[#allocation2 + $0xe0] sm:$0xf] %vm2594, %v2508
        %2621 = vst.msk [vmem:[#allocation2 + $0xe8] sm:$0xf] %vm2594, %v2517
        %2622 = vst.msk [vmem:[#allocation2 + $0xf0] sm:$0xf] %vm2594, %v2526
        %2623 = vst.msk [vmem:[#allocation2 + $0xf8] sm:$0xf] %vm2594, %v2535
        %2624 = vst.msk [vmem:[#allocation2 + $0x100] sm:$0xf] %vm2594, %v2544
        %2625 = vst.msk [vmem:[#allocation2 + $0x108] sm:$0xf] %vm2594, %v2553
        %vm2626 = vcmask 516096
        %vm2627 = vmand %vm2626, %vm1957
        %v2628 = vld [vmem:[#allocation2 + $0x110] sm:$0x1]
        %v2629 = vsel %vm2627, %v2554, %v2628
        %2630 = vst [vmem:[#allocation2 + $0x110] sm:$0x1] %v2629
        %v2647 = vunpack.c.l.b16 %v1935
        %v2648 = vunpack.c.h.b16 %v1935
        %v2649 = vunpack.c.l.b16 %v1936
        %v2650 = vunpack.c.h.b16 %v1936
        %v2651 = vunpack.c.l.b16 %v1937
        %v2652 = vunpack.c.h.b16 %v1937
        %v2653 = vunpack.c.l.b16 %v1938
        %v2654 = vunpack.c.h.b16 %v1938
        %v2655 = vunpack.c.l.b16 %v1939
        %v2656 = vunpack.c.h.b16 %v1939
        %v2657 = vunpack.c.l.b16 %v1940
        %v2658 = vunpack.c.h.b16 %v1940
        %v2659 = vunpack.c.l.b16 %v1941
        %v2660 = vunpack.c.h.b16 %v1941
        %v2661 = vunpack.c.l.b16 %v1942
        %v2662 = vunpack.c.h.b16 %v1942
        %v2663 = vunpack.c.l.b16 %v1943
        %v2664 = vunpack.c.h.b16 %v1943
        %v2665 = vunpack.c.l.b16 %v1944
        %v2666 = vunpack.c.h.b16 %v1944
        %v2667 = vunpack.c.l.b16 %v1945
        %v2668 = vunpack.c.h.b16 %v1945
        %v2669 = vunpack.c.l.b16 %v1946
        %v2670 = vunpack.c.h.b16 %v1946
        %v2671 = vunpack.c.l.b16 %v1947
        %v2672 = vunpack.c.h.b16 %v1947
        %v2673 = vunpack.c.l.b16 %v1948
        %v2674 = vunpack.c.h.b16 %v1948
        %v2675 = vunpack.c.l.b16 %v1949
        %v2676 = vunpack.c.h.b16 %v1949
        %v2677 = vunpack.c.l.b16 %v1950
        %v2678 = vunpack.c.h.b16 %v1950
        %v2679 = vpack.c.b16 %v2647, %v2647
        %v2680 = vpack.c.b16 %v2648, %v2648
        %v2681 = vpack.c.b16 %v2649, %v2649
        %v2682 = vpack.c.b16 %v2650, %v2650
        %v2683 = vpack.c.b16 %v2651, %v2651
        %v2684 = vpack.c.b16 %v2652, %v2652
        %v2685 = vpack.c.b16 %v2653, %v2653
        %v2686 = vpack.c.b16 %v2654, %v2654
        %v2687 = vpack.c.b16 %v2655, %v2655
        %v2688 = vpack.c.b16 %v2656, %v2656
        %v2689 = vpack.c.b16 %v2657, %v2657
        %v2690 = vpack.c.b16 %v2658, %v2658
        %v2691 = vpack.c.b16 %v2659, %v2659
        %v2692 = vpack.c.b16 %v2660, %v2660
        %v2693 = vpack.c.b16 %v2661, %v2661
        %v2694 = vpack.c.b16 %v2662, %v2662
        %v2695 = vpack.c.b16 %v2663, %v2663
        %v2696 = vpack.c.b16 %v2664, %v2664
        %v2697 = vpack.c.b16 %v2665, %v2665
        %v2698 = vpack.c.b16 %v2666, %v2666
        %v2699 = vpack.c.b16 %v2667, %v2667
        %v2700 = vpack.c.b16 %v2668, %v2668
        %v2701 = vpack.c.b16 %v2669, %v2669
        %v2702 = vpack.c.b16 %v2670, %v2670
        %v2703 = vpack.c.b16 %v2671, %v2671
        %v2704 = vpack.c.b16 %v2672, %v2672
        %v2705 = vpack.c.b16 %v2673, %v2673
        %v2706 = vpack.c.b16 %v2674, %v2674
        %v2707 = vpack.c.b16 %v2675, %v2675
        %v2708 = vpack.c.b16 %v2676, %v2676
        %v2709 = vpack.c.b16 %v2677, %v2677
        %v2710 = vpack.c.b16 %v2678, %v2678
        %2711 = vrot.lane.b32.xlu0 %v2679, 64
        %v2712 = vpop.permute.xlu0 %2711
        %2713 = vrot.lane.b32.xlu0 %v2680, 64
        %v2714 = vpop.permute.xlu0 %2713
        %2715 = vrot.lane.b32.xlu0 %v2681, 64
        %v2716 = vpop.permute.xlu0 %2715
        %2717 = vrot.lane.b32.xlu0 %v2682, 64
        %v2718 = vpop.permute.xlu0 %2717
        %2719 = vrot.lane.b32.xlu0 %v2683, 64
        %v2720 = vpop.permute.xlu0 %2719
        %2721 = vrot.lane.b32.xlu0 %v2684, 64
        %v2722 = vpop.permute.xlu0 %2721
        %2723 = vrot.lane.b32.xlu0 %v2685, 64
        %v2724 = vpop.permute.xlu0 %2723
        %2725 = vrot.lane.b32.xlu0 %v2686, 64
        %v2726 = vpop.permute.xlu0 %2725
        %2727 = vrot.lane.b32.xlu0 %v2687, 64
        %v2728 = vpop.permute.xlu0 %2727
        %2729 = vrot.lane.b32.xlu0 %v2688, 64
        %v2730 = vpop.permute.xlu0 %2729
        %2731 = vrot.lane.b32.xlu0 %v2689, 64
        %v2732 = vpop.permute.xlu0 %2731
        %2733 = vrot.lane.b32.xlu0 %v2690, 64
        %v2734 = vpop.permute.xlu0 %2733
        %2735 = vrot.lane.b32.xlu0 %v2691, 64
        %v2736 = vpop.permute.xlu0 %2735
        %2737 = vrot.lane.b32.xlu0 %v2692, 64
        %v2738 = vpop.permute.xlu0 %2737
        %2739 = vrot.lane.b32.xlu0 %v2693, 64
        %v2740 = vpop.permute.xlu0 %2739
        %2741 = vrot.lane.b32.xlu0 %v2694, 64
        %v2742 = vpop.permute.xlu0 %2741
        %2743 = vrot.lane.b32.xlu0 %v2695, 64
        %v2744 = vpop.permute.xlu0 %2743
        %2745 = vrot.lane.b32.xlu0 %v2696, 64
        %v2746 = vpop.permute.xlu0 %2745
        %2747 = vrot.lane.b32.xlu0 %v2697, 64
        %v2748 = vpop.permute.xlu0 %2747
        %2749 = vrot.lane.b32.xlu0 %v2698, 64
        %v2750 = vpop.permute.xlu0 %2749
        %2751 = vrot.lane.b32.xlu0 %v2699, 64
        %v2752 = vpop.permute.xlu0 %2751
        %2753 = vrot.lane.b32.xlu0 %v2700, 64
        %v2754 = vpop.permute.xlu0 %2753
        %2755 = vrot.lane.b32.xlu0 %v2701, 64
        %v2756 = vpop.permute.xlu0 %2755
        %2757 = vrot.lane.b32.xlu0 %v2702, 64
        %v2758 = vpop.permute.xlu0 %2757
        %2759 = vrot.lane.b32.xlu0 %v2703, 64
        %v2760 = vpop.permute.xlu0 %2759
        %2761 = vrot.lane.b32.xlu0 %v2704, 64
        %v2762 = vpop.permute.xlu0 %2761
        %2763 = vrot.lane.b32.xlu0 %v2705, 64
        %v2764 = vpop.permute.xlu0 %2763
        %2765 = vrot.lane.b32.xlu0 %v2706, 64
        %v2766 = vpop.permute.xlu0 %2765
        %2767 = vrot.lane.b32.xlu0 %v2707, 64
        %v2768 = vpop.permute.xlu0 %2767
        %2769 = vrot.lane.b32.xlu0 %v2708, 64
        %v2770 = vpop.permute.xlu0 %2769
        %2771 = vrot.lane.b32.xlu0 %v2709, 64
        %v2772 = vpop.permute.xlu0 %2771
        %2773 = vrot.lane.b32.xlu0 %v2710, 64
        %v2774 = vpop.permute.xlu0 %2773
        %vm2807 = vcmask 1043968
        %2808 = vst.msk [vmem:[#allocation2 + $0x10] sm:$0xf] %vm2807, %v2712
        %2809 = vst.msk [vmem:[#allocation2 + $0x18] sm:$0xf] %vm2807, %v2714
        %2810 = vst.msk [vmem:[#allocation2 + $0x20] sm:$0xf] %vm2807, %v2716
        %2811 = vst.msk [vmem:[#allocation2 + $0x28] sm:$0xf] %vm2807, %v2718
        %2812 = vst.msk [vmem:[#allocation2 + $0x30] sm:$0xf] %vm2807, %v2720
        %2813 = vst.msk [vmem:[#allocation2 + $0x38] sm:$0xf] %vm2807, %v2722
        %2814 = vst.msk [vmem:[#allocation2 + $0x40] sm:$0xf] %vm2807, %v2724
        %2815 = vst.msk [vmem:[#allocation2 + $0x48] sm:$0xf] %vm2807, %v2726
        %2816 = vst.msk [vmem:[#allocation2 + $0x50] sm:$0xf] %vm2807, %v2728
        %2817 = vst.msk [vmem:[#allocation2 + $0x58] sm:$0xf] %vm2807, %v2730
        %2818 = vst.msk [vmem:[#allocation2 + $0x60] sm:$0xf] %vm2807, %v2732
        %2819 = vst.msk [vmem:[#allocation2 + $0x68] sm:$0xf] %vm2807, %v2734
        %2820 = vst.msk [vmem:[#allocation2 + $0x70] sm:$0xf] %vm2807, %v2736
        %2821 = vst.msk [vmem:[#allocation2 + $0x78] sm:$0xf] %vm2807, %v2738
        %2822 = vst.msk [vmem:[#allocation2 + $0x80] sm:$0xf] %vm2807, %v2740
        %2823 = vst.msk [vmem:[#allocation2 + $0x88] sm:$0xf] %vm2807, %v2742
        %2824 = vst.msk [vmem:[#allocation2 + $0x90] sm:$0xf] %vm2807, %v2744
        %2825 = vst.msk [vmem:[#allocation2 + $0x98] sm:$0xf] %vm2807, %v2746
        %2826 = vst.msk [vmem:[#allocation2 + $0xa0] sm:$0xf] %vm2807, %v2748
        %2827 = vst.msk [vmem:[#allocation2 + $0xa8] sm:$0xf] %vm2807, %v2750
        %2828 = vst.msk [vmem:[#allocation2 + $0xb0] sm:$0xf] %vm2807, %v2752
        %2829 = vst.msk [vmem:[#allocation2 + $0xb8] sm:$0xf] %vm2807, %v2754
        %2830 = vst.msk [vmem:[#allocation2 + $0xc0] sm:$0xf] %vm2807, %v2756
        %2831 = vst.msk [vmem:[#allocation2 + $0xc8] sm:$0xf] %vm2807, %v2758
        %2832 = vst.msk [vmem:[#allocation2 + $0xd0] sm:$0xf] %vm2807, %v2760
        %2833 = vst.msk [vmem:[#allocation2 + $0xd8] sm:$0xf] %vm2807, %v2762
        %2834 = vst.msk [vmem:[#allocation2 + $0xe0] sm:$0xf] %vm2807, %v2764
        %2835 = vst.msk [vmem:[#allocation2 + $0xe8] sm:$0xf] %vm2807, %v2766
        %2836 = vst.msk [vmem:[#allocation2 + $0xf0] sm:$0xf] %vm2807, %v2768
        %2837 = vst.msk [vmem:[#allocation2 + $0xf8] sm:$0xf] %vm2807, %v2770
        %2838 = vst.msk [vmem:[#allocation2 + $0x100] sm:$0xf] %vm2807, %v2772
        %2839 = vst.msk [vmem:[#allocation2 + $0x108] sm:$0xf] %vm2807, %v2774
        %v2840 = vsel %vm973, 1, 0
        %v2841 = vsel %vm974, 1, 0
        %v2842 = vsel %vm975, 1, 0
        %v2843 = vsel %vm976, 1, 0
        %v2844 = vsel %vm977, 1, 0
        %v2845 = vsel %vm978, 1, 0
        %v2846 = vsel %vm979, 1, 0
        %v2847 = vsel %vm980, 1, 0
        %v2848 = vsel %vm981, 1, 0
        %v2849 = vsel %vm982, 1, 0
        %v2850 = vsel %vm983, 1, 0
        %v2851 = vsel %vm984, 1, 0
        %v2852 = vsel %vm985, 1, 0
        %v2853 = vsel %vm986, 1, 0
        %v2854 = vsel %vm987, 1, 0
        %v2855 = vsel %vm988, 1, 0
        %v2856 = vsel %vm989, 1, 0
        %v2857 = vsel %vm990, 1, 0
        %v2858 = vsel %vm991, 1, 0
        %v2859 = vsel %vm992, 1, 0
        %v2860 = vsel %vm993, 1, 0
        %v2861 = vsel %vm994, 1, 0
        %v2862 = vsel %vm995, 1, 0
        %v2863 = vsel %vm996, 1, 0
        %v2864 = vsel %vm997, 1, 0
        %v2865 = vsel %vm998, 1, 0
        %v2866 = vsel %vm999, 1, 0
        %v2867 = vsel %vm1000, 1, 0
        %v2868 = vsel %vm1001, 1, 0
        %v2869 = vsel %vm1002, 1, 0
        %v2870 = vsel %vm1003, 1, 0
        %v2871 = vsel %vm1004, 1, 0
        %vm2872 = vcmp.eq.s32.totalorder %v2840, 1
        %vm2873 = vcmp.eq.s32.totalorder %v2841, 1
        %vm2874 = vcmp.eq.s32.totalorder %v2842, 1
        %vm2875 = vcmp.eq.s32.totalorder %v2843, 1
        %vm2876 = vcmp.eq.s32.totalorder %v2844, 1
        %vm2877 = vcmp.eq.s32.totalorder %v2845, 1
        %vm2878 = vcmp.eq.s32.totalorder %v2846, 1
        %vm2879 = vcmp.eq.s32.totalorder %v2847, 1
        %vm2880 = vcmp.eq.s32.totalorder %v2848, 1
        %vm2881 = vcmp.eq.s32.totalorder %v2849, 1
        %vm2882 = vcmp.eq.s32.totalorder %v2850, 1
        %vm2883 = vcmp.eq.s32.totalorder %v2851, 1
        %vm2884 = vcmp.eq.s32.totalorder %v2852, 1
        %vm2885 = vcmp.eq.s32.totalorder %v2853, 1
        %vm2886 = vcmp.eq.s32.totalorder %v2854, 1
        %vm2887 = vcmp.eq.s32.totalorder %v2855, 1
        %vm2888 = vcmp.eq.s32.totalorder %v2856, 1
        %vm2889 = vcmp.eq.s32.totalorder %v2857, 1
        %vm2890 = vcmp.eq.s32.totalorder %v2858, 1
        %vm2891 = vcmp.eq.s32.totalorder %v2859, 1
        %vm2892 = vcmp.eq.s32.totalorder %v2860, 1
        %vm2893 = vcmp.eq.s32.totalorder %v2861, 1
        %vm2894 = vcmp.eq.s32.totalorder %v2862, 1
        %vm2895 = vcmp.eq.s32.totalorder %v2863, 1
        %vm2896 = vcmp.eq.s32.totalorder %v2864, 1
        %vm2897 = vcmp.eq.s32.totalorder %v2865, 1
        %vm2898 = vcmp.eq.s32.totalorder %v2866, 1
        %vm2899 = vcmp.eq.s32.totalorder %v2867, 1
        %vm2900 = vcmp.eq.s32.totalorder %v2868, 1
        %vm2901 = vcmp.eq.s32.totalorder %v2869, 1
        %vm2902 = vcmp.eq.s32.totalorder %v2870, 1
        %vm2903 = vcmp.eq.s32.totalorder %v2871, 1
        %vm2904 = vmpackc.low %vm2872, %vm2872
        %vm2905 = vmpackc.low %vm2873, %vm2873
        %vm2906 = vmpackc.low %vm2874, %vm2874
        %vm2907 = vmpackc.low %vm2875, %vm2875
        %vm2908 = vmpackc.low %vm2876, %vm2876
        %vm2909 = vmpackc.low %vm2877, %vm2877
        %vm2910 = vmpackc.low %vm2878, %vm2878
        %vm2911 = vmpackc.low %vm2879, %vm2879
        %vm2912 = vmpackc.low %vm2880, %vm2880
        %vm2913 = vmpackc.low %vm2881, %vm2881
        %vm2914 = vmpackc.low %vm2882, %vm2882
        %vm2915 = vmpackc.low %vm2883, %vm2883
        %vm2916 = vmpackc.low %vm2884, %vm2884
        %vm2917 = vmpackc.low %vm2885, %vm2885
        %vm2918 = vmpackc.low %vm2886, %vm2886
        %vm2919 = vmpackc.low %vm2887, %vm2887
        %vm2920 = vmpackc.low %vm2888, %vm2888
        %vm2921 = vmpackc.low %vm2889, %vm2889
        %vm2922 = vmpackc.low %vm2890, %vm2890
        %vm2923 = vmpackc.low %vm2891, %vm2891
        %vm2924 = vmpackc.low %vm2892, %vm2892
        %vm2925 = vmpackc.low %vm2893, %vm2893
        %vm2926 = vmpackc.low %vm2894, %vm2894
        %vm2927 = vmpackc.low %vm2895, %vm2895
        %vm2928 = vmpackc.low %vm2896, %vm2896
        %vm2929 = vmpackc.low %vm2897, %vm2897
        %vm2930 = vmpackc.low %vm2898, %vm2898
        %vm2931 = vmpackc.low %vm2899, %vm2899
        %vm2932 = vmpackc.low %vm2900, %vm2900
        %vm2933 = vmpackc.low %vm2901, %vm2901
        %vm2934 = vmpackc.low %vm2902, %vm2902
        %vm2935 = vmpackc.low %vm2903, %vm2903
        %v2936 = vsel %vm2904, 65537, 0
        %v2937 = vsel %vm2905, 65537, 0
        %v2938 = vsel %vm2906, 65537, 0
        %v2939 = vsel %vm2907, 65537, 0
        %v2940 = vsel %vm2908, 65537, 0
        %v2941 = vsel %vm2909, 65537, 0
        %v2942 = vsel %vm2910, 65537, 0
        %v2943 = vsel %vm2911, 65537, 0
        %v2944 = vsel %vm2912, 65537, 0
        %v2945 = vsel %vm2913, 65537, 0
        %v2946 = vsel %vm2914, 65537, 0
        %v2947 = vsel %vm2915, 65537, 0
        %v2948 = vsel %vm2916, 65537, 0
        %v2949 = vsel %vm2917, 65537, 0
        %v2950 = vsel %vm2918, 65537, 0
        %v2951 = vsel %vm2919, 65537, 0
        %v2952 = vsel %vm2920, 65537, 0
        %v2953 = vsel %vm2921, 65537, 0
        %v2954 = vsel %vm2922, 65537, 0
        %v2955 = vsel %vm2923, 65537, 0
        %v2956 = vsel %vm2924, 65537, 0
        %v2957 = vsel %vm2925, 65537, 0
        %v2958 = vsel %vm2926, 65537, 0
        %v2959 = vsel %vm2927, 65537, 0
        %v2960 = vsel %vm2928, 65537, 0
        %v2961 = vsel %vm2929, 65537, 0
        %v2962 = vsel %vm2930, 65537, 0
        %v2963 = vsel %vm2931, 65537, 0
        %v2964 = vsel %vm2932, 65537, 0
        %v2965 = vsel %vm2933, 65537, 0
        %v2966 = vsel %vm2934, 65537, 0
        %v2967 = vsel %vm2935, 65537, 0
        %v2968 = vunpack.c.l.b16 %v2936
        %v2969 = vunpack.c.l.b16 %v2937
        %v2970 = vunpack.c.l.b16 %v2938
        %v2971 = vunpack.c.l.b16 %v2939
        %v2972 = vunpack.c.l.b16 %v2940
        %v2973 = vunpack.c.l.b16 %v2941
        %v2974 = vunpack.c.l.b16 %v2942
        %v2975 = vunpack.c.l.b16 %v2943
        %v2976 = vunpack.c.l.b16 %v2944
        %v2977 = vunpack.c.l.b16 %v2945
        %v2978 = vunpack.c.l.b16 %v2946
        %v2979 = vunpack.c.l.b16 %v2947
        %v2980 = vunpack.c.l.b16 %v2948
        %v2981 = vunpack.c.l.b16 %v2949
        %v2982 = vunpack.c.l.b16 %v2950
        %v2983 = vunpack.c.l.b16 %v2951
        %v2984 = vunpack.c.l.b16 %v2952
        %v2985 = vunpack.c.l.b16 %v2953
        %v2986 = vunpack.c.l.b16 %v2954
        %v2987 = vunpack.c.l.b16 %v2955
        %v2988 = vunpack.c.l.b16 %v2956
        %v2989 = vunpack.c.l.b16 %v2957
        %v2990 = vunpack.c.l.b16 %v2958
        %v2991 = vunpack.c.l.b16 %v2959
        %v2992 = vunpack.c.l.b16 %v2960
        %v2993 = vunpack.c.l.b16 %v2961
        %v2994 = vunpack.c.l.b16 %v2962
        %v2995 = vunpack.c.l.b16 %v2963
        %v2996 = vunpack.c.l.b16 %v2964
        %v2997 = vunpack.c.l.b16 %v2965
        %v2998 = vunpack.c.l.b16 %v2966
        %v2999 = vunpack.c.l.b16 %v2967
        %v3000 = vpack.c.b16 %v2969, %v2968
        %v3001 = vpack.c.b16 %v2971, %v2970
        %v3002 = vpack.c.b16 %v2973, %v2972
        %v3003 = vpack.c.b16 %v2975, %v2974
        %v3004 = vpack.c.b16 %v2977, %v2976
        %v3005 = vpack.c.b16 %v2979, %v2978
        %v3006 = vpack.c.b16 %v2981, %v2980
        %v3007 = vpack.c.b16 %v2983, %v2982
        %v3008 = vpack.c.b16 %v2985, %v2984
        %v3009 = vpack.c.b16 %v2987, %v2986
        %v3010 = vpack.c.b16 %v2989, %v2988
        %v3011 = vpack.c.b16 %v2991, %v2990
        %v3012 = vpack.c.b16 %v2993, %v2992
        %v3013 = vpack.c.b16 %v2995, %v2994
        %v3014 = vpack.c.b16 %v2997, %v2996
        %v3015 = vpack.c.b16 %v2999, %v2998
        %vm3016 = vcmp.ne.s16.totalorder %v3000, 0
        %vm3017 = vcmp.ne.s16.totalorder %v3001, 0
        %vm3018 = vcmp.ne.s16.totalorder %v3002, 0
        %vm3019 = vcmp.ne.s16.totalorder %v3003, 0
        %vm3020 = vcmp.ne.s16.totalorder %v3004, 0
        %vm3021 = vcmp.ne.s16.totalorder %v3005, 0
        %vm3022 = vcmp.ne.s16.totalorder %v3006, 0
        %vm3023 = vcmp.ne.s16.totalorder %v3007, 0
        %vm3024 = vcmp.ne.s16.totalorder %v3008, 0
        %vm3025 = vcmp.ne.s16.totalorder %v3009, 0
        %vm3026 = vcmp.ne.s16.totalorder %v3010, 0
        %vm3027 = vcmp.ne.s16.totalorder %v3011, 0
        %vm3028 = vcmp.ne.s16.totalorder %v3012, 0
        %vm3029 = vcmp.ne.s16.totalorder %v3013, 0
        %vm3030 = vcmp.ne.s16.totalorder %v3014, 0
        %vm3031 = vcmp.ne.s16.totalorder %v3015, 0
        %v3032 = vsel %vm3016, %v1935, 0
        %v3033 = vsel %vm3017, %v1936, 0
        %v3034 = vsel %vm3018, %v1937, 0
        %v3035 = vsel %vm3019, %v1938, 0
        %v3036 = vsel %vm3020, %v1939, 0
        %v3037 = vsel %vm3021, %v1940, 0
        %v3038 = vsel %vm3022, %v1941, 0
        %v3039 = vsel %vm3023, %v1942, 0
        %v3040 = vsel %vm3024, %v1943, 0
        %v3041 = vsel %vm3025, %v1944, 0
        %v3042 = vsel %vm3026, %v1945, 0
        %v3043 = vsel %vm3027, %v1946, 0
        %v3044 = vsel %vm3028, %v1947, 0
        %v3045 = vsel %vm3029, %v1948, 0
        %v3046 = vsel %vm3030, %v1949, 0
        %v3047 = vsel %vm3031, %v1950, 0
        %v3064 = vunpack.c.l.b16 %v3032
        %v3065 = vunpack.c.h.b16 %v3032
        %v3066 = vunpack.c.l.b16 %v3033
        %v3067 = vunpack.c.h.b16 %v3033
        %v3068 = vunpack.c.l.b16 %v3034
        %v3069 = vunpack.c.h.b16 %v3034
        %v3070 = vunpack.c.l.b16 %v3035
        %v3071 = vunpack.c.h.b16 %v3035
        %v3072 = vunpack.c.l.b16 %v3036
        %v3073 = vunpack.c.h.b16 %v3036
        %v3074 = vunpack.c.l.b16 %v3037
        %v3075 = vunpack.c.h.b16 %v3037
        %v3076 = vunpack.c.l.b16 %v3038
        %v3077 = vunpack.c.h.b16 %v3038
        %v3078 = vunpack.c.l.b16 %v3039
        %v3079 = vunpack.c.h.b16 %v3039
        %v3080 = vunpack.c.l.b16 %v3040
        %v3081 = vunpack.c.h.b16 %v3040
        %v3082 = vunpack.c.l.b16 %v3041
        %v3083 = vunpack.c.h.b16 %v3041
        %v3084 = vunpack.c.l.b16 %v3042
        %v3085 = vunpack.c.h.b16 %v3042
        %v3086 = vunpack.c.l.b16 %v3043
        %v3087 = vunpack.c.h.b16 %v3043
        %v3088 = vunpack.c.l.b16 %v3044
        %v3089 = vunpack.c.h.b16 %v3044
        %v3090 = vunpack.c.l.b16 %v3045
        %v3091 = vunpack.c.h.b16 %v3045
        %v3092 = vunpack.c.l.b16 %v3046
        %v3093 = vunpack.c.h.b16 %v3046
        %v3094 = vunpack.c.l.b16 %v3047
        %v3095 = vunpack.c.h.b16 %v3047
        %v3096 = vpack.c.b16 %v3064, %v3064
        %v3097 = vpack.c.b16 %v3065, %v3065
        %v3098 = vpack.c.b16 %v3066, %v3066
        %v3099 = vpack.c.b16 %v3067, %v3067
        %v3100 = vpack.c.b16 %v3068, %v3068
        %v3101 = vpack.c.b16 %v3069, %v3069
        %v3102 = vpack.c.b16 %v3070, %v3070
        %v3103 = vpack.c.b16 %v3071, %v3071
        %v3104 = vpack.c.b16 %v3072, %v3072
        %v3105 = vpack.c.b16 %v3073, %v3073
        %v3106 = vpack.c.b16 %v3074, %v3074
        %v3107 = vpack.c.b16 %v3075, %v3075
        %v3108 = vpack.c.b16 %v3076, %v3076
        %v3109 = vpack.c.b16 %v3077, %v3077
        %v3110 = vpack.c.b16 %v3078, %v3078
        %v3111 = vpack.c.b16 %v3079, %v3079
        %v3112 = vpack.c.b16 %v3080, %v3080
        %v3113 = vpack.c.b16 %v3081, %v3081
        %v3114 = vpack.c.b16 %v3082, %v3082
        %v3115 = vpack.c.b16 %v3083, %v3083
        %v3116 = vpack.c.b16 %v3084, %v3084
        %v3117 = vpack.c.b16 %v3085, %v3085
        %v3118 = vpack.c.b16 %v3086, %v3086
        %v3119 = vpack.c.b16 %v3087, %v3087
        %v3120 = vpack.c.b16 %v3088, %v3088
        %v3121 = vpack.c.b16 %v3089, %v3089
        %v3122 = vpack.c.b16 %v3090, %v3090
        %v3123 = vpack.c.b16 %v3091, %v3091
        %v3124 = vpack.c.b16 %v3092, %v3092
        %v3125 = vpack.c.b16 %v3093, %v3093
        %v3126 = vpack.c.b16 %v3094, %v3094
        %v3127 = vpack.c.b16 %v3095, %v3095
        %vm3128 = vsmask.f32 3328
        %vm3129 = vsmask.f32 7440
        %vm3130 = vmor %vm3128, %vm3129
        %v3132 = vshll.u32 %v3096, 16
        %v3134 = vrot.slane %v3132, 5
        %v3135 = vshrl.u32 %v3096, 16
        %v3137 = vrot.slane %v3135, 4
        %v3138 = vor.u32 %v3137, %v3134
        %v3139 = vrot.slane %v3138, 4
        %v3141 = vshll.u32 %v3097, 16
        %v3143 = vrot.slane %v3141, 5
        %v3144 = vsel %vm3130, %v3139, %v3143
        %v3145 = vshrl.u32 %v3097, 16
        %v3147 = vrot.slane %v3145, 4
        %v3148 = vor.u32 %v3147, %v3143
        %v3149 = vrot.slane %v3148, 4
        %v3151 = vshll.u32 %v3098, 16
        %v3153 = vrot.slane %v3151, 5
        %v3154 = vsel %vm3130, %v3149, %v3153
        %v3155 = vshrl.u32 %v3098, 16
        %v3157 = vrot.slane %v3155, 4
        %v3158 = vor.u32 %v3157, %v3153
        %v3159 = vrot.slane %v3158, 4
        %v3161 = vshll.u32 %v3099, 16
        %v3163 = vrot.slane %v3161, 5
        %v3164 = vsel %vm3130, %v3159, %v3163
        %v3165 = vshrl.u32 %v3099, 16
        %v3167 = vrot.slane %v3165, 4
        %v3168 = vor.u32 %v3167, %v3163
        %v3169 = vrot.slane %v3168, 4
        %v3171 = vshll.u32 %v3100, 16
        %v3173 = vrot.slane %v3171, 5
        %v3174 = vsel %vm3130, %v3169, %v3173
        %v3175 = vshrl.u32 %v3100, 16
        %v3177 = vrot.slane %v3175, 4
        %v3178 = vor.u32 %v3177, %v3173
        %v3179 = vrot.slane %v3178, 4
        %v3181 = vshll.u32 %v3101, 16
        %v3183 = vrot.slane %v3181, 5
        %v3184 = vsel %vm3130, %v3179, %v3183
        %v3185 = vshrl.u32 %v3101, 16
        %v3187 = vrot.slane %v3185, 4
        %v3188 = vor.u32 %v3187, %v3183
        %v3189 = vrot.slane %v3188, 4
        %v3191 = vshll.u32 %v3102, 16
        %v3193 = vrot.slane %v3191, 5
        %v3194 = vsel %vm3130, %v3189, %v3193
        %v3195 = vshrl.u32 %v3102, 16
        %v3197 = vrot.slane %v3195, 4
        %v3198 = vor.u32 %v3197, %v3193
        %v3199 = vrot.slane %v3198, 4
        %v3201 = vshll.u32 %v3103, 16
        %v3203 = vrot.slane %v3201, 5
        %v3204 = vsel %vm3130, %v3199, %v3203
        %v3205 = vshrl.u32 %v3103, 16
        %v3207 = vrot.slane %v3205, 4
        %v3208 = vor.u32 %v3207, %v3203
        %v3209 = vrot.slane %v3208, 4
        %v3211 = vshll.u32 %v3104, 16
        %v3213 = vrot.slane %v3211, 5
        %v3214 = vsel %vm3130, %v3209, %v3213
        %v3215 = vshrl.u32 %v3104, 16
        %v3217 = vrot.slane %v3215, 4
        %v3218 = vor.u32 %v3217, %v3213
        %v3219 = vrot.slane %v3218, 4
        %v3221 = vshll.u32 %v3105, 16
        %v3223 = vrot.slane %v3221, 5
        %v3224 = vsel %vm3130, %v3219, %v3223
        %v3225 = vshrl.u32 %v3105, 16
        %v3227 = vrot.slane %v3225, 4
        %v3228 = vor.u32 %v3227, %v3223
        %v3229 = vrot.slane %v3228, 4
        %v3231 = vshll.u32 %v3106, 16
        %v3233 = vrot.slane %v3231, 5
        %v3234 = vsel %vm3130, %v3229, %v3233
        %v3235 = vshrl.u32 %v3106, 16
        %v3237 = vrot.slane %v3235, 4
        %v3238 = vor.u32 %v3237, %v3233
        %v3239 = vrot.slane %v3238, 4
        %v3241 = vshll.u32 %v3107, 16
        %v3243 = vrot.slane %v3241, 5
        %v3244 = vsel %vm3130, %v3239, %v3243
        %v3245 = vshrl.u32 %v3107, 16
        %v3247 = vrot.slane %v3245, 4
        %v3248 = vor.u32 %v3247, %v3243
        %v3249 = vrot.slane %v3248, 4
        %v3251 = vshll.u32 %v3108, 16
        %v3253 = vrot.slane %v3251, 5
        %v3254 = vsel %vm3130, %v3249, %v3253
        %v3255 = vshrl.u32 %v3108, 16
        %v3257 = vrot.slane %v3255, 4
        %v3258 = vor.u32 %v3257, %v3253
        %v3259 = vrot.slane %v3258, 4
        %v3261 = vshll.u32 %v3109, 16
        %v3263 = vrot.slane %v3261, 5
        %v3264 = vsel %vm3130, %v3259, %v3263
        %v3265 = vshrl.u32 %v3109, 16
        %v3267 = vrot.slane %v3265, 4
        %v3268 = vor.u32 %v3267, %v3263
        %v3269 = vrot.slane %v3268, 4
        %v3271 = vshll.u32 %v3110, 16
        %v3273 = vrot.slane %v3271, 5
        %v3274 = vsel %vm3130, %v3269, %v3273
        %v3275 = vshrl.u32 %v3110, 16
        %v3277 = vrot.slane %v3275, 4
        %v3278 = vor.u32 %v3277, %v3273
        %v3279 = vrot.slane %v3278, 4
        %v3281 = vshll.u32 %v3111, 16
        %v3283 = vrot.slane %v3281, 5
        %v3284 = vsel %vm3130, %v3279, %v3283
        %v3285 = vshrl.u32 %v3111, 16
        %v3287 = vrot.slane %v3285, 4
        %v3288 = vor.u32 %v3287, %v3283
        %v3289 = vrot.slane %v3288, 4
        %v3291 = vshll.u32 %v3112, 16
        %v3293 = vrot.slane %v3291, 5
        %v3294 = vsel %vm3130, %v3289, %v3293
        %v3295 = vshrl.u32 %v3112, 16
        %v3297 = vrot.slane %v3295, 4
        %v3298 = vor.u32 %v3297, %v3293
        %v3299 = vrot.slane %v3298, 4
        %v3301 = vshll.u32 %v3113, 16
        %v3303 = vrot.slane %v3301, 5
        %v3304 = vsel %vm3130, %v3299, %v3303
        %v3305 = vshrl.u32 %v3113, 16
        %v3307 = vrot.slane %v3305, 4
        %v3308 = vor.u32 %v3307, %v3303
        %v3309 = vrot.slane %v3308, 4
        %v3311 = vshll.u32 %v3114, 16
        %v3313 = vrot.slane %v3311, 5
        %v3314 = vsel %vm3130, %v3309, %v3313
        %v3315 = vshrl.u32 %v3114, 16
        %v3317 = vrot.slane %v3315, 4
        %v3318 = vor.u32 %v3317, %v3313
        %v3319 = vrot.slane %v3318, 4
        %v3321 = vshll.u32 %v3115, 16
        %v3323 = vrot.slane %v3321, 5
        %v3324 = vsel %vm3130, %v3319, %v3323
        %v3325 = vshrl.u32 %v3115, 16
        %v3327 = vrot.slane %v3325, 4
        %v3328 = vor.u32 %v3327, %v3323
        %v3329 = vrot.slane %v3328, 4
        %v3331 = vshll.u32 %v3116, 16
        %v3333 = vrot.slane %v3331, 5
        %v3334 = vsel %vm3130, %v3329, %v3333
        %v3335 = vshrl.u32 %v3116, 16
        %v3337 = vrot.slane %v3335, 4
        %v3338 = vor.u32 %v3337, %v3333
        %v3339 = vrot.slane %v3338, 4
        %v3341 = vshll.u32 %v3117, 16
        %v3343 = vrot.slane %v3341, 5
        %v3344 = vsel %vm3130, %v3339, %v3343
        %v3345 = vshrl.u32 %v3117, 16
        %v3347 = vrot.slane %v3345, 4
        %v3348 = vor.u32 %v3347, %v3343
        %v3349 = vrot.slane %v3348, 4
        %v3351 = vshll.u32 %v3118, 16
        %v3353 = vrot.slane %v3351, 5
        %v3354 = vsel %vm3130, %v3349, %v3353
        %v3355 = vshrl.u32 %v3118, 16
        %v3357 = vrot.slane %v3355, 4
        %v3358 = vor.u32 %v3357, %v3353
        %v3359 = vrot.slane %v3358, 4
        %v3361 = vshll.u32 %v3119, 16
        %v3363 = vrot.slane %v3361, 5
        %v3364 = vsel %vm3130, %v3359, %v3363
        %v3365 = vshrl.u32 %v3119, 16
        %v3367 = vrot.slane %v3365, 4
        %v3368 = vor.u32 %v3367, %v3363
        %v3369 = vrot.slane %v3368, 4
        %v3371 = vshll.u32 %v3120, 16
        %v3373 = vrot.slane %v3371, 5
        %v3374 = vsel %vm3130, %v3369, %v3373
        %v3375 = vshrl.u32 %v3120, 16
        %v3377 = vrot.slane %v3375, 4
        %v3378 = vor.u32 %v3377, %v3373
        %v3379 = vrot.slane %v3378, 4
        %v3381 = vshll.u32 %v3121, 16
        %v3383 = vrot.slane %v3381, 5
        %v3384 = vsel %vm3130, %v3379, %v3383
        %v3385 = vshrl.u32 %v3121, 16
        %v3387 = vrot.slane %v3385, 4
        %v3388 = vor.u32 %v3387, %v3383
        %v3389 = vrot.slane %v3388, 4
        %v3391 = vshll.u32 %v3122, 16
        %v3393 = vrot.slane %v3391, 5
        %v3394 = vsel %vm3130, %v3389, %v3393
        %v3395 = vshrl.u32 %v3122, 16
        %v3397 = vrot.slane %v3395, 4
        %v3398 = vor.u32 %v3397, %v3393
        %v3399 = vrot.slane %v3398, 4
        %v3401 = vshll.u32 %v3123, 16
        %v3403 = vrot.slane %v3401, 5
        %v3404 = vsel %vm3130, %v3399, %v3403
        %v3405 = vshrl.u32 %v3123, 16
        %v3407 = vrot.slane %v3405, 4
        %v3408 = vor.u32 %v3407, %v3403
        %v3409 = vrot.slane %v3408, 4
        %v3411 = vshll.u32 %v3124, 16
        %v3413 = vrot.slane %v3411, 5
        %v3414 = vsel %vm3130, %v3409, %v3413
        %v3415 = vshrl.u32 %v3124, 16
        %v3417 = vrot.slane %v3415, 4
        %v3418 = vor.u32 %v3417, %v3413
        %v3419 = vrot.slane %v3418, 4
        %v3421 = vshll.u32 %v3125, 16
        %v3423 = vrot.slane %v3421, 5
        %v3424 = vsel %vm3130, %v3419, %v3423
        %v3425 = vshrl.u32 %v3125, 16
        %v3427 = vrot.slane %v3425, 4
        %v3428 = vor.u32 %v3427, %v3423
        %v3429 = vrot.slane %v3428, 4
        %v3431 = vshll.u32 %v3126, 16
        %v3433 = vrot.slane %v3431, 5
        %v3434 = vsel %vm3130, %v3429, %v3433
        %v3435 = vshrl.u32 %v3126, 16
        %v3437 = vrot.slane %v3435, 4
        %v3438 = vor.u32 %v3437, %v3433
        %v3439 = vrot.slane %v3438, 4
        %v3441 = vshll.u32 %v3127, 16
        %v3443 = vrot.slane %v3441, 5
        %v3444 = vsel %vm3130, %v3439, %v3443
        %v3445 = vshrl.u32 %v3127, 16
        %v3447 = vrot.slane %v3445, 4
        %v3448 = vor.u32 %v3447, %v3443
        %v3449 = vrot.slane %v3448, 4
        %vm3483 = vcmask 519171
        %vm3484 = vmand %vm3483, %vm1967
        %v3485 = vld [vmem:[#allocation2 + $0xc] sm:$0x8]
        %v3486 = vsel %vm3484, %v3134, %v3485
        %3487 = vst [vmem:[#allocation2 + $0xc] sm:$0x8] %v3486
        %3488 = vst.msk [vmem:[#allocation2 + $0x14] sm:$0xf] %vm2594, %v3144
        %3489 = vst.msk [vmem:[#allocation2 + $0x1c] sm:$0xf] %vm2594, %v3154
        %3490 = vst.msk [vmem:[#allocation2 + $0x24] sm:$0xf] %vm2594, %v3164
        %3491 = vst.msk [vmem:[#allocation2 + $0x2c] sm:$0xf] %vm2594, %v3174
        %3492 = vst.msk [vmem:[#allocation2 + $0x34] sm:$0xf] %vm2594, %v3184
        %3493 = vst.msk [vmem:[#allocation2 + $0x3c] sm:$0xf] %vm2594, %v3194
        %3494 = vst.msk [vmem:[#allocation2 + $0x44] sm:$0xf] %vm2594, %v3204
        %3495 = vst.msk [vmem:[#allocation2 + $0x4c] sm:$0xf] %vm2594, %v3214
        %3496 = vst.msk [vmem:[#allocation2 + $0x54] sm:$0xf] %vm2594, %v3224
        %3497 = vst.msk [vmem:[#allocation2 + $0x5c] sm:$0xf] %vm2594, %v3234
        %3498 = vst.msk [vmem:[#allocation2 + $0x64] sm:$0xf] %vm2594, %v3244
        %3499 = vst.msk [vmem:[#allocation2 + $0x6c] sm:$0xf] %vm2594, %v3254
        %3500 = vst.msk [vmem:[#allocation2 + $0x74] sm:$0xf] %vm2594, %v3264
        %3501 = vst.msk [vmem:[#allocation2 + $0x7c] sm:$0xf] %vm2594, %v3274
        %3502 = vst.msk [vmem:[#allocation2 + $0x84] sm:$0xf] %vm2594, %v3284
        %3503 = vst.msk [vmem:[#allocation2 + $0x8c] sm:$0xf] %vm2594, %v3294
        %3504 = vst.msk [vmem:[#allocation2 + $0x94] sm:$0xf] %vm2594, %v3304
        %3505 = vst.msk [vmem:[#allocation2 + $0x9c] sm:$0xf] %vm2594, %v3314
        %3506 = vst.msk [vmem:[#allocation2 + $0xa4] sm:$0xf] %vm2594, %v3324
        %3507 = vst.msk [vmem:[#allocation2 + $0xac] sm:$0xf] %vm2594, %v3334
        %3508 = vst.msk [vmem:[#allocation2 + $0xb4] sm:$0xf] %vm2594, %v3344
        %3509 = vst.msk [vmem:[#allocation2 + $0xbc] sm:$0xf] %vm2594, %v3354
        %3510 = vst.msk [vmem:[#allocation2 + $0xc4] sm:$0xf] %vm2594, %v3364
        %3511 = vst.msk [vmem:[#allocation2 + $0xcc] sm:$0xf] %vm2594, %v3374
        %3512 = vst.msk [vmem:[#allocation2 + $0xd4] sm:$0xf] %vm2594, %v3384
        %3513 = vst.msk [vmem:[#allocation2 + $0xdc] sm:$0xf] %vm2594, %v3394
        %3514 = vst.msk [vmem:[#allocation2 + $0xe4] sm:$0xf] %vm2594, %v3404
        %3515 = vst.msk [vmem:[#allocation2 + $0xec] sm:$0xf] %vm2594, %v3414
        %3516 = vst.msk [vmem:[#allocation2 + $0xf4] sm:$0xf] %vm2594, %v3424
        %3517 = vst.msk [vmem:[#allocation2 + $0xfc] sm:$0xf] %vm2594, %v3434
        %3518 = vst.msk [vmem:[#allocation2 + $0x104] sm:$0xf] %vm2594, %v3444
        %vm3519 = vmand %vm2588, %vm3128
        %v3520 = vld [vmem:[#allocation2 + $0x10c] sm:$0xf]
        %v3521 = vsel %vm3519, %v3449, %v3520
        %3522 = vst [vmem:[#allocation2 + $0x10c] sm:$0xf] %v3521
        %v3523 = vld [vmem:[#allocation2] sm:$0xff]
        %v3524 = vld [vmem:[#allocation2 + $0x8] sm:$0xff]
        %v3525 = vld [vmem:[#allocation2 + $0x10] sm:$0xff]
        %v3526 = vld [vmem:[#allocation2 + $0x18] sm:$0xff]
        %v3527 = vld [vmem:[#allocation2 + $0x20] sm:$0xff]
        %v3528 = vld [vmem:[#allocation2 + $0x28] sm:$0xff]
        %v3529 = vld [vmem:[#allocation2 + $0x30] sm:$0xff]
        %v3530 = vld [vmem:[#allocation2 + $0x38] sm:$0xff]
        %v3531 = vld [vmem:[#allocation2 + $0x40] sm:$0xff]
        %v3532 = vld [vmem:[#allocation2 + $0x48] sm:$0xff]
        %v3533 = vld [vmem:[#allocation2 + $0x50] sm:$0xff]
        %v3534 = vld [vmem:[#allocation2 + $0x58] sm:$0xff]
        %v3535 = vld [vmem:[#allocation2 + $0x60] sm:$0xff]
        %v3536 = vld [vmem:[#allocation2 + $0x68] sm:$0xff]
        %v3537 = vld [vmem:[#allocation2 + $0x70] sm:$0xff]
        %v3538 = vld [vmem:[#allocation2 + $0x78] sm:$0xff]
        %v3539 = vld [vmem:[#allocation2 + $0x80] sm:$0xff]
        %v3540 = vld [vmem:[#allocation2 + $0x88] sm:$0xff]
        %v3541 = vld [vmem:[#allocation2 + $0x90] sm:$0xff]
        %v3542 = vld [vmem:[#allocation2 + $0x98] sm:$0xff]
        %v3543 = vld [vmem:[#allocation2 + $0xa0] sm:$0xff]
        %v3544 = vld [vmem:[#allocation2 + $0xa8] sm:$0xff]
        %v3545 = vld [vmem:[#allocation2 + $0xb0] sm:$0xff]
        %v3546 = vld [vmem:[#allocation2 + $0xb8] sm:$0xff]
        %v3547 = vld [vmem:[#allocation2 + $0xc0] sm:$0xff]
        %v3548 = vld [vmem:[#allocation2 + $0xc8] sm:$0xff]
        %v3549 = vld [vmem:[#allocation2 + $0xd0] sm:$0xff]
        %v3550 = vld [vmem:[#allocation2 + $0xd8] sm:$0xff]
        %v3551 = vld [vmem:[#allocation2 + $0xe0] sm:$0xff]
        %v3552 = vld [vmem:[#allocation2 + $0xe8] sm:$0xff]
        %v3553 = vld [vmem:[#allocation2 + $0xf0] sm:$0xff]
        %v3554 = vld [vmem:[#allocation2 + $0xf8] sm:$0xff]
        %v3555 = vld [vmem:[%s7] sm:$0xf]
        %v3556 = vld [vmem:[%s7 + $0x4] sm:$0xf]
        %v3557 = vld [vmem:[%s7 + $0x8] sm:$0xf]
        %v3558 = vld [vmem:[%s7 + $0xc] sm:$0xf]
        %v3559 = vld [vmem:[%s7 + $0x10] sm:$0xf]
        %v3560 = vld [vmem:[%s7 + $0x14] sm:$0xf]
        %v3561 = vld [vmem:[%s7 + $0x18] sm:$0xf]
        %v3562 = vld [vmem:[%s7 + $0x1c] sm:$0xf]
        %v3563 = vld [vmem:[%s7 + $0x20] sm:$0xf]
        %v3564 = vld [vmem:[%s7 + $0x24] sm:$0xf]
        %v3565 = vld [vmem:[%s7 + $0x28] sm:$0xf]
        %v3566 = vld [vmem:[%s7 + $0x2c] sm:$0xf]
        %v3567 = vld [vmem:[%s7 + $0x30] sm:$0xf]
        %v3568 = vld [vmem:[%s7 + $0x34] sm:$0xf]
        %v3569 = vld [vmem:[%s7 + $0x38] sm:$0xf]
        %v3570 = vld [vmem:[%s7 + $0x3c] sm:$0xf]
        %v3571 = vld [vmem:[%s7 + $0x40] sm:$0xf]
        %v3572 = vld [vmem:[%s7 + $0x44] sm:$0xf]
        %v3573 = vld [vmem:[%s7 + $0x48] sm:$0xf]
        %v3574 = vld [vmem:[%s7 + $0x4c] sm:$0xf]
        %v3575 = vld [vmem:[%s7 + $0x50] sm:$0xf]
        %v3576 = vld [vmem:[%s7 + $0x54] sm:$0xf]
        %v3577 = vld [vmem:[%s7 + $0x58] sm:$0xf]
        %v3578 = vld [vmem:[%s7 + $0x5c] sm:$0xf]
        %v3579 = vld [vmem:[#allocation2 + $0x100] sm:$0xff]
        %v3580 = vld [vmem:[#allocation2 + $0x108] sm:$0xff]
        %s3581 = scalar_lea.vmem %s7, 96
        %v3582 = vld [vmem:[%s3581] sm:$0xf]
        %v3583 = vld [vmem:[%s3581 + $0x4] sm:$0xf]
        %v3584 = vld [vmem:[%s3581 + $0x8] sm:$0xf]
        %v3585 = vld [vmem:[%s3581 + $0xc] sm:$0xf]
        %v3586 = vld [vmem:[%s3581 + $0x10] sm:$0xf]
        %v3587 = vld [vmem:[%s3581 + $0x14] sm:$0xf]
        %v3588 = vld [vmem:[%s3581 + $0x18] sm:$0xf]
        %v3589 = vld [vmem:[%s3581 + $0x1c] sm:$0xf]
        %v3590 = vld [vmem:[%s3581 + $0x20] sm:$0xf]
        %v3591 = vld [vmem:[%s3581 + $0x24] sm:$0xf]
        %v3592 = vld [vmem:[%s3581 + $0x28] sm:$0xf]
        %v3593 = vld [vmem:[%s3581 + $0x2c] sm:$0xf]
        %v3594 = vld [vmem:[%s3581 + $0x30] sm:$0xf]
        %v3595 = vld [vmem:[%s3581 + $0x34] sm:$0xf]
        %v3596 = vld [vmem:[%s3581 + $0x38] sm:$0xf]
        %v3597 = vld [vmem:[%s3581 + $0x3c] sm:$0xf]
        %v3598 = vld [vmem:[%s3581 + $0x40] sm:$0xf]
        %v3599 = vld [vmem:[%s3581 + $0x44] sm:$0xf]
        %v3600 = vld [vmem:[%s3581 + $0x48] sm:$0xf]
        %v3601 = vld [vmem:[%s3581 + $0x4c] sm:$0xf]
        %v3602 = vld [vmem:[%s3581 + $0x50] sm:$0xf]
        %v3603 = vld [vmem:[%s3581 + $0x54] sm:$0xf]
        %v3604 = vld [vmem:[%s3581 + $0x58] sm:$0xf]
        %v3605 = vld [vmem:[%s3581 + $0x5c] sm:$0xf]
        %v3638 = vunpack.c.l.b16 %v3525
        %v3639 = vunpack.c.h.b16 %v3525
        %v3640 = vunpack.c.l.b16 %v3526
        %v3641 = vunpack.c.h.b16 %v3526
        %v3642 = vunpack.c.l.b16 %v3527
        %v3643 = vunpack.c.h.b16 %v3527
        %v3644 = vunpack.c.l.b16 %v3528
        %v3645 = vunpack.c.h.b16 %v3528
        %v3646 = vunpack.c.l.b16 %v3529
        %v3647 = vunpack.c.h.b16 %v3529
        %v3648 = vunpack.c.l.b16 %v3530
        %v3649 = vunpack.c.h.b16 %v3530
        %v3650 = vunpack.c.l.b16 %v3531
        %v3651 = vunpack.c.h.b16 %v3531
        %v3652 = vunpack.c.l.b16 %v3532
        %v3653 = vunpack.c.h.b16 %v3532
        %v3654 = vunpack.c.l.b16 %v3533
        %v3655 = vunpack.c.h.b16 %v3533
        %v3656 = vunpack.c.l.b16 %v3534
        %v3657 = vunpack.c.h.b16 %v3534
        %v3658 = vunpack.c.l.b16 %v3535
        %v3659 = vunpack.c.h.b16 %v3535
        %v3660 = vunpack.c.l.b16 %v3536
        %v3661 = vunpack.c.h.b16 %v3536
        %v3662 = vunpack.c.l.b16 %v3537
        %v3663 = vunpack.c.h.b16 %v3537
        %v3664 = vunpack.c.l.b16 %v3538
        %v3665 = vunpack.c.h.b16 %v3538
        %v3666 = vunpack.c.l.b16 %v3539
        %v3667 = vunpack.c.h.b16 %v3539
        %v3668 = vunpack.c.l.b16 %v3540
        %v3669 = vunpack.c.h.b16 %v3540
        %v3670 = vunpack.c.l.b16 %v3541
        %v3671 = vunpack.c.h.b16 %v3541
        %v3672 = vunpack.c.l.b16 %v3542
        %v3673 = vunpack.c.h.b16 %v3542
        %v3674 = vunpack.c.l.b16 %v3543
        %v3675 = vunpack.c.h.b16 %v3543
        %v3676 = vunpack.c.l.b16 %v3544
        %v3677 = vunpack.c.h.b16 %v3544
        %v3678 = vunpack.c.l.b16 %v3545
        %v3679 = vunpack.c.h.b16 %v3545
        %v3680 = vunpack.c.l.b16 %v3546
        %v3681 = vunpack.c.h.b16 %v3546
        %v3682 = vunpack.c.l.b16 %v3547
        %v3683 = vunpack.c.h.b16 %v3547
        %v3684 = vunpack.c.l.b16 %v3548
        %v3685 = vunpack.c.h.b16 %v3548
        %v3686 = vunpack.c.l.b16 %v3549
        %v3687 = vunpack.c.h.b16 %v3549
        %v3688 = vunpack.c.l.b16 %v3550
        %v3689 = vunpack.c.h.b16 %v3550
        %v3690 = vunpack.c.l.b16 %v3551
        %v3691 = vunpack.c.h.b16 %v3551
        %v3692 = vunpack.c.l.b16 %v3552
        %v3693 = vunpack.c.h.b16 %v3552
        %v3694 = vunpack.c.l.b16 %v3553
        %v3695 = vunpack.c.h.b16 %v3553
        %v3696 = vunpack.c.l.b16 %v3554
        %v3697 = vunpack.c.h.b16 %v3554
        %v3698 = vunpack.c.l.b16 %v3579
        %v3699 = vunpack.c.h.b16 %v3579
        %v3700 = vunpack.c.l.b16 %v3580
        %v3701 = vunpack.c.h.b16 %v3580
        %v3702 = vpack.c.b16 %v3640, %v3638
        %v3703 = vpack.c.b16 %v3641, %v3639
        %v3704 = vpack.c.b16 %v3644, %v3642
        %v3705 = vpack.c.b16 %v3645, %v3643
        %v3706 = vpack.c.b16 %v3648, %v3646
        %v3707 = vpack.c.b16 %v3649, %v3647
        %v3708 = vpack.c.b16 %v3652, %v3650
        %v3709 = vpack.c.b16 %v3653, %v3651
        %v3710 = vpack.c.b16 %v3656, %v3654
        %v3711 = vpack.c.b16 %v3657, %v3655
        %v3712 = vpack.c.b16 %v3660, %v3658
        %v3713 = vpack.c.b16 %v3661, %v3659
        %v3714 = vpack.c.b16 %v3664, %v3662
        %v3715 = vpack.c.b16 %v3665, %v3663
        %v3716 = vpack.c.b16 %v3668, %v3666
        %v3717 = vpack.c.b16 %v3669, %v3667
        %v3718 = vpack.c.b16 %v3672, %v3670
        %v3719 = vpack.c.b16 %v3673, %v3671
        %v3720 = vpack.c.b16 %v3676, %v3674
        %v3721 = vpack.c.b16 %v3677, %v3675
        %v3722 = vpack.c.b16 %v3680, %v3678
        %v3723 = vpack.c.b16 %v3681, %v3679
        %v3724 = vpack.c.b16 %v3684, %v3682
        %v3725 = vpack.c.b16 %v3685, %v3683
        %v3726 = vpack.c.b16 %v3688, %v3686
        %v3727 = vpack.c.b16 %v3689, %v3687
        %v3728 = vpack.c.b16 %v3692, %v3690
        %v3729 = vpack.c.b16 %v3693, %v3691
        %v3730 = vpack.c.b16 %v3696, %v3694
        %v3731 = vpack.c.b16 %v3697, %v3695
        %v3732 = vpack.c.b16 %v3700, %v3698
        %v3733 = vpack.c.b16 %v3701, %v3699
        %v3774 = vunpack.c.l.b16 %v3582
        %v3775 = vunpack.c.l.b16 %v3583
        %v3776 = vunpack.c.l.b16 %v3584
        %v3777 = vunpack.c.l.b16 %v3585
        %v3778 = vunpack.c.l.b16 %v3586
        %v3779 = vunpack.c.l.b16 %v3587
        %v3780 = vunpack.c.l.b16 %v3588
        %v3781 = vunpack.c.l.b16 %v3589
        %v3782 = vunpack.c.l.b16 %v3590
        %v3783 = vunpack.c.l.b16 %v3591
        %v3784 = vunpack.c.l.b16 %v3592
        %v3785 = vunpack.c.l.b16 %v3593
        %v3786 = vunpack.c.l.b16 %v3594
        %v3787 = vunpack.c.l.b16 %v3595
        %v3788 = vunpack.c.l.b16 %v3596
        %v3789 = vunpack.c.l.b16 %v3597
        %v3790 = vunpack.c.l.b16 %v3598
        %v3791 = vunpack.c.l.b16 %v3599
        %v3792 = vunpack.c.l.b16 %v3600
        %v3793 = vunpack.c.l.b16 %v3601
        %v3794 = vunpack.c.l.b16 %v3602
        %v3795 = vunpack.c.l.b16 %v3603
        %v3796 = vunpack.c.l.b16 %v3604
        %v3797 = vunpack.c.l.b16 %v3605
        %v3798 = vpack.c.b16 %v3775, %v3774
        %v3799 = vpack.c.b16 %v3777, %v3776
        %v3800 = vpack.c.b16 %v3779, %v3778
        %v3801 = vpack.c.b16 %v3781, %v3780
        %v3802 = vpack.c.b16 %v3783, %v3782
        %v3803 = vpack.c.b16 %v3785, %v3784
        %v3804 = vpack.c.b16 %v3787, %v3786
        %v3805 = vpack.c.b16 %v3789, %v3788
        %v3806 = vpack.c.b16 %v3791, %v3790
        %v3807 = vpack.c.b16 %v3793, %v3792
        %v3808 = vpack.c.b16 %v3795, %v3794
        %v3809 = vpack.c.b16 %v3797, %v3796
        %v3823 = vsel %vm1501, %v3703, 0
        %v3826 = vsel %vm1501, %v3705, 0
        %v3829 = vsel %vm1501, %v3707, 0
        %v3832 = vsel %vm1501, %v3709, 0
        %v3835 = vsel %vm1501, %v3711, 0
        %v3838 = vsel %vm1501, %v3713, 0
        %v3841 = vsel %vm1501, %v3715, 0
        %v3844 = vsel %vm1501, %v3717, 0
        %v3847 = vsel %vm1501, %v3719, 0
        %v3850 = vsel %vm1501, %v3721, 0
        %v3853 = vsel %vm1501, %v3723, 0
        %v3856 = vsel %vm1501, %v3725, 0
        %v3859 = vsel %vm1501, %v3727, 0
        %v3862 = vsel %vm1501, %v3729, 0
        %v3865 = vsel %vm1501, %v3731, 0
        %v3868 = vsel %vm1501, %v3733, 0
        %3870 = vmatprep.subr.bf16.mxu0 0
        %3871 = vmatpush1.bf16.msra.mxu0 %v3805
        %3872 = vmatprep.subr.bf16.mxu0 0
        %3873 = vmatpush1.bf16.msra.mxu0 %v3804
        %3874 = vmatprep.subr.bf16.mxu0 0
        %3875 = vmatpush1.bf16.msra.mxu0 %v3803
        %3876 = vmatprep.subr.bf16.mxu0 0
        %3877 = vmatpush1.bf16.msra.mxu0 %v3802
        %3878 = vmatprep.subr.bf16.mxu0 0
        %3879 = vmatpush1.bf16.msra.mxu0 %v3801
        %3880 = vmatprep.subr.bf16.mxu0 0
        %3881 = vmatpush1.bf16.msra.mxu0 %v3800
        %3882 = vmatprep.subr.bf16.mxu0 0
        %3883 = vmatpush1.bf16.msra.mxu0 %v3799
        %3884 = vmatprep.subr.bf16.mxu0 0
        %3885 = vmatpush1.bf16.msra.mxu0 %v3798
        %3886 = vmatprep.subr.bf16.mxu0 0
        %3887 = vmatpush2.bf16.msra.mxu0 0
        %3888 = vmatprep.subr.bf16.mxu0 0
        %3889 = vmatpush2.bf16.msra.mxu0 0
        %3890 = vmatprep.subr.bf16.mxu0 0
        %3891 = vmatpush2.bf16.msra.mxu0 0
        %3892 = vmatprep.subr.bf16.mxu0 0
        %3893 = vmatpush2.bf16.msra.mxu0 0
        %3894 = vmatprep.subr.bf16.mxu0 0
        %3895 = vmatpush2.bf16.msra.mxu0 %v3809
        %3896 = vmatprep.subr.bf16.mxu0 0
        %3897 = vmatpush2.bf16.msra.mxu0 %v3808
        %3898 = vmatprep.subr.bf16.mxu0 0
        %3899 = vmatpush2.bf16.msra.mxu0 %v3807
        %3900 = vmatprep.subr.bf16.mxu0 0
        %3901 = vmatpush2.bf16.msra.mxu0 %v3806
        %3902 = vmatprep.mubr.bf16.mxu0 %v3823
        %3903 = vmatmul.mubr.bf16.gmra.mxu0 %v3702
        %v3904 = vpop.f32.mrf.mxu0
        %v3905 = vadd.f32 0.0, %v3904
        %v3906 = vpop.f32.mrf.mxu0
        %v3907 = vpop.f32.mrf.mxu0
        %v3908 = vadd.f32 0.0, %v3907
        %v3909 = vpop.f32.mrf.mxu0
        %3910 = vmatprep.mubr.bf16.mxu0 %v3826
        %3911 = vmatmul.mubr.bf16.gmra.mxu0 %v3704
        %v3912 = vpop.f32.mrf.mxu0
        %v3913 = vadd.f32 0.0, %v3912
        %v3914 = vpop.f32.mrf.mxu0
        %v3915 = vpop.f32.mrf.mxu0
        %v3916 = vadd.f32 0.0, %v3915
        %v3917 = vpop.f32.mrf.mxu0
        %3918 = vmatprep.mubr.bf16.mxu0 %v3829
        %3919 = vmatmul.mubr.bf16.gmra.mxu0 %v3706
        %v3920 = vpop.f32.mrf.mxu0
        %v3921 = vadd.f32 0.0, %v3920
        %v3922 = vpop.f32.mrf.mxu0
        %v3923 = vpop.f32.mrf.mxu0
        %v3924 = vadd.f32 0.0, %v3923
        %v3925 = vpop.f32.mrf.mxu0
        %3926 = vmatprep.mubr.bf16.mxu0 %v3832
        %3927 = vmatmul.mubr.bf16.gmra.mxu0 %v3708
        %v3928 = vpop.f32.mrf.mxu0
        %v3929 = vadd.f32 0.0, %v3928
        %v3930 = vpop.f32.mrf.mxu0
        %v3931 = vpop.f32.mrf.mxu0
        %v3932 = vadd.f32 0.0, %v3931
        %v3933 = vpop.f32.mrf.mxu0
        %3934 = vmatprep.mubr.bf16.mxu0 %v3835
        %3935 = vmatmul.mubr.bf16.gmra.mxu0 %v3710
        %v3936 = vpop.f32.mrf.mxu0
        %v3937 = vadd.f32 0.0, %v3936
        %v3938 = vpop.f32.mrf.mxu0
        %v3939 = vpop.f32.mrf.mxu0
        %v3940 = vadd.f32 0.0, %v3939
        %v3941 = vpop.f32.mrf.mxu0
        %3942 = vmatprep.mubr.bf16.mxu0 %v3838
        %3943 = vmatmul.mubr.bf16.gmra.mxu0 %v3712
        %v3944 = vpop.f32.mrf.mxu0
        %v3945 = vadd.f32 0.0, %v3944
        %v3946 = vpop.f32.mrf.mxu0
        %v3947 = vpop.f32.mrf.mxu0
        %v3948 = vadd.f32 0.0, %v3947
        %v3949 = vpop.f32.mrf.mxu0
        %3950 = vmatprep.mubr.bf16.mxu0 %v3841
        %3951 = vmatmul.mubr.bf16.gmra.mxu0 %v3714
        %v3952 = vpop.f32.mrf.mxu0
        %v3953 = vadd.f32 0.0, %v3952
        %v3954 = vpop.f32.mrf.mxu0
        %v3955 = vpop.f32.mrf.mxu0
        %v3956 = vadd.f32 0.0, %v3955
        %v3957 = vpop.f32.mrf.mxu0
        %3958 = vmatprep.mubr.bf16.mxu0 %v3844
        %3959 = vmatmul.mubr.bf16.gmra.mxu0 %v3716
        %v3960 = vpop.f32.mrf.mxu0
        %v3961 = vadd.f32 0.0, %v3960
        %v3962 = vpop.f32.mrf.mxu0
        %v3963 = vpop.f32.mrf.mxu0
        %v3964 = vadd.f32 0.0, %v3963
        %v3965 = vpop.f32.mrf.mxu0
        %3966 = vmatprep.mubr.bf16.mxu0 %v3847
        %3967 = vmatmul.mubr.bf16.gmra.mxu0 %v3718
        %v3968 = vpop.f32.mrf.mxu0
        %v3969 = vadd.f32 0.0, %v3968
        %v3970 = vpop.f32.mrf.mxu0
        %v3971 = vpop.f32.mrf.mxu0
        %v3972 = vadd.f32 0.0, %v3971
        %v3973 = vpop.f32.mrf.mxu0
        %3974 = vmatprep.mubr.bf16.mxu0 %v3850
        %3975 = vmatmul.mubr.bf16.gmra.mxu0 %v3720
        %v3976 = vpop.f32.mrf.mxu0
        %v3977 = vadd.f32 0.0, %v3976
        %v3978 = vpop.f32.mrf.mxu0
        %v3979 = vpop.f32.mrf.mxu0
        %v3980 = vadd.f32 0.0, %v3979
        %v3981 = vpop.f32.mrf.mxu0
        %3982 = vmatprep.mubr.bf16.mxu0 %v3853
        %3983 = vmatmul.mubr.bf16.gmra.mxu0 %v3722
        %v3984 = vpop.f32.mrf.mxu0
        %v3985 = vadd.f32 0.0, %v3984
        %v3986 = vpop.f32.mrf.mxu0
        %v3987 = vpop.f32.mrf.mxu0
        %v3988 = vadd.f32 0.0, %v3987
        %v3989 = vpop.f32.mrf.mxu0
        %3990 = vmatprep.mubr.bf16.mxu0 %v3856
        %3991 = vmatmul.mubr.bf16.gmra.mxu0 %v3724
        %v3992 = vpop.f32.mrf.mxu0
        %v3993 = vadd.f32 0.0, %v3992
        %v3994 = vpop.f32.mrf.mxu0
        %v3995 = vpop.f32.mrf.mxu0
        %v3996 = vadd.f32 0.0, %v3995
        %v3997 = vpop.f32.mrf.mxu0
        %3998 = vmatprep.mubr.bf16.mxu0 %v3859
        %3999 = vmatmul.mubr.bf16.gmra.mxu0 %v3726
        %v4000 = vpop.f32.mrf.mxu0
        %v4001 = vadd.f32 0.0, %v4000
        %v4002 = vpop.f32.mrf.mxu0
        %v4003 = vpop.f32.mrf.mxu0
        %v4004 = vadd.f32 0.0, %v4003
        %v4005 = vpop.f32.mrf.mxu0
        %4006 = vmatprep.mubr.bf16.mxu0 %v3862
        %4007 = vmatmul.mubr.bf16.gmra.mxu0 %v3728
        %v4008 = vpop.f32.mrf.mxu0
        %v4009 = vadd.f32 0.0, %v4008
        %v4010 = vpop.f32.mrf.mxu0
        %v4011 = vpop.f32.mrf.mxu0
        %v4012 = vadd.f32 0.0, %v4011
        %v4013 = vpop.f32.mrf.mxu0
        %4014 = vmatprep.mubr.bf16.mxu0 %v3865
        %4015 = vmatmul.mubr.bf16.gmra.mxu0 %v3730
        %v4016 = vpop.f32.mrf.mxu0
        %v4017 = vadd.f32 0.0, %v4016
        %v4018 = vpop.f32.mrf.mxu0
        %v4019 = vpop.f32.mrf.mxu0
        %v4020 = vadd.f32 0.0, %v4019
        %v4021 = vpop.f32.mrf.mxu0
        %4022 = vmatprep.mubr.bf16.mxu0 %v3868
        %4023 = vmatmul.mubr.bf16.gmra.mxu0 %v3732
        %v4024 = vpop.f32.mrf.mxu0
        %v4025 = vadd.f32 0.0, %v4024
        %v4026 = vpop.f32.mrf.mxu0
        %v4027 = vpop.f32.mrf.mxu0
        %v4028 = vadd.f32 0.0, %v4027
        %v4029 = vpop.f32.mrf.mxu0
        %4030 = vdwg.mxu0
        %v4033 = vunpack.c.l.b16 %v3523
        %v4034 = vunpack.c.h.b16 %v3523
        %v4035 = vunpack.c.l.b16 %v3524
        %v4036 = vunpack.c.h.b16 %v3524
        %v4037 = vpack.c.b16 %v4035, %v4033
        %v4038 = vpack.c.b16 %v4036, %v4034
        %v4064 = vunpack.c.l.b16 %v3555
        %v4065 = vunpack.c.l.b16 %v3556
        %v4066 = vunpack.c.l.b16 %v3557
        %v4067 = vunpack.c.l.b16 %v3558
        %v4068 = vunpack.c.l.b16 %v3559
        %v4069 = vunpack.c.l.b16 %v3560
        %v4070 = vunpack.c.l.b16 %v3561
        %v4071 = vunpack.c.l.b16 %v3562
        %v4072 = vunpack.c.l.b16 %v3563
        %v4073 = vunpack.c.l.b16 %v3564
        %v4074 = vunpack.c.l.b16 %v3565
        %v4075 = vunpack.c.l.b16 %v3566
        %v4076 = vunpack.c.l.b16 %v3567
        %v4077 = vunpack.c.l.b16 %v3568
        %v4078 = vunpack.c.l.b16 %v3569
        %v4079 = vunpack.c.l.b16 %v3570
        %v4080 = vunpack.c.l.b16 %v3571
        %v4081 = vunpack.c.l.b16 %v3572
        %v4082 = vunpack.c.l.b16 %v3573
        %v4083 = vunpack.c.l.b16 %v3574
        %v4084 = vunpack.c.l.b16 %v3575
        %v4085 = vunpack.c.l.b16 %v3576
        %v4086 = vunpack.c.l.b16 %v3577
        %v4087 = vunpack.c.l.b16 %v3578
        %v4088 = vpack.c.b16 %v4065, %v4064
        %v4089 = vpack.c.b16 %v4067, %v4066
        %v4090 = vpack.c.b16 %v4069, %v4068
        %v4091 = vpack.c.b16 %v4071, %v4070
        %v4092 = vpack.c.b16 %v4073, %v4072
        %v4093 = vpack.c.b16 %v4075, %v4074
        %v4094 = vpack.c.b16 %v4077, %v4076
        %v4095 = vpack.c.b16 %v4079, %v4078
        %v4096 = vpack.c.b16 %v4081, %v4080
        %v4097 = vpack.c.b16 %v4083, %v4082
        %v4098 = vpack.c.b16 %v4085, %v4084
        %v4099 = vpack.c.b16 %v4087, %v4086
        %v4113 = vsel %vm1501, %v4038, 0
        %4115 = vmatprep.subr.bf16.mxu0 0
        %4116 = vmatpush1.bf16.msra.mxu0 %v4095
        %4117 = vmatprep.subr.bf16.mxu0 0
        %4118 = vmatpush1.bf16.msra.mxu0 %v4094
        %4119 = vmatprep.subr.bf16.mxu0 0
        %4120 = vmatpush1.bf16.msra.mxu0 %v4093
        %4121 = vmatprep.subr.bf16.mxu0 0
        %4122 = vmatpush1.bf16.msra.mxu0 %v4092
        %4123 = vmatprep.subr.bf16.mxu0 0
        %4124 = vmatpush1.bf16.msra.mxu0 %v4091
        %4125 = vmatprep.subr.bf16.mxu0 0
        %4126 = vmatpush1.bf16.msra.mxu0 %v4090
        %4127 = vmatprep.subr.bf16.mxu0 0
        %4128 = vmatpush1.bf16.msra.mxu0 %v4089
        %4129 = vmatprep.subr.bf16.mxu0 0
        %4130 = vmatpush1.bf16.msra.mxu0 %v4088
        %4131 = vmatprep.subr.bf16.mxu0 0
        %4132 = vmatpush2.bf16.msra.mxu0 0
        %4133 = vmatprep.subr.bf16.mxu0 0
        %4134 = vmatpush2.bf16.msra.mxu0 0
        %4135 = vmatprep.subr.bf16.mxu0 0
        %4136 = vmatpush2.bf16.msra.mxu0 0
        %4137 = vmatprep.subr.bf16.mxu0 0
        %4138 = vmatpush2.bf16.msra.mxu0 0
        %4139 = vmatprep.subr.bf16.mxu0 0
        %4140 = vmatpush2.bf16.msra.mxu0 %v4099
        %4141 = vmatprep.subr.bf16.mxu0 0
        %4142 = vmatpush2.bf16.msra.mxu0 %v4098
        %4143 = vmatprep.subr.bf16.mxu0 0
        %4144 = vmatpush2.bf16.msra.mxu0 %v4097
        %4145 = vmatprep.subr.bf16.mxu0 0
        %4146 = vmatpush2.bf16.msra.mxu0 %v4096
        %4147 = vmatprep.mubr.bf16.mxu0 %v4113
        %4148 = vmatmul.mubr.bf16.gmra.mxu0 %v4037
        %v4149 = vpop.f32.mrf.mxu0
        %v4150 = vadd.f32 %v3905, %v4149
        %v4151 = vpop.f32.mrf.mxu0
        %v4152 = vpop.f32.mrf.mxu0
        %v4153 = vadd.f32 %v3908, %v4152
        %v4154 = vpop.f32.mrf.mxu0
        %4155 = vmatprep.mubr.bf16.mxu0 %v3823
        %4156 = vmatmul.mubr.bf16.gmra.mxu0 %v3702
        %v4157 = vpop.f32.mrf.mxu0
        %v4158 = vadd.f32 %v3913, %v4157
        %v4159 = vpop.f32.mrf.mxu0
        %v4160 = vpop.f32.mrf.mxu0
        %v4161 = vadd.f32 %v3916, %v4160
        %v4162 = vpop.f32.mrf.mxu0
        %4163 = vmatprep.mubr.bf16.mxu0 %v3826
        %4164 = vmatmul.mubr.bf16.gmra.mxu0 %v3704
        %v4165 = vpop.f32.mrf.mxu0
        %v4166 = vadd.f32 %v3921, %v4165
        %v4167 = vpop.f32.mrf.mxu0
        %v4168 = vpop.f32.mrf.mxu0
        %v4169 = vadd.f32 %v3924, %v4168
        %v4170 = vpop.f32.mrf.mxu0
        %4171 = vmatprep.mubr.bf16.mxu0 %v3829
        %4172 = vmatmul.mubr.bf16.gmra.mxu0 %v3706
        %v4173 = vpop.f32.mrf.mxu0
        %v4174 = vadd.f32 %v3929, %v4173
        %v4175 = vpop.f32.mrf.mxu0
        %v4176 = vpop.f32.mrf.mxu0
        %v4177 = vadd.f32 %v3932, %v4176
        %v4178 = vpop.f32.mrf.mxu0
        %4179 = vmatprep.mubr.bf16.mxu0 %v3832
        %4180 = vmatmul.mubr.bf16.gmra.mxu0 %v3708
        %v4181 = vpop.f32.mrf.mxu0
        %v4182 = vadd.f32 %v3937, %v4181
        %v4183 = vpop.f32.mrf.mxu0
        %v4184 = vpop.f32.mrf.mxu0
        %v4185 = vadd.f32 %v3940, %v4184
        %v4186 = vpop.f32.mrf.mxu0
        %4187 = vmatprep.mubr.bf16.mxu0 %v3835
        %4188 = vmatmul.mubr.bf16.gmra.mxu0 %v3710
        %v4189 = vpop.f32.mrf.mxu0
        %v4190 = vadd.f32 %v3945, %v4189
        %v4191 = vpop.f32.mrf.mxu0
        %v4192 = vpop.f32.mrf.mxu0
        %v4193 = vadd.f32 %v3948, %v4192
        %v4194 = vpop.f32.mrf.mxu0
        %4195 = vmatprep.mubr.bf16.mxu0 %v3838
        %4196 = vmatmul.mubr.bf16.gmra.mxu0 %v3712
        %v4197 = vpop.f32.mrf.mxu0
        %v4198 = vadd.f32 %v3953, %v4197
        %v4199 = vpop.f32.mrf.mxu0
        %v4200 = vpop.f32.mrf.mxu0
        %v4201 = vadd.f32 %v3956, %v4200
        %v4202 = vpop.f32.mrf.mxu0
        %4203 = vmatprep.mubr.bf16.mxu0 %v3841
        %4204 = vmatmul.mubr.bf16.gmra.mxu0 %v3714
        %v4205 = vpop.f32.mrf.mxu0
        %v4206 = vadd.f32 %v3961, %v4205
        %v4207 = vpop.f32.mrf.mxu0
        %v4208 = vpop.f32.mrf.mxu0
        %v4209 = vadd.f32 %v3964, %v4208
        %v4210 = vpop.f32.mrf.mxu0
        %4211 = vmatprep.mubr.bf16.mxu0 %v3844
        %4212 = vmatmul.mubr.bf16.gmra.mxu0 %v3716
        %v4213 = vpop.f32.mrf.mxu0
        %v4214 = vadd.f32 %v3969, %v4213
        %v4215 = vpop.f32.mrf.mxu0
        %v4216 = vpop.f32.mrf.mxu0
        %v4217 = vadd.f32 %v3972, %v4216
        %v4218 = vpop.f32.mrf.mxu0
        %4219 = vmatprep.mubr.bf16.mxu0 %v3847
        %4220 = vmatmul.mubr.bf16.gmra.mxu0 %v3718
        %v4221 = vpop.f32.mrf.mxu0
        %v4222 = vadd.f32 %v3977, %v4221
        %v4223 = vpop.f32.mrf.mxu0
        %v4224 = vpop.f32.mrf.mxu0
        %v4225 = vadd.f32 %v3980, %v4224
        %v4226 = vpop.f32.mrf.mxu0
        %4227 = vmatprep.mubr.bf16.mxu0 %v3850
        %4228 = vmatmul.mubr.bf16.gmra.mxu0 %v3720
        %v4229 = vpop.f32.mrf.mxu0
        %v4230 = vadd.f32 %v3985, %v4229
        %v4231 = vpop.f32.mrf.mxu0
        %v4232 = vpop.f32.mrf.mxu0
        %v4233 = vadd.f32 %v3988, %v4232
        %v4234 = vpop.f32.mrf.mxu0
        %4235 = vmatprep.mubr.bf16.mxu0 %v3853
        %4236 = vmatmul.mubr.bf16.gmra.mxu0 %v3722
        %v4237 = vpop.f32.mrf.mxu0
        %v4238 = vadd.f32 %v3993, %v4237
        %v4239 = vpop.f32.mrf.mxu0
        %v4240 = vpop.f32.mrf.mxu0
        %v4241 = vadd.f32 %v3996, %v4240
        %v4242 = vpop.f32.mrf.mxu0
        %4243 = vmatprep.mubr.bf16.mxu0 %v3856
        %4244 = vmatmul.mubr.bf16.gmra.mxu0 %v3724
        %v4245 = vpop.f32.mrf.mxu0
        %v4246 = vadd.f32 %v4001, %v4245
        %v4247 = vpop.f32.mrf.mxu0
        %v4248 = vpop.f32.mrf.mxu0
        %v4249 = vadd.f32 %v4004, %v4248
        %v4250 = vpop.f32.mrf.mxu0
        %4251 = vmatprep.mubr.bf16.mxu0 %v3859
        %4252 = vmatmul.mubr.bf16.gmra.mxu0 %v3726
        %v4253 = vpop.f32.mrf.mxu0
        %v4254 = vadd.f32 %v4009, %v4253
        %v4255 = vpop.f32.mrf.mxu0
        %v4256 = vpop.f32.mrf.mxu0
        %v4257 = vadd.f32 %v4012, %v4256
        %v4258 = vpop.f32.mrf.mxu0
        %4259 = vmatprep.mubr.bf16.mxu0 %v3862
        %4260 = vmatmul.mubr.bf16.gmra.mxu0 %v3728
        %v4261 = vpop.f32.mrf.mxu0
        %v4262 = vadd.f32 %v4017, %v4261
        %v4263 = vpop.f32.mrf.mxu0
        %v4264 = vpop.f32.mrf.mxu0
        %v4265 = vadd.f32 %v4020, %v4264
        %v4266 = vpop.f32.mrf.mxu0
        %4267 = vmatprep.mubr.bf16.mxu0 %v3865
        %4268 = vmatmul.mubr.bf16.gmra.mxu0 %v3730
        %v4269 = vpop.f32.mrf.mxu0
        %v4270 = vadd.f32 %v4025, %v4269
        %v4271 = vpop.f32.mrf.mxu0
        %v4272 = vpop.f32.mrf.mxu0
        %v4273 = vadd.f32 %v4028, %v4272
        %v4274 = vpop.f32.mrf.mxu0
        %4275 = vdwg.mxu0
        %v4276 = vld [vmem:[#allocation2 + $0x20] sm:$0xff]
        %v4277 = vld [vmem:[#allocation2 + $0x28] sm:$0xff]
        %v4278 = vld [vmem:[#allocation2 + $0x30] sm:$0xff]
        %v4279 = vld [vmem:[#allocation2 + $0x38] sm:$0xff]
        %v4280 = vld [vmem:[#allocation2 + $0x40] sm:$0xff]
        %v4281 = vld [vmem:[#allocation2 + $0x48] sm:$0xff]
        %v4282 = vld [vmem:[#allocation2 + $0x50] sm:$0xff]
        %v4283 = vld [vmem:[#allocation2 + $0x58] sm:$0xff]
        %v4284 = vld [vmem:[#allocation2 + $0x60] sm:$0xff]
        %v4285 = vld [vmem:[#allocation2 + $0x68] sm:$0xff]
        %v4286 = vld [vmem:[#allocation2 + $0x70] sm:$0xff]
        %v4287 = vld [vmem:[#allocation2 + $0x78] sm:$0xff]
        %v4288 = vld [vmem:[#allocation2 + $0x80] sm:$0xff]
        %v4289 = vld [vmem:[#allocation2 + $0x88] sm:$0xff]
        %v4290 = vld [vmem:[#allocation2 + $0x90] sm:$0xff]
        %v4291 = vld [vmem:[#allocation2 + $0x98] sm:$0xff]
        %v4292 = vld [vmem:[#allocation2 + $0xa0] sm:$0xff]
        %v4293 = vld [vmem:[#allocation2 + $0xa8] sm:$0xff]
        %v4294 = vld [vmem:[#allocation2 + $0xb0] sm:$0xff]
        %v4295 = vld [vmem:[#allocation2 + $0xb8] sm:$0xff]
        %v4296 = vld [vmem:[#allocation2 + $0xc0] sm:$0xff]
        %v4297 = vld [vmem:[#allocation2 + $0xc8] sm:$0xff]
        %v4298 = vld [vmem:[#allocation2 + $0xd0] sm:$0xff]
        %v4299 = vld [vmem:[#allocation2 + $0xd8] sm:$0xff]
        %v4300 = vld [vmem:[#allocation2 + $0xe0] sm:$0xff]
        %v4301 = vld [vmem:[#allocation2 + $0xe8] sm:$0xff]
        %v4302 = vld [vmem:[#allocation2 + $0xf0] sm:$0xff]
        %v4303 = vld [vmem:[#allocation2 + $0xf8] sm:$0xff]
        %v4304 = vld [vmem:[#allocation2 + $0x100] sm:$0xff]
        %v4305 = vld [vmem:[#allocation2 + $0x108] sm:$0xff]
        %v4306 = vld [vmem:[#allocation2 + $0x110] sm:$0xff]
        %v4307 = vld [vmem:[#allocation2 + $0x118] sm:$0xff]
        %s4308 = scalar_lea.vmem %s7, 192
        %v4309 = vld [vmem:[%s4308] sm:$0xf]
        %v4310 = vld [vmem:[%s4308 + $0x4] sm:$0xf]
        %v4311 = vld [vmem:[%s4308 + $0x8] sm:$0xf]
        %v4312 = vld [vmem:[%s4308 + $0xc] sm:$0xf]
        %v4313 = vld [vmem:[%s4308 + $0x10] sm:$0xf]
        %v4314 = vld [vmem:[%s4308 + $0x14] sm:$0xf]
        %v4315 = vld [vmem:[%s4308 + $0x18] sm:$0xf]
        %v4316 = vld [vmem:[%s4308 + $0x1c] sm:$0xf]
        %v4317 = vld [vmem:[%s4308 + $0x20] sm:$0xf]
        %v4318 = vld [vmem:[%s4308 + $0x24] sm:$0xf]
        %v4319 = vld [vmem:[%s4308 + $0x28] sm:$0xf]
        %v4320 = vld [vmem:[%s4308 + $0x2c] sm:$0xf]
        %v4321 = vld [vmem:[%s4308 + $0x30] sm:$0xf]
        %v4322 = vld [vmem:[%s4308 + $0x34] sm:$0xf]
        %v4323 = vld [vmem:[%s4308 + $0x38] sm:$0xf]
        %v4324 = vld [vmem:[%s4308 + $0x3c] sm:$0xf]
        %v4325 = vld [vmem:[%s4308 + $0x40] sm:$0xf]
        %v4326 = vld [vmem:[%s4308 + $0x44] sm:$0xf]
        %v4327 = vld [vmem:[%s4308 + $0x48] sm:$0xf]
        %v4328 = vld [vmem:[%s4308 + $0x4c] sm:$0xf]
        %v4329 = vld [vmem:[%s4308 + $0x50] sm:$0xf]
        %v4330 = vld [vmem:[%s4308 + $0x54] sm:$0xf]
        %v4331 = vld [vmem:[%s4308 + $0x58] sm:$0xf]
        %v4332 = vld [vmem:[%s4308 + $0x5c] sm:$0xf]
        %v4365 = vunpack.c.l.b16 %v4276
        %v4366 = vunpack.c.h.b16 %v4276
        %v4367 = vunpack.c.l.b16 %v4277
        %v4368 = vunpack.c.h.b16 %v4277
        %v4369 = vunpack.c.l.b16 %v4278
        %v4370 = vunpack.c.h.b16 %v4278
        %v4371 = vunpack.c.l.b16 %v4279
        %v4372 = vunpack.c.h.b16 %v4279
        %v4373 = vunpack.c.l.b16 %v4280
        %v4374 = vunpack.c.h.b16 %v4280
        %v4375 = vunpack.c.l.b16 %v4281
        %v4376 = vunpack.c.h.b16 %v4281
        %v4377 = vunpack.c.l.b16 %v4282
        %v4378 = vunpack.c.h.b16 %v4282
        %v4379 = vunpack.c.l.b16 %v4283
        %v4380 = vunpack.c.h.b16 %v4283
        %v4381 = vunpack.c.l.b16 %v4284
        %v4382 = vunpack.c.h.b16 %v4284
        %v4383 = vunpack.c.l.b16 %v4285
        %v4384 = vunpack.c.h.b16 %v4285
        %v4385 = vunpack.c.l.b16 %v4286
        %v4386 = vunpack.c.h.b16 %v4286
        %v4387 = vunpack.c.l.b16 %v4287
        %v4388 = vunpack.c.h.b16 %v4287
        %v4389 = vunpack.c.l.b16 %v4288
        %v4390 = vunpack.c.h.b16 %v4288
        %v4391 = vunpack.c.l.b16 %v4289
        %v4392 = vunpack.c.h.b16 %v4289
        %v4393 = vunpack.c.l.b16 %v4290
        %v4394 = vunpack.c.h.b16 %v4290
        %v4395 = vunpack.c.l.b16 %v4291
        %v4396 = vunpack.c.h.b16 %v4291
        %v4397 = vunpack.c.l.b16 %v4292
        %v4398 = vunpack.c.h.b16 %v4292
        %v4399 = vunpack.c.l.b16 %v4293
        %v4400 = vunpack.c.h.b16 %v4293
        %v4401 = vunpack.c.l.b16 %v4294
        %v4402 = vunpack.c.h.b16 %v4294
        %v4403 = vunpack.c.l.b16 %v4295
        %v4404 = vunpack.c.h.b16 %v4295
        %v4405 = vunpack.c.l.b16 %v4296
        %v4406 = vunpack.c.h.b16 %v4296
        %v4407 = vunpack.c.l.b16 %v4297
        %v4408 = vunpack.c.h.b16 %v4297
        %v4409 = vunpack.c.l.b16 %v4298
        %v4410 = vunpack.c.h.b16 %v4298
        %v4411 = vunpack.c.l.b16 %v4299
        %v4412 = vunpack.c.h.b16 %v4299
        %v4413 = vunpack.c.l.b16 %v4300
        %v4414 = vunpack.c.h.b16 %v4300
        %v4415 = vunpack.c.l.b16 %v4301
        %v4416 = vunpack.c.h.b16 %v4301
        %v4417 = vunpack.c.l.b16 %v4302
        %v4418 = vunpack.c.h.b16 %v4302
        %v4419 = vunpack.c.l.b16 %v4303
        %v4420 = vunpack.c.h.b16 %v4303
        %v4421 = vunpack.c.l.b16 %v4304
        %v4422 = vunpack.c.h.b16 %v4304
        %v4423 = vunpack.c.l.b16 %v4305
        %v4424 = vunpack.c.h.b16 %v4305
        %v4425 = vunpack.c.l.b16 %v4306
        %v4426 = vunpack.c.h.b16 %v4306
        %v4427 = vunpack.c.l.b16 %v4307
        %v4428 = vunpack.c.h.b16 %v4307
        %v4429 = vpack.c.b16 %v4367, %v4365
        %v4430 = vpack.c.b16 %v4368, %v4366
        %v4431 = vpack.c.b16 %v4371, %v4369
        %v4432 = vpack.c.b16 %v4372, %v4370
        %v4433 = vpack.c.b16 %v4375, %v4373
        %v4434 = vpack.c.b16 %v4376, %v4374
        %v4435 = vpack.c.b16 %v4379, %v4377
        %v4436 = vpack.c.b16 %v4380, %v4378
        %v4437 = vpack.c.b16 %v4383, %v4381
        %v4438 = vpack.c.b16 %v4384, %v4382
        %v4439 = vpack.c.b16 %v4387, %v4385
        %v4440 = vpack.c.b16 %v4388, %v4386
        %v4441 = vpack.c.b16 %v4391, %v4389
        %v4442 = vpack.c.b16 %v4392, %v4390
        %v4443 = vpack.c.b16 %v4395, %v4393
        %v4444 = vpack.c.b16 %v4396, %v4394
        %v4445 = vpack.c.b16 %v4399, %v4397
        %v4446 = vpack.c.b16 %v4400, %v4398
        %v4447 = vpack.c.b16 %v4403, %v4401
        %v4448 = vpack.c.b16 %v4404, %v4402
        %v4449 = vpack.c.b16 %v4407, %v4405
        %v4450 = vpack.c.b16 %v4408, %v4406
        %v4451 = vpack.c.b16 %v4411, %v4409
        %v4452 = vpack.c.b16 %v4412, %v4410
        %v4453 = vpack.c.b16 %v4415, %v4413
        %v4454 = vpack.c.b16 %v4416, %v4414
        %v4455 = vpack.c.b16 %v4419, %v4417
        %v4456 = vpack.c.b16 %v4420, %v4418
        %v4457 = vpack.c.b16 %v4423, %v4421
        %v4458 = vpack.c.b16 %v4424, %v4422
        %v4459 = vpack.c.b16 %v4427, %v4425
        %v4460 = vpack.c.b16 %v4428, %v4426
        %v4501 = vunpack.c.l.b16 %v4309
        %v4502 = vunpack.c.l.b16 %v4310
        %v4503 = vunpack.c.l.b16 %v4311
        %v4504 = vunpack.c.l.b16 %v4312
        %v4505 = vunpack.c.l.b16 %v4313
        %v4506 = vunpack.c.l.b16 %v4314
        %v4507 = vunpack.c.l.b16 %v4315
        %v4508 = vunpack.c.l.b16 %v4316
        %v4509 = vunpack.c.l.b16 %v4317
        %v4510 = vunpack.c.l.b16 %v4318
        %v4511 = vunpack.c.l.b16 %v4319
        %v4512 = vunpack.c.l.b16 %v4320
        %v4513 = vunpack.c.l.b16 %v4321
        %v4514 = vunpack.c.l.b16 %v4322
        %v4515 = vunpack.c.l.b16 %v4323
        %v4516 = vunpack.c.l.b16 %v4324
        %v4517 = vunpack.c.l.b16 %v4325
        %v4518 = vunpack.c.l.b16 %v4326
        %v4519 = vunpack.c.l.b16 %v4327
        %v4520 = vunpack.c.l.b16 %v4328
        %v4521 = vunpack.c.l.b16 %v4329
        %v4522 = vunpack.c.l.b16 %v4330
        %v4523 = vunpack.c.l.b16 %v4331
        %v4524 = vunpack.c.l.b16 %v4332
        %v4525 = vpack.c.b16 %v4502, %v4501
        %v4526 = vpack.c.b16 %v4504, %v4503
        %v4527 = vpack.c.b16 %v4506, %v4505
        %v4528 = vpack.c.b16 %v4508, %v4507
        %v4529 = vpack.c.b16 %v4510, %v4509
        %v4530 = vpack.c.b16 %v4512, %v4511
        %v4531 = vpack.c.b16 %v4514, %v4513
        %v4532 = vpack.c.b16 %v4516, %v4515
        %v4533 = vpack.c.b16 %v4518, %v4517
        %v4534 = vpack.c.b16 %v4520, %v4519
        %v4535 = vpack.c.b16 %v4522, %v4521
        %v4536 = vpack.c.b16 %v4524, %v4523
        %v4550 = vsel %vm1501, %v4430, 0
        %v4553 = vsel %vm1501, %v4432, 0
        %v4556 = vsel %vm1501, %v4434, 0
        %v4559 = vsel %vm1501, %v4436, 0
        %v4562 = vsel %vm1501, %v4438, 0
        %v4565 = vsel %vm1501, %v4440, 0
        %v4568 = vsel %vm1501, %v4442, 0
        %v4571 = vsel %vm1501, %v4444, 0
        %v4574 = vsel %vm1501, %v4446, 0
        %v4577 = vsel %vm1501, %v4448, 0
        %v4580 = vsel %vm1501, %v4450, 0
        %v4583 = vsel %vm1501, %v4452, 0
        %v4586 = vsel %vm1501, %v4454, 0
        %v4589 = vsel %vm1501, %v4456, 0
        %v4592 = vsel %vm1501, %v4458, 0
        %v4595 = vsel %vm1501, %v4460, 0
        %4597 = vmatprep.subr.bf16.mxu0 0
        %4598 = vmatpush1.bf16.msra.mxu0 %v4532
        %4599 = vmatprep.subr.bf16.mxu0 0
        %4600 = vmatpush1.bf16.msra.mxu0 %v4531
        %4601 = vmatprep.subr.bf16.mxu0 0
        %4602 = vmatpush1.bf16.msra.mxu0 %v4530
        %4603 = vmatprep.subr.bf16.mxu0 0
        %4604 = vmatpush1.bf16.msra.mxu0 %v4529
        %4605 = vmatprep.subr.bf16.mxu0 0
        %4606 = vmatpush1.bf16.msra.mxu0 %v4528
        %4607 = vmatprep.subr.bf16.mxu0 0
        %4608 = vmatpush1.bf16.msra.mxu0 %v4527
        %4609 = vmatprep.subr.bf16.mxu0 0
        %4610 = vmatpush1.bf16.msra.mxu0 %v4526
        %4611 = vmatprep.subr.bf16.mxu0 0
        %4612 = vmatpush1.bf16.msra.mxu0 %v4525
        %4613 = vmatprep.subr.bf16.mxu0 0
        %4614 = vmatpush2.bf16.msra.mxu0 0
        %4615 = vmatprep.subr.bf16.mxu0 0
        %4616 = vmatpush2.bf16.msra.mxu0 0
        %4617 = vmatprep.subr.bf16.mxu0 0
        %4618 = vmatpush2.bf16.msra.mxu0 0
        %4619 = vmatprep.subr.bf16.mxu0 0
        %4620 = vmatpush2.bf16.msra.mxu0 0
        %4621 = vmatprep.subr.bf16.mxu0 0
        %4622 = vmatpush2.bf16.msra.mxu0 %v4536
        %4623 = vmatprep.subr.bf16.mxu0 0
        %4624 = vmatpush2.bf16.msra.mxu0 %v4535
        %4625 = vmatprep.subr.bf16.mxu0 0
        %4626 = vmatpush2.bf16.msra.mxu0 %v4534
        %4627 = vmatprep.subr.bf16.mxu0 0
        %4628 = vmatpush2.bf16.msra.mxu0 %v4533
        %4629 = vmatprep.mubr.bf16.mxu0 %v4550
        %4630 = vmatmul.mubr.bf16.gmra.mxu0 %v4429
        %v4631 = vpop.f32.mrf.mxu0
        %v4632 = vadd.f32 0.0, %v4631
        %v4633 = vpop.f32.mrf.mxu0
        %v4634 = vpop.f32.mrf.mxu0
        %v4635 = vadd.f32 0.0, %v4634
        %v4636 = vpop.f32.mrf.mxu0
        %4637 = vmatprep.mubr.bf16.mxu0 %v4553
        %4638 = vmatmul.mubr.bf16.gmra.mxu0 %v4431
        %v4639 = vpop.f32.mrf.mxu0
        %v4640 = vadd.f32 0.0, %v4639
        %v4641 = vpop.f32.mrf.mxu0
        %v4642 = vpop.f32.mrf.mxu0
        %v4643 = vadd.f32 0.0, %v4642
        %v4644 = vpop.f32.mrf.mxu0
        %4645 = vmatprep.mubr.bf16.mxu0 %v4556
        %4646 = vmatmul.mubr.bf16.gmra.mxu0 %v4433
        %v4647 = vpop.f32.mrf.mxu0
        %v4648 = vadd.f32 0.0, %v4647
        %v4649 = vpop.f32.mrf.mxu0
        %v4650 = vpop.f32.mrf.mxu0
        %v4651 = vadd.f32 0.0, %v4650
        %v4652 = vpop.f32.mrf.mxu0
        %4653 = vmatprep.mubr.bf16.mxu0 %v4559
        %4654 = vmatmul.mubr.bf16.gmra.mxu0 %v4435
        %v4655 = vpop.f32.mrf.mxu0
        %v4656 = vadd.f32 0.0, %v4655
        %v4657 = vpop.f32.mrf.mxu0
        %v4658 = vpop.f32.mrf.mxu0
        %v4659 = vadd.f32 0.0, %v4658
        %v4660 = vpop.f32.mrf.mxu0
        %4661 = vmatprep.mubr.bf16.mxu0 %v4562
        %4662 = vmatmul.mubr.bf16.gmra.mxu0 %v4437
        %v4663 = vpop.f32.mrf.mxu0
        %v4664 = vadd.f32 0.0, %v4663
        %v4665 = vpop.f32.mrf.mxu0
        %v4666 = vpop.f32.mrf.mxu0
        %v4667 = vadd.f32 0.0, %v4666
        %v4668 = vpop.f32.mrf.mxu0
        %4669 = vmatprep.mubr.bf16.mxu0 %v4565
        %4670 = vmatmul.mubr.bf16.gmra.mxu0 %v4439
        %v4671 = vpop.f32.mrf.mxu0
        %v4672 = vadd.f32 0.0, %v4671
        %v4673 = vpop.f32.mrf.mxu0
        %v4674 = vpop.f32.mrf.mxu0
        %v4675 = vadd.f32 0.0, %v4674
        %v4676 = vpop.f32.mrf.mxu0
        %4677 = vmatprep.mubr.bf16.mxu0 %v4568
        %4678 = vmatmul.mubr.bf16.gmra.mxu0 %v4441
        %v4679 = vpop.f32.mrf.mxu0
        %v4680 = vadd.f32 0.0, %v4679
        %v4681 = vpop.f32.mrf.mxu0
        %v4682 = vpop.f32.mrf.mxu0
        %v4683 = vadd.f32 0.0, %v4682
        %v4684 = vpop.f32.mrf.mxu0
        %4685 = vmatprep.mubr.bf16.mxu0 %v4571
        %4686 = vmatmul.mubr.bf16.gmra.mxu0 %v4443
        %v4687 = vpop.f32.mrf.mxu0
        %v4688 = vadd.f32 0.0, %v4687
        %v4689 = vpop.f32.mrf.mxu0
        %v4690 = vpop.f32.mrf.mxu0
        %v4691 = vadd.f32 0.0, %v4690
        %v4692 = vpop.f32.mrf.mxu0
        %4693 = vmatprep.mubr.bf16.mxu0 %v4574
        %4694 = vmatmul.mubr.bf16.gmra.mxu0 %v4445
        %v4695 = vpop.f32.mrf.mxu0
        %v4696 = vadd.f32 0.0, %v4695
        %v4697 = vpop.f32.mrf.mxu0
        %v4698 = vpop.f32.mrf.mxu0
        %v4699 = vadd.f32 0.0, %v4698
        %v4700 = vpop.f32.mrf.mxu0
        %4701 = vmatprep.mubr.bf16.mxu0 %v4577
        %4702 = vmatmul.mubr.bf16.gmra.mxu0 %v4447
        %v4703 = vpop.f32.mrf.mxu0
        %v4704 = vadd.f32 0.0, %v4703
        %v4705 = vpop.f32.mrf.mxu0
        %v4706 = vpop.f32.mrf.mxu0
        %v4707 = vadd.f32 0.0, %v4706
        %v4708 = vpop.f32.mrf.mxu0
        %4709 = vmatprep.mubr.bf16.mxu0 %v4580
        %4710 = vmatmul.mubr.bf16.gmra.mxu0 %v4449
        %v4711 = vpop.f32.mrf.mxu0
        %v4712 = vadd.f32 0.0, %v4711
        %v4713 = vpop.f32.mrf.mxu0
        %v4714 = vpop.f32.mrf.mxu0
        %v4715 = vadd.f32 0.0, %v4714
        %v4716 = vpop.f32.mrf.mxu0
        %4717 = vmatprep.mubr.bf16.mxu0 %v4583
        %4718 = vmatmul.mubr.bf16.gmra.mxu0 %v4451
        %v4719 = vpop.f32.mrf.mxu0
        %v4720 = vadd.f32 0.0, %v4719
        %v4721 = vpop.f32.mrf.mxu0
        %v4722 = vpop.f32.mrf.mxu0
        %v4723 = vadd.f32 0.0, %v4722
        %v4724 = vpop.f32.mrf.mxu0
        %4725 = vmatprep.mubr.bf16.mxu0 %v4586
        %4726 = vmatmul.mubr.bf16.gmra.mxu0 %v4453
        %v4727 = vpop.f32.mrf.mxu0
        %v4728 = vadd.f32 0.0, %v4727
        %v4729 = vpop.f32.mrf.mxu0
        %v4730 = vpop.f32.mrf.mxu0
        %v4731 = vadd.f32 0.0, %v4730
        %v4732 = vpop.f32.mrf.mxu0
        %4733 = vmatprep.mubr.bf16.mxu0 %v4589
        %4734 = vmatmul.mubr.bf16.gmra.mxu0 %v4455
        %v4735 = vpop.f32.mrf.mxu0
        %v4736 = vadd.f32 0.0, %v4735
        %v4737 = vpop.f32.mrf.mxu0
        %v4738 = vpop.f32.mrf.mxu0
        %v4739 = vadd.f32 0.0, %v4738
        %v4740 = vpop.f32.mrf.mxu0
        %4741 = vmatprep.mubr.bf16.mxu0 %v4592
        %4742 = vmatmul.mubr.bf16.gmra.mxu0 %v4457
        %v4743 = vpop.f32.mrf.mxu0
        %v4744 = vadd.f32 0.0, %v4743
        %v4745 = vpop.f32.mrf.mxu0
        %v4746 = vpop.f32.mrf.mxu0
        %v4747 = vadd.f32 0.0, %v4746
        %v4748 = vpop.f32.mrf.mxu0
        %4749 = vmatprep.mubr.bf16.mxu0 %v4595
        %4750 = vmatmul.mubr.bf16.gmra.mxu0 %v4459
        %v4751 = vpop.f32.mrf.mxu0
        %v4752 = vadd.f32 0.0, %v4751
        %v4753 = vpop.f32.mrf.mxu0
        %v4754 = vpop.f32.mrf.mxu0
        %v4755 = vadd.f32 0.0, %v4754
        %v4756 = vpop.f32.mrf.mxu0
        %4757 = vdwg.mxu0
        %v4758 = vadd.f32 %v4150, %v4632
        %v4759 = vadd.f32 %v4153, %v4635
        %v4760 = vadd.f32 %v4158, %v4640
        %v4761 = vadd.f32 %v4161, %v4643
        %v4762 = vadd.f32 %v4166, %v4648
        %v4763 = vadd.f32 %v4169, %v4651
        %v4764 = vadd.f32 %v4174, %v4656
        %v4765 = vadd.f32 %v4177, %v4659
        %v4766 = vadd.f32 %v4182, %v4664
        %v4767 = vadd.f32 %v4185, %v4667
        %v4768 = vadd.f32 %v4190, %v4672
        %v4769 = vadd.f32 %v4193, %v4675
        %v4770 = vadd.f32 %v4198, %v4680
        %v4771 = vadd.f32 %v4201, %v4683
        %v4772 = vadd.f32 %v4206, %v4688
        %v4773 = vadd.f32 %v4209, %v4691
        %v4774 = vadd.f32 %v4214, %v4696
        %v4775 = vadd.f32 %v4217, %v4699
        %v4776 = vadd.f32 %v4222, %v4704
        %v4777 = vadd.f32 %v4225, %v4707
        %v4778 = vadd.f32 %v4230, %v4712
        %v4779 = vadd.f32 %v4233, %v4715
        %v4780 = vadd.f32 %v4238, %v4720
        %v4781 = vadd.f32 %v4241, %v4723
        %v4782 = vadd.f32 %v4246, %v4728
        %v4783 = vadd.f32 %v4249, %v4731
        %v4784 = vadd.f32 %v4254, %v4736
        %v4785 = vadd.f32 %v4257, %v4739
        %v4786 = vadd.f32 %v4262, %v4744
        %v4787 = vadd.f32 %v4265, %v4747
        %v4788 = vadd.f32 %v4270, %v4752
        %v4789 = vadd.f32 %v4273, %v4755
        %v4790 = vld [vmem:[%s8] sm:$0x1]
        %v4792 = vlaneseq
        %v4793 = vshrl.u32 %v4792, 7
        %v4794 = vsub.s32 0, %v4793
        %v4795 = vrot.slane %v4790, %v4794
        %v4797 = vadd.f32 %v4758, %v4795
        %v4798 = vadd.f32 %v4759, %v4795
        %v4799 = vadd.f32 %v4760, %v4795
        %v4800 = vadd.f32 %v4761, %v4795
        %v4801 = vadd.f32 %v4762, %v4795
        %v4802 = vadd.f32 %v4763, %v4795
        %v4803 = vadd.f32 %v4764, %v4795
        %v4804 = vadd.f32 %v4765, %v4795
        %v4805 = vadd.f32 %v4766, %v4795
        %v4806 = vadd.f32 %v4767, %v4795
        %v4807 = vadd.f32 %v4768, %v4795
        %v4808 = vadd.f32 %v4769, %v4795
        %v4809 = vadd.f32 %v4770, %v4795
        %v4810 = vadd.f32 %v4771, %v4795
        %v4811 = vadd.f32 %v4772, %v4795
        %v4812 = vadd.f32 %v4773, %v4795
        %v4813 = vadd.f32 %v4774, %v4795
        %v4814 = vadd.f32 %v4775, %v4795
        %v4815 = vadd.f32 %v4776, %v4795
        %v4816 = vadd.f32 %v4777, %v4795
        %v4817 = vadd.f32 %v4778, %v4795
        %v4818 = vadd.f32 %v4779, %v4795
        %v4819 = vadd.f32 %v4780, %v4795
        %v4820 = vadd.f32 %v4781, %v4795
        %v4821 = vadd.f32 %v4782, %v4795
        %v4822 = vadd.f32 %v4783, %v4795
        %v4823 = vadd.f32 %v4784, %v4795
        %v4824 = vadd.f32 %v4785, %v4795
        %v4825 = vadd.f32 %v4786, %v4795
        %v4826 = vadd.f32 %v4787, %v4795
        %v4827 = vadd.f32 %v4788, %v4795
        %v4828 = vadd.f32 %v4789, %v4795
        %v4829 = vmax.f32 %v4797, 0.0
        %v4830 = vmax.f32 %v4798, 0.0
        %v4831 = vmax.f32 %v4799, 0.0
        %v4832 = vmax.f32 %v4800, 0.0
        %v4833 = vmax.f32 %v4801, 0.0
        %v4834 = vmax.f32 %v4802, 0.0
        %v4835 = vmax.f32 %v4803, 0.0
        %v4836 = vmax.f32 %v4804, 0.0
        %v4837 = vmax.f32 %v4805, 0.0
        %v4838 = vmax.f32 %v4806, 0.0
        %v4839 = vmax.f32 %v4807, 0.0
        %v4840 = vmax.f32 %v4808, 0.0
        %v4841 = vmax.f32 %v4809, 0.0
        %v4842 = vmax.f32 %v4810, 0.0
        %v4843 = vmax.f32 %v4811, 0.0
        %v4844 = vmax.f32 %v4812, 0.0
        %v4845 = vmax.f32 %v4813, 0.0
        %v4846 = vmax.f32 %v4814, 0.0
        %v4847 = vmax.f32 %v4815, 0.0
        %v4848 = vmax.f32 %v4816, 0.0
        %v4849 = vmax.f32 %v4817, 0.0
        %v4850 = vmax.f32 %v4818, 0.0
        %v4851 = vmax.f32 %v4819, 0.0
        %v4852 = vmax.f32 %v4820, 0.0
        %v4853 = vmax.f32 %v4821, 0.0
        %v4854 = vmax.f32 %v4822, 0.0
        %v4855 = vmax.f32 %v4823, 0.0
        %v4856 = vmax.f32 %v4824, 0.0
        %v4857 = vmax.f32 %v4825, 0.0
        %v4858 = vmax.f32 %v4826, 0.0
        %v4859 = vmax.f32 %v4827, 0.0
        %v4860 = vmax.f32 %v4828, 0.0
        %v4861 = vld [vmem:[%s547] sm:$0xff]
        %v4862 = vld [vmem:[%s547 + $0x8] sm:$0xff]
        %v4863 = vld [vmem:[%s547 + $0x10] sm:$0xff]
        %v4864 = vld [vmem:[%s547 + $0x18] sm:$0xff]
        %v4865 = vld [vmem:[%s547 + $0x20] sm:$0xff]
        %v4866 = vld [vmem:[%s547 + $0x28] sm:$0xff]
        %v4867 = vld [vmem:[%s547 + $0x30] sm:$0xff]
        %v4868 = vld [vmem:[%s547 + $0x38] sm:$0xff]
        %v4869 = vld [vmem:[%s547 + $0x40] sm:$0xff]
        %v4870 = vld [vmem:[%s547 + $0x48] sm:$0xff]
        %v4871 = vld [vmem:[%s547 + $0x50] sm:$0xff]
        %v4872 = vld [vmem:[%s547 + $0x58] sm:$0xff]
        %v4873 = vld [vmem:[%s547 + $0x60] sm:$0xff]
        %v4874 = vld [vmem:[%s547 + $0x68] sm:$0xff]
        %v4875 = vld [vmem:[%s547 + $0x70] sm:$0xff]
        %v4876 = vld [vmem:[%s547 + $0x78] sm:$0xff]
        %v4877 = vld [vmem:[%s547 + $0x80] sm:$0xff]
        %v4878 = vld [vmem:[%s547 + $0x88] sm:$0xff]
        %v4879 = vld [vmem:[%s547 + $0x90] sm:$0xff]
        %v4880 = vld [vmem:[%s547 + $0x98] sm:$0xff]
        %v4881 = vld [vmem:[%s547 + $0xa0] sm:$0xff]
        %v4882 = vld [vmem:[%s547 + $0xa8] sm:$0xff]
        %v4883 = vld [vmem:[%s547 + $0xb0] sm:$0xff]
        %v4884 = vld [vmem:[%s547 + $0xb8] sm:$0xff]
        %v4885 = vld [vmem:[%s547 + $0xc0] sm:$0xff]
        %v4886 = vld [vmem:[%s547 + $0xc8] sm:$0xff]
        %v4887 = vld [vmem:[%s547 + $0xd0] sm:$0xff]
        %v4888 = vld [vmem:[%s547 + $0xd8] sm:$0xff]
        %v4889 = vld [vmem:[%s547 + $0xe0] sm:$0xff]
        %v4890 = vld [vmem:[%s547 + $0xe8] sm:$0xff]
        %v4891 = vld [vmem:[%s547 + $0xf0] sm:$0xff]
        %v4892 = vld [vmem:[%s547 + $0xf8] sm:$0xff]
        %v4893 = vpack.c.bf16 %v4862, %v4861
        %v4894 = vpack.c.bf16 %v4864, %v4863
        %v4895 = vpack.c.bf16 %v4866, %v4865
        %v4896 = vpack.c.bf16 %v4868, %v4867
        %v4897 = vpack.c.bf16 %v4870, %v4869
        %v4898 = vpack.c.bf16 %v4872, %v4871
        %v4899 = vpack.c.bf16 %v4874, %v4873
        %v4900 = vpack.c.bf16 %v4876, %v4875
        %v4901 = vpack.c.bf16 %v4878, %v4877
        %v4902 = vpack.c.bf16 %v4880, %v4879
        %v4903 = vpack.c.bf16 %v4882, %v4881
        %v4904 = vpack.c.bf16 %v4884, %v4883
        %v4905 = vpack.c.bf16 %v4886, %v4885
        %v4906 = vpack.c.bf16 %v4888, %v4887
        %v4907 = vpack.c.bf16 %v4890, %v4889
        %v4908 = vpack.c.bf16 %v4892, %v4891
        %v4909 = vld [vmem:[%s9] sm:$0xf]
        %v4910 = vld [vmem:[%s9 + $0x4] sm:$0xf]
        %v4911 = vld [vmem:[%s9 + $0x8] sm:$0xf]
        %v4912 = vld [vmem:[%s9 + $0xc] sm:$0xf]
        %v4913 = vld [vmem:[%s10] sm:$0x1]
        %v4915 = vlaneseq
        %v4916 = vshrl.u32 %v4915, 7
        %v4917 = vsub.s32 0, %v4916
        %v4918 = vrot.slane %v4913, %v4917
        %v4924 = vunpack.c.l.b16 %v4909
        %v4925 = vunpack.c.l.b16 %v4910
        %v4926 = vunpack.c.l.b16 %v4911
        %v4927 = vunpack.c.l.b16 %v4912
        %v4928 = vpack.c.b16 %v4925, %v4924
        %v4929 = vpack.c.b16 %v4927, %v4926
        %v4933 = vsel %vm1140, %v4893, 0
        %v4936 = vsel %vm1140, %v4894, 0
        %v4939 = vsel %vm1140, %v4895, 0
        %v4942 = vsel %vm1140, %v4896, 0
        %v4945 = vsel %vm1140, %v4897, 0
        %v4948 = vsel %vm1140, %v4898, 0
        %v4951 = vsel %vm1140, %v4899, 0
        %v4954 = vsel %vm1140, %v4900, 0
        %v4957 = vsel %vm1140, %v4901, 0
        %v4960 = vsel %vm1140, %v4902, 0
        %v4963 = vsel %vm1140, %v4903, 0
        %v4966 = vsel %vm1140, %v4904, 0
        %v4969 = vsel %vm1140, %v4905, 0
        %v4972 = vsel %vm1140, %v4906, 0
        %v4975 = vsel %vm1140, %v4907, 0
        %v4978 = vsel %vm1140, %v4908, 0
        %4980 = vmatprep.subr.bf16.mxu0 0
        %4981 = vmatpush1.bf16.msra.mxu0 0
        %4982 = vmatprep.subr.bf16.mxu0 0
        %4983 = vmatpush1.bf16.msra.mxu0 0
        %4984 = vmatprep.subr.bf16.mxu0 0
        %4985 = vmatpush1.bf16.msra.mxu0 0
        %4986 = vmatprep.subr.bf16.mxu0 0
        %4987 = vmatpush1.bf16.msra.mxu0 0
        %4988 = vmatprep.subr.bf16.mxu0 0
        %4989 = vmatpush1.bf16.msra.mxu0 0
        %4990 = vmatprep.subr.bf16.mxu0 0
        %4991 = vmatpush1.bf16.msra.mxu0 0
        %4992 = vmatprep.subr.bf16.mxu0 0
        %4993 = vmatpush1.bf16.msra.mxu0 %v4929
        %4994 = vmatprep.subr.bf16.mxu0 0
        %4995 = vmatpush1.bf16.msra.mxu0 %v4928
        %4996 = vmatprep.subr.bf16.mxu0 0
        %4997 = vmatpush2.bf16.msra.mxu0 0
        %4998 = vmatprep.subr.bf16.mxu0 0
        %4999 = vmatpush2.bf16.msra.mxu0 0
        %5000 = vmatprep.subr.bf16.mxu0 0
        %5001 = vmatpush2.bf16.msra.mxu0 0
        %5002 = vmatprep.subr.bf16.mxu0 0
        %5003 = vmatpush2.bf16.msra.mxu0 0
        %5004 = vmatprep.subr.bf16.mxu0 0
        %5005 = vmatpush2.bf16.msra.mxu0 0
        %5006 = vmatprep.subr.bf16.mxu0 0
        %5007 = vmatpush2.bf16.msra.mxu0 0
        %5008 = vmatprep.subr.bf16.mxu0 0
        %5009 = vmatpush2.bf16.msra.mxu0 0
        %5010 = vmatprep.subr.bf16.mxu0 0
        %5011 = vmatpush2.bf16.msra.mxu0 0
        %5012 = vmatprep.mubr.bf16.mxu0 0
        %5013 = vmatmul.mubr.bf16.gmra.mxu0 %v4933
        %v5014 = vpop.f32.mrf.mxu0
        %v5015 = vadd.f32 %v4918, %v5014
        %v5016 = vpop.f32.mrf.mxu0
        %v5017 = vpop.f32.mrf.mxu0
        %v5018 = vadd.f32 %v4918, %v5017
        %v5019 = vpop.f32.mrf.mxu0
        %5020 = vmatprep.mubr.bf16.mxu0 0
        %5021 = vmatmul.mubr.bf16.gmra.mxu0 %v4936
        %v5022 = vpop.f32.mrf.mxu0
        %v5023 = vadd.f32 %v4918, %v5022
        %v5024 = vpop.f32.mrf.mxu0
        %v5025 = vpop.f32.mrf.mxu0
        %v5026 = vadd.f32 %v4918, %v5025
        %v5027 = vpop.f32.mrf.mxu0
        %5028 = vmatprep.mubr.bf16.mxu0 0
        %5029 = vmatmul.mubr.bf16.gmra.mxu0 %v4939
        %v5030 = vpop.f32.mrf.mxu0
        %v5031 = vadd.f32 %v4918, %v5030
        %v5032 = vpop.f32.mrf.mxu0
        %v5033 = vpop.f32.mrf.mxu0
        %v5034 = vadd.f32 %v4918, %v5033
        %v5035 = vpop.f32.mrf.mxu0
        %5036 = vmatprep.mubr.bf16.mxu0 0
        %5037 = vmatmul.mubr.bf16.gmra.mxu0 %v4942
        %v5038 = vpop.f32.mrf.mxu0
        %v5039 = vadd.f32 %v4918, %v5038
        %v5040 = vpop.f32.mrf.mxu0
        %v5041 = vpop.f32.mrf.mxu0
        %v5042 = vadd.f32 %v4918, %v5041
        %v5043 = vpop.f32.mrf.mxu0
        %5044 = vmatprep.mubr.bf16.mxu0 0
        %5045 = vmatmul.mubr.bf16.gmra.mxu0 %v4945
        %v5046 = vpop.f32.mrf.mxu0
        %v5047 = vadd.f32 %v4918, %v5046
        %v5048 = vpop.f32.mrf.mxu0
        %v5049 = vpop.f32.mrf.mxu0
        %v5050 = vadd.f32 %v4918, %v5049
        %v5051 = vpop.f32.mrf.mxu0
        %5052 = vmatprep.mubr.bf16.mxu0 0
        %5053 = vmatmul.mubr.bf16.gmra.mxu0 %v4948
        %v5054 = vpop.f32.mrf.mxu0
        %v5055 = vadd.f32 %v4918, %v5054
        %v5056 = vpop.f32.mrf.mxu0
        %v5057 = vpop.f32.mrf.mxu0
        %v5058 = vadd.f32 %v4918, %v5057
        %v5059 = vpop.f32.mrf.mxu0
        %5060 = vmatprep.mubr.bf16.mxu0 0
        %5061 = vmatmul.mubr.bf16.gmra.mxu0 %v4951
        %v5062 = vpop.f32.mrf.mxu0
        %v5063 = vadd.f32 %v4918, %v5062
        %v5064 = vpop.f32.mrf.mxu0
        %v5065 = vpop.f32.mrf.mxu0
        %v5066 = vadd.f32 %v4918, %v5065
        %v5067 = vpop.f32.mrf.mxu0
        %5068 = vmatprep.mubr.bf16.mxu0 0
        %5069 = vmatmul.mubr.bf16.gmra.mxu0 %v4954
        %v5070 = vpop.f32.mrf.mxu0
        %v5071 = vadd.f32 %v4918, %v5070
        %v5072 = vpop.f32.mrf.mxu0
        %v5073 = vpop.f32.mrf.mxu0
        %v5074 = vadd.f32 %v4918, %v5073
        %v5075 = vpop.f32.mrf.mxu0
        %5076 = vmatprep.mubr.bf16.mxu0 0
        %5077 = vmatmul.mubr.bf16.gmra.mxu0 %v4957
        %v5078 = vpop.f32.mrf.mxu0
        %v5079 = vadd.f32 %v4918, %v5078
        %v5080 = vpop.f32.mrf.mxu0
        %v5081 = vpop.f32.mrf.mxu0
        %v5082 = vadd.f32 %v4918, %v5081
        %v5083 = vpop.f32.mrf.mxu0
        %5084 = vmatprep.mubr.bf16.mxu0 0
        %5085 = vmatmul.mubr.bf16.gmra.mxu0 %v4960
        %v5086 = vpop.f32.mrf.mxu0
        %v5087 = vadd.f32 %v4918, %v5086
        %v5088 = vpop.f32.mrf.mxu0
        %v5089 = vpop.f32.mrf.mxu0
        %v5090 = vadd.f32 %v4918, %v5089
        %v5091 = vpop.f32.mrf.mxu0
        %5092 = vmatprep.mubr.bf16.mxu0 0
        %5093 = vmatmul.mubr.bf16.gmra.mxu0 %v4963
        %v5094 = vpop.f32.mrf.mxu0
        %v5095 = vadd.f32 %v4918, %v5094
        %v5096 = vpop.f32.mrf.mxu0
        %v5097 = vpop.f32.mrf.mxu0
        %v5098 = vadd.f32 %v4918, %v5097
        %v5099 = vpop.f32.mrf.mxu0
        %5100 = vmatprep.mubr.bf16.mxu0 0
        %5101 = vmatmul.mubr.bf16.gmra.mxu0 %v4966
        %v5102 = vpop.f32.mrf.mxu0
        %v5103 = vadd.f32 %v4918, %v5102
        %v5104 = vpop.f32.mrf.mxu0
        %v5105 = vpop.f32.mrf.mxu0
        %v5106 = vadd.f32 %v4918, %v5105
        %v5107 = vpop.f32.mrf.mxu0
        %5108 = vmatprep.mubr.bf16.mxu0 0
        %5109 = vmatmul.mubr.bf16.gmra.mxu0 %v4969
        %v5110 = vpop.f32.mrf.mxu0
        %v5111 = vadd.f32 %v4918, %v5110
        %v5112 = vpop.f32.mrf.mxu0
        %v5113 = vpop.f32.mrf.mxu0
        %v5114 = vadd.f32 %v4918, %v5113
        %v5115 = vpop.f32.mrf.mxu0
        %5116 = vmatprep.mubr.bf16.mxu0 0
        %5117 = vmatmul.mubr.bf16.gmra.mxu0 %v4972
        %v5118 = vpop.f32.mrf.mxu0
        %v5119 = vadd.f32 %v4918, %v5118
        %v5120 = vpop.f32.mrf.mxu0
        %v5121 = vpop.f32.mrf.mxu0
        %v5122 = vadd.f32 %v4918, %v5121
        %v5123 = vpop.f32.mrf.mxu0
        %5124 = vmatprep.mubr.bf16.mxu0 0
        %5125 = vmatmul.mubr.bf16.gmra.mxu0 %v4975
        %v5126 = vpop.f32.mrf.mxu0
        %v5127 = vadd.f32 %v4918, %v5126
        %v5128 = vpop.f32.mrf.mxu0
        %v5129 = vpop.f32.mrf.mxu0
        %v5130 = vadd.f32 %v4918, %v5129
        %v5131 = vpop.f32.mrf.mxu0
        %5132 = vmatprep.mubr.bf16.mxu0 0
        %5133 = vmatmul.mubr.bf16.gmra.mxu0 %v4978
        %v5134 = vpop.f32.mrf.mxu0
        %v5135 = vadd.f32 %v4918, %v5134
        %v5136 = vpop.f32.mrf.mxu0
        %v5137 = vpop.f32.mrf.mxu0
        %v5138 = vadd.f32 %v4918, %v5137
        %v5139 = vpop.f32.mrf.mxu0
        %5140 = vdwg.mxu0
        %vm5141 = vcmp.ge.f32.partialorder %v5015, 0.0
        %vm5142 = vcmp.ge.f32.partialorder %v5018, 0.0
        %vm5143 = vcmp.ge.f32.partialorder %v5023, 0.0
        %vm5144 = vcmp.ge.f32.partialorder %v5026, 0.0
        %vm5145 = vcmp.ge.f32.partialorder %v5031, 0.0
        %vm5146 = vcmp.ge.f32.partialorder %v5034, 0.0
        %vm5147 = vcmp.ge.f32.partialorder %v5039, 0.0
        %vm5148 = vcmp.ge.f32.partialorder %v5042, 0.0
        %vm5149 = vcmp.ge.f32.partialorder %v5047, 0.0
        %vm5150 = vcmp.ge.f32.partialorder %v5050, 0.0
        %vm5151 = vcmp.ge.f32.partialorder %v5055, 0.0
        %vm5152 = vcmp.ge.f32.partialorder %v5058, 0.0
        %vm5153 = vcmp.ge.f32.partialorder %v5063, 0.0
        %vm5154 = vcmp.ge.f32.partialorder %v5066, 0.0
        %vm5155 = vcmp.ge.f32.partialorder %v5071, 0.0
        %vm5156 = vcmp.ge.f32.partialorder %v5074, 0.0
        %vm5157 = vcmp.ge.f32.partialorder %v5079, 0.0
        %vm5158 = vcmp.ge.f32.partialorder %v5082, 0.0
        %vm5159 = vcmp.ge.f32.partialorder %v5087, 0.0
        %vm5160 = vcmp.ge.f32.partialorder %v5090, 0.0
        %vm5161 = vcmp.ge.f32.partialorder %v5095, 0.0
        %vm5162 = vcmp.ge.f32.partialorder %v5098, 0.0
        %vm5163 = vcmp.ge.f32.partialorder %v5103, 0.0
        %vm5164 = vcmp.ge.f32.partialorder %v5106, 0.0
        %vm5165 = vcmp.ge.f32.partialorder %v5111, 0.0
        %vm5166 = vcmp.ge.f32.partialorder %v5114, 0.0
        %vm5167 = vcmp.ge.f32.partialorder %v5119, 0.0
        %vm5168 = vcmp.ge.f32.partialorder %v5122, 0.0
        %vm5169 = vcmp.ge.f32.partialorder %v5127, 0.0
        %vm5170 = vcmp.ge.f32.partialorder %v5130, 0.0
        %vm5171 = vcmp.ge.f32.partialorder %v5135, 0.0
        %vm5172 = vcmp.ge.f32.partialorder %v5138, 0.0
        %v5173 = vmul.f32 %v5015, 0.1
        %v5174 = vmul.f32 %v5018, 0.1
        %v5175 = vmul.f32 %v5023, 0.1
        %v5176 = vmul.f32 %v5026, 0.1
        %v5177 = vmul.f32 %v5031, 0.1
        %v5178 = vmul.f32 %v5034, 0.1
        %v5179 = vmul.f32 %v5039, 0.1
        %v5180 = vmul.f32 %v5042, 0.1
        %v5181 = vmul.f32 %v5047, 0.1
        %v5182 = vmul.f32 %v5050, 0.1
        %v5183 = vmul.f32 %v5055, 0.1
        %v5184 = vmul.f32 %v5058, 0.1
        %v5185 = vmul.f32 %v5063, 0.1
        %v5186 = vmul.f32 %v5066, 0.1
        %v5187 = vmul.f32 %v5071, 0.1
        %v5188 = vmul.f32 %v5074, 0.1
        %v5189 = vmul.f32 %v5079, 0.1
        %v5190 = vmul.f32 %v5082, 0.1
        %v5191 = vmul.f32 %v5087, 0.1
        %v5192 = vmul.f32 %v5090, 0.1
        %v5193 = vmul.f32 %v5095, 0.1
        %v5194 = vmul.f32 %v5098, 0.1
        %v5195 = vmul.f32 %v5103, 0.1
        %v5196 = vmul.f32 %v5106, 0.1
        %v5197 = vmul.f32 %v5111, 0.1
        %v5198 = vmul.f32 %v5114, 0.1
        %v5199 = vmul.f32 %v5119, 0.1
        %v5200 = vmul.f32 %v5122, 0.1
        %v5201 = vmul.f32 %v5127, 0.1
        %v5202 = vmul.f32 %v5130, 0.1
        %v5203 = vmul.f32 %v5135, 0.1
        %v5204 = vmul.f32 %v5138, 0.1
        %v5205 = vsel %vm5141, %v5015, %v5173
        %v5206 = vsel %vm5142, %v5018, %v5174
        %v5207 = vsel %vm5143, %v5023, %v5175
        %v5208 = vsel %vm5144, %v5026, %v5176
        %v5209 = vsel %vm5145, %v5031, %v5177
        %v5210 = vsel %vm5146, %v5034, %v5178
        %v5211 = vsel %vm5147, %v5039, %v5179
        %v5212 = vsel %vm5148, %v5042, %v5180
        %v5213 = vsel %vm5149, %v5047, %v5181
        %v5214 = vsel %vm5150, %v5050, %v5182
        %v5215 = vsel %vm5151, %v5055, %v5183
        %v5216 = vsel %vm5152, %v5058, %v5184
        %v5217 = vsel %vm5153, %v5063, %v5185
        %v5218 = vsel %vm5154, %v5066, %v5186
        %v5219 = vsel %vm5155, %v5071, %v5187
        %v5220 = vsel %vm5156, %v5074, %v5188
        %v5221 = vsel %vm5157, %v5079, %v5189
        %v5222 = vsel %vm5158, %v5082, %v5190
        %v5223 = vsel %vm5159, %v5087, %v5191
        %v5224 = vsel %vm5160, %v5090, %v5192
        %v5225 = vsel %vm5161, %v5095, %v5193
        %v5226 = vsel %vm5162, %v5098, %v5194
        %v5227 = vsel %vm5163, %v5103, %v5195
        %v5228 = vsel %vm5164, %v5106, %v5196
        %v5229 = vsel %vm5165, %v5111, %v5197
        %v5230 = vsel %vm5166, %v5114, %v5198
        %v5231 = vsel %vm5167, %v5119, %v5199
        %v5232 = vsel %vm5168, %v5122, %v5200
        %v5233 = vsel %vm5169, %v5127, %v5201
        %v5234 = vsel %vm5170, %v5130, %v5202
        %v5235 = vsel %vm5171, %v5135, %v5203
        %v5236 = vsel %vm5172, %v5138, %v5204
        %v5237 = vpack.c.bf16 %v5206, %v5205
        %v5238 = vpack.c.bf16 %v5208, %v5207
        %v5239 = vpack.c.bf16 %v5210, %v5209
        %v5240 = vpack.c.bf16 %v5212, %v5211
        %v5241 = vpack.c.bf16 %v5214, %v5213
        %v5242 = vpack.c.bf16 %v5216, %v5215
        %v5243 = vpack.c.bf16 %v5218, %v5217
        %v5244 = vpack.c.bf16 %v5220, %v5219
        %v5245 = vpack.c.bf16 %v5222, %v5221
        %v5246 = vpack.c.bf16 %v5224, %v5223
        %v5247 = vpack.c.bf16 %v5226, %v5225
        %v5248 = vpack.c.bf16 %v5228, %v5227
        %v5249 = vpack.c.bf16 %v5230, %v5229
        %v5250 = vpack.c.bf16 %v5232, %v5231
        %v5251 = vpack.c.bf16 %v5234, %v5233
        %v5252 = vpack.c.bf16 %v5236, %v5235
        %v5253 = vld [vmem:[%s11] sm:$0xf]
        %v5254 = vld [vmem:[%s11 + $0x4] sm:$0xf]
        %v5255 = vld [vmem:[%s11 + $0x8] sm:$0xf]
        %v5256 = vld [vmem:[%s11 + $0xc] sm:$0xf]
        %v5257 = vld [vmem:[%s11 + $0x10] sm:$0xf]
        %v5258 = vld [vmem:[%s11 + $0x14] sm:$0xf]
        %v5259 = vld [vmem:[%s11 + $0x18] sm:$0xf]
        %v5260 = vld [vmem:[%s11 + $0x1c] sm:$0xf]
        %v5261 = vld [vmem:[%s12] sm:$0x1]
        %v5263 = vlaneseq
        %v5264 = vshrl.u32 %v5263, 7
        %v5265 = vsub.s32 0, %v5264
        %v5266 = vrot.slane %v5261, %v5265
        %v5276 = vunpack.c.l.b16 %v5253
        %v5277 = vunpack.c.l.b16 %v5254
        %v5278 = vunpack.c.l.b16 %v5255
        %v5279 = vunpack.c.l.b16 %v5256
        %v5280 = vunpack.c.l.b16 %v5257
        %v5281 = vunpack.c.l.b16 %v5258
        %v5282 = vunpack.c.l.b16 %v5259
        %v5283 = vunpack.c.l.b16 %v5260
        %v5284 = vpack.c.b16 %v5277, %v5276
        %v5285 = vpack.c.b16 %v5279, %v5278
        %v5286 = vpack.c.b16 %v5281, %v5280
        %v5287 = vpack.c.b16 %v5283, %v5282
        %v5293 = vsel %vm1501, %v5237, 0
        %v5296 = vsel %vm1501, %v5238, 0
        %v5299 = vsel %vm1501, %v5239, 0
        %v5302 = vsel %vm1501, %v5240, 0
        %v5305 = vsel %vm1501, %v5241, 0
        %v5308 = vsel %vm1501, %v5242, 0
        %v5311 = vsel %vm1501, %v5243, 0
        %v5314 = vsel %vm1501, %v5244, 0
        %v5317 = vsel %vm1501, %v5245, 0
        %v5320 = vsel %vm1501, %v5246, 0
        %v5323 = vsel %vm1501, %v5247, 0
        %v5326 = vsel %vm1501, %v5248, 0
        %v5329 = vsel %vm1501, %v5249, 0
        %v5332 = vsel %vm1501, %v5250, 0
        %v5335 = vsel %vm1501, %v5251, 0
        %v5338 = vsel %vm1501, %v5252, 0
        %5340 = vmatprep.subr.bf16.mxu0 0
        %5341 = vmatpush1.bf16.msra.mxu0 0
        %5342 = vmatprep.subr.bf16.mxu0 0
        %5343 = vmatpush1.bf16.msra.mxu0 0
        %5344 = vmatprep.subr.bf16.mxu0 0
        %5345 = vmatpush1.bf16.msra.mxu0 0
        %5346 = vmatprep.subr.bf16.mxu0 0
        %5347 = vmatpush1.bf16.msra.mxu0 0
        %5348 = vmatprep.subr.bf16.mxu0 0
        %5349 = vmatpush1.bf16.msra.mxu0 %v5287
        %5350 = vmatprep.subr.bf16.mxu0 0
        %5351 = vmatpush1.bf16.msra.mxu0 %v5286
        %5352 = vmatprep.subr.bf16.mxu0 0
        %5353 = vmatpush1.bf16.msra.mxu0 %v5285
        %5354 = vmatprep.subr.bf16.mxu0 0
        %5355 = vmatpush1.bf16.msra.mxu0 %v5284
        %5356 = vmatprep.subr.bf16.mxu0 0
        %5357 = vmatpush2.bf16.msra.mxu0 0
        %5358 = vmatprep.subr.bf16.mxu0 0
        %5359 = vmatpush2.bf16.msra.mxu0 0
        %5360 = vmatprep.subr.bf16.mxu0 0
        %5361 = vmatpush2.bf16.msra.mxu0 0
        %5362 = vmatprep.subr.bf16.mxu0 0
        %5363 = vmatpush2.bf16.msra.mxu0 0
        %5364 = vmatprep.subr.bf16.mxu0 0
        %5365 = vmatpush2.bf16.msra.mxu0 0
        %5366 = vmatprep.subr.bf16.mxu0 0
        %5367 = vmatpush2.bf16.msra.mxu0 0
        %5368 = vmatprep.subr.bf16.mxu0 0
        %5369 = vmatpush2.bf16.msra.mxu0 0
        %5370 = vmatprep.subr.bf16.mxu0 0
        %5371 = vmatpush2.bf16.msra.mxu0 0
        %5372 = vmatprep.mubr.bf16.mxu0 0
        %5373 = vmatmul.mubr.bf16.gmra.mxu0 %v5293
        %v5374 = vpop.f32.mrf.mxu0
        %v5375 = vadd.f32 %v5266, %v5374
        %v5376 = vpop.f32.mrf.mxu0
        %v5377 = vpop.f32.mrf.mxu0
        %v5378 = vadd.f32 %v5266, %v5377
        %v5379 = vpop.f32.mrf.mxu0
        %5380 = vmatprep.mubr.bf16.mxu0 0
        %5381 = vmatmul.mubr.bf16.gmra.mxu0 %v5296
        %v5382 = vpop.f32.mrf.mxu0
        %v5383 = vadd.f32 %v5266, %v5382
        %v5384 = vpop.f32.mrf.mxu0
        %v5385 = vpop.f32.mrf.mxu0
        %v5386 = vadd.f32 %v5266, %v5385
        %v5387 = vpop.f32.mrf.mxu0
        %5388 = vmatprep.mubr.bf16.mxu0 0
        %5389 = vmatmul.mubr.bf16.gmra.mxu0 %v5299
        %v5390 = vpop.f32.mrf.mxu0
        %v5391 = vadd.f32 %v5266, %v5390
        %v5392 = vpop.f32.mrf.mxu0
        %v5393 = vpop.f32.mrf.mxu0
        %v5394 = vadd.f32 %v5266, %v5393
        %v5395 = vpop.f32.mrf.mxu0
        %5396 = vmatprep.mubr.bf16.mxu0 0
        %5397 = vmatmul.mubr.bf16.gmra.mxu0 %v5302
        %v5398 = vpop.f32.mrf.mxu0
        %v5399 = vadd.f32 %v5266, %v5398
        %v5400 = vpop.f32.mrf.mxu0
        %v5401 = vpop.f32.mrf.mxu0
        %v5402 = vadd.f32 %v5266, %v5401
        %v5403 = vpop.f32.mrf.mxu0
        %5404 = vmatprep.mubr.bf16.mxu0 0
        %5405 = vmatmul.mubr.bf16.gmra.mxu0 %v5305
        %v5406 = vpop.f32.mrf.mxu0
        %v5407 = vadd.f32 %v5266, %v5406
        %v5408 = vpop.f32.mrf.mxu0
        %v5409 = vpop.f32.mrf.mxu0
        %v5410 = vadd.f32 %v5266, %v5409
        %v5411 = vpop.f32.mrf.mxu0
        %5412 = vmatprep.mubr.bf16.mxu0 0
        %5413 = vmatmul.mubr.bf16.gmra.mxu0 %v5308
        %v5414 = vpop.f32.mrf.mxu0
        %v5415 = vadd.f32 %v5266, %v5414
        %v5416 = vpop.f32.mrf.mxu0
        %v5417 = vpop.f32.mrf.mxu0
        %v5418 = vadd.f32 %v5266, %v5417
        %v5419 = vpop.f32.mrf.mxu0
        %5420 = vmatprep.mubr.bf16.mxu0 0
        %5421 = vmatmul.mubr.bf16.gmra.mxu0 %v5311
        %v5422 = vpop.f32.mrf.mxu0
        %v5423 = vadd.f32 %v5266, %v5422
        %v5424 = vpop.f32.mrf.mxu0
        %v5425 = vpop.f32.mrf.mxu0
        %v5426 = vadd.f32 %v5266, %v5425
        %v5427 = vpop.f32.mrf.mxu0
        %5428 = vmatprep.mubr.bf16.mxu0 0
        %5429 = vmatmul.mubr.bf16.gmra.mxu0 %v5314
        %v5430 = vpop.f32.mrf.mxu0
        %v5431 = vadd.f32 %v5266, %v5430
        %v5432 = vpop.f32.mrf.mxu0
        %v5433 = vpop.f32.mrf.mxu0
        %v5434 = vadd.f32 %v5266, %v5433
        %v5435 = vpop.f32.mrf.mxu0
        %5436 = vmatprep.mubr.bf16.mxu0 0
        %5437 = vmatmul.mubr.bf16.gmra.mxu0 %v5317
        %v5438 = vpop.f32.mrf.mxu0
        %v5439 = vadd.f32 %v5266, %v5438
        %v5440 = vpop.f32.mrf.mxu0
        %v5441 = vpop.f32.mrf.mxu0
        %v5442 = vadd.f32 %v5266, %v5441
        %v5443 = vpop.f32.mrf.mxu0
        %5444 = vmatprep.mubr.bf16.mxu0 0
        %5445 = vmatmul.mubr.bf16.gmra.mxu0 %v5320
        %v5446 = vpop.f32.mrf.mxu0
        %v5447 = vadd.f32 %v5266, %v5446
        %v5448 = vpop.f32.mrf.mxu0
        %v5449 = vpop.f32.mrf.mxu0
        %v5450 = vadd.f32 %v5266, %v5449
        %v5451 = vpop.f32.mrf.mxu0
        %5452 = vmatprep.mubr.bf16.mxu0 0
        %5453 = vmatmul.mubr.bf16.gmra.mxu0 %v5323
        %v5454 = vpop.f32.mrf.mxu0
        %v5455 = vadd.f32 %v5266, %v5454
        %v5456 = vpop.f32.mrf.mxu0
        %v5457 = vpop.f32.mrf.mxu0
        %v5458 = vadd.f32 %v5266, %v5457
        %v5459 = vpop.f32.mrf.mxu0
        %5460 = vmatprep.mubr.bf16.mxu0 0
        %5461 = vmatmul.mubr.bf16.gmra.mxu0 %v5326
        %v5462 = vpop.f32.mrf.mxu0
        %v5463 = vadd.f32 %v5266, %v5462
        %v5464 = vpop.f32.mrf.mxu0
        %v5465 = vpop.f32.mrf.mxu0
        %v5466 = vadd.f32 %v5266, %v5465
        %v5467 = vpop.f32.mrf.mxu0
        %5468 = vmatprep.mubr.bf16.mxu0 0
        %5469 = vmatmul.mubr.bf16.gmra.mxu0 %v5329
        %v5470 = vpop.f32.mrf.mxu0
        %v5471 = vadd.f32 %v5266, %v5470
        %v5472 = vpop.f32.mrf.mxu0
        %v5473 = vpop.f32.mrf.mxu0
        %v5474 = vadd.f32 %v5266, %v5473
        %v5475 = vpop.f32.mrf.mxu0
        %5476 = vmatprep.mubr.bf16.mxu0 0
        %5477 = vmatmul.mubr.bf16.gmra.mxu0 %v5332
        %v5478 = vpop.f32.mrf.mxu0
        %v5479 = vadd.f32 %v5266, %v5478
        %v5480 = vpop.f32.mrf.mxu0
        %v5481 = vpop.f32.mrf.mxu0
        %v5482 = vadd.f32 %v5266, %v5481
        %v5483 = vpop.f32.mrf.mxu0
        %5484 = vmatprep.mubr.bf16.mxu0 0
        %5485 = vmatmul.mubr.bf16.gmra.mxu0 %v5335
        %v5486 = vpop.f32.mrf.mxu0
        %v5487 = vadd.f32 %v5266, %v5486
        %v5488 = vpop.f32.mrf.mxu0
        %v5489 = vpop.f32.mrf.mxu0
        %v5490 = vadd.f32 %v5266, %v5489
        %v5491 = vpop.f32.mrf.mxu0
        %5492 = vmatprep.mubr.bf16.mxu0 0
        %5493 = vmatmul.mubr.bf16.gmra.mxu0 %v5338
        %v5494 = vpop.f32.mrf.mxu0
        %v5495 = vadd.f32 %v5266, %v5494
        %v5496 = vpop.f32.mrf.mxu0
        %v5497 = vpop.f32.mrf.mxu0
        %v5498 = vadd.f32 %v5266, %v5497
        %v5499 = vpop.f32.mrf.mxu0
        %5500 = vdwg.mxu0
        %v5501 = vadd.f32 %v5375, 1.0
        %v5502 = vadd.f32 %v5378, 1.0
        %v5503 = vadd.f32 %v5383, 1.0
        %v5504 = vadd.f32 %v5386, 1.0
        %v5505 = vadd.f32 %v5391, 1.0
        %v5506 = vadd.f32 %v5394, 1.0
        %v5507 = vadd.f32 %v5399, 1.0
        %v5508 = vadd.f32 %v5402, 1.0
        %v5509 = vadd.f32 %v5407, 1.0
        %v5510 = vadd.f32 %v5410, 1.0
        %v5511 = vadd.f32 %v5415, 1.0
        %v5512 = vadd.f32 %v5418, 1.0
        %v5513 = vadd.f32 %v5423, 1.0
        %v5514 = vadd.f32 %v5426, 1.0
        %v5515 = vadd.f32 %v5431, 1.0
        %v5516 = vadd.f32 %v5434, 1.0
        %v5517 = vadd.f32 %v5439, 1.0
        %v5518 = vadd.f32 %v5442, 1.0
        %v5519 = vadd.f32 %v5447, 1.0
        %v5520 = vadd.f32 %v5450, 1.0
        %v5521 = vadd.f32 %v5455, 1.0
        %v5522 = vadd.f32 %v5458, 1.0
        %v5523 = vadd.f32 %v5463, 1.0
        %v5524 = vadd.f32 %v5466, 1.0
        %v5525 = vadd.f32 %v5471, 1.0
        %v5526 = vadd.f32 %v5474, 1.0
        %v5527 = vadd.f32 %v5479, 1.0
        %v5528 = vadd.f32 %v5482, 1.0
        %v5529 = vadd.f32 %v5487, 1.0
        %v5530 = vadd.f32 %v5490, 1.0
        %v5531 = vadd.f32 %v5495, 1.0
        %v5532 = vadd.f32 %v5498, 1.0
        %v5533 = vmul.f32 %v4829, %v5501
        %v5534 = vmul.f32 %v4830, %v5502
        %v5535 = vmul.f32 %v4831, %v5503
        %v5536 = vmul.f32 %v4832, %v5504
        %v5537 = vmul.f32 %v4833, %v5505
        %v5538 = vmul.f32 %v4834, %v5506
        %v5539 = vmul.f32 %v4835, %v5507
        %v5540 = vmul.f32 %v4836, %v5508
        %v5541 = vmul.f32 %v4837, %v5509
        %v5542 = vmul.f32 %v4838, %v5510
        %v5543 = vmul.f32 %v4839, %v5511
        %v5544 = vmul.f32 %v4840, %v5512
        %v5545 = vmul.f32 %v4841, %v5513
        %v5546 = vmul.f32 %v4842, %v5514
        %v5547 = vmul.f32 %v4843, %v5515
        %v5548 = vmul.f32 %v4844, %v5516
        %v5549 = vmul.f32 %v4845, %v5517
        %v5550 = vmul.f32 %v4846, %v5518
        %v5551 = vmul.f32 %v4847, %v5519
        %v5552 = vmul.f32 %v4848, %v5520
        %v5553 = vmul.f32 %v4849, %v5521
        %v5554 = vmul.f32 %v4850, %v5522
        %v5555 = vmul.f32 %v4851, %v5523
        %v5556 = vmul.f32 %v4852, %v5524
        %v5557 = vmul.f32 %v4853, %v5525
        %v5558 = vmul.f32 %v4854, %v5526
        %v5559 = vmul.f32 %v4855, %v5527
        %v5560 = vmul.f32 %v4856, %v5528
        %v5561 = vmul.f32 %v4857, %v5529
        %v5562 = vmul.f32 %v4858, %v5530
        %v5563 = vmul.f32 %v4859, %v5531
        %v5564 = vmul.f32 %v4860, %v5532
        %5597 = vrot.lane.b32.xlu0 %v5375, 64
        %v5598 = vpop.permute.xlu0 %5597
        %5599 = vrot.lane.b32.xlu0 %v5378, 64
        %v5600 = vpop.permute.xlu0 %5599
        %5601 = vrot.lane.b32.xlu0 %v5383, 64
        %v5602 = vpop.permute.xlu0 %5601
        %5603 = vrot.lane.b32.xlu0 %v5386, 64
        %v5604 = vpop.permute.xlu0 %5603
        %5605 = vrot.lane.b32.xlu0 %v5391, 64
        %v5606 = vpop.permute.xlu0 %5605
        %5607 = vrot.lane.b32.xlu0 %v5394, 64
        %v5608 = vpop.permute.xlu0 %5607
        %5609 = vrot.lane.b32.xlu0 %v5399, 64
        %v5610 = vpop.permute.xlu0 %5609
        %5611 = vrot.lane.b32.xlu0 %v5402, 64
        %v5612 = vpop.permute.xlu0 %5611
        %5613 = vrot.lane.b32.xlu0 %v5407, 64
        %v5614 = vpop.permute.xlu0 %5613
        %5615 = vrot.lane.b32.xlu0 %v5410, 64
        %v5616 = vpop.permute.xlu0 %5615
        %5617 = vrot.lane.b32.xlu0 %v5415, 64
        %v5618 = vpop.permute.xlu0 %5617
        %5619 = vrot.lane.b32.xlu0 %v5418, 64
        %v5620 = vpop.permute.xlu0 %5619
        %5621 = vrot.lane.b32.xlu0 %v5423, 64
        %v5622 = vpop.permute.xlu0 %5621
        %5623 = vrot.lane.b32.xlu0 %v5426, 64
        %v5624 = vpop.permute.xlu0 %5623
        %5625 = vrot.lane.b32.xlu0 %v5431, 64
        %v5626 = vpop.permute.xlu0 %5625
        %5627 = vrot.lane.b32.xlu0 %v5434, 64
        %v5628 = vpop.permute.xlu0 %5627
        %5629 = vrot.lane.b32.xlu0 %v5439, 64
        %v5630 = vpop.permute.xlu0 %5629
        %5631 = vrot.lane.b32.xlu0 %v5442, 64
        %v5632 = vpop.permute.xlu0 %5631
        %5633 = vrot.lane.b32.xlu0 %v5447, 64
        %v5634 = vpop.permute.xlu0 %5633
        %5635 = vrot.lane.b32.xlu0 %v5450, 64
        %v5636 = vpop.permute.xlu0 %5635
        %5637 = vrot.lane.b32.xlu0 %v5455, 64
        %v5638 = vpop.permute.xlu0 %5637
        %5639 = vrot.lane.b32.xlu0 %v5458, 64
        %v5640 = vpop.permute.xlu0 %5639
        %5641 = vrot.lane.b32.xlu0 %v5463, 64
        %v5642 = vpop.permute.xlu0 %5641
        %5643 = vrot.lane.b32.xlu0 %v5466, 64
        %v5644 = vpop.permute.xlu0 %5643
        %5645 = vrot.lane.b32.xlu0 %v5471, 64
        %v5646 = vpop.permute.xlu0 %5645
        %5647 = vrot.lane.b32.xlu0 %v5474, 64
        %v5648 = vpop.permute.xlu0 %5647
        %5649 = vrot.lane.b32.xlu0 %v5479, 64
        %v5650 = vpop.permute.xlu0 %5649
        %5651 = vrot.lane.b32.xlu0 %v5482, 64
        %v5652 = vpop.permute.xlu0 %5651
        %5653 = vrot.lane.b32.xlu0 %v5487, 64
        %v5654 = vpop.permute.xlu0 %5653
        %5655 = vrot.lane.b32.xlu0 %v5490, 64
        %v5656 = vpop.permute.xlu0 %5655
        %5657 = vrot.lane.b32.xlu0 %v5495, 64
        %v5658 = vpop.permute.xlu0 %5657
        %5659 = vrot.lane.b32.xlu0 %v5498, 64
        %v5660 = vpop.permute.xlu0 %5659
        %v5693 = vadd.f32 %v5533, %v5598
        %v5694 = vadd.f32 %v5534, %v5600
        %v5695 = vadd.f32 %v5535, %v5602
        %v5696 = vadd.f32 %v5536, %v5604
        %v5697 = vadd.f32 %v5537, %v5606
        %v5698 = vadd.f32 %v5538, %v5608
        %v5699 = vadd.f32 %v5539, %v5610
        %v5700 = vadd.f32 %v5540, %v5612
        %v5701 = vadd.f32 %v5541, %v5614
        %v5702 = vadd.f32 %v5542, %v5616
        %v5703 = vadd.f32 %v5543, %v5618
        %v5704 = vadd.f32 %v5544, %v5620
        %v5705 = vadd.f32 %v5545, %v5622
        %v5706 = vadd.f32 %v5546, %v5624
        %v5707 = vadd.f32 %v5547, %v5626
        %v5708 = vadd.f32 %v5548, %v5628
        %v5709 = vadd.f32 %v5549, %v5630
        %v5710 = vadd.f32 %v5550, %v5632
        %v5711 = vadd.f32 %v5551, %v5634
        %v5712 = vadd.f32 %v5552, %v5636
        %v5713 = vadd.f32 %v5553, %v5638
        %v5714 = vadd.f32 %v5554, %v5640
        %v5715 = vadd.f32 %v5555, %v5642
        %v5716 = vadd.f32 %v5556, %v5644
        %v5717 = vadd.f32 %v5557, %v5646
        %v5718 = vadd.f32 %v5558, %v5648
        %v5719 = vadd.f32 %v5559, %v5650
        %v5720 = vadd.f32 %v5560, %v5652
        %v5721 = vadd.f32 %v5561, %v5654
        %v5722 = vadd.f32 %v5562, %v5656
        %v5723 = vadd.f32 %v5563, %v5658
        %v5724 = vadd.f32 %v5564, %v5660
        %v5725 = vpack.c.bf16 %v5694, %v5693
        %v5726 = vpack.c.bf16 %v5696, %v5695
        %v5727 = vpack.c.bf16 %v5698, %v5697
        %v5728 = vpack.c.bf16 %v5700, %v5699
        %v5729 = vpack.c.bf16 %v5702, %v5701
        %v5730 = vpack.c.bf16 %v5704, %v5703
        %v5731 = vpack.c.bf16 %v5706, %v5705
        %v5732 = vpack.c.bf16 %v5708, %v5707
        %v5733 = vpack.c.bf16 %v5710, %v5709
        %v5734 = vpack.c.bf16 %v5712, %v5711
        %v5735 = vpack.c.bf16 %v5714, %v5713
        %v5736 = vpack.c.bf16 %v5716, %v5715
        %v5737 = vpack.c.bf16 %v5718, %v5717
        %v5738 = vpack.c.bf16 %v5720, %v5719
        %v5739 = vpack.c.bf16 %v5722, %v5721
        %v5740 = vpack.c.bf16 %v5724, %v5723
        %5741 = vst.msk [vmem:[#allocation2] sm:$0xff] %vm1953, 0
        %5742 = vst.msk [vmem:[#allocation2 + $0x8] sm:$0xff] %vm1953, 0
        %v5743 = vld [vmem:[#allocation2 + $0x10] sm:$0x11]
        %v5744 = vsel %vm1962, 0, %v5743
        %5745 = vst [vmem:[#allocation2 + $0x10] sm:$0x11] %v5744
        %v5746 = vld [vmem:[#allocation2 + $0x108] sm:$0x88]
        %v5747 = vsel %vm1972, 0, %v5746
        %5748 = vst [vmem:[#allocation2 + $0x108] sm:$0x88] %v5747
        %5749 = vst.msk [vmem:[#allocation2 + $0x110] sm:$0xff] %vm1953, 0
        %5750 = vst.msk [vmem:[#allocation2 + $0x118] sm:$0xff] %vm1953, 0
        %v5751 = vsel %vm2154, %v5725, 0
        %v5752 = vsel %vm2155, %v5726, 0
        %v5753 = vsel %vm2156, %v5727, 0
        %v5754 = vsel %vm2157, %v5728, 0
        %v5755 = vsel %vm2158, %v5729, 0
        %v5756 = vsel %vm2159, %v5730, 0
        %v5757 = vsel %vm2160, %v5731, 0
        %v5758 = vsel %vm2161, %v5732, 0
        %v5759 = vsel %vm2162, %v5733, 0
        %v5760 = vsel %vm2163, %v5734, 0
        %v5761 = vsel %vm2164, %v5735, 0
        %v5762 = vsel %vm2165, %v5736, 0
        %v5763 = vsel %vm2166, %v5737, 0
        %v5764 = vsel %vm2167, %v5738, 0
        %v5765 = vsel %vm2168, %v5739, 0
        %v5766 = vsel %vm2169, %v5740, 0
        %v5783 = vunpack.c.l.b16 %v5751
        %v5784 = vunpack.c.h.b16 %v5751
        %v5785 = vunpack.c.l.b16 %v5752
        %v5786 = vunpack.c.h.b16 %v5752
        %v5787 = vunpack.c.l.b16 %v5753
        %v5788 = vunpack.c.h.b16 %v5753
        %v5789 = vunpack.c.l.b16 %v5754
        %v5790 = vunpack.c.h.b16 %v5754
        %v5791 = vunpack.c.l.b16 %v5755
        %v5792 = vunpack.c.h.b16 %v5755
        %v5793 = vunpack.c.l.b16 %v5756
        %v5794 = vunpack.c.h.b16 %v5756
        %v5795 = vunpack.c.l.b16 %v5757
        %v5796 = vunpack.c.h.b16 %v5757
        %v5797 = vunpack.c.l.b16 %v5758
        %v5798 = vunpack.c.h.b16 %v5758
        %v5799 = vunpack.c.l.b16 %v5759
        %v5800 = vunpack.c.h.b16 %v5759
        %v5801 = vunpack.c.l.b16 %v5760
        %v5802 = vunpack.c.h.b16 %v5760
        %v5803 = vunpack.c.l.b16 %v5761
        %v5804 = vunpack.c.h.b16 %v5761
        %v5805 = vunpack.c.l.b16 %v5762
        %v5806 = vunpack.c.h.b16 %v5762
        %v5807 = vunpack.c.l.b16 %v5763
        %v5808 = vunpack.c.h.b16 %v5763
        %v5809 = vunpack.c.l.b16 %v5764
        %v5810 = vunpack.c.h.b16 %v5764
        %v5811 = vunpack.c.l.b16 %v5765
        %v5812 = vunpack.c.h.b16 %v5765
        %v5813 = vunpack.c.l.b16 %v5766
        %v5814 = vunpack.c.h.b16 %v5766
        %v5815 = vpack.c.b16 %v5783, %v5783
        %v5816 = vpack.c.b16 %v5784, %v5784
        %v5817 = vpack.c.b16 %v5785, %v5785
        %v5818 = vpack.c.b16 %v5786, %v5786
        %v5819 = vpack.c.b16 %v5787, %v5787
        %v5820 = vpack.c.b16 %v5788, %v5788
        %v5821 = vpack.c.b16 %v5789, %v5789
        %v5822 = vpack.c.b16 %v5790, %v5790
        %v5823 = vpack.c.b16 %v5791, %v5791
        %v5824 = vpack.c.b16 %v5792, %v5792
        %v5825 = vpack.c.b16 %v5793, %v5793
        %v5826 = vpack.c.b16 %v5794, %v5794
        %v5827 = vpack.c.b16 %v5795, %v5795
        %v5828 = vpack.c.b16 %v5796, %v5796
        %v5829 = vpack.c.b16 %v5797, %v5797
        %v5830 = vpack.c.b16 %v5798, %v5798
        %v5831 = vpack.c.b16 %v5799, %v5799
        %v5832 = vpack.c.b16 %v5800, %v5800
        %v5833 = vpack.c.b16 %v5801, %v5801
        %v5834 = vpack.c.b16 %v5802, %v5802
        %v5835 = vpack.c.b16 %v5803, %v5803
        %v5836 = vpack.c.b16 %v5804, %v5804
        %v5837 = vpack.c.b16 %v5805, %v5805
        %v5838 = vpack.c.b16 %v5806, %v5806
        %v5839 = vpack.c.b16 %v5807, %v5807
        %v5840 = vpack.c.b16 %v5808, %v5808
        %v5841 = vpack.c.b16 %v5809, %v5809
        %v5842 = vpack.c.b16 %v5810, %v5810
        %v5843 = vpack.c.b16 %v5811, %v5811
        %v5844 = vpack.c.b16 %v5812, %v5812
        %v5845 = vpack.c.b16 %v5813, %v5813
        %v5846 = vpack.c.b16 %v5814, %v5814
        %v5848 = vshrl.u32 %v5815, 16
        %v5850 = vrot.slane %v5848, 7
        %v5851 = vshll.u32 %v5815, 16
        %v5853 = vor.u32 %v5850, %v5851
        %v5854 = vrot.slane %v5850, 4
        %v5856 = vshrl.u32 %v5816, 16
        %v5858 = vrot.slane %v5856, 7
        %v5859 = vshll.u32 %v5816, 16
        %v5861 = vor.u32 %v5858, %v5859
        %v5862 = vsel %vm2267, %v5854, %v5861
        %v5863 = vrot.slane %v5858, 4
        %v5865 = vshrl.u32 %v5817, 16
        %v5867 = vrot.slane %v5865, 7
        %v5868 = vshll.u32 %v5817, 16
        %v5870 = vor.u32 %v5867, %v5868
        %v5871 = vsel %vm2267, %v5863, %v5870
        %v5872 = vrot.slane %v5867, 4
        %v5874 = vshrl.u32 %v5818, 16
        %v5876 = vrot.slane %v5874, 7
        %v5877 = vshll.u32 %v5818, 16
        %v5879 = vor.u32 %v5876, %v5877
        %v5880 = vsel %vm2267, %v5872, %v5879
        %v5881 = vrot.slane %v5876, 4
        %v5883 = vshrl.u32 %v5819, 16
        %v5885 = vrot.slane %v5883, 7
        %v5886 = vshll.u32 %v5819, 16
        %v5888 = vor.u32 %v5885, %v5886
        %v5889 = vsel %vm2267, %v5881, %v5888
        %v5890 = vrot.slane %v5885, 4
        %v5892 = vshrl.u32 %v5820, 16
        %v5894 = vrot.slane %v5892, 7
        %v5895 = vshll.u32 %v5820, 16
        %v5897 = vor.u32 %v5894, %v5895
        %v5898 = vsel %vm2267, %v5890, %v5897
        %v5899 = vrot.slane %v5894, 4
        %v5901 = vshrl.u32 %v5821, 16
        %v5903 = vrot.slane %v5901, 7
        %v5904 = vshll.u32 %v5821, 16
        %v5906 = vor.u32 %v5903, %v5904
        %v5907 = vsel %vm2267, %v5899, %v5906
        %v5908 = vrot.slane %v5903, 4
        %v5910 = vshrl.u32 %v5822, 16
        %v5912 = vrot.slane %v5910, 7
        %v5913 = vshll.u32 %v5822, 16
        %v5915 = vor.u32 %v5912, %v5913
        %v5916 = vsel %vm2267, %v5908, %v5915
        %v5917 = vrot.slane %v5912, 4
        %v5919 = vshrl.u32 %v5823, 16
        %v5921 = vrot.slane %v5919, 7
        %v5922 = vshll.u32 %v5823, 16
        %v5924 = vor.u32 %v5921, %v5922
        %v5925 = vsel %vm2267, %v5917, %v5924
        %v5926 = vrot.slane %v5921, 4
        %v5928 = vshrl.u32 %v5824, 16
        %v5930 = vrot.slane %v5928, 7
        %v5931 = vshll.u32 %v5824, 16
        %v5933 = vor.u32 %v5930, %v5931
        %v5934 = vsel %vm2267, %v5926, %v5933
        %v5935 = vrot.slane %v5930, 4
        %v5937 = vshrl.u32 %v5825, 16
        %v5939 = vrot.slane %v5937, 7
        %v5940 = vshll.u32 %v5825, 16
        %v5942 = vor.u32 %v5939, %v5940
        %v5943 = vsel %vm2267, %v5935, %v5942
        %v5944 = vrot.slane %v5939, 4
        %v5946 = vshrl.u32 %v5826, 16
        %v5948 = vrot.slane %v5946, 7
        %v5949 = vshll.u32 %v5826, 16
        %v5951 = vor.u32 %v5948, %v5949
        %v5952 = vsel %vm2267, %v5944, %v5951
        %v5953 = vrot.slane %v5948, 4
        %v5955 = vshrl.u32 %v5827, 16
        %v5957 = vrot.slane %v5955, 7
        %v5958 = vshll.u32 %v5827, 16
        %v5960 = vor.u32 %v5957, %v5958
        %v5961 = vsel %vm2267, %v5953, %v5960
        %v5962 = vrot.slane %v5957, 4
        %v5964 = vshrl.u32 %v5828, 16
        %v5966 = vrot.slane %v5964, 7
        %v5967 = vshll.u32 %v5828, 16
        %v5969 = vor.u32 %v5966, %v5967
        %v5970 = vsel %vm2267, %v5962, %v5969
        %v5971 = vrot.slane %v5966, 4
        %v5973 = vshrl.u32 %v5829, 16
        %v5975 = vrot.slane %v5973, 7
        %v5976 = vshll.u32 %v5829, 16
        %v5978 = vor.u32 %v5975, %v5976
        %v5979 = vsel %vm2267, %v5971, %v5978
        %v5980 = vrot.slane %v5975, 4
        %v5982 = vshrl.u32 %v5830, 16
        %v5984 = vrot.slane %v5982, 7
        %v5985 = vshll.u32 %v5830, 16
        %v5987 = vor.u32 %v5984, %v5985
        %v5988 = vsel %vm2267, %v5980, %v5987
        %v5989 = vrot.slane %v5984, 4
        %v5991 = vshrl.u32 %v5831, 16
        %v5993 = vrot.slane %v5991, 7
        %v5994 = vshll.u32 %v5831, 16
        %v5996 = vor.u32 %v5993, %v5994
        %v5997 = vsel %vm2267, %v5989, %v5996
        %v5998 = vrot.slane %v5993, 4
        %v6000 = vshrl.u32 %v5832, 16
        %v6002 = vrot.slane %v6000, 7
        %v6003 = vshll.u32 %v5832, 16
        %v6005 = vor.u32 %v6002, %v6003
        %v6006 = vsel %vm2267, %v5998, %v6005
        %v6007 = vrot.slane %v6002, 4
        %v6009 = vshrl.u32 %v5833, 16
        %v6011 = vrot.slane %v6009, 7
        %v6012 = vshll.u32 %v5833, 16
        %v6014 = vor.u32 %v6011, %v6012
        %v6015 = vsel %vm2267, %v6007, %v6014
        %v6016 = vrot.slane %v6011, 4
        %v6018 = vshrl.u32 %v5834, 16
        %v6020 = vrot.slane %v6018, 7
        %v6021 = vshll.u32 %v5834, 16
        %v6023 = vor.u32 %v6020, %v6021
        %v6024 = vsel %vm2267, %v6016, %v6023
        %v6025 = vrot.slane %v6020, 4
        %v6027 = vshrl.u32 %v5835, 16
        %v6029 = vrot.slane %v6027, 7
        %v6030 = vshll.u32 %v5835, 16
        %v6032 = vor.u32 %v6029, %v6030
        %v6033 = vsel %vm2267, %v6025, %v6032
        %v6034 = vrot.slane %v6029, 4
        %v6036 = vshrl.u32 %v5836, 16
        %v6038 = vrot.slane %v6036, 7
        %v6039 = vshll.u32 %v5836, 16
        %v6041 = vor.u32 %v6038, %v6039
        %v6042 = vsel %vm2267, %v6034, %v6041
        %v6043 = vrot.slane %v6038, 4
        %v6045 = vshrl.u32 %v5837, 16
        %v6047 = vrot.slane %v6045, 7
        %v6048 = vshll.u32 %v5837, 16
        %v6050 = vor.u32 %v6047, %v6048
        %v6051 = vsel %vm2267, %v6043, %v6050
        %v6052 = vrot.slane %v6047, 4
        %v6054 = vshrl.u32 %v5838, 16
        %v6056 = vrot.slane %v6054, 7
        %v6057 = vshll.u32 %v5838, 16
        %v6059 = vor.u32 %v6056, %v6057
        %v6060 = vsel %vm2267, %v6052, %v6059
        %v6061 = vrot.slane %v6056, 4
        %v6063 = vshrl.u32 %v5839, 16
        %v6065 = vrot.slane %v6063, 7
        %v6066 = vshll.u32 %v5839, 16
        %v6068 = vor.u32 %v6065, %v6066
        %v6069 = vsel %vm2267, %v6061, %v6068
        %v6070 = vrot.slane %v6065, 4
        %v6072 = vshrl.u32 %v5840, 16
        %v6074 = vrot.slane %v6072, 7
        %v6075 = vshll.u32 %v5840, 16
        %v6077 = vor.u32 %v6074, %v6075
        %v6078 = vsel %vm2267, %v6070, %v6077
        %v6079 = vrot.slane %v6074, 4
        %v6081 = vshrl.u32 %v5841, 16
        %v6083 = vrot.slane %v6081, 7
        %v6084 = vshll.u32 %v5841, 16
        %v6086 = vor.u32 %v6083, %v6084
        %v6087 = vsel %vm2267, %v6079, %v6086
        %v6088 = vrot.slane %v6083, 4
        %v6090 = vshrl.u32 %v5842, 16
        %v6092 = vrot.slane %v6090, 7
        %v6093 = vshll.u32 %v5842, 16
        %v6095 = vor.u32 %v6092, %v6093
        %v6096 = vsel %vm2267, %v6088, %v6095
        %v6097 = vrot.slane %v6092, 4
        %v6099 = vshrl.u32 %v5843, 16
        %v6101 = vrot.slane %v6099, 7
        %v6102 = vshll.u32 %v5843, 16
        %v6104 = vor.u32 %v6101, %v6102
        %v6105 = vsel %vm2267, %v6097, %v6104
        %v6106 = vrot.slane %v6101, 4
        %v6108 = vshrl.u32 %v5844, 16
        %v6110 = vrot.slane %v6108, 7
        %v6111 = vshll.u32 %v5844, 16
        %v6113 = vor.u32 %v6110, %v6111
        %v6114 = vsel %vm2267, %v6106, %v6113
        %v6115 = vrot.slane %v6110, 4
        %v6117 = vshrl.u32 %v5845, 16
        %v6119 = vrot.slane %v6117, 7
        %v6120 = vshll.u32 %v5845, 16
        %v6122 = vor.u32 %v6119, %v6120
        %v6123 = vsel %vm2267, %v6115, %v6122
        %v6124 = vrot.slane %v6119, 4
        %v6126 = vshrl.u32 %v5846, 16
        %v6128 = vrot.slane %v6126, 7
        %v6129 = vshll.u32 %v5846, 16
        %v6131 = vor.u32 %v6128, %v6129
        %v6132 = vsel %vm2267, %v6124, %v6131
        %v6133 = vrot.slane %v6128, 4
        %v6167 = vld [vmem:[#allocation2 + $0x10] sm:$0xf]
        %v6168 = vsel %vm2590, %v5853, %v6167
        %6169 = vst [vmem:[#allocation2 + $0x10] sm:$0xf] %v6168
        %6170 = vst.msk [vmem:[#allocation2 + $0x18] sm:$0xf] %vm2594, %v5862
        %6171 = vst.msk [vmem:[#allocation2 + $0x20] sm:$0xf] %vm2594, %v5871
        %6172 = vst.msk [vmem:[#allocation2 + $0x28] sm:$0xf] %vm2594, %v5880
        %6173 = vst.msk [vmem:[#allocation2 + $0x30] sm:$0xf] %vm2594, %v5889
        %6174 = vst.msk [vmem:[#allocation2 + $0x38] sm:$0xf] %vm2594, %v5898
        %6175 = vst.msk [vmem:[#allocation2 + $0x40] sm:$0xf] %vm2594, %v5907
        %6176 = vst.msk [vmem:[#allocation2 + $0x48] sm:$0xf] %vm2594, %v5916
        %6177 = vst.msk [vmem:[#allocation2 + $0x50] sm:$0xf] %vm2594, %v5925
        %6178 = vst.msk [vmem:[#allocation2 + $0x58] sm:$0xf] %vm2594, %v5934
        %6179 = vst.msk [vmem:[#allocation2 + $0x60] sm:$0xf] %vm2594, %v5943
        %6180 = vst.msk [vmem:[#allocation2 + $0x68] sm:$0xf] %vm2594, %v5952
        %6181 = vst.msk [vmem:[#allocation2 + $0x70] sm:$0xf] %vm2594, %v5961
        %6182 = vst.msk [vmem:[#allocation2 + $0x78] sm:$0xf] %vm2594, %v5970
        %6183 = vst.msk [vmem:[#allocation2 + $0x80] sm:$0xf] %vm2594, %v5979
        %6184 = vst.msk [vmem:[#allocation2 + $0x88] sm:$0xf] %vm2594, %v5988
        %6185 = vst.msk [vmem:[#allocation2 + $0x90] sm:$0xf] %vm2594, %v5997
        %6186 = vst.msk [vmem:[#allocation2 + $0x98] sm:$0xf] %vm2594, %v6006
        %6187 = vst.msk [vmem:[#allocation2 + $0xa0] sm:$0xf] %vm2594, %v6015
        %6188 = vst.msk [vmem:[#allocation2 + $0xa8] sm:$0xf] %vm2594, %v6024
        %6189 = vst.msk [vmem:[#allocation2 + $0xb0] sm:$0xf] %vm2594, %v6033
        %6190 = vst.msk [vmem:[#allocation2 + $0xb8] sm:$0xf] %vm2594, %v6042
        %6191 = vst.msk [vmem:[#allocation2 + $0xc0] sm:$0xf] %vm2594, %v6051
        %6192 = vst.msk [vmem:[#allocation2 + $0xc8] sm:$0xf] %vm2594, %v6060
        %6193 = vst.msk [vmem:[#allocation2 + $0xd0] sm:$0xf] %vm2594, %v6069
        %6194 = vst.msk [vmem:[#allocation2 + $0xd8] sm:$0xf] %vm2594, %v6078
        %6195 = vst.msk [vmem:[#allocation2 + $0xe0] sm:$0xf] %vm2594, %v6087
        %6196 = vst.msk [vmem:[#allocation2 + $0xe8] sm:$0xf] %vm2594, %v6096
        %6197 = vst.msk [vmem:[#allocation2 + $0xf0] sm:$0xf] %vm2594, %v6105
        %6198 = vst.msk [vmem:[#allocation2 + $0xf8] sm:$0xf] %vm2594, %v6114
        %6199 = vst.msk [vmem:[#allocation2 + $0x100] sm:$0xf] %vm2594, %v6123
        %6200 = vst.msk [vmem:[#allocation2 + $0x108] sm:$0xf] %vm2594, %v6132
        %v6201 = vld [vmem:[#allocation2 + $0x110] sm:$0x1]
        %v6202 = vsel %vm2627, %v6133, %v6201
        %6203 = vst [vmem:[#allocation2 + $0x110] sm:$0x1] %v6202
        %v6220 = vunpack.c.l.b16 %v5725
        %v6221 = vunpack.c.h.b16 %v5725
        %v6222 = vunpack.c.l.b16 %v5726
        %v6223 = vunpack.c.h.b16 %v5726
        %v6224 = vunpack.c.l.b16 %v5727
        %v6225 = vunpack.c.h.b16 %v5727
        %v6226 = vunpack.c.l.b16 %v5728
        %v6227 = vunpack.c.h.b16 %v5728
        %v6228 = vunpack.c.l.b16 %v5729
        %v6229 = vunpack.c.h.b16 %v5729
        %v6230 = vunpack.c.l.b16 %v5730
        %v6231 = vunpack.c.h.b16 %v5730
        %v6232 = vunpack.c.l.b16 %v5731
        %v6233 = vunpack.c.h.b16 %v5731
        %v6234 = vunpack.c.l.b16 %v5732
        %v6235 = vunpack.c.h.b16 %v5732
        %v6236 = vunpack.c.l.b16 %v5733
        %v6237 = vunpack.c.h.b16 %v5733
        %v6238 = vunpack.c.l.b16 %v5734
        %v6239 = vunpack.c.h.b16 %v5734
        %v6240 = vunpack.c.l.b16 %v5735
        %v6241 = vunpack.c.h.b16 %v5735
        %v6242 = vunpack.c.l.b16 %v5736
        %v6243 = vunpack.c.h.b16 %v5736
        %v6244 = vunpack.c.l.b16 %v5737
        %v6245 = vunpack.c.h.b16 %v5737
        %v6246 = vunpack.c.l.b16 %v5738
        %v6247 = vunpack.c.h.b16 %v5738
        %v6248 = vunpack.c.l.b16 %v5739
        %v6249 = vunpack.c.h.b16 %v5739
        %v6250 = vunpack.c.l.b16 %v5740
        %v6251 = vunpack.c.h.b16 %v5740
        %v6252 = vpack.c.b16 %v6220, %v6220
        %v6253 = vpack.c.b16 %v6221, %v6221
        %v6254 = vpack.c.b16 %v6222, %v6222
        %v6255 = vpack.c.b16 %v6223, %v6223
        %v6256 = vpack.c.b16 %v6224, %v6224
        %v6257 = vpack.c.b16 %v6225, %v6225
        %v6258 = vpack.c.b16 %v6226, %v6226
        %v6259 = vpack.c.b16 %v6227, %v6227
        %v6260 = vpack.c.b16 %v6228, %v6228
        %v6261 = vpack.c.b16 %v6229, %v6229
        %v6262 = vpack.c.b16 %v6230, %v6230
        %v6263 = vpack.c.b16 %v6231, %v6231
        %v6264 = vpack.c.b16 %v6232, %v6232
        %v6265 = vpack.c.b16 %v6233, %v6233
        %v6266 = vpack.c.b16 %v6234, %v6234
        %v6267 = vpack.c.b16 %v6235, %v6235
        %v6268 = vpack.c.b16 %v6236, %v6236
        %v6269 = vpack.c.b16 %v6237, %v6237
        %v6270 = vpack.c.b16 %v6238, %v6238
        %v6271 = vpack.c.b16 %v6239, %v6239
        %v6272 = vpack.c.b16 %v6240, %v6240
        %v6273 = vpack.c.b16 %v6241, %v6241
        %v6274 = vpack.c.b16 %v6242, %v6242
        %v6275 = vpack.c.b16 %v6243, %v6243
        %v6276 = vpack.c.b16 %v6244, %v6244
        %v6277 = vpack.c.b16 %v6245, %v6245
        %v6278 = vpack.c.b16 %v6246, %v6246
        %v6279 = vpack.c.b16 %v6247, %v6247
        %v6280 = vpack.c.b16 %v6248, %v6248
        %v6281 = vpack.c.b16 %v6249, %v6249
        %v6282 = vpack.c.b16 %v6250, %v6250
        %v6283 = vpack.c.b16 %v6251, %v6251
        %6284 = vrot.lane.b32.xlu0 %v6252, 64
        %v6285 = vpop.permute.xlu0 %6284
        %6286 = vrot.lane.b32.xlu0 %v6253, 64
        %v6287 = vpop.permute.xlu0 %6286
        %6288 = vrot.lane.b32.xlu0 %v6254, 64
        %v6289 = vpop.permute.xlu0 %6288
        %6290 = vrot.lane.b32.xlu0 %v6255, 64
        %v6291 = vpop.permute.xlu0 %6290
        %6292 = vrot.lane.b32.xlu0 %v6256, 64
        %v6293 = vpop.permute.xlu0 %6292
        %6294 = vrot.lane.b32.xlu0 %v6257, 64
        %v6295 = vpop.permute.xlu0 %6294
        %6296 = vrot.lane.b32.xlu0 %v6258, 64
        %v6297 = vpop.permute.xlu0 %6296
        %6298 = vrot.lane.b32.xlu0 %v6259, 64
        %v6299 = vpop.permute.xlu0 %6298
        %6300 = vrot.lane.b32.xlu0 %v6260, 64
        %v6301 = vpop.permute.xlu0 %6300
        %6302 = vrot.lane.b32.xlu0 %v6261, 64
        %v6303 = vpop.permute.xlu0 %6302
        %6304 = vrot.lane.b32.xlu0 %v6262, 64
        %v6305 = vpop.permute.xlu0 %6304
        %6306 = vrot.lane.b32.xlu0 %v6263, 64
        %v6307 = vpop.permute.xlu0 %6306
        %6308 = vrot.lane.b32.xlu0 %v6264, 64
        %v6309 = vpop.permute.xlu0 %6308
        %6310 = vrot.lane.b32.xlu0 %v6265, 64
        %v6311 = vpop.permute.xlu0 %6310
        %6312 = vrot.lane.b32.xlu0 %v6266, 64
        %v6313 = vpop.permute.xlu0 %6312
        %6314 = vrot.lane.b32.xlu0 %v6267, 64
        %v6315 = vpop.permute.xlu0 %6314
        %6316 = vrot.lane.b32.xlu0 %v6268, 64
        %v6317 = vpop.permute.xlu0 %6316
        %6318 = vrot.lane.b32.xlu0 %v6269, 64
        %v6319 = vpop.permute.xlu0 %6318
        %6320 = vrot.lane.b32.xlu0 %v6270, 64
        %v6321 = vpop.permute.xlu0 %6320
        %6322 = vrot.lane.b32.xlu0 %v6271, 64
        %v6323 = vpop.permute.xlu0 %6322
        %6324 = vrot.lane.b32.xlu0 %v6272, 64
        %v6325 = vpop.permute.xlu0 %6324
        %6326 = vrot.lane.b32.xlu0 %v6273, 64
        %v6327 = vpop.permute.xlu0 %6326
        %6328 = vrot.lane.b32.xlu0 %v6274, 64
        %v6329 = vpop.permute.xlu0 %6328
        %6330 = vrot.lane.b32.xlu0 %v6275, 64
        %v6331 = vpop.permute.xlu0 %6330
        %6332 = vrot.lane.b32.xlu0 %v6276, 64
        %v6333 = vpop.permute.xlu0 %6332
        %6334 = vrot.lane.b32.xlu0 %v6277, 64
        %v6335 = vpop.permute.xlu0 %6334
        %6336 = vrot.lane.b32.xlu0 %v6278, 64
        %v6337 = vpop.permute.xlu0 %6336
        %6338 = vrot.lane.b32.xlu0 %v6279, 64
        %v6339 = vpop.permute.xlu0 %6338
        %6340 = vrot.lane.b32.xlu0 %v6280, 64
        %v6341 = vpop.permute.xlu0 %6340
        %6342 = vrot.lane.b32.xlu0 %v6281, 64
        %v6343 = vpop.permute.xlu0 %6342
        %6344 = vrot.lane.b32.xlu0 %v6282, 64
        %v6345 = vpop.permute.xlu0 %6344
        %6346 = vrot.lane.b32.xlu0 %v6283, 64
        %v6347 = vpop.permute.xlu0 %6346
        %6380 = vst.msk [vmem:[#allocation2 + $0x10] sm:$0xf] %vm2807, %v6285
        %6381 = vst.msk [vmem:[#allocation2 + $0x18] sm:$0xf] %vm2807, %v6287
        %6382 = vst.msk [vmem:[#allocation2 + $0x20] sm:$0xf] %vm2807, %v6289
        %6383 = vst.msk [vmem:[#allocation2 + $0x28] sm:$0xf] %vm2807, %v6291
        %6384 = vst.msk [vmem:[#allocation2 + $0x30] sm:$0xf] %vm2807, %v6293
        %6385 = vst.msk [vmem:[#allocation2 + $0x38] sm:$0xf] %vm2807, %v6295
        %6386 = vst.msk [vmem:[#allocation2 + $0x40] sm:$0xf] %vm2807, %v6297
        %6387 = vst.msk [vmem:[#allocation2 + $0x48] sm:$0xf] %vm2807, %v6299
        %6388 = vst.msk [vmem:[#allocation2 + $0x50] sm:$0xf] %vm2807, %v6301
        %6389 = vst.msk [vmem:[#allocation2 + $0x58] sm:$0xf] %vm2807, %v6303
        %6390 = vst.msk [vmem:[#allocation2 + $0x60] sm:$0xf] %vm2807, %v6305
        %6391 = vst.msk [vmem:[#allocation2 + $0x68] sm:$0xf] %vm2807, %v6307
        %6392 = vst.msk [vmem:[#allocation2 + $0x70] sm:$0xf] %vm2807, %v6309
        %6393 = vst.msk [vmem:[#allocation2 + $0x78] sm:$0xf] %vm2807, %v6311
        %6394 = vst.msk [vmem:[#allocation2 + $0x80] sm:$0xf] %vm2807, %v6313
        %6395 = vst.msk [vmem:[#allocation2 + $0x88] sm:$0xf] %vm2807, %v6315
        %6396 = vst.msk [vmem:[#allocation2 + $0x90] sm:$0xf] %vm2807, %v6317
        %6397 = vst.msk [vmem:[#allocation2 + $0x98] sm:$0xf] %vm2807, %v6319
        %6398 = vst.msk [vmem:[#allocation2 + $0xa0] sm:$0xf] %vm2807, %v6321
        %6399 = vst.msk [vmem:[#allocation2 + $0xa8] sm:$0xf] %vm2807, %v6323
        %6400 = vst.msk [vmem:[#allocation2 + $0xb0] sm:$0xf] %vm2807, %v6325
        %6401 = vst.msk [vmem:[#allocation2 + $0xb8] sm:$0xf] %vm2807, %v6327
        %6402 = vst.msk [vmem:[#allocation2 + $0xc0] sm:$0xf] %vm2807, %v6329
        %6403 = vst.msk [vmem:[#allocation2 + $0xc8] sm:$0xf] %vm2807, %v6331
        %6404 = vst.msk [vmem:[#allocation2 + $0xd0] sm:$0xf] %vm2807, %v6333
        %6405 = vst.msk [vmem:[#allocation2 + $0xd8] sm:$0xf] %vm2807, %v6335
        %6406 = vst.msk [vmem:[#allocation2 + $0xe0] sm:$0xf] %vm2807, %v6337
        %6407 = vst.msk [vmem:[#allocation2 + $0xe8] sm:$0xf] %vm2807, %v6339
        %6408 = vst.msk [vmem:[#allocation2 + $0xf0] sm:$0xf] %vm2807, %v6341
        %6409 = vst.msk [vmem:[#allocation2 + $0xf8] sm:$0xf] %vm2807, %v6343
        %6410 = vst.msk [vmem:[#allocation2 + $0x100] sm:$0xf] %vm2807, %v6345
        %6411 = vst.msk [vmem:[#allocation2 + $0x108] sm:$0xf] %vm2807, %v6347
        %v6412 = vsel %vm3016, %v5725, 0
        %v6413 = vsel %vm3017, %v5726, 0
        %v6414 = vsel %vm3018, %v5727, 0
        %v6415 = vsel %vm3019, %v5728, 0
        %v6416 = vsel %vm3020, %v5729, 0
        %v6417 = vsel %vm3021, %v5730, 0
        %v6418 = vsel %vm3022, %v5731, 0
        %v6419 = vsel %vm3023, %v5732, 0
        %v6420 = vsel %vm3024, %v5733, 0
        %v6421 = vsel %vm3025, %v5734, 0
        %v6422 = vsel %vm3026, %v5735, 0
        %v6423 = vsel %vm3027, %v5736, 0
        %v6424 = vsel %vm3028, %v5737, 0
        %v6425 = vsel %vm3029, %v5738, 0
        %v6426 = vsel %vm3030, %v5739, 0
        %v6427 = vsel %vm3031, %v5740, 0
        %v6444 = vunpack.c.l.b16 %v6412
        %v6445 = vunpack.c.h.b16 %v6412
        %v6446 = vunpack.c.l.b16 %v6413
        %v6447 = vunpack.c.h.b16 %v6413
        %v6448 = vunpack.c.l.b16 %v6414
        %v6449 = vunpack.c.h.b16 %v6414
        %v6450 = vunpack.c.l.b16 %v6415
        %v6451 = vunpack.c.h.b16 %v6415
        %v6452 = vunpack.c.l.b16 %v6416
        %v6453 = vunpack.c.h.b16 %v6416
        %v6454 = vunpack.c.l.b16 %v6417
        %v6455 = vunpack.c.h.b16 %v6417
        %v6456 = vunpack.c.l.b16 %v6418
        %v6457 = vunpack.c.h.b16 %v6418
        %v6458 = vunpack.c.l.b16 %v6419
        %v6459 = vunpack.c.h.b16 %v6419
        %v6460 = vunpack.c.l.b16 %v6420
        %v6461 = vunpack.c.h.b16 %v6420
        %v6462 = vunpack.c.l.b16 %v6421
        %v6463 = vunpack.c.h.b16 %v6421
        %v6464 = vunpack.c.l.b16 %v6422
        %v6465 = vunpack.c.h.b16 %v6422
        %v6466 = vunpack.c.l.b16 %v6423
        %v6467 = vunpack.c.h.b16 %v6423
        %v6468 = vunpack.c.l.b16 %v6424
        %v6469 = vunpack.c.h.b16 %v6424
        %v6470 = vunpack.c.l.b16 %v6425
        %v6471 = vunpack.c.h.b16 %v6425
        %v6472 = vunpack.c.l.b16 %v6426
        %v6473 = vunpack.c.h.b16 %v6426
        %v6474 = vunpack.c.l.b16 %v6427
        %v6475 = vunpack.c.h.b16 %v6427
        %v6476 = vpack.c.b16 %v6444, %v6444
        %v6477 = vpack.c.b16 %v6445, %v6445
        %v6478 = vpack.c.b16 %v6446, %v6446
        %v6479 = vpack.c.b16 %v6447, %v6447
        %v6480 = vpack.c.b16 %v6448, %v6448
        %v6481 = vpack.c.b16 %v6449, %v6449
        %v6482 = vpack.c.b16 %v6450, %v6450
        %v6483 = vpack.c.b16 %v6451, %v6451
        %v6484 = vpack.c.b16 %v6452, %v6452
        %v6485 = vpack.c.b16 %v6453, %v6453
        %v6486 = vpack.c.b16 %v6454, %v6454
        %v6487 = vpack.c.b16 %v6455, %v6455
        %v6488 = vpack.c.b16 %v6456, %v6456
        %v6489 = vpack.c.b16 %v6457, %v6457
        %v6490 = vpack.c.b16 %v6458, %v6458
        %v6491 = vpack.c.b16 %v6459, %v6459
        %v6492 = vpack.c.b16 %v6460, %v6460
        %v6493 = vpack.c.b16 %v6461, %v6461
        %v6494 = vpack.c.b16 %v6462, %v6462
        %v6495 = vpack.c.b16 %v6463, %v6463
        %v6496 = vpack.c.b16 %v6464, %v6464
        %v6497 = vpack.c.b16 %v6465, %v6465
        %v6498 = vpack.c.b16 %v6466, %v6466
        %v6499 = vpack.c.b16 %v6467, %v6467
        %v6500 = vpack.c.b16 %v6468, %v6468
        %v6501 = vpack.c.b16 %v6469, %v6469
        %v6502 = vpack.c.b16 %v6470, %v6470
        %v6503 = vpack.c.b16 %v6471, %v6471
        %v6504 = vpack.c.b16 %v6472, %v6472
        %v6505 = vpack.c.b16 %v6473, %v6473
        %v6506 = vpack.c.b16 %v6474, %v6474
        %v6507 = vpack.c.b16 %v6475, %v6475
        %v6509 = vshll.u32 %v6476, 16
        %v6511 = vrot.slane %v6509, 5
        %v6512 = vshrl.u32 %v6476, 16
        %v6514 = vrot.slane %v6512, 4
        %v6515 = vor.u32 %v6514, %v6511
        %v6516 = vrot.slane %v6515, 4
        %v6518 = vshll.u32 %v6477, 16
        %v6520 = vrot.slane %v6518, 5
        %v6521 = vsel %vm3130, %v6516, %v6520
        %v6522 = vshrl.u32 %v6477, 16
        %v6524 = vrot.slane %v6522, 4
        %v6525 = vor.u32 %v6524, %v6520
        %v6526 = vrot.slane %v6525, 4
        %v6528 = vshll.u32 %v6478, 16
        %v6530 = vrot.slane %v6528, 5
        %v6531 = vsel %vm3130, %v6526, %v6530
        %v6532 = vshrl.u32 %v6478, 16
        %v6534 = vrot.slane %v6532, 4
        %v6535 = vor.u32 %v6534, %v6530
        %v6536 = vrot.slane %v6535, 4
        %v6538 = vshll.u32 %v6479, 16
        %v6540 = vrot.slane %v6538, 5
        %v6541 = vsel %vm3130, %v6536, %v6540
        %v6542 = vshrl.u32 %v6479, 16
        %v6544 = vrot.slane %v6542, 4
        %v6545 = vor.u32 %v6544, %v6540
        %v6546 = vrot.slane %v6545, 4
        %v6548 = vshll.u32 %v6480, 16
        %v6550 = vrot.slane %v6548, 5
        %v6551 = vsel %vm3130, %v6546, %v6550
        %v6552 = vshrl.u32 %v6480, 16
        %v6554 = vrot.slane %v6552, 4
        %v6555 = vor.u32 %v6554, %v6550
        %v6556 = vrot.slane %v6555, 4
        %v6558 = vshll.u32 %v6481, 16
        %v6560 = vrot.slane %v6558, 5
        %v6561 = vsel %vm3130, %v6556, %v6560
        %v6562 = vshrl.u32 %v6481, 16
        %v6564 = vrot.slane %v6562, 4
        %v6565 = vor.u32 %v6564, %v6560
        %v6566 = vrot.slane %v6565, 4
        %v6568 = vshll.u32 %v6482, 16
        %v6570 = vrot.slane %v6568, 5
        %v6571 = vsel %vm3130, %v6566, %v6570
        %v6572 = vshrl.u32 %v6482, 16
        %v6574 = vrot.slane %v6572, 4
        %v6575 = vor.u32 %v6574, %v6570
        %v6576 = vrot.slane %v6575, 4
        %v6578 = vshll.u32 %v6483, 16
        %v6580 = vrot.slane %v6578, 5
        %v6581 = vsel %vm3130, %v6576, %v6580
        %v6582 = vshrl.u32 %v6483, 16
        %v6584 = vrot.slane %v6582, 4
        %v6585 = vor.u32 %v6584, %v6580
        %v6586 = vrot.slane %v6585, 4
        %v6588 = vshll.u32 %v6484, 16
        %v6590 = vrot.slane %v6588, 5
        %v6591 = vsel %vm3130, %v6586, %v6590
        %v6592 = vshrl.u32 %v6484, 16
        %v6594 = vrot.slane %v6592, 4
        %v6595 = vor.u32 %v6594, %v6590
        %v6596 = vrot.slane %v6595, 4
        %v6598 = vshll.u32 %v6485, 16
        %v6600 = vrot.slane %v6598, 5
        %v6601 = vsel %vm3130, %v6596, %v6600
        %v6602 = vshrl.u32 %v6485, 16
        %v6604 = vrot.slane %v6602, 4
        %v6605 = vor.u32 %v6604, %v6600
        %v6606 = vrot.slane %v6605, 4
        %v6608 = vshll.u32 %v6486, 16
        %v6610 = vrot.slane %v6608, 5
        %v6611 = vsel %vm3130, %v6606, %v6610
        %v6612 = vshrl.u32 %v6486, 16
        %v6614 = vrot.slane %v6612, 4
        %v6615 = vor.u32 %v6614, %v6610
        %v6616 = vrot.slane %v6615, 4
        %v6618 = vshll.u32 %v6487, 16
        %v6620 = vrot.slane %v6618, 5
        %v6621 = vsel %vm3130, %v6616, %v6620
        %v6622 = vshrl.u32 %v6487, 16
        %v6624 = vrot.slane %v6622, 4
        %v6625 = vor.u32 %v6624, %v6620
        %v6626 = vrot.slane %v6625, 4
        %v6628 = vshll.u32 %v6488, 16
        %v6630 = vrot.slane %v6628, 5
        %v6631 = vsel %vm3130, %v6626, %v6630
        %v6632 = vshrl.u32 %v6488, 16
        %v6634 = vrot.slane %v6632, 4
        %v6635 = vor.u32 %v6634, %v6630
        %v6636 = vrot.slane %v6635, 4
        %v6638 = vshll.u32 %v6489, 16
        %v6640 = vrot.slane %v6638, 5
        %v6641 = vsel %vm3130, %v6636, %v6640
        %v6642 = vshrl.u32 %v6489, 16
        %v6644 = vrot.slane %v6642, 4
        %v6645 = vor.u32 %v6644, %v6640
        %v6646 = vrot.slane %v6645, 4
        %v6648 = vshll.u32 %v6490, 16
        %v6650 = vrot.slane %v6648, 5
        %v6651 = vsel %vm3130, %v6646, %v6650
        %v6652 = vshrl.u32 %v6490, 16
        %v6654 = vrot.slane %v6652, 4
        %v6655 = vor.u32 %v6654, %v6650
        %v6656 = vrot.slane %v6655, 4
        %v6658 = vshll.u32 %v6491, 16
        %v6660 = vrot.slane %v6658, 5
        %v6661 = vsel %vm3130, %v6656, %v6660
        %v6662 = vshrl.u32 %v6491, 16
        %v6664 = vrot.slane %v6662, 4
        %v6665 = vor.u32 %v6664, %v6660
        %v6666 = vrot.slane %v6665, 4
        %v6668 = vshll.u32 %v6492, 16
        %v6670 = vrot.slane %v6668, 5
        %v6671 = vsel %vm3130, %v6666, %v6670
        %v6672 = vshrl.u32 %v6492, 16
        %v6674 = vrot.slane %v6672, 4
        %v6675 = vor.u32 %v6674, %v6670
        %v6676 = vrot.slane %v6675, 4
        %v6678 = vshll.u32 %v6493, 16
        %v6680 = vrot.slane %v6678, 5
        %v6681 = vsel %vm3130, %v6676, %v6680
        %v6682 = vshrl.u32 %v6493, 16
        %v6684 = vrot.slane %v6682, 4
        %v6685 = vor.u32 %v6684, %v6680
        %v6686 = vrot.slane %v6685, 4
        %v6688 = vshll.u32 %v6494, 16
        %v6690 = vrot.slane %v6688, 5
        %v6691 = vsel %vm3130, %v6686, %v6690
        %v6692 = vshrl.u32 %v6494, 16
        %v6694 = vrot.slane %v6692, 4
        %v6695 = vor.u32 %v6694, %v6690
        %v6696 = vrot.slane %v6695, 4
        %v6698 = vshll.u32 %v6495, 16
        %v6700 = vrot.slane %v6698, 5
        %v6701 = vsel %vm3130, %v6696, %v6700
        %v6702 = vshrl.u32 %v6495, 16
        %v6704 = vrot.slane %v6702, 4
        %v6705 = vor.u32 %v6704, %v6700
        %v6706 = vrot.slane %v6705, 4
        %v6708 = vshll.u32 %v6496, 16
        %v6710 = vrot.slane %v6708, 5
        %v6711 = vsel %vm3130, %v6706, %v6710
        %v6712 = vshrl.u32 %v6496, 16
        %v6714 = vrot.slane %v6712, 4
        %v6715 = vor.u32 %v6714, %v6710
        %v6716 = vrot.slane %v6715, 4
        %v6718 = vshll.u32 %v6497, 16
        %v6720 = vrot.slane %v6718, 5
        %v6721 = vsel %vm3130, %v6716, %v6720
        %v6722 = vshrl.u32 %v6497, 16
        %v6724 = vrot.slane %v6722, 4
        %v6725 = vor.u32 %v6724, %v6720
        %v6726 = vrot.slane %v6725, 4
        %v6728 = vshll.u32 %v6498, 16
        %v6730 = vrot.slane %v6728, 5
        %v6731 = vsel %vm3130, %v6726, %v6730
        %v6732 = vshrl.u32 %v6498, 16
        %v6734 = vrot.slane %v6732, 4
        %v6735 = vor.u32 %v6734, %v6730
        %v6736 = vrot.slane %v6735, 4
        %v6738 = vshll.u32 %v6499, 16
        %v6740 = vrot.slane %v6738, 5
        %v6741 = vsel %vm3130, %v6736, %v6740
        %v6742 = vshrl.u32 %v6499, 16
        %v6744 = vrot.slane %v6742, 4
        %v6745 = vor.u32 %v6744, %v6740
        %v6746 = vrot.slane %v6745, 4
        %v6748 = vshll.u32 %v6500, 16
        %v6750 = vrot.slane %v6748, 5
        %v6751 = vsel %vm3130, %v6746, %v6750
        %v6752 = vshrl.u32 %v6500, 16
        %v6754 = vrot.slane %v6752, 4
        %v6755 = vor.u32 %v6754, %v6750
        %v6756 = vrot.slane %v6755, 4
        %v6758 = vshll.u32 %v6501, 16
        %v6760 = vrot.slane %v6758, 5
        %v6761 = vsel %vm3130, %v6756, %v6760
        %v6762 = vshrl.u32 %v6501, 16
        %v6764 = vrot.slane %v6762, 4
        %v6765 = vor.u32 %v6764, %v6760
        %v6766 = vrot.slane %v6765, 4
        %v6768 = vshll.u32 %v6502, 16
        %v6770 = vrot.slane %v6768, 5
        %v6771 = vsel %vm3130, %v6766, %v6770
        %v6772 = vshrl.u32 %v6502, 16
        %v6774 = vrot.slane %v6772, 4
        %v6775 = vor.u32 %v6774, %v6770
        %v6776 = vrot.slane %v6775, 4
        %v6778 = vshll.u32 %v6503, 16
        %v6780 = vrot.slane %v6778, 5
        %v6781 = vsel %vm3130, %v6776, %v6780
        %v6782 = vshrl.u32 %v6503, 16
        %v6784 = vrot.slane %v6782, 4
        %v6785 = vor.u32 %v6784, %v6780
        %v6786 = vrot.slane %v6785, 4
        %v6788 = vshll.u32 %v6504, 16
        %v6790 = vrot.slane %v6788, 5
        %v6791 = vsel %vm3130, %v6786, %v6790
        %v6792 = vshrl.u32 %v6504, 16
        %v6794 = vrot.slane %v6792, 4
        %v6795 = vor.u32 %v6794, %v6790
        %v6796 = vrot.slane %v6795, 4
        %v6798 = vshll.u32 %v6505, 16
        %v6800 = vrot.slane %v6798, 5
        %v6801 = vsel %vm3130, %v6796, %v6800
        %v6802 = vshrl.u32 %v6505, 16
        %v6804 = vrot.slane %v6802, 4
        %v6805 = vor.u32 %v6804, %v6800
        %v6806 = vrot.slane %v6805, 4
        %v6808 = vshll.u32 %v6506, 16
        %v6810 = vrot.slane %v6808, 5
        %v6811 = vsel %vm3130, %v6806, %v6810
        %v6812 = vshrl.u32 %v6506, 16
        %v6814 = vrot.slane %v6812, 4
        %v6815 = vor.u32 %v6814, %v6810
        %v6816 = vrot.slane %v6815, 4
        %v6818 = vshll.u32 %v6507, 16
        %v6820 = vrot.slane %v6818, 5
        %v6821 = vsel %vm3130, %v6816, %v6820
        %v6822 = vshrl.u32 %v6507, 16
        %v6824 = vrot.slane %v6822, 4
        %v6825 = vor.u32 %v6824, %v6820
        %v6826 = vrot.slane %v6825, 4
        %v6860 = vld [vmem:[#allocation2 + $0xc] sm:$0x8]
        %v6861 = vsel %vm3484, %v6511, %v6860
        %6862 = vst [vmem:[#allocation2 + $0xc] sm:$0x8] %v6861
        %6863 = vst.msk [vmem:[#allocation2 + $0x14] sm:$0xf] %vm2594, %v6521
        %6864 = vst.msk [vmem:[#allocation2 + $0x1c] sm:$0xf] %vm2594, %v6531
        %6865 = vst.msk [vmem:[#allocation2 + $0x24] sm:$0xf] %vm2594, %v6541
        %6866 = vst.msk [vmem:[#allocation2 + $0x2c] sm:$0xf] %vm2594, %v6551
        %6867 = vst.msk [vmem:[#allocation2 + $0x34] sm:$0xf] %vm2594, %v6561
        %6868 = vst.msk [vmem:[#allocation2 + $0x3c] sm:$0xf] %vm2594, %v6571
        %6869 = vst.msk [vmem:[#allocation2 + $0x44] sm:$0xf] %vm2594, %v6581
        %6870 = vst.msk [vmem:[#allocation2 + $0x4c] sm:$0xf] %vm2594, %v6591
        %6871 = vst.msk [vmem:[#allocation2 + $0x54] sm:$0xf] %vm2594, %v6601
        %6872 = vst.msk [vmem:[#allocation2 + $0x5c] sm:$0xf] %vm2594, %v6611
        %6873 = vst.msk [vmem:[#allocation2 + $0x64] sm:$0xf] %vm2594, %v6621
        %6874 = vst.msk [vmem:[#allocation2 + $0x6c] sm:$0xf] %vm2594, %v6631
        %6875 = vst.msk [vmem:[#allocation2 + $0x74] sm:$0xf] %vm2594, %v6641
        %6876 = vst.msk [vmem:[#allocation2 + $0x7c] sm:$0xf] %vm2594, %v6651
        %6877 = vst.msk [vmem:[#allocation2 + $0x84] sm:$0xf] %vm2594, %v6661
        %6878 = vst.msk [vmem:[#allocation2 + $0x8c] sm:$0xf] %vm2594, %v6671
        %6879 = vst.msk [vmem:[#allocation2 + $0x94] sm:$0xf] %vm2594, %v6681
        %6880 = vst.msk [vmem:[#allocation2 + $0x9c] sm:$0xf] %vm2594, %v6691
        %6881 = vst.msk [vmem:[#allocation2 + $0xa4] sm:$0xf] %vm2594, %v6701
        %6882 = vst.msk [vmem:[#allocation2 + $0xac] sm:$0xf] %vm2594, %v6711
        %6883 = vst.msk [vmem:[#allocation2 + $0xb4] sm:$0xf] %vm2594, %v6721
        %6884 = vst.msk [vmem:[#allocation2 + $0xbc] sm:$0xf] %vm2594, %v6731
        %6885 = vst.msk [vmem:[#allocation2 + $0xc4] sm:$0xf] %vm2594, %v6741
        %6886 = vst.msk [vmem:[#allocation2 + $0xcc] sm:$0xf] %vm2594, %v6751
        %6887 = vst.msk [vmem:[#allocation2 + $0xd4] sm:$0xf] %vm2594, %v6761
        %6888 = vst.msk [vmem:[#allocation2 + $0xdc] sm:$0xf] %vm2594, %v6771
        %6889 = vst.msk [vmem:[#allocation2 + $0xe4] sm:$0xf] %vm2594, %v6781
        %6890 = vst.msk [vmem:[#allocation2 + $0xec] sm:$0xf] %vm2594, %v6791
        %6891 = vst.msk [vmem:[#allocation2 + $0xf4] sm:$0xf] %vm2594, %v6801
        %6892 = vst.msk [vmem:[#allocation2 + $0xfc] sm:$0xf] %vm2594, %v6811
        %6893 = vst.msk [vmem:[#allocation2 + $0x104] sm:$0xf] %vm2594, %v6821
        %v6894 = vld [vmem:[#allocation2 + $0x10c] sm:$0xf]
        %v6895 = vsel %vm3519, %v6826, %v6894
        %6896 = vst [vmem:[#allocation2 + $0x10c] sm:$0xf] %v6895
        %v6897 = vld [vmem:[#allocation2] sm:$0xff]
        %v6898 = vld [vmem:[#allocation2 + $0x8] sm:$0xff]
        %v6899 = vld [vmem:[#allocation2 + $0x10] sm:$0xff]
        %v6900 = vld [vmem:[#allocation2 + $0x18] sm:$0xff]
        %v6901 = vld [vmem:[#allocation2 + $0x20] sm:$0xff]
        %v6902 = vld [vmem:[#allocation2 + $0x28] sm:$0xff]
        %v6903 = vld [vmem:[#allocation2 + $0x30] sm:$0xff]
        %v6904 = vld [vmem:[#allocation2 + $0x38] sm:$0xff]
        %v6905 = vld [vmem:[#allocation2 + $0x40] sm:$0xff]
        %v6906 = vld [vmem:[#allocation2 + $0x48] sm:$0xff]
        %v6907 = vld [vmem:[#allocation2 + $0x50] sm:$0xff]
        %v6908 = vld [vmem:[#allocation2 + $0x58] sm:$0xff]
        %v6909 = vld [vmem:[#allocation2 + $0x60] sm:$0xff]
        %v6910 = vld [vmem:[#allocation2 + $0x68] sm:$0xff]
        %v6911 = vld [vmem:[#allocation2 + $0x70] sm:$0xff]
        %v6912 = vld [vmem:[#allocation2 + $0x78] sm:$0xff]
        %v6913 = vld [vmem:[#allocation2 + $0x80] sm:$0xff]
        %v6914 = vld [vmem:[#allocation2 + $0x88] sm:$0xff]
        %v6915 = vld [vmem:[#allocation2 + $0x90] sm:$0xff]
        %v6916 = vld [vmem:[#allocation2 + $0x98] sm:$0xff]
        %v6917 = vld [vmem:[#allocation2 + $0xa0] sm:$0xff]
        %v6918 = vld [vmem:[#allocation2 + $0xa8] sm:$0xff]
        %v6919 = vld [vmem:[#allocation2 + $0xb0] sm:$0xff]
        %v6920 = vld [vmem:[#allocation2 + $0xb8] sm:$0xff]
        %v6921 = vld [vmem:[#allocation2 + $0xc0] sm:$0xff]
        %v6922 = vld [vmem:[#allocation2 + $0xc8] sm:$0xff]
        %v6923 = vld [vmem:[#allocation2 + $0xd0] sm:$0xff]
        %v6924 = vld [vmem:[#allocation2 + $0xd8] sm:$0xff]
        %v6925 = vld [vmem:[#allocation2 + $0xe0] sm:$0xff]
        %v6926 = vld [vmem:[#allocation2 + $0xe8] sm:$0xff]
        %v6927 = vld [vmem:[#allocation2 + $0xf0] sm:$0xff]
        %v6928 = vld [vmem:[#allocation2 + $0xf8] sm:$0xff]
        %v6929 = vld [vmem:[%s13] sm:$0xf]
        %v6930 = vld [vmem:[%s13 + $0x4] sm:$0xf]
        %v6931 = vld [vmem:[%s13 + $0x8] sm:$0xf]
        %v6932 = vld [vmem:[%s13 + $0xc] sm:$0xf]
        %v6933 = vld [vmem:[%s13 + $0x10] sm:$0xf]
        %v6934 = vld [vmem:[%s13 + $0x14] sm:$0xf]
        %v6935 = vld [vmem:[%s13 + $0x18] sm:$0xf]
        %v6936 = vld [vmem:[%s13 + $0x1c] sm:$0xf]
        %v6937 = vld [vmem:[%s13 + $0x20] sm:$0xf]
        %v6938 = vld [vmem:[%s13 + $0x24] sm:$0xf]
        %v6939 = vld [vmem:[%s13 + $0x28] sm:$0xf]
        %v6940 = vld [vmem:[%s13 + $0x2c] sm:$0xf]
        %v6941 = vld [vmem:[%s13 + $0x30] sm:$0xf]
        %v6942 = vld [vmem:[%s13 + $0x34] sm:$0xf]
        %v6943 = vld [vmem:[%s13 + $0x38] sm:$0xf]
        %v6944 = vld [vmem:[%s13 + $0x3c] sm:$0xf]
        %v6945 = vld [vmem:[%s13 + $0x40] sm:$0xf]
        %v6946 = vld [vmem:[%s13 + $0x44] sm:$0xf]
        %v6947 = vld [vmem:[%s13 + $0x48] sm:$0xf]
        %v6948 = vld [vmem:[%s13 + $0x4c] sm:$0xf]
        %v6949 = vld [vmem:[%s13 + $0x50] sm:$0xf]
        %v6950 = vld [vmem:[%s13 + $0x54] sm:$0xf]
        %v6951 = vld [vmem:[%s13 + $0x58] sm:$0xf]
        %v6952 = vld [vmem:[%s13 + $0x5c] sm:$0xf]
        %v6953 = vld [vmem:[#allocation2 + $0x100] sm:$0xff]
        %v6954 = vld [vmem:[#allocation2 + $0x108] sm:$0xff]
        %s6955 = scalar_lea.vmem %s13, 96
        %v6956 = vld [vmem:[%s6955] sm:$0xf]
        %v6957 = vld [vmem:[%s6955 + $0x4] sm:$0xf]
        %v6958 = vld [vmem:[%s6955 + $0x8] sm:$0xf]
        %v6959 = vld [vmem:[%s6955 + $0xc] sm:$0xf]
        %v6960 = vld [vmem:[%s6955 + $0x10] sm:$0xf]
        %v6961 = vld [vmem:[%s6955 + $0x14] sm:$0xf]
        %v6962 = vld [vmem:[%s6955 + $0x18] sm:$0xf]
        %v6963 = vld [vmem:[%s6955 + $0x1c] sm:$0xf]
        %v6964 = vld [vmem:[%s6955 + $0x20] sm:$0xf]
        %v6965 = vld [vmem:[%s6955 + $0x24] sm:$0xf]
        %v6966 = vld [vmem:[%s6955 + $0x28] sm:$0xf]
        %v6967 = vld [vmem:[%s6955 + $0x2c] sm:$0xf]
        %v6968 = vld [vmem:[%s6955 + $0x30] sm:$0xf]
        %v6969 = vld [vmem:[%s6955 + $0x34] sm:$0xf]
        %v6970 = vld [vmem:[%s6955 + $0x38] sm:$0xf]
        %v6971 = vld [vmem:[%s6955 + $0x3c] sm:$0xf]
        %v6972 = vld [vmem:[%s6955 + $0x40] sm:$0xf]
        %v6973 = vld [vmem:[%s6955 + $0x44] sm:$0xf]
        %v6974 = vld [vmem:[%s6955 + $0x48] sm:$0xf]
        %v6975 = vld [vmem:[%s6955 + $0x4c] sm:$0xf]
        %v6976 = vld [vmem:[%s6955 + $0x50] sm:$0xf]
        %v6977 = vld [vmem:[%s6955 + $0x54] sm:$0xf]
        %v6978 = vld [vmem:[%s6955 + $0x58] sm:$0xf]
        %v6979 = vld [vmem:[%s6955 + $0x5c] sm:$0xf]
        %v7012 = vunpack.c.l.b16 %v6899
        %v7013 = vunpack.c.h.b16 %v6899
        %v7014 = vunpack.c.l.b16 %v6900
        %v7015 = vunpack.c.h.b16 %v6900
        %v7016 = vunpack.c.l.b16 %v6901
        %v7017 = vunpack.c.h.b16 %v6901
        %v7018 = vunpack.c.l.b16 %v6902
        %v7019 = vunpack.c.h.b16 %v6902
        %v7020 = vunpack.c.l.b16 %v6903
        %v7021 = vunpack.c.h.b16 %v6903
        %v7022 = vunpack.c.l.b16 %v6904
        %v7023 = vunpack.c.h.b16 %v6904
        %v7024 = vunpack.c.l.b16 %v6905
        %v7025 = vunpack.c.h.b16 %v6905
        %v7026 = vunpack.c.l.b16 %v6906
        %v7027 = vunpack.c.h.b16 %v6906
        %v7028 = vunpack.c.l.b16 %v6907
        %v7029 = vunpack.c.h.b16 %v6907
        %v7030 = vunpack.c.l.b16 %v6908
        %v7031 = vunpack.c.h.b16 %v6908
        %v7032 = vunpack.c.l.b16 %v6909
        %v7033 = vunpack.c.h.b16 %v6909
        %v7034 = vunpack.c.l.b16 %v6910
        %v7035 = vunpack.c.h.b16 %v6910
        %v7036 = vunpack.c.l.b16 %v6911
        %v7037 = vunpack.c.h.b16 %v6911
        %v7038 = vunpack.c.l.b16 %v6912
        %v7039 = vunpack.c.h.b16 %v6912
        %v7040 = vunpack.c.l.b16 %v6913
        %v7041 = vunpack.c.h.b16 %v6913
        %v7042 = vunpack.c.l.b16 %v6914
        %v7043 = vunpack.c.h.b16 %v6914
        %v7044 = vunpack.c.l.b16 %v6915
        %v7045 = vunpack.c.h.b16 %v6915
        %v7046 = vunpack.c.l.b16 %v6916
        %v7047 = vunpack.c.h.b16 %v6916
        %v7048 = vunpack.c.l.b16 %v6917
        %v7049 = vunpack.c.h.b16 %v6917
        %v7050 = vunpack.c.l.b16 %v6918
        %v7051 = vunpack.c.h.b16 %v6918
        %v7052 = vunpack.c.l.b16 %v6919
        %v7053 = vunpack.c.h.b16 %v6919
        %v7054 = vunpack.c.l.b16 %v6920
        %v7055 = vunpack.c.h.b16 %v6920
        %v7056 = vunpack.c.l.b16 %v6921
        %v7057 = vunpack.c.h.b16 %v6921
        %v7058 = vunpack.c.l.b16 %v6922
        %v7059 = vunpack.c.h.b16 %v6922
        %v7060 = vunpack.c.l.b16 %v6923
        %v7061 = vunpack.c.h.b16 %v6923
        %v7062 = vunpack.c.l.b16 %v6924
        %v7063 = vunpack.c.h.b16 %v6924
        %v7064 = vunpack.c.l.b16 %v6925
        %v7065 = vunpack.c.h.b16 %v6925
        %v7066 = vunpack.c.l.b16 %v6926
        %v7067 = vunpack.c.h.b16 %v6926
        %v7068 = vunpack.c.l.b16 %v6927
        %v7069 = vunpack.c.h.b16 %v6927
        %v7070 = vunpack.c.l.b16 %v6928
        %v7071 = vunpack.c.h.b16 %v6928
        %v7072 = vunpack.c.l.b16 %v6953
        %v7073 = vunpack.c.h.b16 %v6953
        %v7074 = vunpack.c.l.b16 %v6954
        %v7075 = vunpack.c.h.b16 %v6954
        %v7076 = vpack.c.b16 %v7014, %v7012
        %v7077 = vpack.c.b16 %v7015, %v7013
        %v7078 = vpack.c.b16 %v7018, %v7016
        %v7079 = vpack.c.b16 %v7019, %v7017
        %v7080 = vpack.c.b16 %v7022, %v7020
        %v7081 = vpack.c.b16 %v7023, %v7021
        %v7082 = vpack.c.b16 %v7026, %v7024
        %v7083 = vpack.c.b16 %v7027, %v7025
        %v7084 = vpack.c.b16 %v7030, %v7028
        %v7085 = vpack.c.b16 %v7031, %v7029
        %v7086 = vpack.c.b16 %v7034, %v7032
        %v7087 = vpack.c.b16 %v7035, %v7033
        %v7088 = vpack.c.b16 %v7038, %v7036
        %v7089 = vpack.c.b16 %v7039, %v7037
        %v7090 = vpack.c.b16 %v7042, %v7040
        %v7091 = vpack.c.b16 %v7043, %v7041
        %v7092 = vpack.c.b16 %v7046, %v7044
        %v7093 = vpack.c.b16 %v7047, %v7045
        %v7094 = vpack.c.b16 %v7050, %v7048
        %v7095 = vpack.c.b16 %v7051, %v7049
        %v7096 = vpack.c.b16 %v7054, %v7052
        %v7097 = vpack.c.b16 %v7055, %v7053
        %v7098 = vpack.c.b16 %v7058, %v7056
        %v7099 = vpack.c.b16 %v7059, %v7057
        %v7100 = vpack.c.b16 %v7062, %v7060
        %v7101 = vpack.c.b16 %v7063, %v7061
        %v7102 = vpack.c.b16 %v7066, %v7064
        %v7103 = vpack.c.b16 %v7067, %v7065
        %v7104 = vpack.c.b16 %v7070, %v7068
        %v7105 = vpack.c.b16 %v7071, %v7069
        %v7106 = vpack.c.b16 %v7074, %v7072
        %v7107 = vpack.c.b16 %v7075, %v7073
        %v7148 = vunpack.c.l.b16 %v6956
        %v7149 = vunpack.c.l.b16 %v6957
        %v7150 = vunpack.c.l.b16 %v6958
        %v7151 = vunpack.c.l.b16 %v6959
        %v7152 = vunpack.c.l.b16 %v6960
        %v7153 = vunpack.c.l.b16 %v6961
        %v7154 = vunpack.c.l.b16 %v6962
        %v7155 = vunpack.c.l.b16 %v6963
        %v7156 = vunpack.c.l.b16 %v6964
        %v7157 = vunpack.c.l.b16 %v6965
        %v7158 = vunpack.c.l.b16 %v6966
        %v7159 = vunpack.c.l.b16 %v6967
        %v7160 = vunpack.c.l.b16 %v6968
        %v7161 = vunpack.c.l.b16 %v6969
        %v7162 = vunpack.c.l.b16 %v6970
        %v7163 = vunpack.c.l.b16 %v6971
        %v7164 = vunpack.c.l.b16 %v6972
        %v7165 = vunpack.c.l.b16 %v6973
        %v7166 = vunpack.c.l.b16 %v6974
        %v7167 = vunpack.c.l.b16 %v6975
        %v7168 = vunpack.c.l.b16 %v6976
        %v7169 = vunpack.c.l.b16 %v6977
        %v7170 = vunpack.c.l.b16 %v6978
        %v7171 = vunpack.c.l.b16 %v6979
        %v7172 = vpack.c.b16 %v7149, %v7148
        %v7173 = vpack.c.b16 %v7151, %v7150
        %v7174 = vpack.c.b16 %v7153, %v7152
        %v7175 = vpack.c.b16 %v7155, %v7154
        %v7176 = vpack.c.b16 %v7157, %v7156
        %v7177 = vpack.c.b16 %v7159, %v7158
        %v7178 = vpack.c.b16 %v7161, %v7160
        %v7179 = vpack.c.b16 %v7163, %v7162
        %v7180 = vpack.c.b16 %v7165, %v7164
        %v7181 = vpack.c.b16 %v7167, %v7166
        %v7182 = vpack.c.b16 %v7169, %v7168
        %v7183 = vpack.c.b16 %v7171, %v7170
        %v7197 = vsel %vm1501, %v7077, 0
        %v7200 = vsel %vm1501, %v7079, 0
        %v7203 = vsel %vm1501, %v7081, 0
        %v7206 = vsel %vm1501, %v7083, 0
        %v7209 = vsel %vm1501, %v7085, 0
        %v7212 = vsel %vm1501, %v7087, 0
        %v7215 = vsel %vm1501, %v7089, 0
        %v7218 = vsel %vm1501, %v7091, 0
        %v7221 = vsel %vm1501, %v7093, 0
        %v7224 = vsel %vm1501, %v7095, 0
        %v7227 = vsel %vm1501, %v7097, 0
        %v7230 = vsel %vm1501, %v7099, 0
        %v7233 = vsel %vm1501, %v7101, 0
        %v7236 = vsel %vm1501, %v7103, 0
        %v7239 = vsel %vm1501, %v7105, 0
        %v7242 = vsel %vm1501, %v7107, 0
        %7244 = vmatprep.subr.bf16.mxu0 0
        %7245 = vmatpush1.bf16.msra.mxu0 %v7179
        %7246 = vmatprep.subr.bf16.mxu0 0
        %7247 = vmatpush1.bf16.msra.mxu0 %v7178
        %7248 = vmatprep.subr.bf16.mxu0 0
        %7249 = vmatpush1.bf16.msra.mxu0 %v7177
        %7250 = vmatprep.subr.bf16.mxu0 0
        %7251 = vmatpush1.bf16.msra.mxu0 %v7176
        %7252 = vmatprep.subr.bf16.mxu0 0
        %7253 = vmatpush1.bf16.msra.mxu0 %v7175
        %7254 = vmatprep.subr.bf16.mxu0 0
        %7255 = vmatpush1.bf16.msra.mxu0 %v7174
        %7256 = vmatprep.subr.bf16.mxu0 0
        %7257 = vmatpush1.bf16.msra.mxu0 %v7173
        %7258 = vmatprep.subr.bf16.mxu0 0
        %7259 = vmatpush1.bf16.msra.mxu0 %v7172
        %7260 = vmatprep.subr.bf16.mxu0 0
        %7261 = vmatpush2.bf16.msra.mxu0 0
        %7262 = vmatprep.subr.bf16.mxu0 0
        %7263 = vmatpush2.bf16.msra.mxu0 0
        %7264 = vmatprep.subr.bf16.mxu0 0
        %7265 = vmatpush2.bf16.msra.mxu0 0
        %7266 = vmatprep.subr.bf16.mxu0 0
        %7267 = vmatpush2.bf16.msra.mxu0 0
        %7268 = vmatprep.subr.bf16.mxu0 0
        %7269 = vmatpush2.bf16.msra.mxu0 %v7183
        %7270 = vmatprep.subr.bf16.mxu0 0
        %7271 = vmatpush2.bf16.msra.mxu0 %v7182
        %7272 = vmatprep.subr.bf16.mxu0 0
        %7273 = vmatpush2.bf16.msra.mxu0 %v7181
        %7274 = vmatprep.subr.bf16.mxu0 0
        %7275 = vmatpush2.bf16.msra.mxu0 %v7180
        %7276 = vmatprep.mubr.bf16.mxu0 %v7197
        %7277 = vmatmul.mubr.bf16.gmra.mxu0 %v7076
        %v7278 = vpop.f32.mrf.mxu0
        %v7279 = vadd.f32 0.0, %v7278
        %v7280 = vpop.f32.mrf.mxu0
        %v7281 = vpop.f32.mrf.mxu0
        %v7282 = vadd.f32 0.0, %v7281
        %v7283 = vpop.f32.mrf.mxu0
        %7284 = vmatprep.mubr.bf16.mxu0 %v7200
        %7285 = vmatmul.mubr.bf16.gmra.mxu0 %v7078
        %v7286 = vpop.f32.mrf.mxu0
        %v7287 = vadd.f32 0.0, %v7286
        %v7288 = vpop.f32.mrf.mxu0
        %v7289 = vpop.f32.mrf.mxu0
        %v7290 = vadd.f32 0.0, %v7289
        %v7291 = vpop.f32.mrf.mxu0
        %7292 = vmatprep.mubr.bf16.mxu0 %v7203
        %7293 = vmatmul.mubr.bf16.gmra.mxu0 %v7080
        %v7294 = vpop.f32.mrf.mxu0
        %v7295 = vadd.f32 0.0, %v7294
        %v7296 = vpop.f32.mrf.mxu0
        %v7297 = vpop.f32.mrf.mxu0
        %v7298 = vadd.f32 0.0, %v7297
        %v7299 = vpop.f32.mrf.mxu0
        %7300 = vmatprep.mubr.bf16.mxu0 %v7206
        %7301 = vmatmul.mubr.bf16.gmra.mxu0 %v7082
        %v7302 = vpop.f32.mrf.mxu0
        %v7303 = vadd.f32 0.0, %v7302
        %v7304 = vpop.f32.mrf.mxu0
        %v7305 = vpop.f32.mrf.mxu0
        %v7306 = vadd.f32 0.0, %v7305
        %v7307 = vpop.f32.mrf.mxu0
        %7308 = vmatprep.mubr.bf16.mxu0 %v7209
        %7309 = vmatmul.mubr.bf16.gmra.mxu0 %v7084
        %v7310 = vpop.f32.mrf.mxu0
        %v7311 = vadd.f32 0.0, %v7310
        %v7312 = vpop.f32.mrf.mxu0
        %v7313 = vpop.f32.mrf.mxu0
        %v7314 = vadd.f32 0.0, %v7313
        %v7315 = vpop.f32.mrf.mxu0
        %7316 = vmatprep.mubr.bf16.mxu0 %v7212
        %7317 = vmatmul.mubr.bf16.gmra.mxu0 %v7086
        %v7318 = vpop.f32.mrf.mxu0
        %v7319 = vadd.f32 0.0, %v7318
        %v7320 = vpop.f32.mrf.mxu0
        %v7321 = vpop.f32.mrf.mxu0
        %v7322 = vadd.f32 0.0, %v7321
        %v7323 = vpop.f32.mrf.mxu0
        %7324 = vmatprep.mubr.bf16.mxu0 %v7215
        %7325 = vmatmul.mubr.bf16.gmra.mxu0 %v7088
        %v7326 = vpop.f32.mrf.mxu0
        %v7327 = vadd.f32 0.0, %v7326
        %v7328 = vpop.f32.mrf.mxu0
        %v7329 = vpop.f32.mrf.mxu0
        %v7330 = vadd.f32 0.0, %v7329
        %v7331 = vpop.f32.mrf.mxu0
        %7332 = vmatprep.mubr.bf16.mxu0 %v7218
        %7333 = vmatmul.mubr.bf16.gmra.mxu0 %v7090
        %v7334 = vpop.f32.mrf.mxu0
        %v7335 = vadd.f32 0.0, %v7334
        %v7336 = vpop.f32.mrf.mxu0
        %v7337 = vpop.f32.mrf.mxu0
        %v7338 = vadd.f32 0.0, %v7337
        %v7339 = vpop.f32.mrf.mxu0
        %7340 = vmatprep.mubr.bf16.mxu0 %v7221
        %7341 = vmatmul.mubr.bf16.gmra.mxu0 %v7092
        %v7342 = vpop.f32.mrf.mxu0
        %v7343 = vadd.f32 0.0, %v7342
        %v7344 = vpop.f32.mrf.mxu0
        %v7345 = vpop.f32.mrf.mxu0
        %v7346 = vadd.f32 0.0, %v7345
        %v7347 = vpop.f32.mrf.mxu0
        %7348 = vmatprep.mubr.bf16.mxu0 %v7224
        %7349 = vmatmul.mubr.bf16.gmra.mxu0 %v7094
        %v7350 = vpop.f32.mrf.mxu0
        %v7351 = vadd.f32 0.0, %v7350
        %v7352 = vpop.f32.mrf.mxu0
        %v7353 = vpop.f32.mrf.mxu0
        %v7354 = vadd.f32 0.0, %v7353
        %v7355 = vpop.f32.mrf.mxu0
        %7356 = vmatprep.mubr.bf16.mxu0 %v7227
        %7357 = vmatmul.mubr.bf16.gmra.mxu0 %v7096
        %v7358 = vpop.f32.mrf.mxu0
        %v7359 = vadd.f32 0.0, %v7358
        %v7360 = vpop.f32.mrf.mxu0
        %v7361 = vpop.f32.mrf.mxu0
        %v7362 = vadd.f32 0.0, %v7361
        %v7363 = vpop.f32.mrf.mxu0
        %7364 = vmatprep.mubr.bf16.mxu0 %v7230
        %7365 = vmatmul.mubr.bf16.gmra.mxu0 %v7098
        %v7366 = vpop.f32.mrf.mxu0
        %v7367 = vadd.f32 0.0, %v7366
        %v7368 = vpop.f32.mrf.mxu0
        %v7369 = vpop.f32.mrf.mxu0
        %v7370 = vadd.f32 0.0, %v7369
        %v7371 = vpop.f32.mrf.mxu0
        %7372 = vmatprep.mubr.bf16.mxu0 %v7233
        %7373 = vmatmul.mubr.bf16.gmra.mxu0 %v7100
        %v7374 = vpop.f32.mrf.mxu0
        %v7375 = vadd.f32 0.0, %v7374
        %v7376 = vpop.f32.mrf.mxu0
        %v7377 = vpop.f32.mrf.mxu0
        %v7378 = vadd.f32 0.0, %v7377
        %v7379 = vpop.f32.mrf.mxu0
        %7380 = vmatprep.mubr.bf16.mxu0 %v7236
        %7381 = vmatmul.mubr.bf16.gmra.mxu0 %v7102
        %v7382 = vpop.f32.mrf.mxu0
        %v7383 = vadd.f32 0.0, %v7382
        %v7384 = vpop.f32.mrf.mxu0
        %v7385 = vpop.f32.mrf.mxu0
        %v7386 = vadd.f32 0.0, %v7385
        %v7387 = vpop.f32.mrf.mxu0
        %7388 = vmatprep.mubr.bf16.mxu0 %v7239
        %7389 = vmatmul.mubr.bf16.gmra.mxu0 %v7104
        %v7390 = vpop.f32.mrf.mxu0
        %v7391 = vadd.f32 0.0, %v7390
        %v7392 = vpop.f32.mrf.mxu0
        %v7393 = vpop.f32.mrf.mxu0
        %v7394 = vadd.f32 0.0, %v7393
        %v7395 = vpop.f32.mrf.mxu0
        %7396 = vmatprep.mubr.bf16.mxu0 %v7242
        %7397 = vmatmul.mubr.bf16.gmra.mxu0 %v7106
        %v7398 = vpop.f32.mrf.mxu0
        %v7399 = vadd.f32 0.0, %v7398
        %v7400 = vpop.f32.mrf.mxu0
        %v7401 = vpop.f32.mrf.mxu0
        %v7402 = vadd.f32 0.0, %v7401
        %v7403 = vpop.f32.mrf.mxu0
        %7404 = vdwg.mxu0
        %v7407 = vunpack.c.l.b16 %v6897
        %v7408 = vunpack.c.h.b16 %v6897
        %v7409 = vunpack.c.l.b16 %v6898
        %v7410 = vunpack.c.h.b16 %v6898
        %v7411 = vpack.c.b16 %v7409, %v7407
        %v7412 = vpack.c.b16 %v7410, %v7408
        %v7438 = vunpack.c.l.b16 %v6929
        %v7439 = vunpack.c.l.b16 %v6930
        %v7440 = vunpack.c.l.b16 %v6931
        %v7441 = vunpack.c.l.b16 %v6932
        %v7442 = vunpack.c.l.b16 %v6933
        %v7443 = vunpack.c.l.b16 %v6934
        %v7444 = vunpack.c.l.b16 %v6935
        %v7445 = vunpack.c.l.b16 %v6936
        %v7446 = vunpack.c.l.b16 %v6937
        %v7447 = vunpack.c.l.b16 %v6938
        %v7448 = vunpack.c.l.b16 %v6939
        %v7449 = vunpack.c.l.b16 %v6940
        %v7450 = vunpack.c.l.b16 %v6941
        %v7451 = vunpack.c.l.b16 %v6942
        %v7452 = vunpack.c.l.b16 %v6943
        %v7453 = vunpack.c.l.b16 %v6944
        %v7454 = vunpack.c.l.b16 %v6945
        %v7455 = vunpack.c.l.b16 %v6946
        %v7456 = vunpack.c.l.b16 %v6947
        %v7457 = vunpack.c.l.b16 %v6948
        %v7458 = vunpack.c.l.b16 %v6949
        %v7459 = vunpack.c.l.b16 %v6950
        %v7460 = vunpack.c.l.b16 %v6951
        %v7461 = vunpack.c.l.b16 %v6952
        %v7462 = vpack.c.b16 %v7439, %v7438
        %v7463 = vpack.c.b16 %v7441, %v7440
        %v7464 = vpack.c.b16 %v7443, %v7442
        %v7465 = vpack.c.b16 %v7445, %v7444
        %v7466 = vpack.c.b16 %v7447, %v7446
        %v7467 = vpack.c.b16 %v7449, %v7448
        %v7468 = vpack.c.b16 %v7451, %v7450
        %v7469 = vpack.c.b16 %v7453, %v7452
        %v7470 = vpack.c.b16 %v7455, %v7454
        %v7471 = vpack.c.b16 %v7457, %v7456
        %v7472 = vpack.c.b16 %v7459, %v7458
        %v7473 = vpack.c.b16 %v7461, %v7460
        %v7487 = vsel %vm1501, %v7412, 0
        %7489 = vmatprep.subr.bf16.mxu0 0
        %7490 = vmatpush1.bf16.msra.mxu0 %v7469
        %7491 = vmatprep.subr.bf16.mxu0 0
        %7492 = vmatpush1.bf16.msra.mxu0 %v7468
        %7493 = vmatprep.subr.bf16.mxu0 0
        %7494 = vmatpush1.bf16.msra.mxu0 %v7467
        %7495 = vmatprep.subr.bf16.mxu0 0
        %7496 = vmatpush1.bf16.msra.mxu0 %v7466
        %7497 = vmatprep.subr.bf16.mxu0 0
        %7498 = vmatpush1.bf16.msra.mxu0 %v7465
        %7499 = vmatprep.subr.bf16.mxu0 0
        %7500 = vmatpush1.bf16.msra.mxu0 %v7464
        %7501 = vmatprep.subr.bf16.mxu0 0
        %7502 = vmatpush1.bf16.msra.mxu0 %v7463
        %7503 = vmatprep.subr.bf16.mxu0 0
        %7504 = vmatpush1.bf16.msra.mxu0 %v7462
        %7505 = vmatprep.subr.bf16.mxu0 0
        %7506 = vmatpush2.bf16.msra.mxu0 0
        %7507 = vmatprep.subr.bf16.mxu0 0
        %7508 = vmatpush2.bf16.msra.mxu0 0
        %7509 = vmatprep.subr.bf16.mxu0 0
        %7510 = vmatpush2.bf16.msra.mxu0 0
        %7511 = vmatprep.subr.bf16.mxu0 0
        %7512 = vmatpush2.bf16.msra.mxu0 0
        %7513 = vmatprep.subr.bf16.mxu0 0
        %7514 = vmatpush2.bf16.msra.mxu0 %v7473
        %7515 = vmatprep.subr.bf16.mxu0 0
        %7516 = vmatpush2.bf16.msra.mxu0 %v7472
        %7517 = vmatprep.subr.bf16.mxu0 0
        %7518 = vmatpush2.bf16.msra.mxu0 %v7471
        %7519 = vmatprep.subr.bf16.mxu0 0
        %7520 = vmatpush2.bf16.msra.mxu0 %v7470
        %7521 = vmatprep.mubr.bf16.mxu0 %v7487
        %7522 = vmatmul.mubr.bf16.gmra.mxu0 %v7411
        %v7523 = vpop.f32.mrf.mxu0
        %v7524 = vadd.f32 %v7279, %v7523
        %v7525 = vpop.f32.mrf.mxu0
        %v7526 = vpop.f32.mrf.mxu0
        %v7527 = vadd.f32 %v7282, %v7526
        %v7528 = vpop.f32.mrf.mxu0
        %7529 = vmatprep.mubr.bf16.mxu0 %v7197
        %7530 = vmatmul.mubr.bf16.gmra.mxu0 %v7076
        %v7531 = vpop.f32.mrf.mxu0
        %v7532 = vadd.f32 %v7287, %v7531
        %v7533 = vpop.f32.mrf.mxu0
        %v7534 = vpop.f32.mrf.mxu0
        %v7535 = vadd.f32 %v7290, %v7534
        %v7536 = vpop.f32.mrf.mxu0
        %7537 = vmatprep.mubr.bf16.mxu0 %v7200
        %7538 = vmatmul.mubr.bf16.gmra.mxu0 %v7078
        %v7539 = vpop.f32.mrf.mxu0
        %v7540 = vadd.f32 %v7295, %v7539
        %v7541 = vpop.f32.mrf.mxu0
        %v7542 = vpop.f32.mrf.mxu0
        %v7543 = vadd.f32 %v7298, %v7542
        %v7544 = vpop.f32.mrf.mxu0
        %7545 = vmatprep.mubr.bf16.mxu0 %v7203
        %7546 = vmatmul.mubr.bf16.gmra.mxu0 %v7080
        %v7547 = vpop.f32.mrf.mxu0
        %v7548 = vadd.f32 %v7303, %v7547
        %v7549 = vpop.f32.mrf.mxu0
        %v7550 = vpop.f32.mrf.mxu0
        %v7551 = vadd.f32 %v7306, %v7550
        %v7552 = vpop.f32.mrf.mxu0
        %7553 = vmatprep.mubr.bf16.mxu0 %v7206
        %7554 = vmatmul.mubr.bf16.gmra.mxu0 %v7082
        %v7555 = vpop.f32.mrf.mxu0
        %v7556 = vadd.f32 %v7311, %v7555
        %v7557 = vpop.f32.mrf.mxu0
        %v7558 = vpop.f32.mrf.mxu0
        %v7559 = vadd.f32 %v7314, %v7558
        %v7560 = vpop.f32.mrf.mxu0
        %7561 = vmatprep.mubr.bf16.mxu0 %v7209
        %7562 = vmatmul.mubr.bf16.gmra.mxu0 %v7084
        %v7563 = vpop.f32.mrf.mxu0
        %v7564 = vadd.f32 %v7319, %v7563
        %v7565 = vpop.f32.mrf.mxu0
        %v7566 = vpop.f32.mrf.mxu0
        %v7567 = vadd.f32 %v7322, %v7566
        %v7568 = vpop.f32.mrf.mxu0
        %7569 = vmatprep.mubr.bf16.mxu0 %v7212
        %7570 = vmatmul.mubr.bf16.gmra.mxu0 %v7086
        %v7571 = vpop.f32.mrf.mxu0
        %v7572 = vadd.f32 %v7327, %v7571
        %v7573 = vpop.f32.mrf.mxu0
        %v7574 = vpop.f32.mrf.mxu0
        %v7575 = vadd.f32 %v7330, %v7574
        %v7576 = vpop.f32.mrf.mxu0
        %7577 = vmatprep.mubr.bf16.mxu0 %v7215
        %7578 = vmatmul.mubr.bf16.gmra.mxu0 %v7088
        %v7579 = vpop.f32.mrf.mxu0
        %v7580 = vadd.f32 %v7335, %v7579
        %v7581 = vpop.f32.mrf.mxu0
        %v7582 = vpop.f32.mrf.mxu0
        %v7583 = vadd.f32 %v7338, %v7582
        %v7584 = vpop.f32.mrf.mxu0
        %7585 = vmatprep.mubr.bf16.mxu0 %v7218
        %7586 = vmatmul.mubr.bf16.gmra.mxu0 %v7090
        %v7587 = vpop.f32.mrf.mxu0
        %v7588 = vadd.f32 %v7343, %v7587
        %v7589 = vpop.f32.mrf.mxu0
        %v7590 = vpop.f32.mrf.mxu0
        %v7591 = vadd.f32 %v7346, %v7590
        %v7592 = vpop.f32.mrf.mxu0
        %7593 = vmatprep.mubr.bf16.mxu0 %v7221
        %7594 = vmatmul.mubr.bf16.gmra.mxu0 %v7092
        %v7595 = vpop.f32.mrf.mxu0
        %v7596 = vadd.f32 %v7351, %v7595
        %v7597 = vpop.f32.mrf.mxu0
        %v7598 = vpop.f32.mrf.mxu0
        %v7599 = vadd.f32 %v7354, %v7598
        %v7600 = vpop.f32.mrf.mxu0
        %7601 = vmatprep.mubr.bf16.mxu0 %v7224
        %7602 = vmatmul.mubr.bf16.gmra.mxu0 %v7094
        %v7603 = vpop.f32.mrf.mxu0
        %v7604 = vadd.f32 %v7359, %v7603
        %v7605 = vpop.f32.mrf.mxu0
        %v7606 = vpop.f32.mrf.mxu0
        %v7607 = vadd.f32 %v7362, %v7606
        %v7608 = vpop.f32.mrf.mxu0
        %7609 = vmatprep.mubr.bf16.mxu0 %v7227
        %7610 = vmatmul.mubr.bf16.gmra.mxu0 %v7096
        %v7611 = vpop.f32.mrf.mxu0
        %v7612 = vadd.f32 %v7367, %v7611
        %v7613 = vpop.f32.mrf.mxu0
        %v7614 = vpop.f32.mrf.mxu0
        %v7615 = vadd.f32 %v7370, %v7614
        %v7616 = vpop.f32.mrf.mxu0
        %7617 = vmatprep.mubr.bf16.mxu0 %v7230
        %7618 = vmatmul.mubr.bf16.gmra.mxu0 %v7098
        %v7619 = vpop.f32.mrf.mxu0
        %v7620 = vadd.f32 %v7375, %v7619
        %v7621 = vpop.f32.mrf.mxu0
        %v7622 = vpop.f32.mrf.mxu0
        %v7623 = vadd.f32 %v7378, %v7622
        %v7624 = vpop.f32.mrf.mxu0
        %7625 = vmatprep.mubr.bf16.mxu0 %v7233
        %7626 = vmatmul.mubr.bf16.gmra.mxu0 %v7100
        %v7627 = vpop.f32.mrf.mxu0
        %v7628 = vadd.f32 %v7383, %v7627
        %v7629 = vpop.f32.mrf.mxu0
        %v7630 = vpop.f32.mrf.mxu0
        %v7631 = vadd.f32 %v7386, %v7630
        %v7632 = vpop.f32.mrf.mxu0
        %7633 = vmatprep.mubr.bf16.mxu0 %v7236
        %7634 = vmatmul.mubr.bf16.gmra.mxu0 %v7102
        %v7635 = vpop.f32.mrf.mxu0
        %v7636 = vadd.f32 %v7391, %v7635
        %v7637 = vpop.f32.mrf.mxu0
        %v7638 = vpop.f32.mrf.mxu0
        %v7639 = vadd.f32 %v7394, %v7638
        %v7640 = vpop.f32.mrf.mxu0
        %7641 = vmatprep.mubr.bf16.mxu0 %v7239
        %7642 = vmatmul.mubr.bf16.gmra.mxu0 %v7104
        %v7643 = vpop.f32.mrf.mxu0
        %v7644 = vadd.f32 %v7399, %v7643
        %v7645 = vpop.f32.mrf.mxu0
        %v7646 = vpop.f32.mrf.mxu0
        %v7647 = vadd.f32 %v7402, %v7646
        %v7648 = vpop.f32.mrf.mxu0
        %7649 = vdwg.mxu0
        %v7650 = vld [vmem:[#allocation2 + $0x20] sm:$0xff]
        %v7651 = vld [vmem:[#allocation2 + $0x28] sm:$0xff]
        %v7652 = vld [vmem:[#allocation2 + $0x30] sm:$0xff]
        %v7653 = vld [vmem:[#allocation2 + $0x38] sm:$0xff]
        %v7654 = vld [vmem:[#allocation2 + $0x40] sm:$0xff]
        %v7655 = vld [vmem:[#allocation2 + $0x48] sm:$0xff]
        %v7656 = vld [vmem:[#allocation2 + $0x50] sm:$0xff]
        %v7657 = vld [vmem:[#allocation2 + $0x58] sm:$0xff]
        %v7658 = vld [vmem:[#allocation2 + $0x60] sm:$0xff]
        %v7659 = vld [vmem:[#allocation2 + $0x68] sm:$0xff]
        %v7660 = vld [vmem:[#allocation2 + $0x70] sm:$0xff]
        %v7661 = vld [vmem:[#allocation2 + $0x78] sm:$0xff]
        %v7662 = vld [vmem:[#allocation2 + $0x80] sm:$0xff]
        %v7663 = vld [vmem:[#allocation2 + $0x88] sm:$0xff]
        %v7664 = vld [vmem:[#allocation2 + $0x90] sm:$0xff]
        %v7665 = vld [vmem:[#allocation2 + $0x98] sm:$0xff]
        %v7666 = vld [vmem:[#allocation2 + $0xa0] sm:$0xff]
        %v7667 = vld [vmem:[#allocation2 + $0xa8] sm:$0xff]
        %v7668 = vld [vmem:[#allocation2 + $0xb0] sm:$0xff]
        %v7669 = vld [vmem:[#allocation2 + $0xb8] sm:$0xff]
        %v7670 = vld [vmem:[#allocation2 + $0xc0] sm:$0xff]
        %v7671 = vld [vmem:[#allocation2 + $0xc8] sm:$0xff]
        %v7672 = vld [vmem:[#allocation2 + $0xd0] sm:$0xff]
        %v7673 = vld [vmem:[#allocation2 + $0xd8] sm:$0xff]
        %v7674 = vld [vmem:[#allocation2 + $0xe0] sm:$0xff]
        %v7675 = vld [vmem:[#allocation2 + $0xe8] sm:$0xff]
        %v7676 = vld [vmem:[#allocation2 + $0xf0] sm:$0xff]
        %v7677 = vld [vmem:[#allocation2 + $0xf8] sm:$0xff]
        %v7678 = vld [vmem:[#allocation2 + $0x100] sm:$0xff]
        %v7679 = vld [vmem:[#allocation2 + $0x108] sm:$0xff]
        %v7680 = vld [vmem:[#allocation2 + $0x110] sm:$0xff]
        %v7681 = vld [vmem:[#allocation2 + $0x118] sm:$0xff]
        %s7682 = scalar_lea.vmem %s13, 192
        %v7683 = vld [vmem:[%s7682] sm:$0xf]
        %v7684 = vld [vmem:[%s7682 + $0x4] sm:$0xf]
        %v7685 = vld [vmem:[%s7682 + $0x8] sm:$0xf]
        %v7686 = vld [vmem:[%s7682 + $0xc] sm:$0xf]
        %v7687 = vld [vmem:[%s7682 + $0x10] sm:$0xf]
        %v7688 = vld [vmem:[%s7682 + $0x14] sm:$0xf]
        %v7689 = vld [vmem:[%s7682 + $0x18] sm:$0xf]
        %v7690 = vld [vmem:[%s7682 + $0x1c] sm:$0xf]
        %v7691 = vld [vmem:[%s7682 + $0x20] sm:$0xf]
        %v7692 = vld [vmem:[%s7682 + $0x24] sm:$0xf]
        %v7693 = vld [vmem:[%s7682 + $0x28] sm:$0xf]
        %v7694 = vld [vmem:[%s7682 + $0x2c] sm:$0xf]
        %v7695 = vld [vmem:[%s7682 + $0x30] sm:$0xf]
        %v7696 = vld [vmem:[%s7682 + $0x34] sm:$0xf]
        %v7697 = vld [vmem:[%s7682 + $0x38] sm:$0xf]
        %v7698 = vld [vmem:[%s7682 + $0x3c] sm:$0xf]
        %v7699 = vld [vmem:[%s7682 + $0x40] sm:$0xf]
        %v7700 = vld [vmem:[%s7682 + $0x44] sm:$0xf]
        %v7701 = vld [vmem:[%s7682 + $0x48] sm:$0xf]
        %v7702 = vld [vmem:[%s7682 + $0x4c] sm:$0xf]
        %v7703 = vld [vmem:[%s7682 + $0x50] sm:$0xf]
        %v7704 = vld [vmem:[%s7682 + $0x54] sm:$0xf]
        %v7705 = vld [vmem:[%s7682 + $0x58] sm:$0xf]
        %v7706 = vld [vmem:[%s7682 + $0x5c] sm:$0xf]
        %v7739 = vunpack.c.l.b16 %v7650
        %v7740 = vunpack.c.h.b16 %v7650
        %v7741 = vunpack.c.l.b16 %v7651
        %v7742 = vunpack.c.h.b16 %v7651
        %v7743 = vunpack.c.l.b16 %v7652
        %v7744 = vunpack.c.h.b16 %v7652
        %v7745 = vunpack.c.l.b16 %v7653
        %v7746 = vunpack.c.h.b16 %v7653
        %v7747 = vunpack.c.l.b16 %v7654
        %v7748 = vunpack.c.h.b16 %v7654
        %v7749 = vunpack.c.l.b16 %v7655
        %v7750 = vunpack.c.h.b16 %v7655
        %v7751 = vunpack.c.l.b16 %v7656
        %v7752 = vunpack.c.h.b16 %v7656
        %v7753 = vunpack.c.l.b16 %v7657
        %v7754 = vunpack.c.h.b16 %v7657
        %v7755 = vunpack.c.l.b16 %v7658
        %v7756 = vunpack.c.h.b16 %v7658
        %v7757 = vunpack.c.l.b16 %v7659
        %v7758 = vunpack.c.h.b16 %v7659
        %v7759 = vunpack.c.l.b16 %v7660
        %v7760 = vunpack.c.h.b16 %v7660
        %v7761 = vunpack.c.l.b16 %v7661
        %v7762 = vunpack.c.h.b16 %v7661
        %v7763 = vunpack.c.l.b16 %v7662
        %v7764 = vunpack.c.h.b16 %v7662
        %v7765 = vunpack.c.l.b16 %v7663
        %v7766 = vunpack.c.h.b16 %v7663
        %v7767 = vunpack.c.l.b16 %v7664
        %v7768 = vunpack.c.h.b16 %v7664
        %v7769 = vunpack.c.l.b16 %v7665
        %v7770 = vunpack.c.h.b16 %v7665
        %v7771 = vunpack.c.l.b16 %v7666
        %v7772 = vunpack.c.h.b16 %v7666
        %v7773 = vunpack.c.l.b16 %v7667
        %v7774 = vunpack.c.h.b16 %v7667
        %v7775 = vunpack.c.l.b16 %v7668
        %v7776 = vunpack.c.h.b16 %v7668
        %v7777 = vunpack.c.l.b16 %v7669
        %v7778 = vunpack.c.h.b16 %v7669
        %v7779 = vunpack.c.l.b16 %v7670
        %v7780 = vunpack.c.h.b16 %v7670
        %v7781 = vunpack.c.l.b16 %v7671
        %v7782 = vunpack.c.h.b16 %v7671
        %v7783 = vunpack.c.l.b16 %v7672
        %v7784 = vunpack.c.h.b16 %v7672
        %v7785 = vunpack.c.l.b16 %v7673
        %v7786 = vunpack.c.h.b16 %v7673
        %v7787 = vunpack.c.l.b16 %v7674
        %v7788 = vunpack.c.h.b16 %v7674
        %v7789 = vunpack.c.l.b16 %v7675
        %v7790 = vunpack.c.h.b16 %v7675
        %v7791 = vunpack.c.l.b16 %v7676
        %v7792 = vunpack.c.h.b16 %v7676
        %v7793 = vunpack.c.l.b16 %v7677
        %v7794 = vunpack.c.h.b16 %v7677
        %v7795 = vunpack.c.l.b16 %v7678
        %v7796 = vunpack.c.h.b16 %v7678
        %v7797 = vunpack.c.l.b16 %v7679
        %v7798 = vunpack.c.h.b16 %v7679
        %v7799 = vunpack.c.l.b16 %v7680
        %v7800 = vunpack.c.h.b16 %v7680
        %v7801 = vunpack.c.l.b16 %v7681
        %v7802 = vunpack.c.h.b16 %v7681
        %v7803 = vpack.c.b16 %v7741, %v7739
        %v7804 = vpack.c.b16 %v7742, %v7740
        %v7805 = vpack.c.b16 %v7745, %v7743
        %v7806 = vpack.c.b16 %v7746, %v7744
        %v7807 = vpack.c.b16 %v7749, %v7747
        %v7808 = vpack.c.b16 %v7750, %v7748
        %v7809 = vpack.c.b16 %v7753, %v7751
        %v7810 = vpack.c.b16 %v7754, %v7752
        %v7811 = vpack.c.b16 %v7757, %v7755
        %v7812 = vpack.c.b16 %v7758, %v7756
        %v7813 = vpack.c.b16 %v7761, %v7759
        %v7814 = vpack.c.b16 %v7762, %v7760
        %v7815 = vpack.c.b16 %v7765, %v7763
        %v7816 = vpack.c.b16 %v7766, %v7764
        %v7817 = vpack.c.b16 %v7769, %v7767
        %v7818 = vpack.c.b16 %v7770, %v7768
        %v7819 = vpack.c.b16 %v7773, %v7771
        %v7820 = vpack.c.b16 %v7774, %v7772
        %v7821 = vpack.c.b16 %v7777, %v7775
        %v7822 = vpack.c.b16 %v7778, %v7776
        %v7823 = vpack.c.b16 %v7781, %v7779
        %v7824 = vpack.c.b16 %v7782, %v7780
        %v7825 = vpack.c.b16 %v7785, %v7783
        %v7826 = vpack.c.b16 %v7786, %v7784
        %v7827 = vpack.c.b16 %v7789, %v7787
        %v7828 = vpack.c.b16 %v7790, %v7788
        %v7829 = vpack.c.b16 %v7793, %v7791
        %v7830 = vpack.c.b16 %v7794, %v7792
        %v7831 = vpack.c.b16 %v7797, %v7795
        %v7832 = vpack.c.b16 %v7798, %v7796
        %v7833 = vpack.c.b16 %v7801, %v7799
        %v7834 = vpack.c.b16 %v7802, %v7800
        %v7875 = vunpack.c.l.b16 %v7683
        %v7876 = vunpack.c.l.b16 %v7684
        %v7877 = vunpack.c.l.b16 %v7685
        %v7878 = vunpack.c.l.b16 %v7686
        %v7879 = vunpack.c.l.b16 %v7687
        %v7880 = vunpack.c.l.b16 %v7688
        %v7881 = vunpack.c.l.b16 %v7689
        %v7882 = vunpack.c.l.b16 %v7690
        %v7883 = vunpack.c.l.b16 %v7691
        %v7884 = vunpack.c.l.b16 %v7692
        %v7885 = vunpack.c.l.b16 %v7693
        %v7886 = vunpack.c.l.b16 %v7694
        %v7887 = vunpack.c.l.b16 %v7695
        %v7888 = vunpack.c.l.b16 %v7696
        %v7889 = vunpack.c.l.b16 %v7697
        %v7890 = vunpack.c.l.b16 %v7698
        %v7891 = vunpack.c.l.b16 %v7699
        %v7892 = vunpack.c.l.b16 %v7700
        %v7893 = vunpack.c.l.b16 %v7701
        %v7894 = vunpack.c.l.b16 %v7702
        %v7895 = vunpack.c.l.b16 %v7703
        %v7896 = vunpack.c.l.b16 %v7704
        %v7897 = vunpack.c.l.b16 %v7705
        %v7898 = vunpack.c.l.b16 %v7706
        %v7899 = vpack.c.b16 %v7876, %v7875
        %v7900 = vpack.c.b16 %v7878, %v7877
        %v7901 = vpack.c.b16 %v7880, %v7879
        %v7902 = vpack.c.b16 %v7882, %v7881
        %v7903 = vpack.c.b16 %v7884, %v7883
        %v7904 = vpack.c.b16 %v7886, %v7885
        %v7905 = vpack.c.b16 %v7888, %v7887
        %v7906 = vpack.c.b16 %v7890, %v7889
        %v7907 = vpack.c.b16 %v7892, %v7891
        %v7908 = vpack.c.b16 %v7894, %v7893
        %v7909 = vpack.c.b16 %v7896, %v7895
        %v7910 = vpack.c.b16 %v7898, %v7897
        %v7924 = vsel %vm1501, %v7804, 0
        %v7927 = vsel %vm1501, %v7806, 0
        %v7930 = vsel %vm1501, %v7808, 0
        %v7933 = vsel %vm1501, %v7810, 0
        %v7936 = vsel %vm1501, %v7812, 0
        %v7939 = vsel %vm1501, %v7814, 0
        %v7942 = vsel %vm1501, %v7816, 0
        %v7945 = vsel %vm1501, %v7818, 0
        %v7948 = vsel %vm1501, %v7820, 0
        %v7951 = vsel %vm1501, %v7822, 0
        %v7954 = vsel %vm1501, %v7824, 0
        %v7957 = vsel %vm1501, %v7826, 0
        %v7960 = vsel %vm1501, %v7828, 0
        %v7963 = vsel %vm1501, %v7830, 0
        %v7966 = vsel %vm1501, %v7832, 0
        %v7969 = vsel %vm1501, %v7834, 0
        %7971 = vmatprep.subr.bf16.mxu0 0
        %7972 = vmatpush1.bf16.msra.mxu0 %v7906
        %7973 = vmatprep.subr.bf16.mxu0 0
        %7974 = vmatpush1.bf16.msra.mxu0 %v7905
        %7975 = vmatprep.subr.bf16.mxu0 0
        %7976 = vmatpush1.bf16.msra.mxu0 %v7904
        %7977 = vmatprep.subr.bf16.mxu0 0
        %7978 = vmatpush1.bf16.msra.mxu0 %v7903
        %7979 = vmatprep.subr.bf16.mxu0 0
        %7980 = vmatpush1.bf16.msra.mxu0 %v7902
        %7981 = vmatprep.subr.bf16.mxu0 0
        %7982 = vmatpush1.bf16.msra.mxu0 %v7901
        %7983 = vmatprep.subr.bf16.mxu0 0
        %7984 = vmatpush1.bf16.msra.mxu0 %v7900
        %7985 = vmatprep.subr.bf16.mxu0 0
        %7986 = vmatpush1.bf16.msra.mxu0 %v7899
        %7987 = vmatprep.subr.bf16.mxu0 0
        %7988 = vmatpush2.bf16.msra.mxu0 0
        %7989 = vmatprep.subr.bf16.mxu0 0
        %7990 = vmatpush2.bf16.msra.mxu0 0
        %7991 = vmatprep.subr.bf16.mxu0 0
        %7992 = vmatpush2.bf16.msra.mxu0 0
        %7993 = vmatprep.subr.bf16.mxu0 0
        %7994 = vmatpush2.bf16.msra.mxu0 0
        %7995 = vmatprep.subr.bf16.mxu0 0
        %7996 = vmatpush2.bf16.msra.mxu0 %v7910
        %7997 = vmatprep.subr.bf16.mxu0 0
        %7998 = vmatpush2.bf16.msra.mxu0 %v7909
        %7999 = vmatprep.subr.bf16.mxu0 0
        %8000 = vmatpush2.bf16.msra.mxu0 %v7908
        %8001 = vmatprep.subr.bf16.mxu0 0
        %8002 = vmatpush2.bf16.msra.mxu0 %v7907
        %8003 = vmatprep.mubr.bf16.mxu0 %v7924
        %8004 = vmatmul.mubr.bf16.gmra.mxu0 %v7803
        %v8005 = vpop.f32.mrf.mxu0
        %v8006 = vadd.f32 0.0, %v8005
        %v8007 = vpop.f32.mrf.mxu0
        %v8008 = vpop.f32.mrf.mxu0
        %v8009 = vadd.f32 0.0, %v8008
        %v8010 = vpop.f32.mrf.mxu0
        %8011 = vmatprep.mubr.bf16.mxu0 %v7927
        %8012 = vmatmul.mubr.bf16.gmra.mxu0 %v7805
        %v8013 = vpop.f32.mrf.mxu0
        %v8014 = vadd.f32 0.0, %v8013
        %v8015 = vpop.f32.mrf.mxu0
        %v8016 = vpop.f32.mrf.mxu0
        %v8017 = vadd.f32 0.0, %v8016
        %v8018 = vpop.f32.mrf.mxu0
        %8019 = vmatprep.mubr.bf16.mxu0 %v7930
        %8020 = vmatmul.mubr.bf16.gmra.mxu0 %v7807
        %v8021 = vpop.f32.mrf.mxu0
        %v8022 = vadd.f32 0.0, %v8021
        %v8023 = vpop.f32.mrf.mxu0
        %v8024 = vpop.f32.mrf.mxu0
        %v8025 = vadd.f32 0.0, %v8024
        %v8026 = vpop.f32.mrf.mxu0
        %8027 = vmatprep.mubr.bf16.mxu0 %v7933
        %8028 = vmatmul.mubr.bf16.gmra.mxu0 %v7809
        %v8029 = vpop.f32.mrf.mxu0
        %v8030 = vadd.f32 0.0, %v8029
        %v8031 = vpop.f32.mrf.mxu0
        %v8032 = vpop.f32.mrf.mxu0
        %v8033 = vadd.f32 0.0, %v8032
        %v8034 = vpop.f32.mrf.mxu0
        %8035 = vmatprep.mubr.bf16.mxu0 %v7936
        %8036 = vmatmul.mubr.bf16.gmra.mxu0 %v7811
        %v8037 = vpop.f32.mrf.mxu0
        %v8038 = vadd.f32 0.0, %v8037
        %v8039 = vpop.f32.mrf.mxu0
        %v8040 = vpop.f32.mrf.mxu0
        %v8041 = vadd.f32 0.0, %v8040
        %v8042 = vpop.f32.mrf.mxu0
        %8043 = vmatprep.mubr.bf16.mxu0 %v7939
        %8044 = vmatmul.mubr.bf16.gmra.mxu0 %v7813
        %v8045 = vpop.f32.mrf.mxu0
        %v8046 = vadd.f32 0.0, %v8045
        %v8047 = vpop.f32.mrf.mxu0
        %v8048 = vpop.f32.mrf.mxu0
        %v8049 = vadd.f32 0.0, %v8048
        %v8050 = vpop.f32.mrf.mxu0
        %8051 = vmatprep.mubr.bf16.mxu0 %v7942
        %8052 = vmatmul.mubr.bf16.gmra.mxu0 %v7815
        %v8053 = vpop.f32.mrf.mxu0
        %v8054 = vadd.f32 0.0, %v8053
        %v8055 = vpop.f32.mrf.mxu0
        %v8056 = vpop.f32.mrf.mxu0
        %v8057 = vadd.f32 0.0, %v8056
        %v8058 = vpop.f32.mrf.mxu0
        %8059 = vmatprep.mubr.bf16.mxu0 %v7945
        %8060 = vmatmul.mubr.bf16.gmra.mxu0 %v7817
        %v8061 = vpop.f32.mrf.mxu0
        %v8062 = vadd.f32 0.0, %v8061
        %v8063 = vpop.f32.mrf.mxu0
        %v8064 = vpop.f32.mrf.mxu0
        %v8065 = vadd.f32 0.0, %v8064
        %v8066 = vpop.f32.mrf.mxu0
        %8067 = vmatprep.mubr.bf16.mxu0 %v7948
        %8068 = vmatmul.mubr.bf16.gmra.mxu0 %v7819
        %v8069 = vpop.f32.mrf.mxu0
        %v8070 = vadd.f32 0.0, %v8069
        %v8071 = vpop.f32.mrf.mxu0
        %v8072 = vpop.f32.mrf.mxu0
        %v8073 = vadd.f32 0.0, %v8072
        %v8074 = vpop.f32.mrf.mxu0
        %8075 = vmatprep.mubr.bf16.mxu0 %v7951
        %8076 = vmatmul.mubr.bf16.gmra.mxu0 %v7821
        %v8077 = vpop.f32.mrf.mxu0
        %v8078 = vadd.f32 0.0, %v8077
        %v8079 = vpop.f32.mrf.mxu0
        %v8080 = vpop.f32.mrf.mxu0
        %v8081 = vadd.f32 0.0, %v8080
        %v8082 = vpop.f32.mrf.mxu0
        %8083 = vmatprep.mubr.bf16.mxu0 %v7954
        %8084 = vmatmul.mubr.bf16.gmra.mxu0 %v7823
        %v8085 = vpop.f32.mrf.mxu0
        %v8086 = vadd.f32 0.0, %v8085
        %v8087 = vpop.f32.mrf.mxu0
        %v8088 = vpop.f32.mrf.mxu0
        %v8089 = vadd.f32 0.0, %v8088
        %v8090 = vpop.f32.mrf.mxu0
        %8091 = vmatprep.mubr.bf16.mxu0 %v7957
        %8092 = vmatmul.mubr.bf16.gmra.mxu0 %v7825
        %v8093 = vpop.f32.mrf.mxu0
        %v8094 = vadd.f32 0.0, %v8093
        %v8095 = vpop.f32.mrf.mxu0
        %v8096 = vpop.f32.mrf.mxu0
        %v8097 = vadd.f32 0.0, %v8096
        %v8098 = vpop.f32.mrf.mxu0
        %8099 = vmatprep.mubr.bf16.mxu0 %v7960
        %8100 = vmatmul.mubr.bf16.gmra.mxu0 %v7827
        %v8101 = vpop.f32.mrf.mxu0
        %v8102 = vadd.f32 0.0, %v8101
        %v8103 = vpop.f32.mrf.mxu0
        %v8104 = vpop.f32.mrf.mxu0
        %v8105 = vadd.f32 0.0, %v8104
        %v8106 = vpop.f32.mrf.mxu0
        %8107 = vmatprep.mubr.bf16.mxu0 %v7963
        %8108 = vmatmul.mubr.bf16.gmra.mxu0 %v7829
        %v8109 = vpop.f32.mrf.mxu0
        %v8110 = vadd.f32 0.0, %v8109
        %v8111 = vpop.f32.mrf.mxu0
        %v8112 = vpop.f32.mrf.mxu0
        %v8113 = vadd.f32 0.0, %v8112
        %v8114 = vpop.f32.mrf.mxu0
        %8115 = vmatprep.mubr.bf16.mxu0 %v7966
        %8116 = vmatmul.mubr.bf16.gmra.mxu0 %v7831
        %v8117 = vpop.f32.mrf.mxu0
        %v8118 = vadd.f32 0.0, %v8117
        %v8119 = vpop.f32.mrf.mxu0
        %v8120 = vpop.f32.mrf.mxu0
        %v8121 = vadd.f32 0.0, %v8120
        %v8122 = vpop.f32.mrf.mxu0
        %8123 = vmatprep.mubr.bf16.mxu0 %v7969
        %8124 = vmatmul.mubr.bf16.gmra.mxu0 %v7833
        %v8125 = vpop.f32.mrf.mxu0
        %v8126 = vadd.f32 0.0, %v8125
        %v8127 = vpop.f32.mrf.mxu0
        %v8128 = vpop.f32.mrf.mxu0
        %v8129 = vadd.f32 0.0, %v8128
        %v8130 = vpop.f32.mrf.mxu0
        %8131 = vdwg.mxu0
        %v8132 = vadd.f32 %v7524, %v8006
        %v8133 = vadd.f32 %v7527, %v8009
        %v8134 = vadd.f32 %v7532, %v8014
        %v8135 = vadd.f32 %v7535, %v8017
        %v8136 = vadd.f32 %v7540, %v8022
        %v8137 = vadd.f32 %v7543, %v8025
        %v8138 = vadd.f32 %v7548, %v8030
        %v8139 = vadd.f32 %v7551, %v8033
        %v8140 = vadd.f32 %v7556, %v8038
        %v8141 = vadd.f32 %v7559, %v8041
        %v8142 = vadd.f32 %v7564, %v8046
        %v8143 = vadd.f32 %v7567, %v8049
        %v8144 = vadd.f32 %v7572, %v8054
        %v8145 = vadd.f32 %v7575, %v8057
        %v8146 = vadd.f32 %v7580, %v8062
        %v8147 = vadd.f32 %v7583, %v8065
        %v8148 = vadd.f32 %v7588, %v8070
        %v8149 = vadd.f32 %v7591, %v8073
        %v8150 = vadd.f32 %v7596, %v8078
        %v8151 = vadd.f32 %v7599, %v8081
        %v8152 = vadd.f32 %v7604, %v8086
        %v8153 = vadd.f32 %v7607, %v8089
        %v8154 = vadd.f32 %v7612, %v8094
        %v8155 = vadd.f32 %v7615, %v8097
        %v8156 = vadd.f32 %v7620, %v8102
        %v8157 = vadd.f32 %v7623, %v8105
        %v8158 = vadd.f32 %v7628, %v8110
        %v8159 = vadd.f32 %v7631, %v8113
        %v8160 = vadd.f32 %v7636, %v8118
        %v8161 = vadd.f32 %v7639, %v8121
        %v8162 = vadd.f32 %v7644, %v8126
        %v8163 = vadd.f32 %v7647, %v8129
        %v8164 = vld [vmem:[%s14] sm:$0x1]
        %v8166 = vlaneseq
        %v8167 = vshrl.u32 %v8166, 7
        %v8168 = vsub.s32 0, %v8167
        %v8169 = vrot.slane %v8164, %v8168
        %v8171 = vadd.f32 %v8132, %v8169
        %v8172 = vadd.f32 %v8133, %v8169
        %v8173 = vadd.f32 %v8134, %v8169
        %v8174 = vadd.f32 %v8135, %v8169
        %v8175 = vadd.f32 %v8136, %v8169
        %v8176 = vadd.f32 %v8137, %v8169
        %v8177 = vadd.f32 %v8138, %v8169
        %v8178 = vadd.f32 %v8139, %v8169
        %v8179 = vadd.f32 %v8140, %v8169
        %v8180 = vadd.f32 %v8141, %v8169
        %v8181 = vadd.f32 %v8142, %v8169
        %v8182 = vadd.f32 %v8143, %v8169
        %v8183 = vadd.f32 %v8144, %v8169
        %v8184 = vadd.f32 %v8145, %v8169
        %v8185 = vadd.f32 %v8146, %v8169
        %v8186 = vadd.f32 %v8147, %v8169
        %v8187 = vadd.f32 %v8148, %v8169
        %v8188 = vadd.f32 %v8149, %v8169
        %v8189 = vadd.f32 %v8150, %v8169
        %v8190 = vadd.f32 %v8151, %v8169
        %v8191 = vadd.f32 %v8152, %v8169
        %v8192 = vadd.f32 %v8153, %v8169
        %v8193 = vadd.f32 %v8154, %v8169
        %v8194 = vadd.f32 %v8155, %v8169
        %v8195 = vadd.f32 %v8156, %v8169
        %v8196 = vadd.f32 %v8157, %v8169
        %v8197 = vadd.f32 %v8158, %v8169
        %v8198 = vadd.f32 %v8159, %v8169
        %v8199 = vadd.f32 %v8160, %v8169
        %v8200 = vadd.f32 %v8161, %v8169
        %v8201 = vadd.f32 %v8162, %v8169
        %v8202 = vadd.f32 %v8163, %v8169
        %v8203 = vadd.f32 %v1037, %v8171
        %v8204 = vadd.f32 %v1038, %v8172
        %v8205 = vadd.f32 %v1039, %v8173
        %v8206 = vadd.f32 %v1040, %v8174
        %v8207 = vadd.f32 %v1041, %v8175
        %v8208 = vadd.f32 %v1042, %v8176
        %v8209 = vadd.f32 %v1043, %v8177
        %v8210 = vadd.f32 %v1044, %v8178
        %v8211 = vadd.f32 %v1045, %v8179
        %v8212 = vadd.f32 %v1046, %v8180
        %v8213 = vadd.f32 %v1047, %v8181
        %v8214 = vadd.f32 %v1048, %v8182
        %v8215 = vadd.f32 %v1049, %v8183
        %v8216 = vadd.f32 %v1050, %v8184
        %v8217 = vadd.f32 %v1051, %v8185
        %v8218 = vadd.f32 %v1052, %v8186
        %v8219 = vadd.f32 %v1053, %v8187
        %v8220 = vadd.f32 %v1054, %v8188
        %v8221 = vadd.f32 %v1055, %v8189
        %v8222 = vadd.f32 %v1056, %v8190
        %v8223 = vadd.f32 %v1057, %v8191
        %v8224 = vadd.f32 %v1058, %v8192
        %v8225 = vadd.f32 %v1059, %v8193
        %v8226 = vadd.f32 %v1060, %v8194
        %v8227 = vadd.f32 %v1061, %v8195
        %v8228 = vadd.f32 %v1062, %v8196
        %v8229 = vadd.f32 %v1063, %v8197
        %v8230 = vadd.f32 %v1064, %v8198
        %v8231 = vadd.f32 %v1065, %v8199
        %v8232 = vadd.f32 %v1066, %v8200
        %v8233 = vadd.f32 %v1067, %v8201
        %v8234 = vadd.f32 %v1068, %v8202
        %8235 = vst.msk [vmem:[%s542] sm:$0xff] %vm1501, %v8203
        %8236 = vst.msk [vmem:[%s542 + $0x8] sm:$0xff] %vm1501, %v8204
        %8237 = vst.msk [vmem:[%s542 + $0x10] sm:$0xff] %vm1501, %v8205
        %8238 = vst.msk [vmem:[%s542 + $0x18] sm:$0xff] %vm1501, %v8206
        %8239 = vst.msk [vmem:[%s542 + $0x20] sm:$0xff] %vm1501, %v8207
        %8240 = vst.msk [vmem:[%s542 + $0x28] sm:$0xff] %vm1501, %v8208
        %8241 = vst.msk [vmem:[%s542 + $0x30] sm:$0xff] %vm1501, %v8209
        %8242 = vst.msk [vmem:[%s542 + $0x38] sm:$0xff] %vm1501, %v8210
        %8243 = vst.msk [vmem:[%s542 + $0x40] sm:$0xff] %vm1501, %v8211
        %8244 = vst.msk [vmem:[%s542 + $0x48] sm:$0xff] %vm1501, %v8212
        %8245 = vst.msk [vmem:[%s542 + $0x50] sm:$0xff] %vm1501, %v8213
        %8246 = vst.msk [vmem:[%s542 + $0x58] sm:$0xff] %vm1501, %v8214
        %8247 = vst.msk [vmem:[%s542 + $0x60] sm:$0xff] %vm1501, %v8215
        %8248 = vst.msk [vmem:[%s542 + $0x68] sm:$0xff] %vm1501, %v8216
        %8249 = vst.msk [vmem:[%s542 + $0x70] sm:$0xff] %vm1501, %v8217
        %8250 = vst.msk [vmem:[%s542 + $0x78] sm:$0xff] %vm1501, %v8218
        %8251 = vst.msk [vmem:[%s542 + $0x80] sm:$0xff] %vm1501, %v8219
        %8252 = vst.msk [vmem:[%s542 + $0x88] sm:$0xff] %vm1501, %v8220
        %8253 = vst.msk [vmem:[%s542 + $0x90] sm:$0xff] %vm1501, %v8221
        %8254 = vst.msk [vmem:[%s542 + $0x98] sm:$0xff] %vm1501, %v8222
        %8255 = vst.msk [vmem:[%s542 + $0xa0] sm:$0xff] %vm1501, %v8223
        %8256 = vst.msk [vmem:[%s542 + $0xa8] sm:$0xff] %vm1501, %v8224
        %8257 = vst.msk [vmem:[%s542 + $0xb0] sm:$0xff] %vm1501, %v8225
        %8258 = vst.msk [vmem:[%s542 + $0xb8] sm:$0xff] %vm1501, %v8226
        %8259 = vst.msk [vmem:[%s542 + $0xc0] sm:$0xff] %vm1501, %v8227
        %8260 = vst.msk [vmem:[%s542 + $0xc8] sm:$0xff] %vm1501, %v8228
        %8261 = vst.msk [vmem:[%s542 + $0xd0] sm:$0xff] %vm1501, %v8229
        %8262 = vst.msk [vmem:[%s542 + $0xd8] sm:$0xff] %vm1501, %v8230
        %8263 = vst.msk [vmem:[%s542 + $0xe0] sm:$0xff] %vm1501, %v8231
        %8264 = vst.msk [vmem:[%s542 + $0xe8] sm:$0xff] %vm1501, %v8232
        %8265 = vst.msk [vmem:[%s542 + $0xf0] sm:$0xff] %vm1501, %v8233
        %8266 = vst.msk [vmem:[%s542 + $0xf8] sm:$0xff] %vm1501, %v8234
        %s8267 = sand.u32 %s370, 1
        %s8268 = scalar_lea.sflag [#allocation5], %s8267
        %s8269 = sand.u32 %s370, 1
        %s8270 = smul.addr %s8269, 256
        %s8271 = scalar_lea.vmem [#allocation6], %s8270
        // Predicated region
        $region85: #{resblock_sft_forward.1} parent=79 // pred_check
          %p8272 = pneg %p380
        $region86: #{resblock_sft_forward.1} parent=79 // pred_check_branch
          %8274 = sbr.rel (%p8272) target = $region88
        $region87: #{resblock_sft_forward.1} parent=79 // pred_region
          %s8276 = ssub.s32 4096, 4096
          %8277 = vsyncadd %s8268, %s8276
          %s8278 = smul.addr %s32, 32
          %s8279 = smul.addr %s8278, 128
          %s8280 = scalar_lea.hbm %s15, %s8279
          %s8281 = sshll.u32 %s8271, 4
          %s8282 = int_to_ptr.vmem [resolvable:$true] %s8281
          %8287 = dma.vmem_to_hbm [thread:$0]  %s8282, 4096, %s8280, %s8268, 128, 128, 8
        $region88: #{resblock_sft_forward.1} parent=79 // pred_fallthru
          _
      $region80: #{resblock_sft_forward.1} parent=5 // pred_fallthru
        _
      %p8288 = scmp.le.s32.totalorder 2, %s27
      // Predicated region
      $region89: #{resblock_sft_forward.1} parent=5 // pred_check
        %p8289 = pneg %p8288
      $region90: #{resblock_sft_forward.1} parent=5 // pred_check_branch
        %8291 = sbr.rel (%p8289) target = $region92
      $region91: #{resblock_sft_forward.1} parent=5 // pred_region
        %s8292 = ssub.s32 %s27, 2
        // Predicated region
        $region93: #{resblock_sft_forward.1} parent=91 // pred_check
          %p8293 = pneg %p386
        $region94: #{resblock_sft_forward.1} parent=91 // pred_check_branch
          %8295 = sbr.rel (%p8293) target = $region96
        $region95: #{resblock_sft_forward.1} parent=91 // pred_region
          %s8296 = sand.u32 %s371, 1
          %s8297 = scalar_lea.sflag [#allocation5], %s8296
          %s8298 = sand.u32 %s371, 1
          %s8299 = smul.addr %s8298, 256
          %s8300 = scalar_lea.vmem [#allocation6], %s8299
          %8301 = dma.done %s8297, 4096
        $region96: #{resblock_sft_forward.1} parent=91 // pred_fallthru
          _
      $region92: #{resblock_sft_forward.1} parent=5 // pred_fallthru
        _
    $region6: #{resblock_sft_forward.1} parent=1 // loop_footer
      %s31 = sadd.s32 1, %s27
    $region7: #{resblock_sft_forward.1} parent=1 // loop_footer_branch
      %26 = sbr.rel target = $region3
    $region8: #{resblock_sft_forward.1} parent=1 // loop_exit
      _
    %8302 = vsyncpa [#allocation4], 1
    %s8303 = scalar_lea.sflag [#allocation4], 1
    %8304 = vsyncpa %s8303, 1
    %8305 = vsyncpa [#allocation5], 1
    %s8306 = scalar_lea.sflag [#allocation5], 1
    %8307 = vsyncpa %s8306, 1

</llo_original>
